<compile_context>
chip_gen: v7x
topology: tpu7x:2x2x1
jax: 0.10.0
libtpu: 0.0.40
codegen_flags: <defaults>
</compile_context>

<pallas_src>
import functools

import jax
import jax.numpy as jnp
from jax.experimental import pallas as pl
from jax.experimental.pallas import tpu as pltpu

_VMEM_LIMIT = 48 * 1024 * 1024   # fits all of v5e/v6e/v7x


def _round_up(x, m):
    return (x + m - 1) // m * m


# ----------------------------------------------------------------------------
# Tiled matmul + bias (+ optional ReLU): bf16 operands, f32 accumulation.
# ----------------------------------------------------------------------------
def _matmul_kernel(x_ref, w_ref, b_ref, o_ref, acc_ref, *, relu):
    @pl.when(pl.program_id(2) == 0)
    def _():
        acc_ref[...] = jnp.zeros_like(acc_ref)

    acc_ref[...] += jnp.dot(x_ref[...], w_ref[...],
                            preferred_element_type=jnp.float32)

    @pl.when(pl.program_id(2) == pl.num_programs(2) - 1)
    def _():
        out = acc_ref[...] + b_ref[...]
        if relu:
            out = jnp.maximum(out, 0.0)
        o_ref[...] = out.astype(o_ref.dtype)


def matmul_bias(x, w, b, relu=False):
    """x: (M, K), w: (K, N), b: (N,) -> (M, N).  Tiled, lane-dense padded N."""
    M, K = x.shape
    K2, N = w.shape
    assert K == K2
    Kp = _round_up(K, 128)
    Np = _round_up(N, 128)
    tm = min(256, _round_up(M, 8))
    Mp = _round_up(M, tm)
    tn = 256 if Np % 256 == 0 else 128
    tk = 512 if Kp % 512 == 0 else (256 if Kp % 256 == 0 else 128)

    xp = jnp.pad(x.astype(jnp.bfloat16), ((0, Mp - M), (0, Kp - K)))
    wp = jnp.pad(w.astype(jnp.bfloat16), ((0, Kp - K), (0, Np - N)))
    bp = jnp.pad(b.astype(jnp.float32).reshape(1, N), ((0, 0), (0, Np - N)))

    out = pl.pallas_call(
        functools.partial(_matmul_kernel, relu=relu),
        out_shape=jax.ShapeDtypeStruct((Mp, Np), jnp.float32),
        grid_spec=pltpu.PrefetchScalarGridSpec(
            num_scalar_prefetch=0,
            grid=(Mp // tm, Np // tn, Kp // tk),
            in_specs=[pl.BlockSpec((tm, tk), lambda i, j, k: (i, k)),
                      pl.BlockSpec((tk, tn), lambda i, j, k: (k, j)),
                      pl.BlockSpec((1, tn), lambda i, j, k: (0, j))],
            out_specs=pl.BlockSpec((tm, tn), lambda i, j, k: (i, j)),
            scratch_shapes=[pltpu.VMEM((tm, tn), jnp.float32)]),
        compiler_params=pltpu.CompilerParams(
            dimension_semantics=("parallel", "parallel", "arbitrary"),
            vmem_limit_bytes=_VMEM_LIMIT),
    )(xp, wp, bp)
    return out[:M, :N]


# ----------------------------------------------------------------------------
# Fused row-LayerNorm + ReLU + matmul + bias (used for the BiLSTM gate matmul).
# Single K block (K is small here); gamma is zero-padded so padded K columns
# contribute exactly zero.  Mean/var use the true K as divisor.
# ----------------------------------------------------------------------------
def _ln_matmul_kernel(x_ref, g_ref, bln_ref, w_ref, b_ref, o_ref, *, eps, k_true):
    x = x_ref[...]                                   # (tm, Kp) f32
    inv_k = 1.0 / k_true
    s = jnp.sum(x, axis=-1, keepdims=True)
    ss = jnp.sum(x * x, axis=-1, keepdims=True)
    mu = s * inv_k
    var = jnp.maximum(ss * inv_k - mu * mu, 0.0)
    y = (x - mu) * jax.lax.rsqrt(var + eps)
    y = y * g_ref[...] + bln_ref[...]
    y = jnp.maximum(y, 0.0)
    acc = jnp.dot(y.astype(jnp.bfloat16), w_ref[...],
                  preferred_element_type=jnp.float32)
    o_ref[...] = (acc + b_ref[...]).astype(o_ref.dtype)


def ln_relu_matmul_bias(x, gamma, beta, w, b, eps=1e-5):
    """relu(LayerNorm(x)) @ w + b, fused.  x: (M, K), w: (K, N)."""
    M, K = x.shape
    _, N = w.shape
    Kp = _round_up(K, 128)
    Np = _round_up(N, 128)
    tm = min(256, _round_up(M, 8))
    Mp = _round_up(M, tm)
    tn = 256 if Np % 256 == 0 else 128

    xp = jnp.pad(x.astype(jnp.float32), ((0, Mp - M), (0, Kp - K)))
    gp = jnp.pad(gamma.astype(jnp.float32).reshape(1, K), ((0, 0), (0, Kp - K)))
    btp = jnp.pad(beta.astype(jnp.float32).reshape(1, K), ((0, 0), (0, Kp - K)))
    wp = jnp.pad(w.astype(jnp.bfloat16), ((0, Kp - K), (0, Np - N)))
    bp = jnp.pad(b.astype(jnp.float32).reshape(1, N), ((0, 0), (0, Np - N)))

    out = pl.pallas_call(
        functools.partial(_ln_matmul_kernel, eps=eps, k_true=float(K)),
        out_shape=jax.ShapeDtypeStruct((Mp, Np), jnp.float32),
        grid_spec=pltpu.PrefetchScalarGridSpec(
            num_scalar_prefetch=0,
            grid=(Mp // tm, Np // tn),
            in_specs=[pl.BlockSpec((tm, Kp), lambda i, j: (i, 0)),
                      pl.BlockSpec((1, Kp), lambda i, j: (0, 0)),
                      pl.BlockSpec((1, Kp), lambda i, j: (0, 0)),
                      pl.BlockSpec((Kp, tn), lambda i, j: (0, j)),
                      pl.BlockSpec((1, tn), lambda i, j: (0, j))],
            out_specs=pl.BlockSpec((tm, tn), lambda i, j: (i, j))),
        compiler_params=pltpu.CompilerParams(
            dimension_semantics=("parallel", "parallel"),
            vmem_limit_bytes=_VMEM_LIMIT),
    )(xp, gp, btp, wp, bp)
    return out[:M, :N]


# ----------------------------------------------------------------------------
# Fully fused ResidualCNN block (one batch image per grid step):
#   LN1(n_feats) + ReLU + 3x3 conv1 + bias
#   LN2(n_feats) + ReLU + 3x3 conv2 + bias + residual add
# No intermediate tensor (im2col or conv1 output) ever touches HBM.  The
# zero-padded halo lives in a single bf16 VMEM scratch that is reused for both
# convs (Cin == Cout).  The 9 taps are accumulated on the MXU in f32.
# ----------------------------------------------------------------------------
def _resblock_kernel(x_ref, g1_ref, b1_ref, w1_ref, cb1_ref,
                     g2_ref, b2_ref, w2_ref, cb2_ref,
                     o_ref, xpad_ref, *, eps):
    H, W, C = x_ref.shape

    def ln_relu(v, g_ref, b_ref):
        # CNNLayerNorm over the n_feats (H) axis -> leading-axis reduction.
        mu = jnp.mean(v, axis=0, keepdims=True)
        var = jnp.mean(jnp.square(v - mu), axis=0, keepdims=True)
        y = (v - mu) * jax.lax.rsqrt(var + eps)
        y = y * g_ref[...] + b_ref[...]
        return jnp.maximum(y, 0.0)

    def conv3x3(w_ref, cb_ref):
        acc = jnp.zeros((H * W, C), jnp.float32)
        for kh in range(3):
            for kw in range(3):
                tap = xpad_ref[kh:kh + H, kw:kw + W, :]        # (H, W, C) bf16
                acc = acc + jnp.dot(tap.reshape(H * W, C), w_ref[kh * 3 + kw],
                                    preferred_element_type=jnp.float32)
        return (acc + cb_ref[...]).reshape(H, W, C)

    x = x_ref[...].astype(jnp.float32)                         # (H, W, C)

    # --- conv1 path ---
    y = ln_relu(x, g1_ref, b1_ref)
    xpad_ref[...] = jnp.zeros_like(xpad_ref)                   # zero halo
    xpad_ref[1:H + 1, 1:W + 1, :] = y.astype(xpad_ref.dtype)
    y1 = conv3x3(w1_ref, cb1_ref)

    # --- conv2 path (halo border is still zero; only interior rewritten) ---
    y2 = ln_relu(y1, g2_ref, b2_ref)
    xpad_ref[1:H + 1, 1:W + 1, :] = y2.astype(xpad_ref.dtype)
    out = conv3x3(w2_ref, cb2_ref) + x                         # residual add

    o_ref[...] = out.astype(o_ref.dtype)


def fused_residual_block(x, rp, eps=1e-5):
    """x: (B, H, W, C) NHWC; rp holds LN/conv params of one ResidualCNN block."""
    # TODO(synk): for very long time axes, tile W with halo DMA instead of one
    # whole image per grid step (fine at these channel counts / demo shapes).
    B, H, W, C = x.shape
    assert rp['cnn1_w'].shape[0] == C and rp['cnn2_w'].shape[0] == C

    g1 = rp['ln1_g'].reshape(H, 1, 1).astype(jnp.float32)
    b1 = rp['ln1_b'].reshape(H, 1, 1).astype(jnp.float32)
    g2 = rp['ln2_g'].reshape(H, 1, 1).astype(jnp.float32)
    b2 = rp['ln2_b'].reshape(H, 1, 1).astype(jnp.float32)
    w1 = _w9(rp['cnn1_w']).astype(jnp.bfloat16)                # (9, C, C)
    w2 = _w9(rp['cnn2_w']).astype(jnp.bfloat16)
    cb1 = rp['cnn1_b'].reshape(1, C).astype(jnp.float32)
    cb2 = rp['cnn2_b'].reshape(1, C).astype(jnp.float32)

    ln_spec = pl.BlockSpec((H, 1, 1), lambda bi: (0, 0, 0))
    w_spec = pl.BlockSpec((9, C, C), lambda bi: (0, 0, 0))
    cb_spec = pl.BlockSpec((1, C), lambda bi: (0, 0))

    return pl.pallas_call(
        functools.partial(_resblock_kernel, eps=eps),
        out_shape=jax.ShapeDtypeStruct((B, H, W, C), jnp.float32),
        grid_spec=pltpu.PrefetchScalarGridSpec(
            num_scalar_prefetch=0,
            grid=(B,),
            in_specs=[pl.BlockSpec((None, H, W, C), lambda bi: (bi, 0, 0, 0)),
                      ln_spec, ln_spec, w_spec, cb_spec,
                      ln_spec, ln_spec, w_spec, cb_spec],
            out_specs=pl.BlockSpec((None, H, W, C), lambda bi: (bi, 0, 0, 0)),
            scratch_shapes=[pltpu.VMEM((H + 2, W + 2, C), jnp.bfloat16)]),
        compiler_params=pltpu.CompilerParams(
            dimension_semantics=("parallel",),
            vmem_limit_bytes=_VMEM_LIMIT),
    )(x, g1, b1, w1, cb1, g2, b2, w2, cb2)


# ----------------------------------------------------------------------------
# Bidirectional LSTM recurrence: both directions as a "parallel" grid axis.
# gx is time-major (T, B, 8H) -> no HBM transposes / flips needed.
# ----------------------------------------------------------------------------
def _bilstm_kernel(gx_ref, whh_ref, out_ref, h_ref, c_ref):
    T, B, H = out_ref.shape
    d = pl.program_id(0)                       # 0 = forward, 1 = backward
    h_ref[...] = jnp.zeros_like(h_ref)
    c_ref[...] = jnp.zeros_like(c_ref)
    whh = whh_ref[...]                         # (H, 4H) bf16

    def step(s, carry):
        t = jnp.where(d == 0, s, T - 1 - s)
        g = gx_ref[t] + jnp.dot(h_ref[...].astype(jnp.bfloat16), whh,
                                preferred_element_type=jnp.float32)
        i_g = jax.nn.sigmoid(g[:, 0 * H:1 * H])
        f_g = jax.nn.sigmoid(g[:, 1 * H:2 * H])
        g_g = jnp.tanh(g[:, 2 * H:3 * H])
        o_g = jax.nn.sigmoid(g[:, 3 * H:4 * H])
        c_new = f_g * c_ref[...] + i_g * g_g
        h_new = o_g * jnp.tanh(c_new)
        c_ref[...] = c_new
        h_ref[...] = h_new
        out_ref[t] = h_new
        return carry

    jax.lax.fori_loop(0, T, step, 0)


def bilstm_block(y, p):
    """y: (T, B, D) time-major -> (T, B, 2H).  LayerNorm+ReLU fused into gx."""
    # TODO(synk): for very long T, chunk/double-buffer gx over the time axis
    # instead of keeping the whole (T,B,8H) block resident in VMEM.
    T, B, D = y.shape
    H = p['w_hh_f'].shape[1]
    w_cat = jnp.concatenate([p['w_ih_f'].T, p['w_ih_b'].T], axis=1)       # (D, 8H)
    b_cat = jnp.concatenate([p['b_ih_f'] + p['b_hh_f'],
                             p['b_ih_b'] + p['b_hh_b']])                  # (8H,)
    gx = ln_relu_matmul_bias(y.reshape(T * B, D), p['ln_g'], p['ln_b'],
                             w_cat, b_cat).reshape(T, B, 8 * H)
    whh = jnp.stack([p['w_hh_f'].T, p['w_hh_b'].T]).astype(jnp.bfloat16)  # (2, H, 4H)

    out2 = pl.pallas_call(
        _bilstm_kernel,
        out_shape=jax.ShapeDtypeStruct((2, T, B, H), jnp.float32),
        grid_spec=pltpu.PrefetchScalarGridSpec(
            num_scalar_prefetch=0,
            grid=(2,),
            in_specs=[pl.BlockSpec((T, B, 4 * H), lambda d: (0, 0, d)),
                      pl.BlockSpec((None, H, 4 * H), lambda d: (d, 0, 0))],
            out_specs=pl.BlockSpec((None, T, B, H), lambda d: (d, 0, 0, 0)),
            scratch_shapes=[pltpu.VMEM((B, H), jnp.float32),
                            pltpu.VMEM((B, H), jnp.float32)]),
        compiler_params=pltpu.CompilerParams(
            dimension_semantics=("parallel",),
            vmem_limit_bytes=_VMEM_LIMIT),
    )(gx, whh)
    return jnp.concatenate([out2[0], out2[1]], axis=-1)                   # (T, B, 2H)


# ----------------------------------------------------------------------------
# Fused classifier: Linear -> ReLU -> Linear (n_class padded to 128 lanes).
# ----------------------------------------------------------------------------
def _classifier_kernel(x_ref, w1_ref, b1_ref, w2_ref, b2_ref, o_ref):
    h = jnp.dot(x_ref[...].astype(jnp.bfloat16), w1_ref[...],
                preferred_element_type=jnp.float32) + b1_ref[...]
    h = jnp.maximum(h, 0.0)
    out = jnp.dot(h.astype(jnp.bfloat16), w2_ref[...],
                  preferred_element_type=jnp.float32) + b2_ref[...]
    o_ref[...] = out.astype(o_ref.dtype)


def classifier_fused(x2d, w1, b1, w2, b2, n_class):
    """x2d: (M, 2H), w1: (2H, H), w2: (H, n_class)."""
    M, Din = x2d.shape
    Hc = w1.shape[1]
    Np = _round_up(n_class, 128)
    tm = min(256, _round_up(M, 8))
    Mp = _round_up(M, tm)
    xp = jnp.pad(x2d.astype(jnp.float32), ((0, Mp - M), (0, 0)))
    w2p = jnp.pad(w2.astype(jnp.bfloat16), ((0, 0), (0, Np - n_class)))
    b2p = jnp.pad(b2.astype(jnp.float32).reshape(1, n_class),
                  ((0, 0), (0, Np - n_class)))

    out = pl.pallas_call(
        _classifier_kernel,
        out_shape=jax.ShapeDtypeStruct((Mp, Np), jnp.float32),
        grid_spec=pltpu.PrefetchScalarGridSpec(
            num_scalar_prefetch=0,
            grid=(Mp // tm,),
            in_specs=[pl.BlockSpec((tm, Din), lambda i: (i, 0)),
                      pl.BlockSpec((Din, Hc), lambda i: (0, 0)),
                      pl.BlockSpec((1, Hc), lambda i: (0, 0)),
                      pl.BlockSpec((Hc, Np), lambda i: (0, 0)),
                      pl.BlockSpec((1, Np), lambda i: (0, 0))],
            out_specs=pl.BlockSpec((tm, Np), lambda i: (i, 0))),
        compiler_params=pltpu.CompilerParams(
            dimension_semantics=("parallel",),
            vmem_limit_bytes=_VMEM_LIMIT),
    )(xp, w1.astype(jnp.bfloat16), b1.astype(jnp.float32).reshape(1, Hc), w2p, b2p)
    return out[:M, :n_class]


# ----------------------------------------------------------------------------
# Model glue
# ----------------------------------------------------------------------------
def _w9(w):
    """PyTorch conv weight (Cout, Cin, 3, 3) -> (9, Cin, Cout)."""
    Cout, Cin = w.shape[0], w.shape[1]
    return jnp.transpose(w, (2, 3, 1, 0)).reshape(9, Cin, Cout)


def conv0_stride2(x, w, b):
    """First Conv2d(1, 32, 3, stride=2, pad=1).  Cin=1 so the im2col patches are
    tiny; the MACs run in the tiled Pallas matmul."""
    # TODO(synk): no fused Pallas stride-2 conv kernel; XLA im2col glue feeds the
    # tiled Pallas matmul for this single 1-channel layer.
    B, H, W, Cin = x.shape
    Cout = w.shape[0]
    xp = jnp.pad(x, ((0, 0), (1, 1), (1, 1), (0, 0)))
    Ho = (H + 2 - 3) // 2 + 1
    Wo = (W + 2 - 3) // 2 + 1
    cols = []
    for i in range(3):
        for j in range(3):
            cols.append(xp[:, i:i + 2 * Ho:2, j:j + 2 * Wo:2, :])
    patches = jnp.concatenate(cols, axis=-1).reshape(B * Ho * Wo, 9 * Cin)
    wmat = jnp.transpose(w, (2, 3, 1, 0)).reshape(9 * Cin, Cout)
    out = matmul_bias(patches, wmat, b)
    return out.reshape(B, Ho, Wo, Cout)


def speech_model_forward(x_nchw, params):
    """x_nchw: (B, 1, n_feats, time) -> (B, time//2, n_class)."""
    x = jnp.transpose(x_nchw, (0, 2, 3, 1))                    # NCHW -> NHWC
    x = conv0_stride2(x, params['cnn_w'], params['cnn_b'])     # (B, F/2, T/2, 32)

    # Residual CNN blocks: LN+ReLU+conv1+LN+ReLU+conv2+residual fully fused.
    for rp in params['res']:
        x = fused_residual_block(x, rp)

    B, Hh, Wt, C = x.shape
    # PyTorch: view(B, C*H, W).transpose(1, 2) -> feature index = c*H + h.
    # Build it time-major (T, B, C*H) so the whole LSTM stack needs no transposes.
    feat = jnp.transpose(x, (2, 0, 3, 1)).reshape(Wt, B, C * Hh)
    y = matmul_bias(feat.reshape(Wt * B, C * Hh),
                    params['lin_w'].T, params['lin_b']).reshape(Wt, B, -1)

    for lp in params['lstms']:
        y = bilstm_block(y, lp)                                # (T, B, 2H)

    T, Bb, D = y.shape
    z = classifier_fused(y.reshape(T * Bb, D),
                         params['cls1_w'].T, params['cls1_b'],
                         params['cls2_w'].T, params['cls2_b'],
                         n_class=params['cls2_w'].shape[0])
    return jnp.transpose(z.reshape(T, Bb, -1), (1, 0, 2))      # (B, T, n_class)


# ----------------------------------------------------------------------------
# Deterministic parameter init (PyTorch-like uniform(-1/sqrt(fan_in), +...))
# ----------------------------------------------------------------------------
def init_params(key, *, n_feats_half, n_cnn_layers, n_rnn_layers,
                lstm_input_dim, hidden_size, n_class):
    keys = iter(jax.random.split(key, 256))

    def uni(shape, fan_in):
        s = 1.0 / (fan_in ** 0.5)
        return jax.random.uniform(next(keys), shape, jnp.float32, -s, s)

    params = {
        'cnn_w': uni((32, 1, 3, 3), 1 * 9),
        'cnn_b': uni((32,), 1 * 9),
        'res': [],
        'lstms': [],
    }
    for _ in range(n_cnn_layers):
        params['res'].append({
            'ln1_g': jnp.ones((n_feats_half,), jnp.float32),
            'ln1_b': jnp.zeros((n_feats_half,), jnp.float32),
            'ln2_g': jnp.ones((n_feats_half,), jnp.float32),
            'ln2_b': jnp.zeros((n_feats_half,), jnp.float32),
            'cnn1_w': uni((32, 32, 3, 3), 32 * 9),
            'cnn1_b': uni((32,), 32 * 9),
            'cnn2_w': uni((32, 32, 3, 3), 32 * 9),
            'cnn2_b': uni((32,), 32 * 9),
        })
    lin_in = 32 * n_feats_half
    params['lin_w'] = uni((lstm_input_dim, lin_in), lin_in)
    params['lin_b'] = uni((lstm_input_dim,), lin_in)
    H = hidden_size
    for i in range(n_rnn_layers):
        d_in = lstm_input_dim if i == 0 else 2 * hidden_size
        params['lstms'].append({
            'ln_g': jnp.ones((d_in,), jnp.float32),
            'ln_b': jnp.zeros((d_in,), jnp.float32),
            'w_ih_f': uni((4 * H, d_in), H), 'w_hh_f': uni((4 * H, H), H),
            'b_ih_f': uni((4 * H,), H),      'b_hh_f': uni((4 * H,), H),
            'w_ih_b': uni((4 * H, d_in), H), 'w_hh_b': uni((4 * H, H), H),
            'b_ih_b': uni((4 * H,), H),      'b_hh_b': uni((4 * H,), H),
        })
    params['cls1_w'] = uni((hidden_size, 2 * hidden_size), 2 * hidden_size)
    params['cls1_b'] = uni((hidden_size,), 2 * hidden_size)
    params['cls2_w'] = uni((n_class, hidden_size), hidden_size)
    params['cls2_b'] = uni((n_class,), hidden_size)
    return params


# ----------------------------------------------------------------------------
if __name__ == "__main__":
    B = 2
    N_FEATS = 16          # spectrogram feature bins
    TIME = 16             # time frames
    N_CNN_LAYERS = 2
    N_RNN_LAYERS = 1      # reference LayerNorm(hidden_size) only works for 1 layer
    HIDDEN = 32
    LSTM_INPUT_DIM = 32   # must equal HIDDEN for the reference LayerNorm to type-check
    N_CLASS = 10
    N_FEATS_HALF = N_FEATS // 2

    key = jax.random.PRNGKey(0)
    pkey, xkey = jax.random.split(key)
    params = init_params(pkey,
                         n_feats_half=N_FEATS_HALF,
                         n_cnn_layers=N_CNN_LAYERS,
                         n_rnn_layers=N_RNN_LAYERS,
                         lstm_input_dim=LSTM_INPUT_DIM,
                         hidden_size=HIDDEN,
                         n_class=N_CLASS)

    x = jax.random.normal(xkey, (B, 1, N_FEATS, TIME), jnp.float32)

    forward = jax.jit(speech_model_forward)
    out = forward(x, params)
    out = jax.block_until_ready(out)

    expected_shape = (B, TIME // 2, N_CLASS)
    assert out.shape == expected_shape, (out.shape, expected_shape)
    assert bool(jnp.all(jnp.isfinite(out)))
    print("KERNEL_OK")
</pallas_src>

<mosaic_0001>
module attributes {stable_mosaic.version = 11 : i64} {
  func.func @_matmul_kernel(%arg0: i32, %arg1: i32, %arg2: i32, %arg3: memref<128x128xbf16, #tpu.memory_space<vmem>>, %arg4: memref<128x128xbf16, #tpu.memory_space<vmem>>, %arg5: memref<1x128xf32, #tpu.memory_space<vmem>>, %arg6: memref<128x128xf32, #tpu.memory_space<vmem>>, %arg7: memref<128x128xf32, #tpu.memory_space<vmem>>) attributes {dimension_semantics = [#tpu.dimension_semantics<parallel>, #tpu.dimension_semantics<parallel>, #tpu.dimension_semantics<arbitrary>], iteration_bounds = array<i64: 1, 1, 1>, scalar_prefetch = 0 : i64, scratch_operands = 1 : i64, tpu.core_type = #tpu.core_type<tc>, window_params = [{transform_indices = @transform_0, window_bounds = array<i64: 128, 128>}, {transform_indices = @transform_1, window_bounds = array<i64: 128, 128>}, {transform_indices = @transform_2, window_bounds = array<i64: 1, 128>}, {transform_indices = @transform_3, window_bounds = array<i64: 128, 128>}]} {
    %c0_i32 = arith.constant 0 : i32
    %0 = arith.cmpi eq, %arg2, %c0_i32 : i32
    %1 = arith.extui %0 : i1 to i32
    %c0_i32_0 = arith.constant 0 : i32
    %2 = arith.cmpi ne, %1, %c0_i32_0 : i32
    scf.if %2 {
      %cst_10 = arith.constant 0.000000e+00 : f32
      %12 = vector.broadcast %cst_10 : f32 to vector<128x128xf32>
      %c0_11 = arith.constant 0 : index
      %c0_12 = arith.constant 0 : index
      %13 = vector.load %arg7[%c0_11, %c0_12] : memref<128x128xf32, #tpu.memory_space<vmem>>, vector<128x128xf32>
      tpu.vector_store %arg7[%c0_11, %c0_12], %12 {strides = array<i32>} : memref<128x128xf32, #tpu.memory_space<vmem>>, vector<128x128xf32>,
    } else {
    }
    %c0 = arith.constant 0 : index
    %c0_1 = arith.constant 0 : index
    %3 = vector.load %arg7[%c0, %c0_1] : memref<128x128xf32, #tpu.memory_space<vmem>>, vector<128x128xf32>
    %c0_2 = arith.constant 0 : index
    %c0_3 = arith.constant 0 : index
    %4 = vector.load %arg3[%c0_2, %c0_3] : memref<128x128xbf16, #tpu.memory_space<vmem>>, vector<128x128xbf16>
    %c0_4 = arith.constant 0 : index
    %c0_5 = arith.constant 0 : index
    %5 = vector.load %arg4[%c0_4, %c0_5] : memref<128x128xbf16, #tpu.memory_space<vmem>>, vector<128x128xbf16>
    %cst = arith.constant dense<0.000000e+00> : vector<128x128xf32>
    %6 = tpu.matmul %4, %5, %cst {dimension_numbers = #tpu.dot_dimension_numbers<[1], [0], [0], [1], [0, 0, 1, 1], [], []>} : vector<128x128xbf16>, vector<128x128xbf16>, vector<128x128xf32> -> vector<128x128xf32>
    %7 = arith.addf %3, %6 : vector<128x128xf32>
    %c0_6 = arith.constant 0 : index
    %c0_7 = arith.constant 0 : index
    %8 = vector.load %arg7[%c0_6, %c0_7] : memref<128x128xf32, #tpu.memory_space<vmem>>, vector<128x128xf32>
    tpu.vector_store %arg7[%c0_6, %c0_7], %7 {strides = array<i32>} : memref<128x128xf32, #tpu.memory_space<vmem>>, vector<128x128xf32>,
    %c0_i32_8 = arith.constant 0 : i32
    %9 = arith.cmpi eq, %arg2, %c0_i32_8 : i32
    %10 = arith.extui %9 : i1 to i32
    %c0_i32_9 = arith.constant 0 : i32
    %11 = arith.cmpi ne, %10, %c0_i32_9 : i32
    scf.if %11 {
      %c0_10 = arith.constant 0 : index
      %c0_11 = arith.constant 0 : index
      %12 = vector.load %arg7[%c0_10, %c0_11] : memref<128x128xf32, #tpu.memory_space<vmem>>, vector<128x128xf32>
      %c0_12 = arith.constant 0 : index
      %c0_13 = arith.constant 0 : index
      %13 = vector.load %arg5[%c0_12, %c0_13] : memref<1x128xf32, #tpu.memory_space<vmem>>, vector<1x128xf32>
      %14 = vector.broadcast %13 : vector<1x128xf32> to vector<128x128xf32>
      %15 = arith.addf %12, %14 : vector<128x128xf32>
      %c0_14 = arith.constant 0 : index
      %c0_15 = arith.constant 0 : index
      %16 = vector.load %arg6[%c0_14, %c0_15] : memref<128x128xf32, #tpu.memory_space<vmem>>, vector<128x128xf32>
      tpu.vector_store %arg6[%c0_14, %c0_15], %15 {strides = array<i32>} : memref<128x128xf32, #tpu.memory_space<vmem>>, vector<128x128xf32>,
    } else {
    }
    return
  }
  func.func @transform_0(%arg0: i32, %arg1: i32, %arg2: i32) -> (i32, i32) {
    %c0_i32 = arith.constant 0 : i32
    return %arg0, %arg2 : i32, i32
  }
  func.func @transform_1(%arg0: i32, %arg1: i32, %arg2: i32) -> (i32, i32) {
    %c0_i32 = arith.constant 0 : i32
    return %arg2, %arg1 : i32, i32
  }
  func.func @transform_2(%arg0: i32, %arg1: i32, %arg2: i32) -> (i32, i32) {
    %c0_i32 = arith.constant 0 : i32
    %c0_i32_0 = arith.constant 0 : i32
    return %c0_i32, %arg1 : i32, i32
  }
  func.func @transform_3(%arg0: i32, %arg1: i32, %arg2: i32) -> (i32, i32) {
    %c0_i32 = arith.constant 0 : i32
    return %arg0, %arg1 : i32, i32
  }
}

module attributes {stable_mosaic.version = 11 : i64} {
  func.func @_resblock_kernel(%arg0: i32, %arg1: memref<1x8x8x32xf32, #tpu.memory_space<vmem>>, %arg2: memref<8x1x1xf32, #tpu.memory_space<vmem>>, %arg3: memref<8x1x1xf32, #tpu.memory_space<vmem>>, %arg4: memref<9x32x32xbf16, #tpu.memory_space<vmem>>, %arg5: memref<1x32xf32, #tpu.memory_space<vmem>>, %arg6: memref<8x1x1xf32, #tpu.memory_space<vmem>>, %arg7: memref<8x1x1xf32, #tpu.memory_space<vmem>>, %arg8: memref<9x32x32xbf16, #tpu.memory_space<vmem>>, %arg9: memref<1x32xf32, #tpu.memory_space<vmem>>, %arg10: memref<1x8x8x32xf32, #tpu.memory_space<vmem>>, %arg11: memref<10x10x32xbf16, #tpu.memory_space<vmem>>) attributes {dimension_semantics = [#tpu.dimension_semantics<parallel>], iteration_bounds = array<i64: 2>, scalar_prefetch = 0 : i64, scratch_operands = 1 : i64, tpu.core_type = #tpu.core_type<tc>, window_params = [{transform_indices = @transform_0, window_bounds = array<i64: 1, 8, 8, 32>}, {pipeline_mode = #tpu.pipeline_mode<synchronous>, transform_indices = @transform_1, window_bounds = array<i64: 8, 1, 1>}, {pipeline_mode = #tpu.pipeline_mode<synchronous>, transform_indices = @transform_2, window_bounds = array<i64: 8, 1, 1>}, {pipeline_mode = #tpu.pipeline_mode<synchronous>, transform_indices = @transform_3, window_bounds = array<i64: 9, 32, 32>}, {pipeline_mode = #tpu.pipeline_mode<synchronous>, transform_indices = @transform_4, window_bounds = array<i64: 1, 32>}, {pipeline_mode = #tpu.pipeline_mode<synchronous>, transform_indices = @transform_5, window_bounds = array<i64: 8, 1, 1>}, {pipeline_mode = #tpu.pipeline_mode<synchronous>, transform_indices = @transform_6, window_bounds = array<i64: 8, 1, 1>}, {pipeline_mode = #tpu.pipeline_mode<synchronous>, transform_indices = @transform_7, window_bounds = array<i64: 9, 32, 32>}, {pipeline_mode = #tpu.pipeline_mode<synchronous>, transform_indices = @transform_8, window_bounds = array<i64: 1, 32>}, {transform_indices = @transform_9, window_bounds = array<i64: 1, 8, 8, 32>}]} {
    %c0 = arith.constant 0 : index
    %c0_0 = arith.constant 0 : index
    %c0_1 = arith.constant 0 : index
    %c0_2 = arith.constant 0 : index
    %0 = vector.load %arg1[%c0, %c0_0, %c0_1, %c0_2] : memref<1x8x8x32xf32, #tpu.memory_space<vmem>>, vector<1x8x8x32xf32>
    %1 = vector.shape_cast %0 : vector<1x8x8x32xf32> to vector<8x8x32xf32>
    %cst = arith.constant dense<0.000000e+00> : vector<8x32xf32>
    %2 = vector.multi_reduction <add>, %1, %cst [0] : vector<8x8x32xf32> to vector<8x32xf32>
    %3 = vector.shape_cast %2 : vector<8x32xf32> to vector<1x8x32xf32>
    %cst_3 = arith.constant 8.000000e+00 : f32
    %4 = vector.broadcast %cst_3 : f32 to vector<1x8x32xf32>
    %5 = arith.divf %3, %4 : vector<1x8x32xf32>
    %6 = vector.broadcast %5 : vector<1x8x32xf32> to vector<8x8x32xf32>
    %7 = arith.subf %1, %6 : vector<8x8x32xf32>
    %8 = arith.mulf %7, %7 : vector<8x8x32xf32>
    %cst_4 = arith.constant dense<0.000000e+00> : vector<8x32xf32>
    %9 = vector.multi_reduction <add>, %8, %cst_4 [0] : vector<8x8x32xf32> to vector<8x32xf32>
    %10 = vector.shape_cast %9 : vector<8x32xf32> to vector<1x8x32xf32>
    %cst_5 = arith.constant 8.000000e+00 : f32
    %11 = vector.broadcast %cst_5 : f32 to vector<1x8x32xf32>
    %12 = arith.divf %10, %11 : vector<1x8x32xf32>
    %13 = vector.broadcast %5 : vector<1x8x32xf32> to vector<8x8x32xf32>
    %14 = arith.subf %1, %13 : vector<8x8x32xf32>
    %cst_6 = arith.constant 9.99999974E-6 : f32
    %15 = vector.broadcast %cst_6 : f32 to vector<1x8x32xf32>
    %16 = arith.addf %12, %15 : vector<1x8x32xf32>
    %17 = math.rsqrt %16 : vector<1x8x32xf32>
    %18 = vector.broadcast %17 : vector<1x8x32xf32> to vector<8x8x32xf32>
    %19 = arith.mulf %14, %18 : vector<8x8x32xf32>
    %c0_7 = arith.constant 0 : index
    %c0_8 = arith.constant 0 : index
    %c0_9 = arith.constant 0 : index
    %20 = vector.load %arg2[%c0_7, %c0_8, %c0_9] : memref<8x1x1xf32, #tpu.memory_space<vmem>>, vector<8x1x1xf32>
    %21 = vector.broadcast %20 : vector<8x1x1xf32> to vector<8x8x32xf32>
    %22 = arith.mulf %19, %21 : vector<8x8x32xf32>
    %c0_10 = arith.constant 0 : index
    %c0_11 = arith.constant 0 : index
    %c0_12 = arith.constant 0 : index
    %23 = vector.load %arg3[%c0_10, %c0_11, %c0_12] : memref<8x1x1xf32, #tpu.memory_space<vmem>>, vector<8x1x1xf32>
    %24 = vector.broadcast %23 : vector<8x1x1xf32> to vector<8x8x32xf32>
    %25 = arith.addf %22, %24 : vector<8x8x32xf32>
    %cst_13 = arith.constant 0.000000e+00 : f32
    %26 = vector.broadcast %cst_13 : f32 to vector<8x8x32xf32>
    %27 = arith.maximumf %25, %26 : vector<8x8x32xf32>
    %cst_14 = arith.constant 0.000000e+00 : bf16
    %28 = vector.broadcast %cst_14 : bf16 to vector<10x10x32xbf16>
    %c0_15 = arith.constant 0 : index
    %c0_16 = arith.constant 0 : index
    %c0_17 = arith.constant 0 : index
    %29 = vector.load %arg11[%c0_15, %c0_16, %c0_17] : memref<10x10x32xbf16, #tpu.memory_space<vmem>>, vector<10x10x32xbf16>
    tpu.vector_store %arg11[%c0_15, %c0_16, %c0_17], %28 {strides = array<i32>} : memref<10x10x32xbf16, #tpu.memory_space<vmem>>, vector<10x10x32xbf16>,
    %30 = arith.truncf %27 : vector<8x8x32xf32> to vector<8x8x32xbf16>
    %c1 = arith.constant 1 : index
    %c1_18 = arith.constant 1 : index
    %c0_19 = arith.constant 0 : index
    %31 = vector.load %arg11[%c1, %c1_18, %c0_19] : memref<10x10x32xbf16, #tpu.memory_space<vmem>>, vector<8x8x32xbf16>
    tpu.vector_store %arg11[%c1, %c1_18, %c0_19], %30 {strides = array<i32>} : memref<10x10x32xbf16, #tpu.memory_space<vmem>>, vector<8x8x32xbf16>,
    %cst_20 = arith.constant 0.000000e+00 : f32
    %32 = vector.broadcast %cst_20 : f32 to vector<64x32xf32>
    %c0_21 = arith.constant 0 : index
    %c0_22 = arith.constant 0 : index
    %c0_23 = arith.constant 0 : index
    %33 = vector.load %arg11[%c0_21, %c0_22, %c0_23] : memref<10x10x32xbf16, #tpu.memory_space<vmem>>, vector<8x8x32xbf16>
    %34 = vector.shape_cast %33 : vector<8x8x32xbf16> to vector<64x32xbf16>
    %c0_24 = arith.constant 0 : index
    %c0_25 = arith.constant 0 : index
    %c0_26 = arith.constant 0 : index
    %35 = vector.load %arg4[%c0_24, %c0_25, %c0_26] : memref<9x32x32xbf16, #tpu.memory_space<vmem>>, vector<1x32x32xbf16>
    %36 = vector.shape_cast %35 : vector<1x32x32xbf16> to vector<32x32xbf16>
    %cst_27 = arith.constant dense<0.000000e+00> : vector<64x32xf32>
    %37 = tpu.matmul %34, %36, %cst_27 {dimension_numbers = #tpu.dot_dimension_numbers<[1], [0], [0], [1], [0, 0, 1, 1], [], []>} : vector<64x32xbf16>, vector<32x32xbf16>, vector<64x32xf32> -> vector<64x32xf32>
    %38 = arith.addf %32, %37 : vector<64x32xf32>
    %c0_28 = arith.constant 0 : index
    %c1_29 = arith.constant 1 : index
    %c0_30 = arith.constant 0 : index
    %39 = vector.load %arg11[%c0_28, %c1_29, %c0_30] : memref<10x10x32xbf16, #tpu.memory_space<vmem>>, vector<8x8x32xbf16>
    %40 = vector.shape_cast %39 : vector<8x8x32xbf16> to vector<64x32xbf16>
    %c1_31 = arith.constant 1 : index
    %c0_32 = arith.constant 0 : index
    %c0_33 = arith.constant 0 : index
    %41 = vector.load %arg4[%c1_31, %c0_32, %c0_33] : memref<9x32x32xbf16, #tpu.memory_space<vmem>>, vector<1x32x32xbf16>
    %42 = vector.shape_cast %41 : vector<1x32x32xbf16> to vector<32x32xbf16>
    %cst_34 = arith.constant dense<0.000000e+00> : vector<64x32xf32>
    %43 = tpu.matmul %40, %42, %cst_34 {dimension_numbers = #tpu.dot_dimension_numbers<[1], [0], [0], [1], [0, 0, 1, 1], [], []>} : vector<64x32xbf16>, vector<32x32xbf16>, vector<64x32xf32> -> vector<64x32xf32>
    %44 = arith.addf %38, %43 : vector<64x32xf32>
    %c0_35 = arith.constant 0 : index
    %c2 = arith.constant 2 : index
    %c0_36 = arith.constant 0 : index
    %45 = vector.load %arg11[%c0_35, %c2, %c0_36] : memref<10x10x32xbf16, #tpu.memory_space<vmem>>, vector<8x8x32xbf16>
    %46 = vector.shape_cast %45 : vector<8x8x32xbf16> to vector<64x32xbf16>
    %c2_37 = arith.constant 2 : index
    %c0_38 = arith.constant 0 : index
    %c0_39 = arith.constant 0 : index
    %47 = vector.load %arg4[%c2_37, %c0_38, %c0_39] : memref<9x32x32xbf16, #tpu.memory_space<vmem>>, vector<1x32x32xbf16>
    %48 = vector.shape_cast %47 : vector<1x32x32xbf16> to vector<32x32xbf16>
    %cst_40 = arith.constant dense<0.000000e+00> : vector<64x32xf32>
    %49 = tpu.matmul %46, %48, %cst_40 {dimension_numbers = #tpu.dot_dimension_numbers<[1], [0], [0], [1], [0, 0, 1, 1], [], []>} : vector<64x32xbf16>, vector<32x32xbf16>, vector<64x32xf32> -> vector<64x32xf32>
    %50 = arith.addf %44, %49 : vector<64x32xf32>
    %c1_41 = arith.constant 1 : index
    %c0_42 = arith.constant 0 : index
    %c0_43 = arith.constant 0 : index
    %51 = vector.load %arg11[%c1_41, %c0_42, %c0_43] : memref<10x10x32xbf16, #tpu.memory_space<vmem>>, vector<8x8x32xbf16>
    %52 = vector.shape_cast %51 : vector<8x8x32xbf16> to vector<64x32xbf16>
    %c3 = arith.constant 3 : index
    %c0_44 = arith.constant 0 : index
    %c0_45 = arith.constant 0 : index
    %53 = vector.load %arg4[%c3, %c0_44, %c0_45] : memref<9x32x32xbf16, #tpu.memory_space<vmem>>, vector<1x32x32xbf16>
    %54 = vector.shape_cast %53 : vector<1x32x32xbf16> to vector<32x32xbf16>
    %cst_46 = arith.constant dense<0.000000e+00> : vector<64x32xf32>
    %55 = tpu.matmul %52, %54, %cst_46 {dimension_numbers = #tpu.dot_dimension_numbers<[1], [0], [0], [1], [0, 0, 1, 1], [], []>} : vector<64x32xbf16>, vector<32x32xbf16>, vector<64x32xf32> -> vector<64x32xf32>
    %56 = arith.addf %50, %55 : vector<64x32xf32>
    %c1_47 = arith.constant 1 : index
    %c1_48 = arith.constant 1 : index
    %c0_49 = arith.constant 0 : index
    %57 = vector.load %arg11[%c1_47, %c1_48, %c0_49] : memref<10x10x32xbf16, #tpu.memory_space<vmem>>, vector<8x8x32xbf16>
    %58 = vector.shape_cast %57 : vector<8x8x32xbf16> to vector<64x32xbf16>
    %c4 = arith.constant 4 : index
    %c0_50 = arith.constant 0 : index
    %c0_51 = arith.constant 0 : index
    %59 = vector.load %arg4[%c4, %c0_50, %c0_51] : memref<9x32x32xbf16, #tpu.memory_space<vmem>>, vector<1x32x32xbf16>
    %60 = vector.shape_cast %59 : vector<1x32x32xbf16> to vector<32x32xbf16>
    %cst_52 = arith.constant dense<0.000000e+00> : vector<64x32xf32>
    %61 = tpu.matmul %58, %60, %cst_52 {dimension_numbers = #tpu.dot_dimension_numbers<[1], [0], [0], [1], [0, 0, 1, 1], [], []>} : vector<64x32xbf16>, vector<32x32xbf16>, vector<64x32xf32> -> vector<64x32xf32>
    %62 = arith.addf %56, %61 : vector<64x32xf32>
    %c1_53 = arith.constant 1 : index
    %c2_54 = arith.constant 2 : index
    %c0_55 = arith.constant 0 : index
    %63 = vector.load %arg11[%c1_53, %c2_54, %c0_55] : memref<10x10x32xbf16, #tpu.memory_space<vmem>>, vector<8x8x32xbf16>
    %64 = vector.shape_cast %63 : vector<8x8x32xbf16> to vector<64x32xbf16>
    %c5 = arith.constant 5 : index
    %c0_56 = arith.constant 0 : index
    %c0_57 = arith.constant 0 : index
    %65 = vector.load %arg4[%c5, %c0_56, %c0_57] : memref<9x32x32xbf16, #tpu.memory_space<vmem>>, vector<1x32x32xbf16>
    %66 = vector.shape_cast %65 : vector<1x32x32xbf16> to vector<32x32xbf16>
    %cst_58 = arith.constant dense<0.000000e+00> : vector<64x32xf32>
    %67 = tpu.matmul %64, %66, %cst_58 {dimension_numbers = #tpu.dot_dimension_numbers<[1], [0], [0], [1], [0, 0, 1, 1], [], []>} : vector<64x32xbf16>, vector<32x32xbf16>, vector<64x32xf32> -> vector<64x32xf32>
    %68 = arith.addf %62, %67 : vector<64x32xf32>
    %c2_59 = arith.constant 2 : index
    %c0_60 = arith.constant 0 : index
    %c0_61 = arith.constant 0 : index
    %69 = vector.load %arg11[%c2_59, %c0_60, %c0_61] : memref<10x10x32xbf16, #tpu.memory_space<vmem>>, vector<8x8x32xbf16>
    %70 = vector.shape_cast %69 : vector<8x8x32xbf16> to vector<64x32xbf16>
    %c6 = arith.constant 6 : index
    %c0_62 = arith.constant 0 : index
    %c0_63 = arith.constant 0 : index
    %71 = vector.load %arg4[%c6, %c0_62, %c0_63] : memref<9x32x32xbf16, #tpu.memory_space<vmem>>, vector<1x32x32xbf16>
    %72 = vector.shape_cast %71 : vector<1x32x32xbf16> to vector<32x32xbf16>
    %cst_64 = arith.constant dense<0.000000e+00> : vector<64x32xf32>
    %73 = tpu.matmul %70, %72, %cst_64 {dimension_numbers = #tpu.dot_dimension_numbers<[1], [0], [0], [1], [0, 0, 1, 1], [], []>} : vector<64x32xbf16>, vector<32x32xbf16>, vector<64x32xf32> -> vector<64x32xf32>
    %74 = arith.addf %68, %73 : vector<64x32xf32>
    %c2_65 = arith.constant 2 : index
    %c1_66 = arith.constant 1 : index
    %c0_67 = arith.constant 0 : index
    %75 = vector.load %arg11[%c2_65, %c1_66, %c0_67] : memref<10x10x32xbf16, #tpu.memory_space<vmem>>, vector<8x8x32xbf16>
    %76 = vector.shape_cast %75 : vector<8x8x32xbf16> to vector<64x32xbf16>
    %c7 = arith.constant 7 : index
    %c0_68 = arith.constant 0 : index
    %c0_69 = arith.constant 0 : index
    %77 = vector.load %arg4[%c7, %c0_68, %c0_69] : memref<9x32x32xbf16, #tpu.memory_space<vmem>>, vector<1x32x32xbf16>
    %78 = vector.shape_cast %77 : vector<1x32x32xbf16> to vector<32x32xbf16>
    %cst_70 = arith.constant dense<0.000000e+00> : vector<64x32xf32>
    %79 = tpu.matmul %76, %78, %cst_70 {dimension_numbers = #tpu.dot_dimension_numbers<[1], [0], [0], [1], [0, 0, 1, 1], [], []>} : vector<64x32xbf16>, vector<32x32xbf16>, vector<64x32xf32> -> vector<64x32xf32>
    %80 = arith.addf %74, %79 : vector<64x32xf32>
    %c2_71 = arith.constant 2 : index
    %c2_72 = arith.constant 2 : index
    %c0_73 = arith.constant 0 : index
    %81 = vector.load %arg11[%c2_71, %c2_72, %c0_73] : memref<10x10x32xbf16, #tpu.memory_space<vmem>>, vector<8x8x32xbf16>
    %82 = vector.shape_cast %81 : vector<8x8x32xbf16> to vector<64x32xbf16>
    %c8 = arith.constant 8 : index
    %c0_74 = arith.constant 0 : index
    %c0_75 = arith.constant 0 : index
    %83 = vector.load %arg4[%c8, %c0_74, %c0_75] : memref<9x32x32xbf16, #tpu.memory_space<vmem>>, vector<1x32x32xbf16>
    %84 = vector.shape_cast %83 : vector<1x32x32xbf16> to vector<32x32xbf16>
    %cst_76 = arith.constant dense<0.000000e+00> : vector<64x32xf32>
    %85 = tpu.matmul %82, %84, %cst_76 {dimension_numbers = #tpu.dot_dimension_numbers<[1], [0], [0], [1], [0, 0, 1, 1], [], []>} : vector<64x32xbf16>, vector<32x32xbf16>, vector<64x32xf32> -> vector<64x32xf32>
    %86 = arith.addf %80, %85 : vector<64x32xf32>
    %c0_77 = arith.constant 0 : index
    %c0_78 = arith.constant 0 : index
    %87 = vector.load %arg5[%c0_77, %c0_78] : memref<1x32xf32, #tpu.memory_space<vmem>>, vector<1x32xf32>
    %88 = vector.broadcast %87 : vector<1x32xf32> to vector<64x32xf32>
    %89 = arith.addf %86, %88 : vector<64x32xf32>
    %90 = vector.shape_cast %89 : vector<64x32xf32> to vector<8x8x32xf32>
    %cst_79 = arith.constant dense<0.000000e+00> : vector<8x32xf32>
    %91 = vector.multi_reduction <add>, %90, %cst_79 [0] : vector<8x8x32xf32> to vector<8x32xf32>
    %92 = vector.shape_cast %91 : vector<8x32xf32> to vector<1x8x32xf32>
    %cst_80 = arith.constant 8.000000e+00 : f32
    %93 = vector.broadcast %cst_80 : f32 to vector<1x8x32xf32>
    %94 = arith.divf %92, %93 : vector<1x8x32xf32>
    %95 = vector.broadcast %94 : vector<1x8x32xf32> to vector<8x8x32xf32>
    %96 = arith.subf %90, %95 : vector<8x8x32xf32>
    %97 = arith.mulf %96, %96 : vector<8x8x32xf32>
    %cst_81 = arith.constant dense<0.000000e+00> : vector<8x32xf32>
    %98 = vector.multi_reduction <add>, %97, %cst_81 [0] : vector<8x8x32xf32> to vector<8x32xf32>
    %99 = vector.shape_cast %98 : vector<8x32xf32> to vector<1x8x32xf32>
    %cst_82 = arith.constant 8.000000e+00 : f32
    %100 = vector.broadcast %cst_82 : f32 to vector<1x8x32xf32>
    %101 = arith.divf %99, %100 : vector<1x8x32xf32>
    %102 = vector.broadcast %94 : vector<1x8x32xf32> to vector<8x8x32xf32>
    %103 = arith.subf %90, %102 : vector<8x8x32xf32>
    %cst_83 = arith.constant 9.99999974E-6 : f32
    %104 = vector.broadcast %cst_83 : f32 to vector<1x8x32xf32>
    %105 = arith.addf %101, %104 : vector<1x8x32xf32>
    %106 = math.rsqrt %105 : vector<1x8x32xf32>
    %107 = vector.broadcast %106 : vector<1x8x32xf32> to vector<8x8x32xf32>
    %108 = arith.mulf %103, %107 : vector<8x8x32xf32>
    %c0_84 = arith.constant 0 : index
    %c0_85 = arith.constant 0 : index
    %c0_86 = arith.constant 0 : index
    %109 = vector.load %arg6[%c0_84, %c0_85, %c0_86] : memref<8x1x1xf32, #tpu.memory_space<vmem>>, vector<8x1x1xf32>
    %110 = vector.broadcast %109 : vector<8x1x1xf32> to vector<8x8x32xf32>
    %111 = arith.mulf %108, %110 : vector<8x8x32xf32>
    %c0_87 = arith.constant 0 : index
    %c0_88 = arith.constant 0 : index
    %c0_89 = arith.constant 0 : index
    %112 = vector.load %arg7[%c0_87, %c0_88, %c0_89] : memref<8x1x1xf32, #tpu.memory_space<vmem>>, vector<8x1x1xf32>
    %113 = vector.broadcast %112 : vector<8x1x1xf32> to vector<8x8x32xf32>
    %114 = arith.addf %111, %113 : vector<8x8x32xf32>
    %cst_90 = arith.constant 0.000000e+00 : f32
    %115 = vector.broadcast %cst_90 : f32 to vector<8x8x32xf32>
    %116 = arith.maximumf %114, %115 : vector<8x8x32xf32>
    %117 = arith.truncf %116 : vector<8x8x32xf32> to vector<8x8x32xbf16>
    %c1_91 = arith.constant 1 : index
    %c1_92 = arith.constant 1 : index
    %c0_93 = arith.constant 0 : index
    %118 = vector.load %arg11[%c1_91, %c1_92, %c0_93] : memref<10x10x32xbf16, #tpu.memory_space<vmem>>, vector<8x8x32xbf16>
    tpu.vector_store %arg11[%c1_91, %c1_92, %c0_93], %117 {strides = array<i32>} : memref<10x10x32xbf16, #tpu.memory_space<vmem>>, vector<8x8x32xbf16>,
    %cst_94 = arith.constant 0.000000e+00 : f32
    %119 = vector.broadcast %cst_94 : f32 to vector<64x32xf32>
    %c0_95 = arith.constant 0 : index
    %c0_96 = arith.constant 0 : index
    %c0_97 = arith.constant 0 : index
    %120 = vector.load %arg11[%c0_95, %c0_96, %c0_97] : memref<10x10x32xbf16, #tpu.memory_space<vmem>>, vector<8x8x32xbf16>
    %121 = vector.shape_cast %120 : vector<8x8x32xbf16> to vector<64x32xbf16>
    %c0_98 = arith.constant 0 : index
    %c0_99 = arith.constant 0 : index
    %c0_100 = arith.constant 0 : index
    %122 = vector.load %arg8[%c0_98, %c0_99, %c0_100] : memref<9x32x32xbf16, #tpu.memory_space<vmem>>, vector<1x32x32xbf16>
    %123 = vector.shape_cast %122 : vector<1x32x32xbf16> to vector<32x32xbf16>
    %cst_101 = arith.constant dense<0.000000e+00> : vector<64x32xf32>
    %124 = tpu.matmul %121, %123, %cst_101 {dimension_numbers = #tpu.dot_dimension_numbers<[1], [0], [0], [1], [0, 0, 1, 1], [], []>} : vector<64x32xbf16>, vector<32x32xbf16>, vector<64x32xf32> -> vector<64x32xf32>
    %125 = arith.addf %119, %124 : vector<64x32xf32>
    %c0_102 = arith.constant 0 : index
    %c1_103 = arith.constant 1 : index
    %c0_104 = arith.constant 0 : index
    %126 = vector.load %arg11[%c0_102, %c1_103, %c0_104] : memref<10x10x32xbf16, #tpu.memory_space<vmem>>, vector<8x8x32xbf16>
    %127 = vector.shape_cast %126 : vector<8x8x32xbf16> to vector<64x32xbf16>
    %c1_105 = arith.constant 1 : index
    %c0_106 = arith.constant 0 : index
    %c0_107 = arith.constant 0 : index
    %128 = vector.load %arg8[%c1_105, %c0_106, %c0_107] : memref<9x32x32xbf16, #tpu.memory_space<vmem>>, vector<1x32x32xbf16>
    %129 = vector.shape_cast %128 : vector<1x32x32xbf16> to vector<32x32xbf16>
    %cst_108 = arith.constant dense<0.000000e+00> : vector<64x32xf32>
    %130 = tpu.matmul %127, %129, %cst_108 {dimension_numbers = #tpu.dot_dimension_numbers<[1], [0], [0], [1], [0, 0, 1, 1], [], []>} : vector<64x32xbf16>, vector<32x32xbf16>, vector<64x32xf32> -> vector<64x32xf32>
    %131 = arith.addf %125, %130 : vector<64x32xf32>
    %c0_109 = arith.constant 0 : index
    %c2_110 = arith.constant 2 : index
    %c0_111 = arith.constant 0 : index
    %132 = vector.load %arg11[%c0_109, %c2_110, %c0_111] : memref<10x10x32xbf16, #tpu.memory_space<vmem>>, vector<8x8x32xbf16>
    %133 = vector.shape_cast %132 : vector<8x8x32xbf16> to vector<64x32xbf16>
    %c2_112 = arith.constant 2 : index
    %c0_113 = arith.constant 0 : index
    %c0_114 = arith.constant 0 : index
    %134 = vector.load %arg8[%c2_112, %c0_113, %c0_114] : memref<9x32x32xbf16, #tpu.memory_space<vmem>>, vector<1x32x32xbf16>
    %135 = vector.shape_cast %134 : vector<1x32x32xbf16> to vector<32x32xbf16>
    %cst_115 = arith.constant dense<0.000000e+00> : vector<64x32xf32>
    %136 = tpu.matmul %133, %135, %cst_115 {dimension_numbers = #tpu.dot_dimension_numbers<[1], [0], [0], [1], [0, 0, 1, 1], [], []>} : vector<64x32xbf16>, vector<32x32xbf16>, vector<64x32xf32> -> vector<64x32xf32>
    %137 = arith.addf %131, %136 : vector<64x32xf32>
    %c1_116 = arith.constant 1 : index
    %c0_117 = arith.constant 0 : index
    %c0_118 = arith.constant 0 : index
    %138 = vector.load %arg11[%c1_116, %c0_117, %c0_118] : memref<10x10x32xbf16, #tpu.memory_space<vmem>>, vector<8x8x32xbf16>
    %139 = vector.shape_cast %138 : vector<8x8x32xbf16> to vector<64x32xbf16>
    %c3_119 = arith.constant 3 : index
    %c0_120 = arith.constant 0 : index
    %c0_121 = arith.constant 0 : index
    %140 = vector.load %arg8[%c3_119, %c0_120, %c0_121] : memref<9x32x32xbf16, #tpu.memory_space<vmem>>, vector<1x32x32xbf16>
    %141 = vector.shape_cast %140 : vector<1x32x32xbf16> to vector<32x32xbf16>
    %cst_122 = arith.constant dense<0.000000e+00> : vector<64x32xf32>
    %142 = tpu.matmul %139, %141, %cst_122 {dimension_numbers = #tpu.dot_dimension_numbers<[1], [0], [0], [1], [0, 0, 1, 1], [], []>} : vector<64x32xbf16>, vector<32x32xbf16>, vector<64x32xf32> -> vector<64x32xf32>
    %143 = arith.addf %137, %142 : vector<64x32xf32>
    %c1_123 = arith.constant 1 : index
    %c1_124 = arith.constant 1 : index
    %c0_125 = arith.constant 0 : index
    %144 = vector.load %arg11[%c1_123, %c1_124, %c0_125] : memref<10x10x32xbf16, #tpu.memory_space<vmem>>, vector<8x8x32xbf16>
    %145 = vector.shape_cast %144 : vector<8x8x32xbf16> to vector<64x32xbf16>
    %c4_126 = arith.constant 4 : index
    %c0_127 = arith.constant 0 : index
    %c0_128 = arith.constant 0 : index
    %146 = vector.load %arg8[%c4_126, %c0_127, %c0_128] : memref<9x32x32xbf16, #tpu.memory_space<vmem>>, vector<1x32x32xbf16>
    %147 = vector.shape_cast %146 : vector<1x32x32xbf16> to vector<32x32xbf16>
    %cst_129 = arith.constant dense<0.000000e+00> : vector<64x32xf32>
    %148 = tpu.matmul %145, %147, %cst_129 {dimension_numbers = #tpu.dot_dimension_numbers<[1], [0], [0], [1], [0, 0, 1, 1], [], []>} : vector<64x32xbf16>, vector<32x32xbf16>, vector<64x32xf32> -> vector<64x32xf32>
    %149 = arith.addf %143, %148 : vector<64x32xf32>
    %c1_130 = arith.constant 1 : index
    %c2_131 = arith.constant 2 : index
    %c0_132 = arith.constant 0 : index
    %150 = vector.load %arg11[%c1_130, %c2_131, %c0_132] : memref<10x10x32xbf16, #tpu.memory_space<vmem>>, vector<8x8x32xbf16>
    %151 = vector.shape_cast %150 : vector<8x8x32xbf16> to vector<64x32xbf16>
    %c5_133 = arith.constant 5 : index
    %c0_134 = arith.constant 0 : index
    %c0_135 = arith.constant 0 : index
    %152 = vector.load %arg8[%c5_133, %c0_134, %c0_135] : memref<9x32x32xbf16, #tpu.memory_space<vmem>>, vector<1x32x32xbf16>
    %153 = vector.shape_cast %152 : vector<1x32x32xbf16> to vector<32x32xbf16>
    %cst_136 = arith.constant dense<0.000000e+00> : vector<64x32xf32>
    %154 = tpu.matmul %151, %153, %cst_136 {dimension_numbers = #tpu.dot_dimension_numbers<[1], [0], [0], [1], [0, 0, 1, 1], [], []>} : vector<64x32xbf16>, vector<32x32xbf16>, vector<64x32xf32> -> vector<64x32xf32>
    %155 = arith.addf %149, %154 : vector<64x32xf32>
    %c2_137 = arith.constant 2 : index
    %c0_138 = arith.constant 0 : index
    %c0_139 = arith.constant 0 : index
    %156 = vector.load %arg11[%c2_137, %c0_138, %c0_139] : memref<10x10x32xbf16, #tpu.memory_space<vmem>>, vector<8x8x32xbf16>
    %157 = vector.shape_cast %156 : vector<8x8x32xbf16> to vector<64x32xbf16>
    %c6_140 = arith.constant 6 : index
    %c0_141 = arith.constant 0 : index
    %c0_142 = arith.constant 0 : index
    %158 = vector.load %arg8[%c6_140, %c0_141, %c0_142] : memref<9x32x32xbf16, #tpu.memory_space<vmem>>, vector<1x32x32xbf16>
    %159 = vector.shape_cast %158 : vector<1x32x32xbf16> to vector<32x32xbf16>
    %cst_143 = arith.constant dense<0.000000e+00> : vector<64x32xf32>
    %160 = tpu.matmul %157, %159, %cst_143 {dimension_numbers = #tpu.dot_dimension_numbers<[1], [0], [0], [1], [0, 0, 1, 1], [], []>} : vector<64x32xbf16>, vector<32x32xbf16>, vector<64x32xf32> -> vector<64x32xf32>
    %161 = arith.addf %155, %160 : vector<64x32xf32>
    %c2_144 = arith.constant 2 : index
    %c1_145 = arith.constant 1 : index
    %c0_146 = arith.constant 0 : index
    %162 = vector.load %arg11[%c2_144, %c1_145, %c0_146] : memref<10x10x32xbf16, #tpu.memory_space<vmem>>, vector<8x8x32xbf16>
    %163 = vector.shape_cast %162 : vector<8x8x32xbf16> to vector<64x32xbf16>
    %c7_147 = arith.constant 7 : index
    %c0_148 = arith.constant 0 : index
    %c0_149 = arith.constant 0 : index
    %164 = vector.load %arg8[%c7_147, %c0_148, %c0_149] : memref<9x32x32xbf16, #tpu.memory_space<vmem>>, vector<1x32x32xbf16>
    %165 = vector.shape_cast %164 : vector<1x32x32xbf16> to vector<32x32xbf16>
    %cst_150 = arith.constant dense<0.000000e+00> : vector<64x32xf32>
    %166 = tpu.matmul %163, %165, %cst_150 {dimension_numbers = #tpu.dot_dimension_numbers<[1], [0], [0], [1], [0, 0, 1, 1], [], []>} : vector<64x32xbf16>, vector<32x32xbf16>, vector<64x32xf32> -> vector<64x32xf32>
    %167 = arith.addf %161, %166 : vector<64x32xf32>
    %c2_151 = arith.constant 2 : index
    %c2_152 = arith.constant 2 : index
    %c0_153 = arith.constant 0 : index
    %168 = vector.load %arg11[%c2_151, %c2_152, %c0_153] : memref<10x10x32xbf16, #tpu.memory_space<vmem>>, vector<8x8x32xbf16>
    %169 = vector.shape_cast %168 : vector<8x8x32xbf16> to vector<64x32xbf16>
    %c8_154 = arith.constant 8 : index
    %c0_155 = arith.constant 0 : index
    %c0_156 = arith.constant 0 : index
    %170 = vector.load %arg8[%c8_154, %c0_155, %c0_156] : memref<9x32x32xbf16, #tpu.memory_space<vmem>>, vector<1x32x32xbf16>
    %171 = vector.shape_cast %170 : vector<1x32x32xbf16> to vector<32x32xbf16>
    %cst_157 = arith.constant dense<0.000000e+00> : vector<64x32xf32>
    %172 = tpu.matmul %169, %171, %cst_157 {dimension_numbers = #tpu.dot_dimension_numbers<[1], [0], [0], [1], [0, 0, 1, 1], [], []>} : vector<64x32xbf16>, vector<32x32xbf16>, vector<64x32xf32> -> vector<64x32xf32>
    %173 = arith.addf %167, %172 : vector<64x32xf32>
    %c0_158 = arith.constant 0 : index
    %c0_159 = arith.constant 0 : index
    %174 = vector.load %arg9[%c0_158, %c0_159] : memref<1x32xf32, #tpu.memory_space<vmem>>, vector<1x32xf32>
    %175 = vector.broadcast %174 : vector<1x32xf32> to vector<64x32xf32>
    %176 = arith.addf %173, %175 : vector<64x32xf32>
    %177 = vector.shape_cast %176 : vector<64x32xf32> to vector<8x8x32xf32>
    %178 = arith.addf %177, %1 : vector<8x8x32xf32>
    %c0_160 = arith.constant 0 : index
    %c0_161 = arith.constant 0 : index
    %c0_162 = arith.constant 0 : index
    %c0_163 = arith.constant 0 : index
    %179 = vector.load %arg10[%c0_160, %c0_161, %c0_162, %c0_163] : memref<1x8x8x32xf32, #tpu.memory_space<vmem>>, vector<1x8x8x32xf32>
    %180 = vector.shape_cast %179 : vector<1x8x8x32xf32> to vector<8x8x32xf32>
    %181 = vector.shape_cast %178 : vector<8x8x32xf32> to vector<1x8x8x32xf32>
    tpu.vector_store %arg10[%c0_160, %c0_161, %c0_162, %c0_163], %181 {strides = array<i32>} : memref<1x8x8x32xf32, #tpu.memory_space<vmem>>, vector<1x8x8x32xf32>,
    return
  }
  func.func @transform_0(%arg0: i32) -> (i32, i32, i32, i32) {
    %c0_i32 = arith.constant 0 : i32
    %c0_i32_0 = arith.constant 0 : i32
    %c0_i32_1 = arith.constant 0 : i32
    %c0_i32_2 = arith.constant 0 : i32
    return %arg0, %c0_i32, %c0_i32_0, %c0_i32_1 : i32, i32, i32, i32
  }
  func.func @transform_1(%arg0: i32) -> (i32, i32, i32) {
    %c0_i32 = arith.constant 0 : i32
    %c0_i32_0 = arith.constant 0 : i32
    %c0_i32_1 = arith.constant 0 : i32
    %c0_i32_2 = arith.constant 0 : i32
    return %c0_i32, %c0_i32_0, %c0_i32_1 : i32, i32, i32
  }
  func.func @transform_2(%arg0: i32) -> (i32, i32, i32) {
    %c0_i32 = arith.constant 0 : i32
    %c0_i32_0 = arith.constant 0 : i32
    %c0_i32_1 = arith.constant 0 : i32
    %c0_i32_2 = arith.constant 0 : i32
    return %c0_i32, %c0_i32_0, %c0_i32_1 : i32, i32, i32
  }
  func.func @transform_3(%arg0: i32) -> (i32, i32, i32) {
    %c0_i32 = arith.constant 0 : i32
    %c0_i32_0 = arith.constant 0 : i32
    %c0_i32_1 = arith.constant 0 : i32
    %c0_i32_2 = arith.constant 0 : i32
    return %c0_i32, %c0_i32_0, %c0_i32_1 : i32, i32, i32
  }
  func.func @transform_4(%arg0: i32) -> (i32, i32) {
    %c0_i32 = arith.constant 0 : i32
    %c0_i32_0 = arith.constant 0 : i32
    %c0_i32_1 = arith.constant 0 : i32
    return %c0_i32, %c0_i32_0 : i32, i32
  }
  func.func @transform_5(%arg0: i32) -> (i32, i32, i32) {
    %c0_i32 = arith.constant 0 : i32
    %c0_i32_0 = arith.constant 0 : i32
    %c0_i32_1 = arith.constant 0 : i32
    %c0_i32_2 = arith.constant 0 : i32
    return %c0_i32, %c0_i32_0, %c0_i32_1 : i32, i32, i32
  }
  func.func @transform_6(%arg0: i32) -> (i32, i32, i32) {
    %c0_i32 = arith.constant 0 : i32
    %c0_i32_0 = arith.constant 0 : i32
    %c0_i32_1 = arith.constant 0 : i32
    %c0_i32_2 = arith.constant 0 : i32
    return %c0_i32, %c0_i32_0, %c0_i32_1 : i32, i32, i32
  }
  func.func @transform_7(%arg0: i32) -> (i32, i32, i32) {
    %c0_i32 = arith.constant 0 : i32
    %c0_i32_0 = arith.constant 0 : i32
    %c0_i32_1 = arith.constant 0 : i32
    %c0_i32_2 = arith.constant 0 : i32
    return %c0_i32, %c0_i32_0, %c0_i32_1 : i32, i32, i32
  }
  func.func @transform_8(%arg0: i32) -> (i32, i32) {
    %c0_i32 = arith.constant 0 : i32
    %c0_i32_0 = arith.constant 0 : i32
    %c0_i32_1 = arith.constant 0 : i32
    return %c0_i32, %c0_i32_0 : i32, i32
  }
  func.func @transform_9(%arg0: i32) -> (i32, i32, i32, i32) {
    %c0_i32 = arith.constant 0 : i32
    %c0_i32_0 = arith.constant 0 : i32
    %c0_i32_1 = arith.constant 0 : i32
    %c0_i32_2 = arith.constant 0 : i32
    return %arg0, %c0_i32, %c0_i32_0, %c0_i32_1 : i32, i32, i32, i32
  }
}

module attributes {stable_mosaic.version = 11 : i64} {
  func.func @_matmul_kernel(%arg0: i32, %arg1: i32, %arg2: i32, %arg3: memref<16x256xbf16, #tpu.memory_space<vmem>>, %arg4: memref<256x128xbf16, #tpu.memory_space<vmem>>, %arg5: memref<1x128xf32, #tpu.memory_space<vmem>>, %arg6: memref<16x128xf32, #tpu.memory_space<vmem>>, %arg7: memref<16x128xf32, #tpu.memory_space<vmem>>) attributes {dimension_semantics = [#tpu.dimension_semantics<parallel>, #tpu.dimension_semantics<parallel>, #tpu.dimension_semantics<arbitrary>], iteration_bounds = array<i64: 1, 1, 1>, scalar_prefetch = 0 : i64, scratch_operands = 1 : i64, tpu.core_type = #tpu.core_type<tc>, window_params = [{transform_indices = @transform_0, window_bounds = array<i64: 16, 256>}, {transform_indices = @transform_1, window_bounds = array<i64: 256, 128>}, {transform_indices = @transform_2, window_bounds = array<i64: 1, 128>}, {transform_indices = @transform_3, window_bounds = array<i64: 16, 128>}]} {
    %c0_i32 = arith.constant 0 : i32
    %0 = arith.cmpi eq, %arg2, %c0_i32 : i32
    %1 = arith.extui %0 : i1 to i32
    %c0_i32_0 = arith.constant 0 : i32
    %2 = arith.cmpi ne, %1, %c0_i32_0 : i32
    scf.if %2 {
      %cst_10 = arith.constant 0.000000e+00 : f32
      %12 = vector.broadcast %cst_10 : f32 to vector<16x128xf32>
      %c0_11 = arith.constant 0 : index
      %c0_12 = arith.constant 0 : index
      %13 = vector.load %arg7[%c0_11, %c0_12] : memref<16x128xf32, #tpu.memory_space<vmem>>, vector<16x128xf32>
      tpu.vector_store %arg7[%c0_11, %c0_12], %12 {strides = array<i32>} : memref<16x128xf32, #tpu.memory_space<vmem>>, vector<16x128xf32>,
    } else {
    }
    %c0 = arith.constant 0 : index
    %c0_1 = arith.constant 0 : index
    %3 = vector.load %arg7[%c0, %c0_1] : memref<16x128xf32, #tpu.memory_space<vmem>>, vector<16x128xf32>
    %c0_2 = arith.constant 0 : index
    %c0_3 = arith.constant 0 : index
    %4 = vector.load %arg3[%c0_2, %c0_3] : memref<16x256xbf16, #tpu.memory_space<vmem>>, vector<16x256xbf16>
    %c0_4 = arith.constant 0 : index
    %c0_5 = arith.constant 0 : index
    %5 = vector.load %arg4[%c0_4, %c0_5] : memref<256x128xbf16, #tpu.memory_space<vmem>>, vector<256x128xbf16>
    %cst = arith.constant dense<0.000000e+00> : vector<16x128xf32>
    %6 = tpu.matmul %4, %5, %cst {dimension_numbers = #tpu.dot_dimension_numbers<[1], [0], [0], [1], [0, 0, 1, 1], [], []>} : vector<16x256xbf16>, vector<256x128xbf16>, vector<16x128xf32> -> vector<16x128xf32>
    %7 = arith.addf %3, %6 : vector<16x128xf32>
    %c0_6 = arith.constant 0 : index
    %c0_7 = arith.constant 0 : index
    %8 = vector.load %arg7[%c0_6, %c0_7] : memref<16x128xf32, #tpu.memory_space<vmem>>, vector<16x128xf32>
    tpu.vector_store %arg7[%c0_6, %c0_7], %7 {strides = array<i32>} : memref<16x128xf32, #tpu.memory_space<vmem>>, vector<16x128xf32>,
    %c0_i32_8 = arith.constant 0 : i32
    %9 = arith.cmpi eq, %arg2, %c0_i32_8 : i32
    %10 = arith.extui %9 : i1 to i32
    %c0_i32_9 = arith.constant 0 : i32
    %11 = arith.cmpi ne, %10, %c0_i32_9 : i32
    scf.if %11 {
      %c0_10 = arith.constant 0 : index
      %c0_11 = arith.constant 0 : index
      %12 = vector.load %arg7[%c0_10, %c0_11] : memref<16x128xf32, #tpu.memory_space<vmem>>, vector<16x128xf32>
      %c0_12 = arith.constant 0 : index
      %c0_13 = arith.constant 0 : index
      %13 = vector.load %arg5[%c0_12, %c0_13] : memref<1x128xf32, #tpu.memory_space<vmem>>, vector<1x128xf32>
      %14 = vector.broadcast %13 : vector<1x128xf32> to vector<16x128xf32>
      %15 = arith.addf %12, %14 : vector<16x128xf32>
      %c0_14 = arith.constant 0 : index
      %c0_15 = arith.constant 0 : index
      %16 = vector.load %arg6[%c0_14, %c0_15] : memref<16x128xf32, #tpu.memory_space<vmem>>, vector<16x128xf32>
      tpu.vector_store %arg6[%c0_14, %c0_15], %15 {strides = array<i32>} : memref<16x128xf32, #tpu.memory_space<vmem>>, vector<16x128xf32>,
    } else {
    }
    return
  }
  func.func @transform_0(%arg0: i32, %arg1: i32, %arg2: i32) -> (i32, i32) {
    %c0_i32 = arith.constant 0 : i32
    return %arg0, %arg2 : i32, i32
  }
  func.func @transform_1(%arg0: i32, %arg1: i32, %arg2: i32) -> (i32, i32) {
    %c0_i32 = arith.constant 0 : i32
    return %arg2, %arg1 : i32, i32
  }
  func.func @transform_2(%arg0: i32, %arg1: i32, %arg2: i32) -> (i32, i32) {
    %c0_i32 = arith.constant 0 : i32
    %c0_i32_0 = arith.constant 0 : i32
    return %c0_i32, %arg1 : i32, i32
  }
  func.func @transform_3(%arg0: i32, %arg1: i32, %arg2: i32) -> (i32, i32) {
    %c0_i32 = arith.constant 0 : i32
    return %arg0, %arg1 : i32, i32
  }
}

module attributes {stable_mosaic.version = 11 : i64} {
  func.func @_bilstm_kernel(%arg0: i32, %arg1: memref<8x2x128xf32, #tpu.memory_space<vmem>>, %arg2: memref<1x32x128xbf16, #tpu.memory_space<vmem>>, %arg3: memref<1x8x2x32xf32, #tpu.memory_space<vmem>>, %arg4: memref<2x32xf32, #tpu.memory_space<vmem>>, %arg5: memref<2x32xf32, #tpu.memory_space<vmem>>) attributes {dimension_semantics = [#tpu.dimension_semantics<parallel>], iteration_bounds = array<i64: 2>, scalar_prefetch = 0 : i64, scratch_operands = 2 : i64, tpu.core_type = #tpu.core_type<tc>, window_params = [{transform_indices = @transform_0, window_bounds = array<i64: 8, 2, 128>}, {transform_indices = @transform_1, window_bounds = array<i64: 1, 32, 128>}, {transform_indices = @transform_2, window_bounds = array<i64: 1, 8, 2, 32>}]} {
    %cst = arith.constant 0.000000e+00 : f32
    %0 = vector.broadcast %cst : f32 to vector<2x32xf32>
    %c0 = arith.constant 0 : index
    %c0_0 = arith.constant 0 : index
    %1 = vector.load %arg4[%c0, %c0_0] : memref<2x32xf32, #tpu.memory_space<vmem>>, vector<2x32xf32>
    tpu.vector_store %arg4[%c0, %c0_0], %0 {strides = array<i32>} : memref<2x32xf32, #tpu.memory_space<vmem>>, vector<2x32xf32>,
    %cst_1 = arith.constant 0.000000e+00 : f32
    %2 = vector.broadcast %cst_1 : f32 to vector<2x32xf32>
    %c0_2 = arith.constant 0 : index
    %c0_3 = arith.constant 0 : index
    %3 = vector.load %arg5[%c0_2, %c0_3] : memref<2x32xf32, #tpu.memory_space<vmem>>, vector<2x32xf32>
    tpu.vector_store %arg5[%c0_2, %c0_3], %2 {strides = array<i32>} : memref<2x32xf32, #tpu.memory_space<vmem>>, vector<2x32xf32>,
    %c0_4 = arith.constant 0 : index
    %c0_5 = arith.constant 0 : index
    %c0_6 = arith.constant 0 : index
    %4 = vector.load %arg2[%c0_4, %c0_5, %c0_6] : memref<1x32x128xbf16, #tpu.memory_space<vmem>>, vector<1x32x128xbf16>
    %5 = vector.shape_cast %4 : vector<1x32x128xbf16> to vector<32x128xbf16>
    %c0_i32 = arith.constant 0 : i32
    %c8_i32 = arith.constant 8 : i32
    %6 = arith.addi %c0_i32, %c8_i32 : i32
    %c1_i32 = arith.constant 1 : i32
    scf.for %arg6 = %c0_i32 to %6 step %c1_i32  : i32 {
      %c0_i32_8 = arith.constant 0 : i32
      %7 = arith.cmpi eq, %arg0, %c0_i32_8 : i32
      %c7_i32 = arith.constant 7 : i32
      %8 = arith.subi %c7_i32, %arg6 : i32
      %9 = arith.select %7, %arg6, %8 : i32
      %10 = arith.index_cast %9 : i32 to index
      %c0_9 = arith.constant 0 : index
      %c0_10 = arith.constant 0 : index
      %11 = vector.load %arg1[%10, %c0_9, %c0_10] : memref<8x2x128xf32, #tpu.memory_space<vmem>>, vector<1x2x128xf32>
      %12 = vector.shape_cast %11 : vector<1x2x128xf32> to vector<2x128xf32>
      %c0_11 = arith.constant 0 : index
      %c0_12 = arith.constant 0 : index
      %13 = vector.load %arg4[%c0_11, %c0_12] : memref<2x32xf32, #tpu.memory_space<vmem>>, vector<2x32xf32>
      %14 = arith.truncf %13 : vector<2x32xf32> to vector<2x32xbf16>
      %cst_13 = arith.constant dense<0.000000e+00> : vector<2x128xf32>
      %15 = tpu.matmul %14, %5, %cst_13 {dimension_numbers = #tpu.dot_dimension_numbers<[1], [0], [0], [1], [0, 0, 1, 1], [], []>} : vector<2x32xbf16>, vector<32x128xbf16>, vector<2x128xf32> -> vector<2x128xf32>
      %16 = arith.addf %12, %15 : vector<2x128xf32>
      %17 = vector.extract_strided_slice %16 {offsets = [0, 0], sizes = [2, 32], strides = [1, 1]} : vector<2x128xf32> to vector<2x32xf32>
      %18 = arith.negf %17 : vector<2x32xf32>
      %19 = math.exp %18 : vector<2x32xf32>
      %cst_14 = arith.constant 1.000000e+00 : f32
      %20 = vector.broadcast %cst_14 : f32 to vector<2x32xf32>
      %21 = arith.addf %20, %19 : vector<2x32xf32>
      %22 = arith.divf %20, %21 : vector<2x32xf32>
      %23 = vector.extract_strided_slice %16 {offsets = [0, 32], sizes = [2, 32], strides = [1, 1]} : vector<2x128xf32> to vector<2x32xf32>
      %24 = arith.negf %23 : vector<2x32xf32>
      %25 = math.exp %24 : vector<2x32xf32>
      %cst_15 = arith.constant 1.000000e+00 : f32
      %26 = vector.broadcast %cst_15 : f32 to vector<2x32xf32>
      %27 = arith.addf %26, %25 : vector<2x32xf32>
      %28 = arith.divf %26, %27 : vector<2x32xf32>
      %29 = vector.extract_strided_slice %16 {offsets = [0, 64], sizes = [2, 32], strides = [1, 1]} : vector<2x128xf32> to vector<2x32xf32>
      %30 = math.tanh %29 : vector<2x32xf32>
      %31 = vector.extract_strided_slice %16 {offsets = [0, 96], sizes = [2, 32], strides = [1, 1]} : vector<2x128xf32> to vector<2x32xf32>
      %32 = arith.negf %31 : vector<2x32xf32>
      %33 = math.exp %32 : vector<2x32xf32>
      %cst_16 = arith.constant 1.000000e+00 : f32
      %34 = vector.broadcast %cst_16 : f32 to vector<2x32xf32>
      %35 = arith.addf %34, %33 : vector<2x32xf32>
      %36 = arith.divf %34, %35 : vector<2x32xf32>
      %c0_17 = arith.constant 0 : index
      %c0_18 = arith.constant 0 : index
      %37 = vector.load %arg5[%c0_17, %c0_18] : memref<2x32xf32, #tpu.memory_space<vmem>>, vector<2x32xf32>
      %38 = arith.mulf %28, %37 : vector<2x32xf32>
      %39 = arith.mulf %22, %30 : vector<2x32xf32>
      %40 = arith.addf %38, %39 : vector<2x32xf32>
      %41 = math.tanh %40 : vector<2x32xf32>
      %42 = arith.mulf %36, %41 : vector<2x32xf32>
      %c0_19 = arith.constant 0 : index
      %c0_20 = arith.constant 0 : index
      %43 = vector.load %arg5[%c0_19, %c0_20] : memref<2x32xf32, #tpu.memory_space<vmem>>, vector<2x32xf32>
      tpu.vector_store %arg5[%c0_19, %c0_20], %40 {strides = array<i32>} : memref<2x32xf32, #tpu.memory_space<vmem>>, vector<2x32xf32>,
      %c0_21 = arith.constant 0 : index
      %c0_22 = arith.constant 0 : index
      %44 = vector.load %arg4[%c0_21, %c0_22] : memref<2x32xf32, #tpu.memory_space<vmem>>, vector<2x32xf32>
      tpu.vector_store %arg4[%c0_21, %c0_22], %42 {strides = array<i32>} : memref<2x32xf32, #tpu.memory_space<vmem>>, vector<2x32xf32>,
      %c0_23 = arith.constant 0 : index
      %45 = arith.index_cast %9 : i32 to index
      %c0_24 = arith.constant 0 : index
      %c0_25 = arith.constant 0 : index
      %46 = vector.load %arg3[%c0_23, %45, %c0_24, %c0_25] : memref<1x8x2x32xf32, #tpu.memory_space<vmem>>, vector<1x1x2x32xf32>
      %47 = vector.shape_cast %46 : vector<1x1x2x32xf32> to vector<2x32xf32>
      %48 = vector.shape_cast %42 : vector<2x32xf32> to vector<1x1x2x32xf32>
      tpu.vector_store %arg3[%c0_23, %45, %c0_24, %c0_25], %48 {strides = array<i32>} : memref<1x8x2x32xf32, #tpu.memory_space<vmem>>, vector<1x1x2x32xf32>,
    }
    %c8_i32_7 = arith.constant 8 : i32
    return
  }
  func.func @transform_0(%arg0: i32) -> (i32, i32, i32) {
    %c0_i32 = arith.constant 0 : i32
    %c0_i32_0 = arith.constant 0 : i32
    %c0_i32_1 = arith.constant 0 : i32
    return %c0_i32, %c0_i32_0, %arg0 : i32, i32, i32
  }
  func.func @transform_1(%arg0: i32) -> (i32, i32, i32) {
    %c0_i32 = arith.constant 0 : i32
    %c0_i32_0 = arith.constant 0 : i32
    %c0_i32_1 = arith.constant 0 : i32
    return %arg0, %c0_i32, %c0_i32_0 : i32, i32, i32
  }
  func.func @transform_2(%arg0: i32) -> (i32, i32, i32, i32) {
    %c0_i32 = arith.constant 0 : i32
    %c0_i32_0 = arith.constant 0 : i32
    %c0_i32_1 = arith.constant 0 : i32
    %c0_i32_2 = arith.constant 0 : i32
    return %arg0, %c0_i32, %c0_i32_0, %c0_i32_1 : i32, i32, i32, i32
  }
}

module attributes {stable_mosaic.version = 11 : i64} {
  func.func @_ln_matmul_kernel(%arg0: i32, %arg1: i32, %arg2: memref<16x128xf32, #tpu.memory_space<vmem>>, %arg3: memref<1x128xf32, #tpu.memory_space<vmem>>, %arg4: memref<1x128xf32, #tpu.memory_space<vmem>>, %arg5: memref<128x256xbf16, #tpu.memory_space<vmem>>, %arg6: memref<1x256xf32, #tpu.memory_space<vmem>>, %arg7: memref<16x256xf32, #tpu.memory_space<vmem>>) attributes {dimension_semantics = [#tpu.dimension_semantics<parallel>, #tpu.dimension_semantics<parallel>], iteration_bounds = array<i64: 1, 1>, scalar_prefetch = 0 : i64, scratch_operands = 0 : i64, tpu.core_type = #tpu.core_type<tc>, window_params = [{transform_indices = @transform_0, window_bounds = array<i64: 16, 128>}, {pipeline_mode = #tpu.pipeline_mode<synchronous>, transform_indices = @transform_1, window_bounds = array<i64: 1, 128>}, {pipeline_mode = #tpu.pipeline_mode<synchronous>, transform_indices = @transform_2, window_bounds = array<i64: 1, 128>}, {transform_indices = @transform_3, window_bounds = array<i64: 128, 256>}, {transform_indices = @transform_4, window_bounds = array<i64: 1, 256>}, {transform_indices = @transform_5, window_bounds = array<i64: 16, 256>}]} {
    %c0 = arith.constant 0 : index
    %c0_0 = arith.constant 0 : index
    %0 = vector.load %arg2[%c0, %c0_0] : memref<16x128xf32, #tpu.memory_space<vmem>>, vector<16x128xf32>
    %cst = arith.constant dense<0.000000e+00> : vector<16xf32>
    %1 = vector.multi_reduction <add>, %0, %cst [1] : vector<16x128xf32> to vector<16xf32>
    %2 = vector.shape_cast %1 : vector<16xf32> to vector<16x1xf32>
    %3 = arith.mulf %0, %0 : vector<16x128xf32>
    %cst_1 = arith.constant dense<0.000000e+00> : vector<16xf32>
    %4 = vector.multi_reduction <add>, %3, %cst_1 [1] : vector<16x128xf32> to vector<16xf32>
    %5 = vector.shape_cast %4 : vector<16xf32> to vector<16x1xf32>
    %cst_2 = arith.constant 3.125000e-02 : f32
    %6 = vector.broadcast %cst_2 : f32 to vector<16x1xf32>
    %7 = arith.mulf %2, %6 : vector<16x1xf32>
    %cst_3 = arith.constant 3.125000e-02 : f32
    %8 = vector.broadcast %cst_3 : f32 to vector<16x1xf32>
    %9 = arith.mulf %5, %8 : vector<16x1xf32>
    %10 = arith.mulf %7, %7 : vector<16x1xf32>
    %11 = arith.subf %9, %10 : vector<16x1xf32>
    %cst_4 = arith.constant 0.000000e+00 : f32
    %12 = vector.broadcast %cst_4 : f32 to vector<16x1xf32>
    %13 = arith.maximumf %11, %12 : vector<16x1xf32>
    %14 = vector.broadcast %7 : vector<16x1xf32> to vector<16x128xf32>
    %15 = arith.subf %0, %14 : vector<16x128xf32>
    %cst_5 = arith.constant 9.99999974E-6 : f32
    %16 = vector.broadcast %cst_5 : f32 to vector<16x1xf32>
    %17 = arith.addf %13, %16 : vector<16x1xf32>
    %18 = math.rsqrt %17 : vector<16x1xf32>
    %19 = vector.broadcast %18 : vector<16x1xf32> to vector<16x128xf32>
    %20 = arith.mulf %15, %19 : vector<16x128xf32>
    %c0_6 = arith.constant 0 : index
    %c0_7 = arith.constant 0 : index
    %21 = vector.load %arg3[%c0_6, %c0_7] : memref<1x128xf32, #tpu.memory_space<vmem>>, vector<1x128xf32>
    %22 = vector.broadcast %21 : vector<1x128xf32> to vector<16x128xf32>
    %23 = arith.mulf %20, %22 : vector<16x128xf32>
    %c0_8 = arith.constant 0 : index
    %c0_9 = arith.constant 0 : index
    %24 = vector.load %arg4[%c0_8, %c0_9] : memref<1x128xf32, #tpu.memory_space<vmem>>, vector<1x128xf32>
    %25 = vector.broadcast %24 : vector<1x128xf32> to vector<16x128xf32>
    %26 = arith.addf %23, %25 : vector<16x128xf32>
    %cst_10 = arith.constant 0.000000e+00 : f32
    %27 = vector.broadcast %cst_10 : f32 to vector<16x128xf32>
    %28 = arith.maximumf %26, %27 : vector<16x128xf32>
    %29 = arith.truncf %28 : vector<16x128xf32> to vector<16x128xbf16>
    %c0_11 = arith.constant 0 : index
    %c0_12 = arith.constant 0 : index
    %30 = vector.load %arg5[%c0_11, %c0_12] : memref<128x256xbf16, #tpu.memory_space<vmem>>, vector<128x256xbf16>
    %cst_13 = arith.constant dense<0.000000e+00> : vector<16x256xf32>
    %31 = tpu.matmul %29, %30, %cst_13 {dimension_numbers = #tpu.dot_dimension_numbers<[1], [0], [0], [1], [0, 0, 1, 1], [], []>} : vector<16x128xbf16>, vector<128x256xbf16>, vector<16x256xf32> -> vector<16x256xf32>
    %c0_14 = arith.constant 0 : index
    %c0_15 = arith.constant 0 : index
    %32 = vector.load %arg6[%c0_14, %c0_15] : memref<1x256xf32, #tpu.memory_space<vmem>>, vector<1x256xf32>
    %33 = vector.broadcast %32 : vector<1x256xf32> to vector<16x256xf32>
    %34 = arith.addf %31, %33 : vector<16x256xf32>
    %c0_16 = arith.constant 0 : index
    %c0_17 = arith.constant 0 : index
    %35 = vector.load %arg7[%c0_16, %c0_17] : memref<16x256xf32, #tpu.memory_space<vmem>>, vector<16x256xf32>
    tpu.vector_store %arg7[%c0_16, %c0_17], %34 {strides = array<i32>} : memref<16x256xf32, #tpu.memory_space<vmem>>, vector<16x256xf32>,
    return
  }
  func.func @transform_0(%arg0: i32, %arg1: i32) -> (i32, i32) {
    %c0_i32 = arith.constant 0 : i32
    %c0_i32_0 = arith.constant 0 : i32
    return %arg0, %c0_i32 : i32, i32
  }
  func.func @transform_1(%arg0: i32, %arg1: i32) -> (i32, i32) {
    %c0_i32 = arith.constant 0 : i32
    %c0_i32_0 = arith.constant 0 : i32
    %c0_i32_1 = arith.constant 0 : i32
    return %c0_i32, %c0_i32_0 : i32, i32
  }
  func.func @transform_2(%arg0: i32, %arg1: i32) -> (i32, i32) {
    %c0_i32 = arith.constant 0 : i32
    %c0_i32_0 = arith.constant 0 : i32
    %c0_i32_1 = arith.constant 0 : i32
    return %c0_i32, %c0_i32_0 : i32, i32
  }
  func.func @transform_3(%arg0: i32, %arg1: i32) -> (i32, i32) {
    %c0_i32 = arith.constant 0 : i32
    %c0_i32_0 = arith.constant 0 : i32
    return %c0_i32, %arg1 : i32, i32
  }
  func.func @transform_4(%arg0: i32, %arg1: i32) -> (i32, i32) {
    %c0_i32 = arith.constant 0 : i32
    %c0_i32_0 = arith.constant 0 : i32
    return %c0_i32, %arg1 : i32, i32
  }
  func.func @transform_5(%arg0: i32, %arg1: i32) -> (i32, i32) {
    %c0_i32 = arith.constant 0 : i32
    return %arg0, %arg1 : i32, i32
  }
}

module attributes {stable_mosaic.version = 11 : i64} {
  func.func @_classifier_kernel(%arg0: i32, %arg1: memref<16x64xf32, #tpu.memory_space<vmem>>, %arg2: memref<64x32xbf16, #tpu.memory_space<vmem>>, %arg3: memref<1x32xf32, #tpu.memory_space<vmem>>, %arg4: memref<32x128xbf16, #tpu.memory_space<vmem>>, %arg5: memref<1x128xf32, #tpu.memory_space<vmem>>, %arg6: memref<16x128xf32, #tpu.memory_space<vmem>>) attributes {dimension_semantics = [#tpu.dimension_semantics<parallel>], iteration_bounds = array<i64: 1>, scalar_prefetch = 0 : i64, scratch_operands = 0 : i64, tpu.core_type = #tpu.core_type<tc>, window_params = [{transform_indices = @transform_0, window_bounds = array<i64: 16, 64>}, {pipeline_mode = #tpu.pipeline_mode<synchronous>, transform_indices = @transform_1, window_bounds = array<i64: 64, 32>}, {pipeline_mode = #tpu.pipeline_mode<synchronous>, transform_indices = @transform_2, window_bounds = array<i64: 1, 32>}, {pipeline_mode = #tpu.pipeline_mode<synchronous>, transform_indices = @transform_3, window_bounds = array<i64: 32, 128>}, {pipeline_mode = #tpu.pipeline_mode<synchronous>, transform_indices = @transform_4, window_bounds = array<i64: 1, 128>}, {transform_indices = @transform_5, window_bounds = array<i64: 16, 128>}]} {
    %c0 = arith.constant 0 : index
    %c0_0 = arith.constant 0 : index
    %0 = vector.load %arg1[%c0, %c0_0] : memref<16x64xf32, #tpu.memory_space<vmem>>, vector<16x64xf32>
    %1 = arith.truncf %0 : vector<16x64xf32> to vector<16x64xbf16>
    %c0_1 = arith.constant 0 : index
    %c0_2 = arith.constant 0 : index
    %2 = vector.load %arg2[%c0_1, %c0_2] : memref<64x32xbf16, #tpu.memory_space<vmem>>, vector<64x32xbf16>
    %cst = arith.constant dense<0.000000e+00> : vector<16x32xf32>
    %3 = tpu.matmul %1, %2, %cst {dimension_numbers = #tpu.dot_dimension_numbers<[1], [0], [0], [1], [0, 0, 1, 1], [], []>} : vector<16x64xbf16>, vector<64x32xbf16>, vector<16x32xf32> -> vector<16x32xf32>
    %c0_3 = arith.constant 0 : index
    %c0_4 = arith.constant 0 : index
    %4 = vector.load %arg3[%c0_3, %c0_4] : memref<1x32xf32, #tpu.memory_space<vmem>>, vector<1x32xf32>
    %5 = vector.broadcast %4 : vector<1x32xf32> to vector<16x32xf32>
    %6 = arith.addf %3, %5 : vector<16x32xf32>
    %cst_5 = arith.constant 0.000000e+00 : f32
    %7 = vector.broadcast %cst_5 : f32 to vector<16x32xf32>
    %8 = arith.maximumf %6, %7 : vector<16x32xf32>
    %9 = arith.truncf %8 : vector<16x32xf32> to vector<16x32xbf16>
    %c0_6 = arith.constant 0 : index
    %c0_7 = arith.constant 0 : index
    %10 = vector.load %arg4[%c0_6, %c0_7] : memref<32x128xbf16, #tpu.memory_space<vmem>>, vector<32x128xbf16>
    %cst_8 = arith.constant dense<0.000000e+00> : vector<16x128xf32>
    %11 = tpu.matmul %9, %10, %cst_8 {dimension_numbers = #tpu.dot_dimension_numbers<[1], [0], [0], [1], [0, 0, 1, 1], [], []>} : vector<16x32xbf16>, vector<32x128xbf16>, vector<16x128xf32> -> vector<16x128xf32>
    %c0_9 = arith.constant 0 : index
    %c0_10 = arith.constant 0 : index
    %12 = vector.load %arg5[%c0_9, %c0_10] : memref<1x128xf32, #tpu.memory_space<vmem>>, vector<1x128xf32>
    %13 = vector.broadcast %12 : vector<1x128xf32> to vector<16x128xf32>
    %14 = arith.addf %11, %13 : vector<16x128xf32>
    %c0_11 = arith.constant 0 : index
    %c0_12 = arith.constant 0 : index
    %15 = vector.load %arg6[%c0_11, %c0_12] : memref<16x128xf32, #tpu.memory_space<vmem>>, vector<16x128xf32>
    tpu.vector_store %arg6[%c0_11, %c0_12], %14 {strides = array<i32>} : memref<16x128xf32, #tpu.memory_space<vmem>>, vector<16x128xf32>,
    return
  }
  func.func @transform_0(%arg0: i32) -> (i32, i32) {
    %c0_i32 = arith.constant 0 : i32
    %c0_i32_0 = arith.constant 0 : i32
    return %arg0, %c0_i32 : i32, i32
  }
  func.func @transform_1(%arg0: i32) -> (i32, i32) {
    %c0_i32 = arith.constant 0 : i32
    %c0_i32_0 = arith.constant 0 : i32
    %c0_i32_1 = arith.constant 0 : i32
    return %c0_i32, %c0_i32_0 : i32, i32
  }
  func.func @transform_2(%arg0: i32) -> (i32, i32) {
    %c0_i32 = arith.constant 0 : i32
    %c0_i32_0 = arith.constant 0 : i32
    %c0_i32_1 = arith.constant 0 : i32
    return %c0_i32, %c0_i32_0 : i32, i32
  }
  func.func @transform_3(%arg0: i32) -> (i32, i32) {
    %c0_i32 = arith.constant 0 : i32
    %c0_i32_0 = arith.constant 0 : i32
    %c0_i32_1 = arith.constant 0 : i32
    return %c0_i32, %c0_i32_0 : i32, i32
  }
  func.func @transform_4(%arg0: i32) -> (i32, i32) {
    %c0_i32 = arith.constant 0 : i32
    %c0_i32_0 = arith.constant 0 : i32
    %c0_i32_1 = arith.constant 0 : i32
    return %c0_i32, %c0_i32_0 : i32, i32
  }
  func.func @transform_5(%arg0: i32) -> (i32, i32) {
    %c0_i32 = arith.constant 0 : i32
    %c0_i32_0 = arith.constant 0 : i32
    return %arg0, %c0_i32 : i32, i32
  }
}

</mosaic_0001>

<llo_original>
// kernel: speech_model_forward.7
$region0: #{speech_model_forward.7}
  #allocation0 [shape = 'u32[]', space=smem, size = 0x4, offset = 0x4, fixed_abs, tag = 'smem constant byte address 0x4 - core index']
  #allocation1 [shape = 'u32[144,128]{1,0:T(1,128)}', space=vmem, size = 0x12000, scoped, tag = 'internal scratch']
  #allocation2 [shape = 'f32[128,128]{1,0:T(8,128)}', space=vmem, size = 0x10000, scoped, tag = 'scratch operand']
  %s0 = inlined_call_operand.vmem [shape: bf16[128,128], index: 0, kind: input, shape index: {}]
  %s1 = inlined_call_operand.vmem [shape: bf16[128,128], index: 1, kind: input, shape index: {}]
  %s2 = inlined_call_operand.vmem [shape: f32[1,128], index: 2, kind: input, shape index: {}]
  %s3 = inlined_call_operand.vmem [shape: f32[128,128], index: 3, kind: output, shape index: {}]
  %s4 = sld [smem:[#allocation0]]
  $region30: #{speech_model_forward.7} parent=0
    _
  %s6 = ssub.s32 1, %s4
  %s7 = scalar_select 0, %s6, %s4
  // Predicated region
  $region2: #{speech_model_forward.7} parent=0 // pred_check
    _
  $region3: #{speech_model_forward.7} parent=0 // pred_check_branch
    %9 = sbr.rel (0) target = $region5
  $region4: #{speech_model_forward.7} parent=0 // pred_region
    _
  $region5: #{speech_model_forward.7} parent=0 // pred_fallthru
    _
  // Predicated region
  $region6: #{speech_model_forward.7} parent=0 // pred_check
    _
  $region7: #{speech_model_forward.7} parent=0 // pred_check_branch
    %11 = sbr.rel (0) target = $region9
  $region8: #{speech_model_forward.7} parent=0 // pred_region
    _
  $region9: #{speech_model_forward.7} parent=0 // pred_fallthru
    _
  // Predicated region
  $region10: #{speech_model_forward.7} parent=0 // pred_check
    _
  $region11: #{speech_model_forward.7} parent=0 // pred_check_branch
    %13 = sbr.rel (0) target = $region13
  $region12: #{speech_model_forward.7} parent=0 // pred_region
    _
  $region13: #{speech_model_forward.7} parent=0 // pred_fallthru
    _
  %p15 = scmp.eq.s32.totalorder 0, 0
  // Predicated region
  $region14: #{speech_model_forward.7} parent=0 // pred_check
    %p16 = pneg %p15
  $region15: #{speech_model_forward.7} parent=0 // pred_check_branch
    %18 = sbr.rel (%p16) target = $region17
  $region16: #{speech_model_forward.7} parent=0 // pred_region
    %19 = vst [vmem:[#allocation2] sm:$0xff] 0.0
    %20 = vst [vmem:[#allocation2 + $0x8] sm:$0xff] 0.0
    %21 = vst [vmem:[#allocation2 + $0x10] sm:$0xff] 0.0
    %22 = vst [vmem:[#allocation2 + $0x18] sm:$0xff] 0.0
    %23 = vst [vmem:[#allocation2 + $0x20] sm:$0xff] 0.0
    %24 = vst [vmem:[#allocation2 + $0x28] sm:$0xff] 0.0
    %25 = vst [vmem:[#allocation2 + $0x30] sm:$0xff] 0.0
    %26 = vst [vmem:[#allocation2 + $0x38] sm:$0xff] 0.0
    %27 = vst [vmem:[#allocation2 + $0x40] sm:$0xff] 0.0
    %28 = vst [vmem:[#allocation2 + $0x48] sm:$0xff] 0.0
    %29 = vst [vmem:[#allocation2 + $0x50] sm:$0xff] 0.0
    %30 = vst [vmem:[#allocation2 + $0x58] sm:$0xff] 0.0
    %31 = vst [vmem:[#allocation2 + $0x60] sm:$0xff] 0.0
    %32 = vst [vmem:[#allocation2 + $0x68] sm:$0xff] 0.0
    %33 = vst [vmem:[#allocation2 + $0x70] sm:$0xff] 0.0
    %34 = vst [vmem:[#allocation2 + $0x78] sm:$0xff] 0.0
  $region17: #{speech_model_forward.7} parent=0 // pred_fallthru
    _
  %v35 = vld [vmem:[#allocation2] sm:$0xff]
  %v36 = vld [vmem:[#allocation2 + $0x8] sm:$0xff]
  %v37 = vld [vmem:[#allocation2 + $0x10] sm:$0xff]
  %v38 = vld [vmem:[#allocation2 + $0x18] sm:$0xff]
  %v39 = vld [vmem:[#allocation2 + $0x20] sm:$0xff]
  %v40 = vld [vmem:[#allocation2 + $0x28] sm:$0xff]
  %v41 = vld [vmem:[#allocation2 + $0x30] sm:$0xff]
  %v42 = vld [vmem:[#allocation2 + $0x38] sm:$0xff]
  %v43 = vld [vmem:[#allocation2 + $0x40] sm:$0xff]
  %v44 = vld [vmem:[#allocation2 + $0x48] sm:$0xff]
  %v45 = vld [vmem:[#allocation2 + $0x50] sm:$0xff]
  %v46 = vld [vmem:[#allocation2 + $0x58] sm:$0xff]
  %v47 = vld [vmem:[#allocation2 + $0x60] sm:$0xff]
  %v48 = vld [vmem:[#allocation2 + $0x68] sm:$0xff]
  %v49 = vld [vmem:[#allocation2 + $0x70] sm:$0xff]
  %v50 = vld [vmem:[#allocation2 + $0x78] sm:$0xff]
  %v51 = vld [vmem:[%s0] sm:$0xf]
  %v52 = vld [vmem:[%s0 + $0x4] sm:$0xf]
  %v53 = vld [vmem:[%s0 + $0x8] sm:$0xf]
  %v54 = vld [vmem:[%s0 + $0xc] sm:$0xf]
  %v55 = vld [vmem:[%s0 + $0x10] sm:$0xf]
  %v56 = vld [vmem:[%s0 + $0x14] sm:$0xf]
  %v57 = vld [vmem:[%s0 + $0x18] sm:$0xf]
  %v58 = vld [vmem:[%s0 + $0x1c] sm:$0xf]
  %v59 = vld [vmem:[%s0 + $0x20] sm:$0xf]
  %v60 = vld [vmem:[%s0 + $0x24] sm:$0xf]
  %v61 = vld [vmem:[%s0 + $0x28] sm:$0xf]
  %v62 = vld [vmem:[%s0 + $0x2c] sm:$0xf]
  %v63 = vld [vmem:[%s0 + $0x30] sm:$0xf]
  %v64 = vld [vmem:[%s0 + $0x34] sm:$0xf]
  %v65 = vld [vmem:[%s0 + $0x38] sm:$0xf]
  %v66 = vld [vmem:[%s0 + $0x3c] sm:$0xf]
  %v67 = vld [vmem:[%s1] sm:$0xf]
  %v68 = vld [vmem:[%s1 + $0x4] sm:$0xf]
  %v69 = vld [vmem:[%s1 + $0x8] sm:$0xf]
  %v70 = vld [vmem:[%s1 + $0xc] sm:$0xf]
  %v71 = vld [vmem:[%s1 + $0x10] sm:$0xf]
  %v72 = vld [vmem:[%s1 + $0x14] sm:$0xf]
  %v73 = vld [vmem:[%s1 + $0x18] sm:$0xf]
  %v74 = vld [vmem:[%s1 + $0x1c] sm:$0xf]
  %v75 = vld [vmem:[%s1 + $0x20] sm:$0xf]
  %v76 = vld [vmem:[%s1 + $0x24] sm:$0xf]
  %v77 = vld [vmem:[%s1 + $0x28] sm:$0xf]
  %v78 = vld [vmem:[%s1 + $0x2c] sm:$0xf]
  %v79 = vld [vmem:[%s1 + $0x30] sm:$0xf]
  %v80 = vld [vmem:[%s1 + $0x34] sm:$0xf]
  %v81 = vld [vmem:[%s1 + $0x38] sm:$0xf]
  %v82 = vld [vmem:[%s1 + $0x3c] sm:$0xf]
  %v99 = vunpack.c.l.b16 %v51
  %v100 = vunpack.c.l.b16 %v52
  %v101 = vunpack.c.l.b16 %v53
  %v102 = vunpack.c.l.b16 %v54
  %v103 = vunpack.c.l.b16 %v55
  %v104 = vunpack.c.l.b16 %v56
  %v105 = vunpack.c.l.b16 %v57
  %v106 = vunpack.c.l.b16 %v58
  %v107 = vunpack.c.l.b16 %v59
  %v108 = vunpack.c.l.b16 %v60
  %v109 = vunpack.c.l.b16 %v61
  %v110 = vunpack.c.l.b16 %v62
  %v111 = vunpack.c.l.b16 %v63
  %v112 = vunpack.c.l.b16 %v64
  %v113 = vunpack.c.l.b16 %v65
  %v114 = vunpack.c.l.b16 %v66
  %v115 = vpack.c.b16 %v100, %v99
  %v116 = vpack.c.b16 %v102, %v101
  %v117 = vpack.c.b16 %v104, %v103
  %v118 = vpack.c.b16 %v106, %v105
  %v119 = vpack.c.b16 %v108, %v107
  %v120 = vpack.c.b16 %v110, %v109
  %v121 = vpack.c.b16 %v112, %v111
  %v122 = vpack.c.b16 %v114, %v113
  %v147 = vunpack.c.l.b16 %v67
  %v148 = vunpack.c.l.b16 %v68
  %v149 = vunpack.c.l.b16 %v69
  %v150 = vunpack.c.l.b16 %v70
  %v151 = vunpack.c.l.b16 %v71
  %v152 = vunpack.c.l.b16 %v72
  %v153 = vunpack.c.l.b16 %v73
  %v154 = vunpack.c.l.b16 %v74
  %v155 = vunpack.c.l.b16 %v75
  %v156 = vunpack.c.l.b16 %v76
  %v157 = vunpack.c.l.b16 %v77
  %v158 = vunpack.c.l.b16 %v78
  %v159 = vunpack.c.l.b16 %v79
  %v160 = vunpack.c.l.b16 %v80
  %v161 = vunpack.c.l.b16 %v81
  %v162 = vunpack.c.l.b16 %v82
  %v163 = vpack.c.b16 %v148, %v147
  %v164 = vpack.c.b16 %v150, %v149
  %v165 = vpack.c.b16 %v152, %v151
  %v166 = vpack.c.b16 %v154, %v153
  %v167 = vpack.c.b16 %v156, %v155
  %v168 = vpack.c.b16 %v158, %v157
  %v169 = vpack.c.b16 %v160, %v159
  %v170 = vpack.c.b16 %v162, %v161
  %179 = vmatprep.subr.bf16.mxu0 0
  %180 = vmatpush1.bf16.msra.mxu0 %v163
  %181 = vmatprep.subr.bf16.mxu0 0
  %182 = vmatpush1.bf16.msra.mxu0 %v164
  %183 = vmatprep.subr.bf16.mxu0 0
  %184 = vmatpush1.bf16.msra.mxu0 %v165
  %185 = vmatprep.subr.bf16.mxu0 0
  %186 = vmatpush1.bf16.msra.mxu0 %v166
  %187 = vmatprep.subr.bf16.mxu0 0
  %188 = vmatpush1.bf16.msra.mxu0 %v167
  %189 = vmatprep.subr.bf16.mxu0 0
  %190 = vmatpush1.bf16.msra.mxu0 %v168
  %191 = vmatprep.subr.bf16.mxu0 0
  %192 = vmatpush1.bf16.msra.mxu0 %v169
  %193 = vmatprep.subr.bf16.mxu0 0
  %194 = vmatpush1.bf16.msra.mxu0 %v170
  %195 = vmatprep.subr.bf16.mxu0 0
  %196 = vmatpush1.bf16.msra.mxu0 0
  %197 = vmatprep.subr.bf16.mxu0 0
  %198 = vmatpush1.bf16.msra.mxu0 0
  %199 = vmatprep.subr.bf16.mxu0 0
  %200 = vmatpush1.bf16.msra.mxu0 0
  %201 = vmatprep.subr.bf16.mxu0 0
  %202 = vmatpush1.bf16.msra.mxu0 0
  %203 = vmatprep.subr.bf16.mxu0 0
  %204 = vmatpush1.bf16.msra.mxu0 0
  %205 = vmatprep.subr.bf16.mxu0 0
  %206 = vmatpush1.bf16.msra.mxu0 0
  %207 = vmatprep.subr.bf16.mxu0 0
  %208 = vmatpush1.bf16.msra.mxu0 0
  %209 = vmatprep.subr.bf16.mxu0 0
  %210 = vmatpush1.bf16.msra.mxu0 0
  %211 = vmatprep.mubr.bf16.mxu0 0
  %212 = vmatmul.mubr.bf16.gmra.mrb[0].mxu0 %v115
  %v213 = vpop.f32.mrb[0].mxu0
  %v214 = vadd.f32 0.0, %v213
  %v215 = vpop.f32.mrb[0].mxu0
  %v216 = vpop.f32.mrb[0].mxu0
  %v217 = vadd.f32 0.0, %v216
  %v218 = vpop.f32.mrb[0].mxu0
  %219 = vmatprep.mubr.bf16.mxu0 0
  %220 = vmatmul.mubr.bf16.gmra.mrb[0].mxu0 %v116
  %v221 = vpop.f32.mrb[0].mxu0
  %v222 = vadd.f32 0.0, %v221
  %v223 = vpop.f32.mrb[0].mxu0
  %v224 = vpop.f32.mrb[0].mxu0
  %v225 = vadd.f32 0.0, %v224
  %v226 = vpop.f32.mrb[0].mxu0
  %227 = vmatprep.mubr.bf16.mxu0 0
  %228 = vmatmul.mubr.bf16.gmra.mrb[0].mxu0 %v117
  %v229 = vpop.f32.mrb[0].mxu0
  %v230 = vadd.f32 0.0, %v229
  %v231 = vpop.f32.mrb[0].mxu0
  %v232 = vpop.f32.mrb[0].mxu0
  %v233 = vadd.f32 0.0, %v232
  %v234 = vpop.f32.mrb[0].mxu0
  %235 = vmatprep.mubr.bf16.mxu0 0
  %236 = vmatmul.mubr.bf16.gmra.mrb[0].mxu0 %v118
  %v237 = vpop.f32.mrb[0].mxu0
  %v238 = vadd.f32 0.0, %v237
  %v239 = vpop.f32.mrb[0].mxu0
  %v240 = vpop.f32.mrb[0].mxu0
  %v241 = vadd.f32 0.0, %v240
  %v242 = vpop.f32.mrb[0].mxu0
  %243 = vmatprep.mubr.bf16.mxu0 0
  %244 = vmatmul.mubr.bf16.gmra.mrb[0].mxu0 %v119
  %v245 = vpop.f32.mrb[0].mxu0
  %v246 = vadd.f32 0.0, %v245
  %v247 = vpop.f32.mrb[0].mxu0
  %v248 = vpop.f32.mrb[0].mxu0
  %v249 = vadd.f32 0.0, %v248
  %v250 = vpop.f32.mrb[0].mxu0
  %251 = vmatprep.mubr.bf16.mxu0 0
  %252 = vmatmul.mubr.bf16.gmra.mrb[0].mxu0 %v120
  %v253 = vpop.f32.mrb[0].mxu0
  %v254 = vadd.f32 0.0, %v253
  %v255 = vpop.f32.mrb[0].mxu0
  %v256 = vpop.f32.mrb[0].mxu0
  %v257 = vadd.f32 0.0, %v256
  %v258 = vpop.f32.mrb[0].mxu0
  %259 = vmatprep.mubr.bf16.mxu0 0
  %260 = vmatmul.mubr.bf16.gmra.mrb[0].mxu0 %v121
  %v261 = vpop.f32.mrb[0].mxu0
  %v262 = vadd.f32 0.0, %v261
  %v263 = vpop.f32.mrb[0].mxu0
  %v264 = vpop.f32.mrb[0].mxu0
  %v265 = vadd.f32 0.0, %v264
  %v266 = vpop.f32.mrb[0].mxu0
  %267 = vmatprep.mubr.bf16.mxu0 0
  %268 = vmatmul.mubr.bf16.gmra.mrb[0].mxu0 %v122
  %v269 = vpop.f32.mrb[0].mxu0
  %v270 = vadd.f32 0.0, %v269
  %v271 = vpop.f32.mrb[0].mxu0
  %v272 = vpop.f32.mrb[0].mxu0
  %v273 = vadd.f32 0.0, %v272
  %v274 = vpop.f32.mrb[0].mxu0
  %275 = vdwg.mxu0
  %v276 = vadd.f32 %v35, %v214
  %v277 = vadd.f32 %v36, %v217
  %v278 = vadd.f32 %v37, %v222
  %v279 = vadd.f32 %v38, %v225
  %v280 = vadd.f32 %v39, %v230
  %v281 = vadd.f32 %v40, %v233
  %v282 = vadd.f32 %v41, %v238
  %v283 = vadd.f32 %v42, %v241
  %v284 = vadd.f32 %v43, %v246
  %v285 = vadd.f32 %v44, %v249
  %v286 = vadd.f32 %v45, %v254
  %v287 = vadd.f32 %v46, %v257
  %v288 = vadd.f32 %v47, %v262
  %v289 = vadd.f32 %v48, %v265
  %v290 = vadd.f32 %v49, %v270
  %v291 = vadd.f32 %v50, %v273
  %292 = vst [vmem:[#allocation2] sm:$0xff] %v276
  %293 = vst [vmem:[#allocation2 + $0x8] sm:$0xff] %v277
  %294 = vst [vmem:[#allocation2 + $0x10] sm:$0xff] %v278
  %295 = vst [vmem:[#allocation2 + $0x18] sm:$0xff] %v279
  %296 = vst [vmem:[#allocation2 + $0x20] sm:$0xff] %v280
  %297 = vst [vmem:[#allocation2 + $0x28] sm:$0xff] %v281
  %298 = vst [vmem:[#allocation2 + $0x30] sm:$0xff] %v282
  %299 = vst [vmem:[#allocation2 + $0x38] sm:$0xff] %v283
  %300 = vst [vmem:[#allocation2 + $0x40] sm:$0xff] %v284
  %301 = vst [vmem:[#allocation2 + $0x48] sm:$0xff] %v285
  %302 = vst [vmem:[#allocation2 + $0x50] sm:$0xff] %v286
  %303 = vst [vmem:[#allocation2 + $0x58] sm:$0xff] %v287
  %304 = vst [vmem:[#allocation2 + $0x60] sm:$0xff] %v288
  %305 = vst [vmem:[#allocation2 + $0x68] sm:$0xff] %v289
  %306 = vst [vmem:[#allocation2 + $0x70] sm:$0xff] %v290
  %307 = vst [vmem:[#allocation2 + $0x78] sm:$0xff] %v291
  // Predicated region
  $region18: #{speech_model_forward.7} parent=0 // pred_check
    %p308 = pneg %p15
  $region19: #{speech_model_forward.7} parent=0 // pred_check_branch
    %310 = sbr.rel (%p308) target = $region21
  $region20: #{speech_model_forward.7} parent=0 // pred_region
    %v311 = vld [vmem:[#allocation2] sm:$0xff]
    %v312 = vld [vmem:[#allocation2 + $0x8] sm:$0xff]
    %v313 = vld [vmem:[#allocation2 + $0x10] sm:$0xff]
    %v314 = vld [vmem:[#allocation2 + $0x18] sm:$0xff]
    %v315 = vld [vmem:[#allocation2 + $0x20] sm:$0xff]
    %v316 = vld [vmem:[#allocation2 + $0x28] sm:$0xff]
    %v317 = vld [vmem:[#allocation2 + $0x30] sm:$0xff]
    %v318 = vld [vmem:[#allocation2 + $0x38] sm:$0xff]
    %v319 = vld [vmem:[#allocation2 + $0x40] sm:$0xff]
    %v320 = vld [vmem:[#allocation2 + $0x48] sm:$0xff]
    %v321 = vld [vmem:[#allocation2 + $0x50] sm:$0xff]
    %v322 = vld [vmem:[#allocation2 + $0x58] sm:$0xff]
    %v323 = vld [vmem:[#allocation2 + $0x60] sm:$0xff]
    %v324 = vld [vmem:[#allocation2 + $0x68] sm:$0xff]
    %v325 = vld [vmem:[#allocation2 + $0x70] sm:$0xff]
    %v326 = vld [vmem:[#allocation2 + $0x78] sm:$0xff]
    %v327 = vld [vmem:[%s2] sm:$0x1]
    %v329 = vlaneseq
    %v330 = vshrl.u32 %v329, 7
    %v331 = vsub.s32 0, %v330
    %v332 = vrot.slane %v327, %v331
    %v334 = vadd.f32 %v311, %v332
    %v335 = vadd.f32 %v312, %v332
    %v336 = vadd.f32 %v313, %v332
    %v337 = vadd.f32 %v314, %v332
    %v338 = vadd.f32 %v315, %v332
    %v339 = vadd.f32 %v316, %v332
    %v340 = vadd.f32 %v317, %v332
    %v341 = vadd.f32 %v318, %v332
    %v342 = vadd.f32 %v319, %v332
    %v343 = vadd.f32 %v320, %v332
    %v344 = vadd.f32 %v321, %v332
    %v345 = vadd.f32 %v322, %v332
    %v346 = vadd.f32 %v323, %v332
    %v347 = vadd.f32 %v324, %v332
    %v348 = vadd.f32 %v325, %v332
    %v349 = vadd.f32 %v326, %v332
    %350 = vst [vmem:[%s3] sm:$0xff] %v334
    %351 = vst [vmem:[%s3 + $0x8] sm:$0xff] %v335
    %352 = vst [vmem:[%s3 + $0x10] sm:$0xff] %v336
    %353 = vst [vmem:[%s3 + $0x18] sm:$0xff] %v337
    %354 = vst [vmem:[%s3 + $0x20] sm:$0xff] %v338
    %355 = vst [vmem:[%s3 + $0x28] sm:$0xff] %v339
    %356 = vst [vmem:[%s3 + $0x30] sm:$0xff] %v340
    %357 = vst [vmem:[%s3 + $0x38] sm:$0xff] %v341
    %358 = vst [vmem:[%s3 + $0x40] sm:$0xff] %v342
    %359 = vst [vmem:[%s3 + $0x48] sm:$0xff] %v343
    %360 = vst [vmem:[%s3 + $0x50] sm:$0xff] %v344
    %361 = vst [vmem:[%s3 + $0x58] sm:$0xff] %v345
    %362 = vst [vmem:[%s3 + $0x60] sm:$0xff] %v346
    %363 = vst [vmem:[%s3 + $0x68] sm:$0xff] %v347
    %364 = vst [vmem:[%s3 + $0x70] sm:$0xff] %v348
    %365 = vst [vmem:[%s3 + $0x78] sm:$0xff] %v349
  $region21: #{speech_model_forward.7} parent=0 // pred_fallthru
    _
  // Predicated region
  $region22: #{speech_model_forward.7} parent=0 // pred_check
    _
  $region23: #{speech_model_forward.7} parent=0 // pred_check_branch
    %367 = sbr.rel (0) target = $region25
  $region24: #{speech_model_forward.7} parent=0 // pred_region
    _
  $region25: #{speech_model_forward.7} parent=0 // pred_fallthru
    _
  // Predicated region
  $region26: #{speech_model_forward.7} parent=0 // pred_check
    _
  $region27: #{speech_model_forward.7} parent=0 // pred_check_branch
    %369 = sbr.rel (0) target = $region29
  $region28: #{speech_model_forward.7} parent=0 // pred_region
    _
  $region29: #{speech_model_forward.7} parent=0 // pred_fallthru
    _

// kernel: speech_model_forward.10
$region0: #{speech_model_forward.10}
  #allocation0 [shape = 'u32[]', space=smem, size = 0x4, offset = 0x4, fixed_abs, tag = 'smem constant byte address 0x4 - core index']
  #allocation1 [shape = 'u32[144,128]{1,0:T(1,128)}', space=vmem, size = 0x12000, scoped, tag = 'internal scratch']
  #allocation2 [shape = 'f32[16,128]{1,0:T(8,128)}', space=vmem, size = 0x2000, scoped, tag = 'scratch operand']
  %s0 = inlined_call_operand.vmem [shape: bf16[16,256], index: 0, kind: input, shape index: {}]
  %s1 = inlined_call_operand.vmem [shape: bf16[256,128], index: 1, kind: input, shape index: {}]
  %s2 = inlined_call_operand.vmem [shape: f32[1,128], index: 2, kind: input, shape index: {}]
  %s3 = inlined_call_operand.vmem [shape: f32[16,128], index: 3, kind: output, shape index: {}]
  %s4 = sld [smem:[#allocation0]]
  $region30: #{speech_model_forward.10} parent=0
    _
  %s6 = ssub.s32 1, %s4
  %s7 = scalar_select 0, %s6, %s4
  // Predicated region
  $region2: #{speech_model_forward.10} parent=0 // pred_check
    _
  $region3: #{speech_model_forward.10} parent=0 // pred_check_branch
    %9 = sbr.rel (0) target = $region5
  $region4: #{speech_model_forward.10} parent=0 // pred_region
    _
  $region5: #{speech_model_forward.10} parent=0 // pred_fallthru
    _
  // Predicated region
  $region6: #{speech_model_forward.10} parent=0 // pred_check
    _
  $region7: #{speech_model_forward.10} parent=0 // pred_check_branch
    %11 = sbr.rel (0) target = $region9
  $region8: #{speech_model_forward.10} parent=0 // pred_region
    _
  $region9: #{speech_model_forward.10} parent=0 // pred_fallthru
    _
  // Predicated region
  $region10: #{speech_model_forward.10} parent=0 // pred_check
    _
  $region11: #{speech_model_forward.10} parent=0 // pred_check_branch
    %13 = sbr.rel (0) target = $region13
  $region12: #{speech_model_forward.10} parent=0 // pred_region
    _
  $region13: #{speech_model_forward.10} parent=0 // pred_fallthru
    _
  %p15 = scmp.eq.s32.totalorder 0, 0
  // Predicated region
  $region14: #{speech_model_forward.10} parent=0 // pred_check
    %p16 = pneg %p15
  $region15: #{speech_model_forward.10} parent=0 // pred_check_branch
    %18 = sbr.rel (%p16) target = $region17
  $region16: #{speech_model_forward.10} parent=0 // pred_region
    %19 = vst [vmem:[#allocation2] sm:$0xff] 0.0
    %20 = vst [vmem:[#allocation2 + $0x8] sm:$0xff] 0.0
  $region17: #{speech_model_forward.10} parent=0 // pred_fallthru
    _
  %v21 = vld [vmem:[#allocation2] sm:$0xff]
  %v22 = vld [vmem:[#allocation2 + $0x8] sm:$0xff]
  %v23 = vld [vmem:[%s0] sm:$0xff]
  %v24 = vld [vmem:[%s0 + $0x8] sm:$0xff]
  %v25 = vld [vmem:[%s1] sm:$0xf]
  %v26 = vld [vmem:[%s1 + $0x4] sm:$0xf]
  %v27 = vld [vmem:[%s1 + $0x8] sm:$0xf]
  %v28 = vld [vmem:[%s1 + $0xc] sm:$0xf]
  %v29 = vld [vmem:[%s1 + $0x10] sm:$0xf]
  %v30 = vld [vmem:[%s1 + $0x14] sm:$0xf]
  %v31 = vld [vmem:[%s1 + $0x18] sm:$0xf]
  %v32 = vld [vmem:[%s1 + $0x1c] sm:$0xf]
  %v33 = vld [vmem:[%s1 + $0x20] sm:$0xf]
  %v34 = vld [vmem:[%s1 + $0x24] sm:$0xf]
  %v35 = vld [vmem:[%s1 + $0x28] sm:$0xf]
  %v36 = vld [vmem:[%s1 + $0x2c] sm:$0xf]
  %v37 = vld [vmem:[%s1 + $0x30] sm:$0xf]
  %v38 = vld [vmem:[%s1 + $0x34] sm:$0xf]
  %v39 = vld [vmem:[%s1 + $0x38] sm:$0xf]
  %v40 = vld [vmem:[%s1 + $0x3c] sm:$0xf]
  %v41 = vld [vmem:[%s1 + $0x40] sm:$0xf]
  %v42 = vld [vmem:[%s1 + $0x44] sm:$0xf]
  %v43 = vld [vmem:[%s1 + $0x48] sm:$0xf]
  %v44 = vld [vmem:[%s1 + $0x4c] sm:$0xf]
  %v45 = vld [vmem:[%s1 + $0x50] sm:$0xf]
  %v46 = vld [vmem:[%s1 + $0x54] sm:$0xf]
  %v47 = vld [vmem:[%s1 + $0x58] sm:$0xf]
  %v48 = vld [vmem:[%s1 + $0x5c] sm:$0xf]
  %v49 = vld [vmem:[%s1 + $0x60] sm:$0xf]
  %v50 = vld [vmem:[%s1 + $0x64] sm:$0xf]
  %v51 = vld [vmem:[%s1 + $0x68] sm:$0xf]
  %v52 = vld [vmem:[%s1 + $0x6c] sm:$0xf]
  %v53 = vld [vmem:[%s1 + $0x70] sm:$0xf]
  %v54 = vld [vmem:[%s1 + $0x74] sm:$0xf]
  %v55 = vld [vmem:[%s1 + $0x78] sm:$0xf]
  %v56 = vld [vmem:[%s1 + $0x7c] sm:$0xf]
  %v59 = vunpack.c.l.b16 %v23
  %v60 = vunpack.c.h.b16 %v23
  %v61 = vunpack.c.l.b16 %v24
  %v62 = vunpack.c.h.b16 %v24
  %v63 = vpack.c.b16 %v61, %v59
  %v64 = vpack.c.b16 %v62, %v60
  %v99 = vunpack.c.l.b16 %v25
  %v100 = vunpack.c.l.b16 %v26
  %v101 = vunpack.c.l.b16 %v27
  %v102 = vunpack.c.l.b16 %v28
  %v103 = vunpack.c.l.b16 %v29
  %v104 = vunpack.c.l.b16 %v30
  %v105 = vunpack.c.l.b16 %v31
  %v106 = vunpack.c.l.b16 %v32
  %v107 = vunpack.c.l.b16 %v33
  %v108 = vunpack.c.l.b16 %v34
  %v109 = vunpack.c.l.b16 %v35
  %v110 = vunpack.c.l.b16 %v36
  %v111 = vunpack.c.l.b16 %v37
  %v112 = vunpack.c.l.b16 %v38
  %v113 = vunpack.c.l.b16 %v39
  %v114 = vunpack.c.l.b16 %v40
  %v115 = vunpack.c.l.b16 %v41
  %v116 = vunpack.c.l.b16 %v42
  %v117 = vunpack.c.l.b16 %v43
  %v118 = vunpack.c.l.b16 %v44
  %v119 = vunpack.c.l.b16 %v45
  %v120 = vunpack.c.l.b16 %v46
  %v121 = vunpack.c.l.b16 %v47
  %v122 = vunpack.c.l.b16 %v48
  %v123 = vunpack.c.l.b16 %v49
  %v124 = vunpack.c.l.b16 %v50
  %v125 = vunpack.c.l.b16 %v51
  %v126 = vunpack.c.l.b16 %v52
  %v127 = vunpack.c.l.b16 %v53
  %v128 = vunpack.c.l.b16 %v54
  %v129 = vunpack.c.l.b16 %v55
  %v130 = vunpack.c.l.b16 %v56
  %v131 = vpack.c.b16 %v100, %v99
  %v132 = vpack.c.b16 %v102, %v101
  %v133 = vpack.c.b16 %v104, %v103
  %v134 = vpack.c.b16 %v106, %v105
  %v135 = vpack.c.b16 %v108, %v107
  %v136 = vpack.c.b16 %v110, %v109
  %v137 = vpack.c.b16 %v112, %v111
  %v138 = vpack.c.b16 %v114, %v113
  %v139 = vpack.c.b16 %v116, %v115
  %v140 = vpack.c.b16 %v118, %v117
  %v141 = vpack.c.b16 %v120, %v119
  %v142 = vpack.c.b16 %v122, %v121
  %v143 = vpack.c.b16 %v124, %v123
  %v144 = vpack.c.b16 %v126, %v125
  %v145 = vpack.c.b16 %v128, %v127
  %v146 = vpack.c.b16 %v130, %v129
  %163 = vmatprep.subr.bf16.mxu0 0
  %164 = vmatpush1.bf16.msra.mxu0 %v131
  %165 = vmatprep.subr.bf16.mxu0 0
  %166 = vmatpush1.bf16.msra.mxu0 %v132
  %167 = vmatprep.subr.bf16.mxu0 0
  %168 = vmatpush1.bf16.msra.mxu0 %v133
  %169 = vmatprep.subr.bf16.mxu0 0
  %170 = vmatpush1.bf16.msra.mxu0 %v134
  %171 = vmatprep.subr.bf16.mxu0 0
  %172 = vmatpush1.bf16.msra.mxu0 %v135
  %173 = vmatprep.subr.bf16.mxu0 0
  %174 = vmatpush1.bf16.msra.mxu0 %v136
  %175 = vmatprep.subr.bf16.mxu0 0
  %176 = vmatpush1.bf16.msra.mxu0 %v137
  %177 = vmatprep.subr.bf16.mxu0 0
  %178 = vmatpush1.bf16.msra.mxu0 %v138
  %179 = vmatprep.subr.bf16.mxu0 0
  %180 = vmatpush1.bf16.msra.mxu0 %v139
  %181 = vmatprep.subr.bf16.mxu0 0
  %182 = vmatpush1.bf16.msra.mxu0 %v140
  %183 = vmatprep.subr.bf16.mxu0 0
  %184 = vmatpush1.bf16.msra.mxu0 %v141
  %185 = vmatprep.subr.bf16.mxu0 0
  %186 = vmatpush1.bf16.msra.mxu0 %v142
  %187 = vmatprep.subr.bf16.mxu0 0
  %188 = vmatpush1.bf16.msra.mxu0 %v143
  %189 = vmatprep.subr.bf16.mxu0 0
  %190 = vmatpush1.bf16.msra.mxu0 %v144
  %191 = vmatprep.subr.bf16.mxu0 0
  %192 = vmatpush1.bf16.msra.mxu0 %v145
  %193 = vmatprep.subr.bf16.mxu0 0
  %194 = vmatpush1.bf16.msra.mxu0 %v146
  %195 = vmatprep.mubr.bf16.mxu0 %v64
  %196 = vmatmul.mubr.bf16.gmra.mrb[0].mxu0 %v63
  %v197 = vpop.f32.mrb[0].mxu0
  %v198 = vadd.f32 0.0, %v197
  %v199 = vpop.f32.mrb[0].mxu0
  %v200 = vpop.f32.mrb[0].mxu0
  %v201 = vadd.f32 0.0, %v200
  %v202 = vpop.f32.mrb[0].mxu0
  %203 = vdwg.mxu0
  %v204 = vadd.f32 %v21, %v198
  %v205 = vadd.f32 %v22, %v201
  %206 = vst [vmem:[#allocation2] sm:$0xff] %v204
  %207 = vst [vmem:[#allocation2 + $0x8] sm:$0xff] %v205
  // Predicated region
  $region18: #{speech_model_forward.10} parent=0 // pred_check
    %p208 = pneg %p15
  $region19: #{speech_model_forward.10} parent=0 // pred_check_branch
    %210 = sbr.rel (%p208) target = $region21
  $region20: #{speech_model_forward.10} parent=0 // pred_region
    %v211 = vld [vmem:[#allocation2] sm:$0xff]
    %v212 = vld [vmem:[#allocation2 + $0x8] sm:$0xff]
    %v213 = vld [vmem:[%s2] sm:$0x1]
    %v215 = vlaneseq
    %v216 = vshrl.u32 %v215, 7
    %v217 = vsub.s32 0, %v216
    %v218 = vrot.slane %v213, %v217
    %v220 = vadd.f32 %v211, %v218
    %v221 = vadd.f32 %v212, %v218
    %222 = vst [vmem:[%s3] sm:$0xff] %v220
    %223 = vst [vmem:[%s3 + $0x8] sm:$0xff] %v221
  $region21: #{speech_model_forward.10} parent=0 // pred_fallthru
    _
  // Predicated region
  $region22: #{speech_model_forward.10} parent=0 // pred_check
    _
  $region23: #{speech_model_forward.10} parent=0 // pred_check_branch
    %225 = sbr.rel (0) target = $region25
  $region24: #{speech_model_forward.10} parent=0 // pred_region
    _
  $region25: #{speech_model_forward.10} parent=0 // pred_fallthru
    _
  // Predicated region
  $region26: #{speech_model_forward.10} parent=0 // pred_check
    _
  $region27: #{speech_model_forward.10} parent=0 // pred_check_branch
    %227 = sbr.rel (0) target = $region29
  $region28: #{speech_model_forward.10} parent=0 // pred_region
    _
  $region29: #{speech_model_forward.10} parent=0 // pred_fallthru
    _

// kernel: speech_model_forward.12
$region0: #{speech_model_forward.12}
  #allocation0 [shape = 'u32[]', space=smem, size = 0x4, offset = 0x4, fixed_abs, tag = 'smem constant byte address 0x4 - core index']
  #allocation1 [shape = 'u32[144,128]{1,0:T(1,128)}', space=vmem, size = 0x12000, scoped, tag = 'internal scratch']
  #allocation2 [shape = 'f32[2,32]{1,0:T(2,128)}', space=vmem, size = 0x400, scoped, tag = 'scratch operand']
  #allocation3 [shape = 'f32[2,32]{1,0:T(2,128)}', space=vmem, size = 0x400, scoped, tag = 'scratch operand']
  %s0 = inlined_call_operand.vmem [shape: f32[8,2,256], index: 0, kind: input, shape index: {}]
  %s1 = inlined_call_operand.vmem [shape: bf16[2,32,128], index: 1, kind: input, shape index: {}]
  %s2 = inlined_call_operand.vmem [shape: f32[2,8,2,32], index: 2, kind: output, shape index: {}]
  %s3 = sld [smem:[#allocation0]]
  $region89: #{speech_model_forward.12} parent=0
    _
  %s5 = ssub.s32 1, %s3
  %s6 = scalar_select 0, %s5, %s3
  $region1: #{speech_model_forward.12} parent=0
    #allocation4 [shape = 'u8[16384]{0}', space=vmem, size = 0x4000, scoped, tag = 'input window, operand 0']
    loop: start=0, step=1, limit=4
    $region2: #{speech_model_forward.12} parent=1 // loop_pre_header
      _
    $region3: #{speech_model_forward.12} parent=1 // loop_header
      %s8 = sphi 0, %s12
      %p9 = scmp.ge.s32.totalorder %s8, 4
      %s18 = sphi 0, %s20
      %s21 = sphi 0, %s18
      %s22 = sphi 0, %s21
      %s38 = sphi 0, %s22
      %s44 = sphi 0, %s46
      %s47 = sphi 0, %s44
      %s48 = sphi 0, %s47
      %s64 = sphi 0, %s48
      %s70 = sphi 0, %s72
      %s73 = sphi 0, %s70
      %s74 = sphi 0, %s73
      %s90 = sphi 0, %s74
    $region4: #{speech_model_forward.12} parent=1 // loop_header_branch
      %11 = sbr.rel (%p9) target = $region8
    $region5: #{speech_model_forward.12} parent=1 // loop_body
      %s13 = ssub.s32 %s8, 1
      %s14 = ssub.s32 %s8, 2
      %s15 = sadd.s32 %s8, 1
      %s16 = ssub.s32 %s8, %s15
      %p17 = scmp.eq.s32.totalorder %s16, 0
      %s19 = sadd.s32 %s18, 1
      %s20 = scalar_select %p17, %s18, %s19
      %p23 = pneg %p17
      %p24 = scmp.eq.s32.totalorder %s8, 1
      %p25 = por %p23, %p24
      %p26 = scmp.ne.s32.totalorder %s18, %s21
      %p27 = scmp.eq.s32.totalorder %s8, 0
      %p28 = por %p26, %p27
      %p29 = scmp.ne.s32.totalorder %s18, %s21
      %p30 = scmp.eq.s32.totalorder %s13, 1
      %p31 = por %p29, %p30
      %p32 = scmp.ne.s32.totalorder %s21, %s22
      %p33 = scmp.eq.s32.totalorder %s13, 0
      %p34 = por %p32, %p33
      %p35 = scmp.ne.s32.totalorder %s21, %s22
      %p36 = scmp.eq.s32.totalorder %s14, 1
      %p37 = por %p35, %p36
      %p39 = scmp.ne.s32.totalorder %s22, %s38
      %p40 = scmp.eq.s32.totalorder %s14, 0
      %p41 = por %p39, %p40
      %s42 = ssub.s32 %s8, %s15
      %p43 = scmp.eq.s32.totalorder %s42, 0
      %s45 = sadd.s32 %s44, 1
      %s46 = scalar_select %p43, %s44, %s45
      %p49 = pneg %p43
      %p50 = scmp.eq.s32.totalorder %s8, 1
      %p51 = por %p49, %p50
      %p52 = scmp.ne.s32.totalorder %s44, %s47
      %p53 = scmp.eq.s32.totalorder %s8, 0
      %p54 = por %p52, %p53
      %p55 = scmp.ne.s32.totalorder %s44, %s47
      %p56 = scmp.eq.s32.totalorder %s13, 1
      %p57 = por %p55, %p56
      %p58 = scmp.ne.s32.totalorder %s47, %s48
      %p59 = scmp.eq.s32.totalorder %s13, 0
      %p60 = por %p58, %p59
      %p61 = scmp.ne.s32.totalorder %s47, %s48
      %p62 = scmp.eq.s32.totalorder %s14, 1
      %p63 = por %p61, %p62
      %p65 = scmp.ne.s32.totalorder %s48, %s64
      %p66 = scmp.eq.s32.totalorder %s14, 0
      %p67 = por %p65, %p66
      %s68 = ssub.s32 %s8, %s15
      %p69 = scmp.eq.s32.totalorder %s68, 0
      %s71 = sadd.s32 %s70, 1
      %s72 = scalar_select %p69, %s70, %s71
      %p75 = pneg %p69
      %p76 = scmp.eq.s32.totalorder %s8, 1
      %p77 = por %p75, %p76
      %p78 = scmp.ne.s32.totalorder %s70, %s73
      %p79 = scmp.eq.s32.totalorder %s8, 0
      %p80 = por %p78, %p79
      %p81 = scmp.ne.s32.totalorder %s70, %s73
      %p82 = scmp.eq.s32.totalorder %s13, 1
      %p83 = por %p81, %p82
      %p84 = scmp.ne.s32.totalorder %s73, %s74
      %p85 = scmp.eq.s32.totalorder %s13, 0
      %p86 = por %p84, %p85
      %p87 = scmp.ne.s32.totalorder %s73, %s74
      %p88 = scmp.eq.s32.totalorder %s14, 1
      %p89 = por %p87, %p88
      %p91 = scmp.ne.s32.totalorder %s74, %s90
      %p92 = scmp.eq.s32.totalorder %s14, 0
      %p93 = por %p91, %p92
      %p94 = scmp.le.s32.totalorder 1, %s8
      %p95 = scmp.lt.s32.totalorder %s8, 3
      %p96 = pnand %p94, %p95
      %p97 = pneg %p96
      // Predicated region
      $region9: #{speech_model_forward.12} parent=5 // pred_check
        _
      $region10: #{speech_model_forward.12} parent=5 // pred_check_branch
        %99 = sbr.rel (%p96) target = $region12
      $region11: #{speech_model_forward.12} parent=5 // pred_region
        %s100 = ssub.s32 %s8, 1
      $region12: #{speech_model_forward.12} parent=5 // pred_fallthru
        _
      %p101 = scmp.lt.s32.totalorder %s8, 2
      // Predicated region
      $region13: #{speech_model_forward.12} parent=5 // pred_check
        %p102 = pneg %p101
      $region14: #{speech_model_forward.12} parent=5 // pred_check_branch
        %104 = sbr.rel (%p102) target = $region16
      $region15: #{speech_model_forward.12} parent=5 // pred_region
        // Predicated region
        $region17: #{speech_model_forward.12} parent=15 // pred_check
          %p105 = pneg %p28
        $region18: #{speech_model_forward.12} parent=15 // pred_check_branch
          %107 = sbr.rel (%p105) target = $region20
        $region19: #{speech_model_forward.12} parent=15 // pred_region
          %s108 = sand.u32 %s18, 1
          %s109 = sand.u32 %s18, 1
          %s110 = smul.addr %s109, 16
          %s111 = scalar_lea.vmem [#allocation4], %s110
          %s112 = smul.addr %s8, 2
          %s113 = scalar_lea.vmem %s0, %s112
          // Predicated region
          $region21: #{speech_model_forward.12} parent=19 // pred_check
            _
          $region22: #{speech_model_forward.12} parent=19 // pred_check_branch
            %115 = sbr.rel (0) target = $region24
          $region23: #{speech_model_forward.12} parent=19 // pred_region
            // Predicated region
            $region25: #{speech_model_forward.12} parent=23 // pred_check
              _
            $region26: #{speech_model_forward.12} parent=23 // pred_check_branch
              %117 = sbr.rel target = $region28
            $region27: #{speech_model_forward.12} parent=23 // pred_region
              // Predicated region
              $region40: #{speech_model_forward.12} parent=27 // pred_check
                _
              $region41: #{speech_model_forward.12} parent=27 // pred_check_branch
                %146 = sbr.rel (0) target = $region43
              $region42: #{speech_model_forward.12} parent=27 // pred_region
                loop: start=0, step=1, limit=1
                $region44: #{speech_model_forward.12} parent=42 // loop_pre_header
                  _
                $region45: #{speech_model_forward.12} parent=42 // loop_header
                  %s148 = sphi 0, %s152
                  %p149 = scmp.ge.s32.totalorder %s148, 1
                  %s153 = sphi %s113, %s113
                  %s154 = sphi %s111, %s111
                $region46: #{speech_model_forward.12} parent=42 // loop_header_branch
                  %151 = sbr.rel (%p149) target = $region50
                $region47: #{speech_model_forward.12} parent=42 // loop_body
                  _
                $region48: #{speech_model_forward.12} parent=42 // loop_footer
                  %s152 = sadd.s32 1, %s148
                $region49: #{speech_model_forward.12} parent=42 // loop_footer_branch
                  %147 = sbr.rel target = $region45
                $region50: #{speech_model_forward.12} parent=42 // loop_exit
                  _
                loop: start=0, step=1, limit=1
                $region51: #{speech_model_forward.12} parent=42 // loop_pre_header
                  _
                $region52: #{speech_model_forward.12} parent=42 // loop_header
                  %s157 = sphi 0, %s161
                  %p158 = scmp.ge.s32.totalorder %s157, 1
                  %s162 = sphi %s113, %s113
                  %s163 = sphi %s111, %s111
                $region53: #{speech_model_forward.12} parent=42 // loop_header_branch
                  %160 = sbr.rel (%p158) target = $region57
                $region54: #{speech_model_forward.12} parent=42 // loop_body
                  %v164 = vld [vmem:[%s162] sm:$0x3]
                  %165 = vst [vmem:[%s163] sm:$0x3] %v164
                  %v166 = vld [vmem:[%s162 + $0x4] sm:$0x3]
                  %167 = vst [vmem:[%s163 + $0x2] sm:$0x3] %v166
                  %v168 = vld [vmem:[%s162 + $0x8] sm:$0x3]
                  %169 = vst [vmem:[%s163 + $0x4] sm:$0x3] %v168
                  %v170 = vld [vmem:[%s162 + $0xc] sm:$0x3]
                  %171 = vst [vmem:[%s163 + $0x6] sm:$0x3] %v170
                  %v172 = vld [vmem:[%s162 + $0x10] sm:$0x3]
                  %173 = vst [vmem:[%s163 + $0x8] sm:$0x3] %v172
                  %v174 = vld [vmem:[%s162 + $0x14] sm:$0x3]
                  %175 = vst [vmem:[%s163 + $0xa] sm:$0x3] %v174
                  %v176 = vld [vmem:[%s162 + $0x18] sm:$0x3]
                  %177 = vst [vmem:[%s163 + $0xc] sm:$0x3] %v176
                  %v178 = vld [vmem:[%s162 + $0x1c] sm:$0x3]
                  %179 = vst [vmem:[%s163 + $0xe] sm:$0x3] %v178
                $region55: #{speech_model_forward.12} parent=42 // loop_footer
                  %s161 = sadd.s32 1, %s157
                $region56: #{speech_model_forward.12} parent=42 // loop_footer_branch
                  %156 = sbr.rel target = $region52
                $region57: #{speech_model_forward.12} parent=42 // loop_exit
                  _
              $region43: #{speech_model_forward.12} parent=27 // pred_fallthru
                _
            $region28: #{speech_model_forward.12} parent=23 // pred_fallthru
              _
            // Predicated region
            $region29: #{speech_model_forward.12} parent=23 // pred_check
              _
            $region30: #{speech_model_forward.12} parent=23 // pred_check_branch
              %119 = sbr.rel (0) target = $region32
            $region31: #{speech_model_forward.12} parent=23 // pred_region
              loop: start=0, step=1, limit=1
              $region33: #{speech_model_forward.12} parent=31 // loop_pre_header
                _
              $region34: #{speech_model_forward.12} parent=31 // loop_header
                %s122 = sphi 0, %s126
                %p123 = scmp.ge.s32.totalorder %s122, 1
                %s127 = sphi %s113, %s113
                %s128 = sphi %s111, %s111
              $region35: #{speech_model_forward.12} parent=31 // loop_header_branch
                %125 = sbr.rel (%p123) target = $region39
              $region36: #{speech_model_forward.12} parent=31 // loop_body
                %v129 = vld [vmem:[%s127] sm:$0x3]
                %130 = vst [vmem:[%s128] sm:$0x3] %v129
                %v131 = vld [vmem:[%s127 + $0x4] sm:$0x3]
                %132 = vst [vmem:[%s128 + $0x2] sm:$0x3] %v131
                %v133 = vld [vmem:[%s127 + $0x8] sm:$0x3]
                %134 = vst [vmem:[%s128 + $0x4] sm:$0x3] %v133
                %v135 = vld [vmem:[%s127 + $0xc] sm:$0x3]
                %136 = vst [vmem:[%s128 + $0x6] sm:$0x3] %v135
                %v137 = vld [vmem:[%s127 + $0x10] sm:$0x3]
                %138 = vst [vmem:[%s128 + $0x8] sm:$0x3] %v137
                %v139 = vld [vmem:[%s127 + $0x14] sm:$0x3]
                %140 = vst [vmem:[%s128 + $0xa] sm:$0x3] %v139
                %v141 = vld [vmem:[%s127 + $0x18] sm:$0x3]
                %142 = vst [vmem:[%s128 + $0xc] sm:$0x3] %v141
                %v143 = vld [vmem:[%s127 + $0x1c] sm:$0x3]
                %144 = vst [vmem:[%s128 + $0xe] sm:$0x3] %v143
              $region37: #{speech_model_forward.12} parent=31 // loop_footer
                %s126 = sadd.s32 1, %s122
              $region38: #{speech_model_forward.12} parent=31 // loop_footer_branch
                %121 = sbr.rel target = $region34
              $region39: #{speech_model_forward.12} parent=31 // loop_exit
                _
            $region32: #{speech_model_forward.12} parent=23 // pred_fallthru
              _
          $region24: #{speech_model_forward.12} parent=19 // pred_fallthru
            _
          %180 = vnop
        $region20: #{speech_model_forward.12} parent=15 // pred_fallthru
          _
        // Predicated region
        $region58: #{speech_model_forward.12} parent=15 // pred_check
          %p181 = pneg %p54
        $region59: #{speech_model_forward.12} parent=15 // pred_check_branch
          %183 = sbr.rel (%p181) target = $region61
        $region60: #{speech_model_forward.12} parent=15 // pred_region
          %p184 = scmp.lt.s32.totalorder %s8, 1
          %s185 = scalar_select %p184, %s8, 1
          %s186 = smul.addr %s185, 4
          %s187 = smul.addr %s186, 4
          %s188 = scalar_lea.vmem %s1, %s187
        $region61: #{speech_model_forward.12} parent=15 // pred_fallthru
          _
      $region16: #{speech_model_forward.12} parent=5 // pred_fallthru
        _
      %p189 = scmp.le.s32.totalorder 1, %s8
      %p190 = scmp.lt.s32.totalorder %s8, 3
      %p191 = pnand %p189, %p190
      %p192 = pneg %p191
      // Predicated region
      $region62: #{speech_model_forward.12} parent=5 // pred_check
        _
      $region63: #{speech_model_forward.12} parent=5 // pred_check_branch
        %194 = sbr.rel (%p191) target = $region65
      $region64: #{speech_model_forward.12} parent=5 // pred_region
        %s195 = ssub.s32 %s8, 1
        %s196 = sand.u32 %s21, 1
        %s197 = sand.u32 %s21, 1
        %s198 = smul.addr %s197, 16
        %s199 = scalar_lea.vmem [#allocation4], %s198
        // Predicated region
        $region66: #{speech_model_forward.12} parent=64 // pred_check
          %p200 = pneg %p34
        $region67: #{speech_model_forward.12} parent=64 // pred_check_branch
          %202 = sbr.rel (%p200) target = $region69
        $region68: #{speech_model_forward.12} parent=64 // pred_region
          _
        $region69: #{speech_model_forward.12} parent=64 // pred_fallthru
          _
        %s203 = sand.u32 %s21, 1
        %s204 = sand.u32 %s21, 1
        %s205 = smul.addr %s204, 16
        %s206 = scalar_lea.vmem [#allocation4], %s205
        %p207 = pneg %p34
        %p208 = pneg %p31
        %p209 = scmp.lt.s32.totalorder %s13, 1
        %s210 = scalar_select %p209, %s13, 1
        %s211 = smul.addr %s210, 4
        %s212 = smul.addr %s211, 4
        %s213 = scalar_lea.vmem %s1, %s212
        %p214 = pneg %p60
        %p215 = pneg %p57
        %p216 = pneg %p86
        %p217 = pneg %p83
        %p218 = scmp.lt.s32.totalorder %s13, 1
        %s219 = scalar_select %p218, %s13, 1
        %s220 = smul.addr %s219, 8
        %s221 = smul.addr %s220, 2
        %s222 = scalar_lea.vmem %s2, %s221
        %p223 = scmp.lt.s32.totalorder %s13, 1
        %s224 = scalar_select %p223, %s13, 1
        %s225 = smul.addr %s224, 4
        %s226 = smul.addr %s225, 4
        %s227 = scalar_lea.vmem %s1, %s226
        %p228 = scmp.lt.s32.totalorder %s13, 1
        %s229 = scalar_select %p228, %s13, 1
        %s230 = smul.addr %s229, 8
        %s231 = smul.addr %s230, 2
        %s232 = scalar_lea.vmem %s2, %s231
        %vm234 = vcmask 254976
        %235 = vst.msk [vmem:[#allocation2] sm:$0x3] %vm234, 0.0
        %236 = vst.msk [vmem:[#allocation3] sm:$0x3] %vm234, 0.0
        %v237 = vld [vmem:[%s227] sm:$0xf]
        %v238 = vld [vmem:[%s227 + $0x4] sm:$0xf]
        %v239 = vld [vmem:[%s227 + $0x8] sm:$0xf]
        %v240 = vld [vmem:[%s227 + $0xc] sm:$0xf]
        loop: start=0, step=1, limit=8
        $region70: #{speech_model_forward.12} parent=64 // loop_pre_header
          _
        $region71: #{speech_model_forward.12} parent=64 // loop_header
          %s242 = sphi 0, %s246
          %p243 = scmp.ge.s32.totalorder %s242, 8
        $region72: #{speech_model_forward.12} parent=64 // loop_header_branch
          %245 = sbr.rel (%p243) target = $region76
        $region73: #{speech_model_forward.12} parent=64 // loop_body
          %p247 = scmp.eq.s32.totalorder %s13, 0
          %s248 = ssub.s32 7, %s242
          %s249 = scalar_select %p247, %s242, %s248
          %s250 = smul.u32 %s249, 2
          %s251 = scalar_lea.vmem %s199, %s250 [#allocation4]
          %v252 = vld [vmem:[%s251] sm:$0x3]
          %v253 = vld [vmem:[#allocation2] sm:$0x3]
          %v254 = vpack.c.bf16 %v253, %v253
          %v259 = vunpack.c.l.b16 %v237
          %v260 = vunpack.c.l.b16 %v238
          %v261 = vunpack.c.l.b16 %v239
          %v262 = vunpack.c.l.b16 %v240
          %v263 = vpack.c.b16 %v260, %v259
          %v264 = vpack.c.b16 %v262, %v261
          %vm267 = vcmask 261120
          %v269 = vsel %vm267, %v254, 0
          %271 = vmatprep.subr.bf16.mxu0 0
          %272 = vmatpush1.bf16.msra.mxu0 %v263
          %273 = vmatprep.subr.bf16.mxu0 0
          %274 = vmatpush1.bf16.msra.mxu0 %v264
          %275 = vmatprep.subr.bf16.mxu0 0
          %276 = vmatpush1.bf16.msra.mxu0 0
          %277 = vmatprep.subr.bf16.mxu0 0
          %278 = vmatpush1.bf16.msra.mxu0 0
          %279 = vmatprep.subr.bf16.mxu0 0
          %280 = vmatpush1.bf16.msra.mxu0 0
          %281 = vmatprep.subr.bf16.mxu0 0
          %282 = vmatpush1.bf16.msra.mxu0 0
          %283 = vmatprep.subr.bf16.mxu0 0
          %284 = vmatpush1.bf16.msra.mxu0 0
          %285 = vmatprep.subr.bf16.mxu0 0
          %286 = vmatpush1.bf16.msra.mxu0 0
          %287 = vmatprep.subr.bf16.mxu0 0
          %288 = vmatpush1.bf16.msra.mxu0 0
          %289 = vmatprep.subr.bf16.mxu0 0
          %290 = vmatpush1.bf16.msra.mxu0 0
          %291 = vmatprep.subr.bf16.mxu0 0
          %292 = vmatpush1.bf16.msra.mxu0 0
          %293 = vmatprep.subr.bf16.mxu0 0
          %294 = vmatpush1.bf16.msra.mxu0 0
          %295 = vmatprep.subr.bf16.mxu0 0
          %296 = vmatpush1.bf16.msra.mxu0 0
          %297 = vmatprep.subr.bf16.mxu0 0
          %298 = vmatpush1.bf16.msra.mxu0 0
          %299 = vmatprep.subr.bf16.mxu0 0
          %300 = vmatpush1.bf16.msra.mxu0 0
          %301 = vmatprep.subr.bf16.mxu0 0
          %302 = vmatpush1.bf16.msra.mxu0 0
          %303 = vmatprep.mubr.bf16.mxu0 0
          %304 = vmatmul.mubr.bf16.gmra.mrb[0].mxu0 %v269
          %v305 = vpop.f32.mrb[0].mxu0
          %v306 = vadd.f32 0.0, %v305
          %v307 = vpop.f32.mrb[0].mxu0
          %v308 = vpop.f32.mrb[0].mxu0
          %v309 = vpop.f32.mrb[0].mxu0
          %310 = vdwg.mxu0
          %v311 = vadd.f32 %v252, %v306
          %v312 = vxor.u32 %v311, 2147483648
          %v313 = vmul.f32 %v312, 1.442695
          %v314 = vpow.pop %v313
          %v315 = vadd.f32 %v314, 1.0
          %v316 = vrcp.pop %v315
          %v317 = vmul.f32 1.0, %v316
          %v318 = vtanh.pop %v311
          %v319 = vld [vmem:[#allocation3] sm:$0x3]
          %321 = vrot.lane.b32.xlu0 %v319, 32
          %v322 = vpop.permute.xlu0 %321
          %v324 = vmul.f32 %v317, %v322
          %326 = vrot.lane.b32.xlu0 %v318, 64
          %v327 = vpop.permute.xlu0 %326
          %v329 = vmul.f32 %v317, %v327
          %331 = vrot.lane.b32.xlu0 %v329, 32
          %v332 = vpop.permute.xlu0 %331
          %v334 = vadd.f32 %v324, %v332
          %v335 = vtanh.pop %v334
          %337 = vrot.lane.b32.xlu0 %v335, 64
          %v338 = vpop.permute.xlu0 %337
          %v340 = vmul.f32 %v317, %v338
          %342 = vrot.lane.b32.xlu0 %v334, 96
          %v343 = vpop.permute.xlu0 %342
          %345 = vst.msk [vmem:[#allocation3] sm:$0x3] %vm234, %v343
          %347 = vrot.lane.b32.xlu0 %v340, 32
          %v348 = vpop.permute.xlu0 %347
          %350 = vst.msk [vmem:[#allocation2] sm:$0x3] %vm234, %v348
          %s351 = scalar_lea.vmem %s232, %s250
          %352 = vst.msk [vmem:[%s351] sm:$0x3] %vm234, %v348
        $region74: #{speech_model_forward.12} parent=64 // loop_footer
          %s246 = sadd.s32 1, %s242
        $region75: #{speech_model_forward.12} parent=64 // loop_footer_branch
          %241 = sbr.rel target = $region71
        $region76: #{speech_model_forward.12} parent=64 // loop_exit
          _
        %p353 = scmp.lt.s32.totalorder %s13, 1
        %s354 = scalar_select %p353, %s13, 1
        %s355 = smul.addr %s354, 8
        %s356 = smul.addr %s355, 2
        %s357 = scalar_lea.vmem %s2, %s356
        // Predicated region
        $region77: #{speech_model_forward.12} parent=64 // pred_check
          %p358 = pneg %p83
        $region78: #{speech_model_forward.12} parent=64 // pred_check_branch
          %360 = sbr.rel (%p358) target = $region80
        $region79: #{speech_model_forward.12} parent=64 // pred_region
          _
        $region80: #{speech_model_forward.12} parent=64 // pred_fallthru
          _
      $region65: #{speech_model_forward.12} parent=5 // pred_fallthru
        _
      %p361 = scmp.le.s32.totalorder 2, %s8
      // Predicated region
      $region81: #{speech_model_forward.12} parent=5 // pred_check
        %p362 = pneg %p361
      $region82: #{speech_model_forward.12} parent=5 // pred_check_branch
        %364 = sbr.rel (%p362) target = $region84
      $region83: #{speech_model_forward.12} parent=5 // pred_region
        %s365 = ssub.s32 %s8, 2
        // Predicated region
        $region85: #{speech_model_forward.12} parent=83 // pred_check
          %p366 = pneg %p89
        $region86: #{speech_model_forward.12} parent=83 // pred_check_branch
          %368 = sbr.rel (%p366) target = $region88
        $region87: #{speech_model_forward.12} parent=83 // pred_region
          %p369 = scmp.lt.s32.totalorder %s14, 1
          %s370 = scalar_select %p369, %s14, 1
          %s371 = smul.addr %s370, 8
          %s372 = smul.addr %s371, 2
          %s373 = scalar_lea.vmem %s2, %s372
        $region88: #{speech_model_forward.12} parent=83 // pred_fallthru
          _
      $region84: #{speech_model_forward.12} parent=5 // pred_fallthru
        _
    $region6: #{speech_model_forward.12} parent=1 // loop_footer
      %s12 = sadd.s32 1, %s8
    $region7: #{speech_model_forward.12} parent=1 // loop_footer_branch
      %7 = sbr.rel target = $region3
    $region8: #{speech_model_forward.12} parent=1 // loop_exit
      _

// kernel: speech_model_forward.11
$region0: #{speech_model_forward.11}
  #allocation0 [shape = 'u32[]', space=smem, size = 0x4, offset = 0x4, fixed_abs, tag = 'smem constant byte address 0x4 - core index']
  #allocation1 [shape = 'u32[144,128]{1,0:T(1,128)}', space=vmem, size = 0x12000, scoped, tag = 'internal scratch']
  %s0 = inlined_call_operand.vmem [shape: f32[16,128], index: 0, kind: input, shape index: {}]
  %s1 = inlined_call_operand.vmem [shape: f32[1,128], index: 1, kind: input, shape index: {}]
  %s2 = inlined_call_operand.vmem [shape: f32[1,128], index: 2, kind: input, shape index: {}]
  %s3 = inlined_call_operand.vmem [shape: bf16[128,256], index: 3, kind: input, shape index: {}]
  %s4 = inlined_call_operand.vmem [shape: f32[1,256], index: 4, kind: input, shape index: {}]
  %s5 = inlined_call_operand.vmem [shape: f32[16,256], index: 5, kind: output, shape index: {}]
  %s6 = sld [smem:[#allocation0]]
  $region30: #{speech_model_forward.11} parent=0
    _
  %s8 = ssub.s32 1, %s6
  %s9 = scalar_select 0, %s8, %s6
  // Predicated region
  $region2: #{speech_model_forward.11} parent=0 // pred_check
    _
  $region3: #{speech_model_forward.11} parent=0 // pred_check_branch
    %11 = sbr.rel (0) target = $region5
  $region4: #{speech_model_forward.11} parent=0 // pred_region
    _
  $region5: #{speech_model_forward.11} parent=0 // pred_fallthru
    _
  // Predicated region
  $region6: #{speech_model_forward.11} parent=0 // pred_check
    _
  $region7: #{speech_model_forward.11} parent=0 // pred_check_branch
    %13 = sbr.rel (0) target = $region9
  $region8: #{speech_model_forward.11} parent=0 // pred_region
    _
  $region9: #{speech_model_forward.11} parent=0 // pred_fallthru
    _
  // Predicated region
  $region10: #{speech_model_forward.11} parent=0 // pred_check
    _
  $region11: #{speech_model_forward.11} parent=0 // pred_check_branch
    %15 = sbr.rel (0) target = $region13
  $region12: #{speech_model_forward.11} parent=0 // pred_region
    _
  $region13: #{speech_model_forward.11} parent=0 // pred_fallthru
    _
  // Predicated region
  $region14: #{speech_model_forward.11} parent=0 // pred_check
    _
  $region15: #{speech_model_forward.11} parent=0 // pred_check_branch
    %17 = sbr.rel (0) target = $region17
  $region16: #{speech_model_forward.11} parent=0 // pred_region
    _
  $region17: #{speech_model_forward.11} parent=0 // pred_fallthru
    _
  // Predicated region
  $region18: #{speech_model_forward.11} parent=0 // pred_check
    _
  $region19: #{speech_model_forward.11} parent=0 // pred_check_branch
    %19 = sbr.rel (0) target = $region21
  $region20: #{speech_model_forward.11} parent=0 // pred_region
    _
  $region21: #{speech_model_forward.11} parent=0 // pred_fallthru
    _
  %v21 = vld [vmem:[%s0] sm:$0xff]
  %v22 = vld [vmem:[%s0 + $0x8] sm:$0xff]
  %23 = vadd.xlane.f32.xlu0 %v21
  %v24 = vpop.xlane.xlu0 %23
  %25 = vadd.xlane.f32.xlu0 %v22
  %v26 = vpop.xlane.xlu0 %25
  %v27 = vmul.f32 %v21, %v21
  %v28 = vmul.f32 %v22, %v22
  %29 = vadd.xlane.f32.xlu0 %v27
  %v30 = vpop.xlane.xlu0 %29
  %31 = vadd.xlane.f32.xlu0 %v28
  %v32 = vpop.xlane.xlu0 %31
  %v33 = vmul.f32 %v24, 0.03125
  %v34 = vmul.f32 %v26, 0.03125
  %v35 = vmul.f32 %v30, 0.03125
  %v36 = vmul.f32 %v32, 0.03125
  %v37 = vmul.f32 %v33, %v33
  %v38 = vmul.f32 %v34, %v34
  %v39 = vsub.f32 %v35, %v37
  %v40 = vsub.f32 %v36, %v38
  %v41 = vmax.f32 %v39, 0.0
  %v42 = vmax.f32 %v40, 0.0
  %v43 = vsub.f32 %v21, %v33
  %v44 = vsub.f32 %v22, %v34
  %v45 = vadd.f32 %v41, 1e-05
  %v46 = vadd.f32 %v42, 1e-05
  %v47 = vrsqrt.pop %v45
  %v48 = vrsqrt.pop %v46
  %v49 = vmul.f32 %v43, %v47
  %v50 = vmul.f32 %v44, %v48
  %v51 = vld [vmem:[%s1] sm:$0x1]
  %v53 = vlaneseq
  %v54 = vshrl.u32 %v53, 7
  %v55 = vsub.s32 0, %v54
  %v56 = vrot.slane %v51, %v55
  %v58 = vmul.f32 %v49, %v56
  %v59 = vmul.f32 %v50, %v56
  %v60 = vld [vmem:[%s2] sm:$0x1]
  %v62 = vlaneseq
  %v63 = vshrl.u32 %v62, 7
  %v64 = vsub.s32 0, %v63
  %v65 = vrot.slane %v60, %v64
  %v67 = vadd.f32 %v58, %v65
  %v68 = vadd.f32 %v59, %v65
  %v69 = vmax.f32 %v67, 0.0
  %v70 = vmax.f32 %v68, 0.0
  %v71 = vpack.c.bf16 %v70, %v69
  %v72 = vld [vmem:[%s3] sm:$0xff]
  %v73 = vld [vmem:[%s3 + $0x8] sm:$0xff]
  %v74 = vld [vmem:[%s3 + $0x10] sm:$0xff]
  %v75 = vld [vmem:[%s3 + $0x18] sm:$0xff]
  %v76 = vld [vmem:[%s3 + $0x20] sm:$0xff]
  %v77 = vld [vmem:[%s3 + $0x28] sm:$0xff]
  %v78 = vld [vmem:[%s3 + $0x30] sm:$0xff]
  %v79 = vld [vmem:[%s3 + $0x38] sm:$0xff]
  %v80 = vld [vmem:[%s3 + $0x40] sm:$0xff]
  %v81 = vld [vmem:[%s3 + $0x48] sm:$0xff]
  %v82 = vld [vmem:[%s3 + $0x50] sm:$0xff]
  %v83 = vld [vmem:[%s3 + $0x58] sm:$0xff]
  %v84 = vld [vmem:[%s3 + $0x60] sm:$0xff]
  %v85 = vld [vmem:[%s3 + $0x68] sm:$0xff]
  %v86 = vld [vmem:[%s3 + $0x70] sm:$0xff]
  %v87 = vld [vmem:[%s3 + $0x78] sm:$0xff]
  %v88 = vld [vmem:[%s4] sm:$0x3]
  %v90 = vlaneseq
  %v91 = vshrl.u32 %v90, 7
  %v92 = vsub.s32 0, %v91
  %v93 = vrot.slane %v88, %v92
  %v94 = vlaneseq
  %v95 = vshrl.u32 %v94, 7
  %v96 = vsub.s32 1, %v95
  %v97 = vrot.slane %v88, %v96
  %v116 = vunpack.c.l.b16 %v72
  %v117 = vunpack.c.h.b16 %v72
  %v118 = vunpack.c.l.b16 %v73
  %v119 = vunpack.c.h.b16 %v73
  %v120 = vunpack.c.l.b16 %v74
  %v121 = vunpack.c.h.b16 %v74
  %v122 = vunpack.c.l.b16 %v75
  %v123 = vunpack.c.h.b16 %v75
  %v124 = vunpack.c.l.b16 %v76
  %v125 = vunpack.c.h.b16 %v76
  %v126 = vunpack.c.l.b16 %v77
  %v127 = vunpack.c.h.b16 %v77
  %v128 = vunpack.c.l.b16 %v78
  %v129 = vunpack.c.h.b16 %v78
  %v130 = vunpack.c.l.b16 %v79
  %v131 = vunpack.c.h.b16 %v79
  %v132 = vunpack.c.l.b16 %v80
  %v133 = vunpack.c.h.b16 %v80
  %v134 = vunpack.c.l.b16 %v81
  %v135 = vunpack.c.h.b16 %v81
  %v136 = vunpack.c.l.b16 %v82
  %v137 = vunpack.c.h.b16 %v82
  %v138 = vunpack.c.l.b16 %v83
  %v139 = vunpack.c.h.b16 %v83
  %v140 = vunpack.c.l.b16 %v84
  %v141 = vunpack.c.h.b16 %v84
  %v142 = vunpack.c.l.b16 %v85
  %v143 = vunpack.c.h.b16 %v85
  %v144 = vunpack.c.l.b16 %v86
  %v145 = vunpack.c.h.b16 %v86
  %v146 = vunpack.c.l.b16 %v87
  %v147 = vunpack.c.h.b16 %v87
  %v148 = vpack.c.b16 %v118, %v116
  %v149 = vpack.c.b16 %v119, %v117
  %v150 = vpack.c.b16 %v122, %v120
  %v151 = vpack.c.b16 %v123, %v121
  %v152 = vpack.c.b16 %v126, %v124
  %v153 = vpack.c.b16 %v127, %v125
  %v154 = vpack.c.b16 %v130, %v128
  %v155 = vpack.c.b16 %v131, %v129
  %v156 = vpack.c.b16 %v134, %v132
  %v157 = vpack.c.b16 %v135, %v133
  %v158 = vpack.c.b16 %v138, %v136
  %v159 = vpack.c.b16 %v139, %v137
  %v160 = vpack.c.b16 %v142, %v140
  %v161 = vpack.c.b16 %v143, %v141
  %v162 = vpack.c.b16 %v146, %v144
  %v163 = vpack.c.b16 %v147, %v145
  %180 = vmatprep.subr.bf16.mxu0 %v149
  %181 = vmatpush1.bf16.msra.mxu0 %v148
  %182 = vmatprep.subr.bf16.mxu0 %v151
  %183 = vmatpush1.bf16.msra.mxu0 %v150
  %184 = vmatprep.subr.bf16.mxu0 %v153
  %185 = vmatpush1.bf16.msra.mxu0 %v152
  %186 = vmatprep.subr.bf16.mxu0 %v155
  %187 = vmatpush1.bf16.msra.mxu0 %v154
  %188 = vmatprep.subr.bf16.mxu0 %v157
  %189 = vmatpush1.bf16.msra.mxu0 %v156
  %190 = vmatprep.subr.bf16.mxu0 %v159
  %191 = vmatpush1.bf16.msra.mxu0 %v158
  %192 = vmatprep.subr.bf16.mxu0 %v161
  %193 = vmatpush1.bf16.msra.mxu0 %v160
  %194 = vmatprep.subr.bf16.mxu0 %v163
  %195 = vmatpush1.bf16.msra.mxu0 %v162
  %196 = vmatprep.subr.bf16.mxu0 0
  %197 = vmatpush1.bf16.msra.mxu0 0
  %198 = vmatprep.subr.bf16.mxu0 0
  %199 = vmatpush1.bf16.msra.mxu0 0
  %200 = vmatprep.subr.bf16.mxu0 0
  %201 = vmatpush1.bf16.msra.mxu0 0
  %202 = vmatprep.subr.bf16.mxu0 0
  %203 = vmatpush1.bf16.msra.mxu0 0
  %204 = vmatprep.subr.bf16.mxu0 0
  %205 = vmatpush1.bf16.msra.mxu0 0
  %206 = vmatprep.subr.bf16.mxu0 0
  %207 = vmatpush1.bf16.msra.mxu0 0
  %208 = vmatprep.subr.bf16.mxu0 0
  %209 = vmatpush1.bf16.msra.mxu0 0
  %210 = vmatprep.subr.bf16.mxu0 0
  %211 = vmatpush1.bf16.msra.mxu0 0
  %212 = vmatprep.mubr.bf16.mxu0 0
  %213 = vmatmul.mubr.bf16.gmra.mrb[0].mxu0 %v71
  %v214 = vpop.f32.mrb[0].mxu0
  %v215 = vadd.f32 %v93, %v214
  %v216 = vpop.f32.mrb[0].mxu0
  %v217 = vadd.f32 %v97, %v216
  %v218 = vpop.f32.mrb[0].mxu0
  %v219 = vadd.f32 %v93, %v218
  %v220 = vpop.f32.mrb[0].mxu0
  %v221 = vadd.f32 %v97, %v220
  %222 = vdwg.mxu0
  %223 = vst [vmem:[%s5] sm:$0xff] %v215
  %224 = vst [vmem:[%s5 + $0x8] sm:$0xff] %v217
  %225 = vst [vmem:[%s5 + $0x10] sm:$0xff] %v219
  %226 = vst [vmem:[%s5 + $0x18] sm:$0xff] %v221
  // Predicated region
  $region22: #{speech_model_forward.11} parent=0 // pred_check
    _
  $region23: #{speech_model_forward.11} parent=0 // pred_check_branch
    %228 = sbr.rel (0) target = $region25
  $region24: #{speech_model_forward.11} parent=0 // pred_region
    _
  $region25: #{speech_model_forward.11} parent=0 // pred_fallthru
    _
  // Predicated region
  $region26: #{speech_model_forward.11} parent=0 // pred_check
    _
  $region27: #{speech_model_forward.11} parent=0 // pred_check_branch
    %230 = sbr.rel (0) target = $region29
  $region28: #{speech_model_forward.11} parent=0 // pred_region
    _
  $region29: #{speech_model_forward.11} parent=0 // pred_fallthru
    _

// kernel: speech_model_forward.8
$region0: #{speech_model_forward.8}
  #allocation0 [shape = 'u32[]', space=smem, size = 0x4, offset = 0x4, fixed_abs, tag = 'smem constant byte address 0x4 - core index']
  #allocation1 [shape = 'u32[144,128]{1,0:T(1,128)}', space=vmem, size = 0x12000, scoped, tag = 'internal scratch']
  #allocation2 [shape = 'bf16[10,10,32]{2,1,0:T(8,128)(2,1)}', space=vmem, size = 0xa000, scoped, tag = 'scratch operand']
  %s0 = inlined_call_operand.vmem [shape: f32[2,8,8,32], index: 0, kind: input, shape index: {}]
  %s1 = inlined_call_operand.vmem [shape: f32[8,1,1], index: 1, kind: input, shape index: {}]
  %s2 = inlined_call_operand.vmem [shape: f32[8,1,1], index: 2, kind: input, shape index: {}]
  %s3 = inlined_call_operand.vmem [shape: bf16[9,32,32], index: 3, kind: input, shape index: {}]
  %s4 = inlined_call_operand.vmem [shape: f32[1,32], index: 4, kind: input, shape index: {}]
  %s5 = inlined_call_operand.vmem [shape: f32[8,1,1], index: 5, kind: input, shape index: {}]
  %s6 = inlined_call_operand.vmem [shape: f32[8,1,1], index: 6, kind: input, shape index: {}]
  %s7 = inlined_call_operand.vmem [shape: bf16[9,32,32], index: 7, kind: input, shape index: {}]
  %s8 = inlined_call_operand.vmem [shape: f32[1,32], index: 8, kind: input, shape index: {}]
  %s9 = inlined_call_operand.vmem [shape: f32[2,8,8,32], index: 9, kind: output, shape index: {}]
  %s10 = sld [smem:[#allocation0]]
  $region69: #{speech_model_forward.8} parent=0
    _
  %s12 = ssub.s32 1, %s10
  %s13 = scalar_select 0, %s12, %s10
  loop: start=0, step=1, limit=4
  $region2: #{speech_model_forward.8} parent=0 // loop_pre_header
    _
  $region3: #{speech_model_forward.8} parent=0 // loop_header
    %s15 = sphi 0, %s19
    %p16 = scmp.ge.s32.totalorder %s15, 4
    %s25 = sphi 0, %s27
    %s28 = sphi 0, %s25
    %s29 = sphi 0, %s28
    %s45 = sphi 0, %s29
    %s49 = sphi 0, %s49
    %s51 = sphi 0, %s49
    %s52 = sphi 0, %s51
    %s66 = sphi 0, %s52
    %s70 = sphi 0, %s70
    %s72 = sphi 0, %s70
    %s73 = sphi 0, %s72
    %s87 = sphi 0, %s73
    %s91 = sphi 0, %s91
    %s93 = sphi 0, %s91
    %s94 = sphi 0, %s93
    %s108 = sphi 0, %s94
    %s112 = sphi 0, %s112
    %s114 = sphi 0, %s112
    %s115 = sphi 0, %s114
    %s129 = sphi 0, %s115
    %s133 = sphi 0, %s133
    %s135 = sphi 0, %s133
    %s136 = sphi 0, %s135
    %s150 = sphi 0, %s136
    %s154 = sphi 0, %s154
    %s156 = sphi 0, %s154
    %s157 = sphi 0, %s156
    %s171 = sphi 0, %s157
    %s175 = sphi 0, %s175
    %s177 = sphi 0, %s175
    %s178 = sphi 0, %s177
    %s192 = sphi 0, %s178
    %s196 = sphi 0, %s196
    %s198 = sphi 0, %s196
    %s199 = sphi 0, %s198
    %s213 = sphi 0, %s199
    %s219 = sphi 0, %s221
    %s222 = sphi 0, %s219
    %s223 = sphi 0, %s222
    %s239 = sphi 0, %s223
  $region4: #{speech_model_forward.8} parent=0 // loop_header_branch
    %18 = sbr.rel (%p16) target = $region8
  $region5: #{speech_model_forward.8} parent=0 // loop_body
    %s20 = ssub.s32 %s15, 1
    %s21 = ssub.s32 %s15, 2
    %s22 = sadd.s32 %s15, 1
    %s23 = ssub.s32 %s15, %s22
    %p24 = scmp.eq.s32.totalorder %s23, 0
    %s26 = sadd.s32 %s25, 1
    %s27 = scalar_select %p24, %s25, %s26
    %p30 = pneg %p24
    %p31 = scmp.eq.s32.totalorder %s15, 1
    %p32 = por %p30, %p31
    %p33 = scmp.ne.s32.totalorder %s25, %s28
    %p34 = scmp.eq.s32.totalorder %s15, 0
    %p35 = por %p33, %p34
    %p36 = scmp.ne.s32.totalorder %s25, %s28
    %p37 = scmp.eq.s32.totalorder %s20, 1
    %p38 = por %p36, %p37
    %p39 = scmp.ne.s32.totalorder %s28, %s29
    %p40 = scmp.eq.s32.totalorder %s20, 0
    %p41 = por %p39, %p40
    %p42 = scmp.ne.s32.totalorder %s28, %s29
    %p43 = scmp.eq.s32.totalorder %s21, 1
    %p44 = por %p42, %p43
    %p46 = scmp.ne.s32.totalorder %s29, %s45
    %p47 = scmp.eq.s32.totalorder %s21, 0
    %p48 = por %p46, %p47
    %s50 = sadd.s32 %s49, 1
    %p53 = scmp.eq.s32.totalorder %s15, 1
    %p54 = scmp.ne.s32.totalorder %s49, %s51
    %p55 = scmp.eq.s32.totalorder %s15, 0
    %p56 = por %p54, %p55
    %p57 = scmp.ne.s32.totalorder %s49, %s51
    %p58 = scmp.eq.s32.totalorder %s20, 1
    %p59 = por %p57, %p58
    %p60 = scmp.ne.s32.totalorder %s51, %s52
    %p61 = scmp.eq.s32.totalorder %s20, 0
    %p62 = por %p60, %p61
    %p63 = scmp.ne.s32.totalorder %s51, %s52
    %p64 = scmp.eq.s32.totalorder %s21, 1
    %p65 = por %p63, %p64
    %p67 = scmp.ne.s32.totalorder %s52, %s66
    %p68 = scmp.eq.s32.totalorder %s21, 0
    %p69 = por %p67, %p68
    %s71 = sadd.s32 %s70, 1
    %p74 = scmp.eq.s32.totalorder %s15, 1
    %p75 = scmp.ne.s32.totalorder %s70, %s72
    %p76 = scmp.eq.s32.totalorder %s15, 0
    %p77 = por %p75, %p76
    %p78 = scmp.ne.s32.totalorder %s70, %s72
    %p79 = scmp.eq.s32.totalorder %s20, 1
    %p80 = por %p78, %p79
    %p81 = scmp.ne.s32.totalorder %s72, %s73
    %p82 = scmp.eq.s32.totalorder %s20, 0
    %p83 = por %p81, %p82
    %p84 = scmp.ne.s32.totalorder %s72, %s73
    %p85 = scmp.eq.s32.totalorder %s21, 1
    %p86 = por %p84, %p85
    %p88 = scmp.ne.s32.totalorder %s73, %s87
    %p89 = scmp.eq.s32.totalorder %s21, 0
    %p90 = por %p88, %p89
    %s92 = sadd.s32 %s91, 1
    %p95 = scmp.eq.s32.totalorder %s15, 1
    %p96 = scmp.ne.s32.totalorder %s91, %s93
    %p97 = scmp.eq.s32.totalorder %s15, 0
    %p98 = por %p96, %p97
    %p99 = scmp.ne.s32.totalorder %s91, %s93
    %p100 = scmp.eq.s32.totalorder %s20, 1
    %p101 = por %p99, %p100
    %p102 = scmp.ne.s32.totalorder %s93, %s94
    %p103 = scmp.eq.s32.totalorder %s20, 0
    %p104 = por %p102, %p103
    %p105 = scmp.ne.s32.totalorder %s93, %s94
    %p106 = scmp.eq.s32.totalorder %s21, 1
    %p107 = por %p105, %p106
    %p109 = scmp.ne.s32.totalorder %s94, %s108
    %p110 = scmp.eq.s32.totalorder %s21, 0
    %p111 = por %p109, %p110
    %s113 = sadd.s32 %s112, 1
    %p116 = scmp.eq.s32.totalorder %s15, 1
    %p117 = scmp.ne.s32.totalorder %s112, %s114
    %p118 = scmp.eq.s32.totalorder %s15, 0
    %p119 = por %p117, %p118
    %p120 = scmp.ne.s32.totalorder %s112, %s114
    %p121 = scmp.eq.s32.totalorder %s20, 1
    %p122 = por %p120, %p121
    %p123 = scmp.ne.s32.totalorder %s114, %s115
    %p124 = scmp.eq.s32.totalorder %s20, 0
    %p125 = por %p123, %p124
    %p126 = scmp.ne.s32.totalorder %s114, %s115
    %p127 = scmp.eq.s32.totalorder %s21, 1
    %p128 = por %p126, %p127
    %p130 = scmp.ne.s32.totalorder %s115, %s129
    %p131 = scmp.eq.s32.totalorder %s21, 0
    %p132 = por %p130, %p131
    %s134 = sadd.s32 %s133, 1
    %p137 = scmp.eq.s32.totalorder %s15, 1
    %p138 = scmp.ne.s32.totalorder %s133, %s135
    %p139 = scmp.eq.s32.totalorder %s15, 0
    %p140 = por %p138, %p139
    %p141 = scmp.ne.s32.totalorder %s133, %s135
    %p142 = scmp.eq.s32.totalorder %s20, 1
    %p143 = por %p141, %p142
    %p144 = scmp.ne.s32.totalorder %s135, %s136
    %p145 = scmp.eq.s32.totalorder %s20, 0
    %p146 = por %p144, %p145
    %p147 = scmp.ne.s32.totalorder %s135, %s136
    %p148 = scmp.eq.s32.totalorder %s21, 1
    %p149 = por %p147, %p148
    %p151 = scmp.ne.s32.totalorder %s136, %s150
    %p152 = scmp.eq.s32.totalorder %s21, 0
    %p153 = por %p151, %p152
    %s155 = sadd.s32 %s154, 1
    %p158 = scmp.eq.s32.totalorder %s15, 1
    %p159 = scmp.ne.s32.totalorder %s154, %s156
    %p160 = scmp.eq.s32.totalorder %s15, 0
    %p161 = por %p159, %p160
    %p162 = scmp.ne.s32.totalorder %s154, %s156
    %p163 = scmp.eq.s32.totalorder %s20, 1
    %p164 = por %p162, %p163
    %p165 = scmp.ne.s32.totalorder %s156, %s157
    %p166 = scmp.eq.s32.totalorder %s20, 0
    %p167 = por %p165, %p166
    %p168 = scmp.ne.s32.totalorder %s156, %s157
    %p169 = scmp.eq.s32.totalorder %s21, 1
    %p170 = por %p168, %p169
    %p172 = scmp.ne.s32.totalorder %s157, %s171
    %p173 = scmp.eq.s32.totalorder %s21, 0
    %p174 = por %p172, %p173
    %s176 = sadd.s32 %s175, 1
    %p179 = scmp.eq.s32.totalorder %s15, 1
    %p180 = scmp.ne.s32.totalorder %s175, %s177
    %p181 = scmp.eq.s32.totalorder %s15, 0
    %p182 = por %p180, %p181
    %p183 = scmp.ne.s32.totalorder %s175, %s177
    %p184 = scmp.eq.s32.totalorder %s20, 1
    %p185 = por %p183, %p184
    %p186 = scmp.ne.s32.totalorder %s177, %s178
    %p187 = scmp.eq.s32.totalorder %s20, 0
    %p188 = por %p186, %p187
    %p189 = scmp.ne.s32.totalorder %s177, %s178
    %p190 = scmp.eq.s32.totalorder %s21, 1
    %p191 = por %p189, %p190
    %p193 = scmp.ne.s32.totalorder %s178, %s192
    %p194 = scmp.eq.s32.totalorder %s21, 0
    %p195 = por %p193, %p194
    %s197 = sadd.s32 %s196, 1
    %p200 = scmp.eq.s32.totalorder %s15, 1
    %p201 = scmp.ne.s32.totalorder %s196, %s198
    %p202 = scmp.eq.s32.totalorder %s15, 0
    %p203 = por %p201, %p202
    %p204 = scmp.ne.s32.totalorder %s196, %s198
    %p205 = scmp.eq.s32.totalorder %s20, 1
    %p206 = por %p204, %p205
    %p207 = scmp.ne.s32.totalorder %s198, %s199
    %p208 = scmp.eq.s32.totalorder %s20, 0
    %p209 = por %p207, %p208
    %p210 = scmp.ne.s32.totalorder %s198, %s199
    %p211 = scmp.eq.s32.totalorder %s21, 1
    %p212 = por %p210, %p211
    %p214 = scmp.ne.s32.totalorder %s199, %s213
    %p215 = scmp.eq.s32.totalorder %s21, 0
    %p216 = por %p214, %p215
    %s217 = ssub.s32 %s15, %s22
    %p218 = scmp.eq.s32.totalorder %s217, 0
    %s220 = sadd.s32 %s219, 1
    %s221 = scalar_select %p218, %s219, %s220
    %p224 = pneg %p218
    %p225 = scmp.eq.s32.totalorder %s15, 1
    %p226 = por %p224, %p225
    %p227 = scmp.ne.s32.totalorder %s219, %s222
    %p228 = scmp.eq.s32.totalorder %s15, 0
    %p229 = por %p227, %p228
    %p230 = scmp.ne.s32.totalorder %s219, %s222
    %p231 = scmp.eq.s32.totalorder %s20, 1
    %p232 = por %p230, %p231
    %p233 = scmp.ne.s32.totalorder %s222, %s223
    %p234 = scmp.eq.s32.totalorder %s20, 0
    %p235 = por %p233, %p234
    %p236 = scmp.ne.s32.totalorder %s222, %s223
    %p237 = scmp.eq.s32.totalorder %s21, 1
    %p238 = por %p236, %p237
    %p240 = scmp.ne.s32.totalorder %s223, %s239
    %p241 = scmp.eq.s32.totalorder %s21, 0
    %p242 = por %p240, %p241
    %p243 = scmp.le.s32.totalorder 1, %s15
    %p244 = scmp.lt.s32.totalorder %s15, 3
    %p245 = pnand %p243, %p244
    %p246 = pneg %p245
    // Predicated region
    $region9: #{speech_model_forward.8} parent=5 // pred_check
      _
    $region10: #{speech_model_forward.8} parent=5 // pred_check_branch
      %248 = sbr.rel (%p245) target = $region12
    $region11: #{speech_model_forward.8} parent=5 // pred_region
      %s249 = ssub.s32 %s15, 1
      // Predicated region
      $region13: #{speech_model_forward.8} parent=11 // pred_check
        %p250 = pneg %p62
      $region14: #{speech_model_forward.8} parent=11 // pred_check_branch
        %252 = sbr.rel (%p250) target = $region16
      $region15: #{speech_model_forward.8} parent=11 // pred_region
        _
      $region16: #{speech_model_forward.8} parent=11 // pred_fallthru
        _
      // Predicated region
      $region17: #{speech_model_forward.8} parent=11 // pred_check
        %p253 = pneg %p83
      $region18: #{speech_model_forward.8} parent=11 // pred_check_branch
        %255 = sbr.rel (%p253) target = $region20
      $region19: #{speech_model_forward.8} parent=11 // pred_region
        _
      $region20: #{speech_model_forward.8} parent=11 // pred_fallthru
        _
      // Predicated region
      $region21: #{speech_model_forward.8} parent=11 // pred_check
        %p256 = pneg %p104
      $region22: #{speech_model_forward.8} parent=11 // pred_check_branch
        %258 = sbr.rel (%p256) target = $region24
      $region23: #{speech_model_forward.8} parent=11 // pred_region
        _
      $region24: #{speech_model_forward.8} parent=11 // pred_fallthru
        _
      // Predicated region
      $region25: #{speech_model_forward.8} parent=11 // pred_check
        %p259 = pneg %p125
      $region26: #{speech_model_forward.8} parent=11 // pred_check_branch
        %261 = sbr.rel (%p259) target = $region28
      $region27: #{speech_model_forward.8} parent=11 // pred_region
        _
      $region28: #{speech_model_forward.8} parent=11 // pred_fallthru
        _
      // Predicated region
      $region29: #{speech_model_forward.8} parent=11 // pred_check
        %p262 = pneg %p146
      $region30: #{speech_model_forward.8} parent=11 // pred_check_branch
        %264 = sbr.rel (%p262) target = $region32
      $region31: #{speech_model_forward.8} parent=11 // pred_region
        _
      $region32: #{speech_model_forward.8} parent=11 // pred_fallthru
        _
      // Predicated region
      $region33: #{speech_model_forward.8} parent=11 // pred_check
        %p265 = pneg %p167
      $region34: #{speech_model_forward.8} parent=11 // pred_check_branch
        %267 = sbr.rel (%p265) target = $region36
      $region35: #{speech_model_forward.8} parent=11 // pred_region
        _
      $region36: #{speech_model_forward.8} parent=11 // pred_fallthru
        _
      // Predicated region
      $region37: #{speech_model_forward.8} parent=11 // pred_check
        %p268 = pneg %p188
      $region38: #{speech_model_forward.8} parent=11 // pred_check_branch
        %270 = sbr.rel (%p268) target = $region40
      $region39: #{speech_model_forward.8} parent=11 // pred_region
        _
      $region40: #{speech_model_forward.8} parent=11 // pred_fallthru
        _
      // Predicated region
      $region41: #{speech_model_forward.8} parent=11 // pred_check
        %p271 = pneg %p209
      $region42: #{speech_model_forward.8} parent=11 // pred_check_branch
        %273 = sbr.rel (%p271) target = $region44
      $region43: #{speech_model_forward.8} parent=11 // pred_region
        _
      $region44: #{speech_model_forward.8} parent=11 // pred_fallthru
        _
    $region12: #{speech_model_forward.8} parent=5 // pred_fallthru
      _
    %p274 = scmp.lt.s32.totalorder %s15, 2
    // Predicated region
    $region45: #{speech_model_forward.8} parent=5 // pred_check
      %p275 = pneg %p274
    $region46: #{speech_model_forward.8} parent=5 // pred_check_branch
      %277 = sbr.rel (%p275) target = $region48
    $region47: #{speech_model_forward.8} parent=5 // pred_region
      // Predicated region
      $region49: #{speech_model_forward.8} parent=47 // pred_check
        %p278 = pneg %p35
      $region50: #{speech_model_forward.8} parent=47 // pred_check_branch
        %280 = sbr.rel (%p278) target = $region52
      $region51: #{speech_model_forward.8} parent=47 // pred_region
        %p281 = scmp.lt.s32.totalorder %s15, 1
        %s282 = scalar_select %p281, %s15, 1
        %s283 = smul.addr %s282, 8
        %s284 = smul.addr %s283, 8
        %s285 = scalar_lea.vmem %s0, %s284
      $region52: #{speech_model_forward.8} parent=47 // pred_fallthru
        _
    $region48: #{speech_model_forward.8} parent=5 // pred_fallthru
      _
    %p286 = scmp.le.s32.totalorder 1, %s15
    %p287 = scmp.lt.s32.totalorder %s15, 3
    %p288 = pnand %p286, %p287
    %p289 = pneg %p288
    // Predicated region
    $region53: #{speech_model_forward.8} parent=5 // pred_check
      _
    $region54: #{speech_model_forward.8} parent=5 // pred_check_branch
      %291 = sbr.rel (%p288) target = $region56
    $region55: #{speech_model_forward.8} parent=5 // pred_region
      %s292 = ssub.s32 %s15, 1
      %p293 = scmp.lt.s32.totalorder %s20, 1
      %s294 = scalar_select %p293, %s20, 1
      %s295 = smul.addr %s294, 8
      %s296 = smul.addr %s295, 8
      %s297 = scalar_lea.vmem %s0, %s296
      %p298 = pneg %p41
      %p299 = pneg %p38
      %p300 = pneg %p62
      %p301 = pneg %p59
      %p302 = pneg %p83
      %p303 = pneg %p80
      %p304 = pneg %p104
      %p305 = pneg %p101
      %p306 = pneg %p125
      %p307 = pneg %p122
      %p308 = pneg %p146
      %p309 = pneg %p143
      %p310 = pneg %p167
      %p311 = pneg %p164
      %p312 = pneg %p188
      %p313 = pneg %p185
      %p314 = pneg %p209
      %p315 = pneg %p206
      %p316 = pneg %p235
      %p317 = pneg %p232
      %p318 = scmp.lt.s32.totalorder %s20, 1
      %s319 = scalar_select %p318, %s20, 1
      %s320 = smul.addr %s319, 8
      %s321 = smul.addr %s320, 8
      %s322 = scalar_lea.vmem %s9, %s321
      %p323 = scmp.lt.s32.totalorder %s20, 1
      %s324 = scalar_select %p323, %s20, 1
      %s325 = smul.addr %s324, 8
      %s326 = smul.addr %s325, 8
      %s327 = scalar_lea.vmem %s0, %s326
      %p328 = scmp.lt.s32.totalorder %s20, 1
      %s329 = scalar_select %p328, %s20, 1
      %s330 = smul.addr %s329, 8
      %s331 = smul.addr %s330, 8
      %s332 = scalar_lea.vmem %s9, %s331
      %v334 = vld [vmem:[%s327] sm:$0xff]
      %v335 = vld [vmem:[%s327 + $0x8] sm:$0xff]
      %v336 = vld [vmem:[%s327 + $0x10] sm:$0xff]
      %v337 = vld [vmem:[%s327 + $0x18] sm:$0xff]
      %v338 = vld [vmem:[%s327 + $0x20] sm:$0xff]
      %v339 = vld [vmem:[%s327 + $0x28] sm:$0xff]
      %v340 = vld [vmem:[%s327 + $0x30] sm:$0xff]
      %v341 = vld [vmem:[%s327 + $0x38] sm:$0xff]
      %vm342 = vcmask 261120
      %v343 = vsel %vm342, %v334, 0.0
      %v344 = vsel %vm342, %v335, 0.0
      %v345 = vadd.f32 %v343, %v344
      %v346 = vsel %vm342, %v336, 0.0
      %v347 = vadd.f32 %v345, %v346
      %v348 = vsel %vm342, %v337, 0.0
      %v349 = vadd.f32 %v347, %v348
      %v350 = vsel %vm342, %v338, 0.0
      %v351 = vadd.f32 %v349, %v350
      %v352 = vsel %vm342, %v339, 0.0
      %v353 = vadd.f32 %v351, %v352
      %v354 = vsel %vm342, %v340, 0.0
      %v355 = vadd.f32 %v353, %v354
      %v356 = vsel %vm342, %v341, 0.0
      %v357 = vadd.f32 %v355, %v356
      %v358 = vrcp.pop 8.0
      %v359 = vmul.f32 %v357, %v358
      %v360 = vsub.f32 %v334, %v359
      %v361 = vsub.f32 %v335, %v359
      %v362 = vsub.f32 %v336, %v359
      %v363 = vsub.f32 %v337, %v359
      %v364 = vsub.f32 %v338, %v359
      %v365 = vsub.f32 %v339, %v359
      %v366 = vsub.f32 %v340, %v359
      %v367 = vsub.f32 %v341, %v359
      %v368 = vmul.f32 %v360, %v360
      %v369 = vmul.f32 %v361, %v361
      %v370 = vmul.f32 %v362, %v362
      %v371 = vmul.f32 %v363, %v363
      %v372 = vmul.f32 %v364, %v364
      %v373 = vmul.f32 %v365, %v365
      %v374 = vmul.f32 %v366, %v366
      %v375 = vmul.f32 %v367, %v367
      %v376 = vsel %vm342, %v368, 0.0
      %v377 = vsel %vm342, %v369, 0.0
      %v378 = vadd.f32 %v376, %v377
      %v379 = vsel %vm342, %v370, 0.0
      %v380 = vadd.f32 %v378, %v379
      %v381 = vsel %vm342, %v371, 0.0
      %v382 = vadd.f32 %v380, %v381
      %v383 = vsel %vm342, %v372, 0.0
      %v384 = vadd.f32 %v382, %v383
      %v385 = vsel %vm342, %v373, 0.0
      %v386 = vadd.f32 %v384, %v385
      %v387 = vsel %vm342, %v374, 0.0
      %v388 = vadd.f32 %v386, %v387
      %v389 = vsel %vm342, %v375, 0.0
      %v390 = vadd.f32 %v388, %v389
      %v391 = vmul.f32 %v390, %v358
      %v392 = vadd.f32 %v391, 1e-05
      %v393 = vrsqrt.pop %v392
      %v394 = vmul.f32 %v360, %v393
      %v395 = vmul.f32 %v361, %v393
      %v396 = vmul.f32 %v362, %v393
      %v397 = vmul.f32 %v363, %v393
      %v398 = vmul.f32 %v364, %v393
      %v399 = vmul.f32 %v365, %v393
      %v400 = vmul.f32 %v366, %v393
      %v401 = vmul.f32 %v367, %v393
      %v402 = vld [vmem:[%s1] sm:$0x1]
      %v403 = vld [vmem:[%s1 + $0x1] sm:$0x1]
      %v404 = vld [vmem:[%s1 + $0x2] sm:$0x1]
      %v405 = vld [vmem:[%s1 + $0x3] sm:$0x1]
      %v406 = vld [vmem:[%s1 + $0x4] sm:$0x1]
      %v407 = vld [vmem:[%s1 + $0x5] sm:$0x1]
      %v408 = vld [vmem:[%s1 + $0x6] sm:$0x1]
      %v409 = vld [vmem:[%s1 + $0x7] sm:$0x1]
      %v418 = vlaneseq
      %v419 = vshrl.u32 %v418, 7
      %v420 = vsub.s32 0, %v419
      %v421 = vrot.slane %v402, %v420
      %v422 = vlaneseq
      %v423 = vshrl.u32 %v422, 7
      %v424 = vsub.s32 0, %v423
      %v425 = vrot.slane %v403, %v424
      %v426 = vlaneseq
      %v427 = vshrl.u32 %v426, 7
      %v428 = vsub.s32 0, %v427
      %v429 = vrot.slane %v404, %v428
      %v430 = vlaneseq
      %v431 = vshrl.u32 %v430, 7
      %v432 = vsub.s32 0, %v431
      %v433 = vrot.slane %v405, %v432
      %v434 = vlaneseq
      %v435 = vshrl.u32 %v434, 7
      %v436 = vsub.s32 0, %v435
      %v437 = vrot.slane %v406, %v436
      %v438 = vlaneseq
      %v439 = vshrl.u32 %v438, 7
      %v440 = vsub.s32 0, %v439
      %v441 = vrot.slane %v407, %v440
      %v442 = vlaneseq
      %v443 = vshrl.u32 %v442, 7
      %v444 = vsub.s32 0, %v443
      %v445 = vrot.slane %v408, %v444
      %v446 = vlaneseq
      %v447 = vshrl.u32 %v446, 7
      %v448 = vsub.s32 0, %v447
      %v449 = vrot.slane %v409, %v448
      %450 = vset.pattern.permute.xlu0 0
      %451 = vperm.xlu0 %450, %v421
      %v452 = vpop.permute.xlu0 %451
      %454 = vset.pattern.permute.xlu0 0
      %455 = vperm.xlu0 %454, %v425
      %v456 = vpop.permute.xlu0 %455
      %458 = vset.pattern.permute.xlu0 0
      %459 = vperm.xlu0 %458, %v429
      %v460 = vpop.permute.xlu0 %459
      %462 = vset.pattern.permute.xlu0 0
      %463 = vperm.xlu0 %462, %v433
      %v464 = vpop.permute.xlu0 %463
      %466 = vset.pattern.permute.xlu0 0
      %467 = vperm.xlu0 %466, %v437
      %v468 = vpop.permute.xlu0 %467
      %470 = vset.pattern.permute.xlu0 0
      %471 = vperm.xlu0 %470, %v441
      %v472 = vpop.permute.xlu0 %471
      %474 = vset.pattern.permute.xlu0 0
      %475 = vperm.xlu0 %474, %v445
      %v476 = vpop.permute.xlu0 %475
      %478 = vset.pattern.permute.xlu0 0
      %479 = vperm.xlu0 %478, %v449
      %v480 = vpop.permute.xlu0 %479
      %v482 = vmul.f32 %v394, %v452
      %v483 = vmul.f32 %v395, %v456
      %v484 = vmul.f32 %v396, %v460
      %v485 = vmul.f32 %v397, %v464
      %v486 = vmul.f32 %v398, %v468
      %v487 = vmul.f32 %v399, %v472
      %v488 = vmul.f32 %v400, %v476
      %v489 = vmul.f32 %v401, %v480
      %v490 = vld [vmem:[%s2] sm:$0x1]
      %v491 = vld [vmem:[%s2 + $0x1] sm:$0x1]
      %v492 = vld [vmem:[%s2 + $0x2] sm:$0x1]
      %v493 = vld [vmem:[%s2 + $0x3] sm:$0x1]
      %v494 = vld [vmem:[%s2 + $0x4] sm:$0x1]
      %v495 = vld [vmem:[%s2 + $0x5] sm:$0x1]
      %v496 = vld [vmem:[%s2 + $0x6] sm:$0x1]
      %v497 = vld [vmem:[%s2 + $0x7] sm:$0x1]
      %v506 = vlaneseq
      %v507 = vshrl.u32 %v506, 7
      %v508 = vsub.s32 0, %v507
      %v509 = vrot.slane %v490, %v508
      %v510 = vlaneseq
      %v511 = vshrl.u32 %v510, 7
      %v512 = vsub.s32 0, %v511
      %v513 = vrot.slane %v491, %v512
      %v514 = vlaneseq
      %v515 = vshrl.u32 %v514, 7
      %v516 = vsub.s32 0, %v515
      %v517 = vrot.slane %v492, %v516
      %v518 = vlaneseq
      %v519 = vshrl.u32 %v518, 7
      %v520 = vsub.s32 0, %v519
      %v521 = vrot.slane %v493, %v520
      %v522 = vlaneseq
      %v523 = vshrl.u32 %v522, 7
      %v524 = vsub.s32 0, %v523
      %v525 = vrot.slane %v494, %v524
      %v526 = vlaneseq
      %v527 = vshrl.u32 %v526, 7
      %v528 = vsub.s32 0, %v527
      %v529 = vrot.slane %v495, %v528
      %v530 = vlaneseq
      %v531 = vshrl.u32 %v530, 7
      %v532 = vsub.s32 0, %v531
      %v533 = vrot.slane %v496, %v532
      %v534 = vlaneseq
      %v535 = vshrl.u32 %v534, 7
      %v536 = vsub.s32 0, %v535
      %v537 = vrot.slane %v497, %v536
      %538 = vset.pattern.permute.xlu0 0
      %539 = vperm.xlu0 %538, %v509
      %v540 = vpop.permute.xlu0 %539
      %542 = vset.pattern.permute.xlu0 0
      %543 = vperm.xlu0 %542, %v513
      %v544 = vpop.permute.xlu0 %543
      %546 = vset.pattern.permute.xlu0 0
      %547 = vperm.xlu0 %546, %v517
      %v548 = vpop.permute.xlu0 %547
      %550 = vset.pattern.permute.xlu0 0
      %551 = vperm.xlu0 %550, %v521
      %v552 = vpop.permute.xlu0 %551
      %554 = vset.pattern.permute.xlu0 0
      %555 = vperm.xlu0 %554, %v525
      %v556 = vpop.permute.xlu0 %555
      %558 = vset.pattern.permute.xlu0 0
      %559 = vperm.xlu0 %558, %v529
      %v560 = vpop.permute.xlu0 %559
      %562 = vset.pattern.permute.xlu0 0
      %563 = vperm.xlu0 %562, %v533
      %v564 = vpop.permute.xlu0 %563
      %566 = vset.pattern.permute.xlu0 0
      %567 = vperm.xlu0 %566, %v537
      %v568 = vpop.permute.xlu0 %567
      %v570 = vadd.f32 %v482, %v540
      %v571 = vadd.f32 %v483, %v544
      %v572 = vadd.f32 %v484, %v548
      %v573 = vadd.f32 %v485, %v552
      %v574 = vadd.f32 %v486, %v556
      %v575 = vadd.f32 %v487, %v560
      %v576 = vadd.f32 %v488, %v564
      %v577 = vadd.f32 %v489, %v568
      %v578 = vmax.f32 %v570, 0.0
      %v579 = vmax.f32 %v571, 0.0
      %v580 = vmax.f32 %v572, 0.0
      %v581 = vmax.f32 %v573, 0.0
      %v582 = vmax.f32 %v574, 0.0
      %v583 = vmax.f32 %v575, 0.0
      %v584 = vmax.f32 %v576, 0.0
      %v585 = vmax.f32 %v577, 0.0
      %vm586 = vcmask 257024
      %587 = vst.msk [vmem:[#allocation2] sm:$0xf] %vm586, 0
      %vm588 = vcmask 253952
      %589 = vst.msk [vmem:[#allocation2 + $0x4] sm:$0x1] %vm588, 0
      %590 = vst.msk [vmem:[#allocation2 + $0x8] sm:$0xf] %vm586, 0
      %591 = vst.msk [vmem:[#allocation2 + $0xc] sm:$0x1] %vm588, 0
      %592 = vst.msk [vmem:[#allocation2 + $0x10] sm:$0xf] %vm586, 0
      %593 = vst.msk [vmem:[#allocation2 + $0x14] sm:$0x1] %vm588, 0
      %594 = vst.msk [vmem:[#allocation2 + $0x18] sm:$0xf] %vm586, 0
      %595 = vst.msk [vmem:[#allocation2 + $0x1c] sm:$0x1] %vm588, 0
      %596 = vst.msk [vmem:[#allocation2 + $0x20] sm:$0xf] %vm586, 0
      %597 = vst.msk [vmem:[#allocation2 + $0x24] sm:$0x1] %vm588, 0
      %598 = vst.msk [vmem:[#allocation2 + $0x28] sm:$0xf] %vm586, 0
      %599 = vst.msk [vmem:[#allocation2 + $0x2c] sm:$0x1] %vm588, 0
      %600 = vst.msk [vmem:[#allocation2 + $0x30] sm:$0xf] %vm586, 0
      %601 = vst.msk [vmem:[#allocation2 + $0x34] sm:$0x1] %vm588, 0
      %602 = vst.msk [vmem:[#allocation2 + $0x38] sm:$0xf] %vm586, 0
      %603 = vst.msk [vmem:[#allocation2 + $0x3c] sm:$0x1] %vm588, 0
      %604 = vst.msk [vmem:[#allocation2 + $0x40] sm:$0xf] %vm586, 0
      %605 = vst.msk [vmem:[#allocation2 + $0x44] sm:$0x1] %vm588, 0
      %606 = vst.msk [vmem:[#allocation2 + $0x48] sm:$0xf] %vm586, 0
      %607 = vst.msk [vmem:[#allocation2 + $0x4c] sm:$0x1] %vm588, 0
      %v608 = vpack.c.bf16 %v578, %v578
      %v609 = vpack.c.bf16 %v579, %v579
      %v610 = vpack.c.bf16 %v580, %v580
      %v611 = vpack.c.bf16 %v581, %v581
      %v612 = vpack.c.bf16 %v582, %v582
      %v613 = vpack.c.bf16 %v583, %v583
      %v614 = vpack.c.bf16 %v584, %v584
      %v615 = vpack.c.bf16 %v585, %v585
      %v624 = vunpack.c.l.b16 %v608
      %v625 = vunpack.c.l.b16 %v609
      %v626 = vunpack.c.l.b16 %v610
      %v627 = vunpack.c.l.b16 %v611
      %v628 = vunpack.c.l.b16 %v612
      %v629 = vunpack.c.l.b16 %v613
      %v630 = vunpack.c.l.b16 %v614
      %v631 = vunpack.c.l.b16 %v615
      %v632 = vpack.c.b16 %v624, %v624
      %v633 = vpack.c.b16 %v625, %v625
      %v634 = vpack.c.b16 %v626, %v626
      %v635 = vpack.c.b16 %v627, %v627
      %v636 = vpack.c.b16 %v628, %v628
      %v637 = vpack.c.b16 %v629, %v629
      %v638 = vpack.c.b16 %v630, %v630
      %v639 = vpack.c.b16 %v631, %v631
      %v641 = vshrl.u32 %v632, 16
      %v643 = vrot.slane %v641, 7
      %v644 = vshll.u32 %v632, 16
      %v646 = vor.u32 %v643, %v644
      %v647 = vrot.slane %v643, 4
      %v649 = vshrl.u32 %v633, 16
      %v651 = vrot.slane %v649, 7
      %v652 = vshll.u32 %v633, 16
      %v654 = vor.u32 %v651, %v652
      %v655 = vrot.slane %v651, 4
      %v657 = vshrl.u32 %v634, 16
      %v659 = vrot.slane %v657, 7
      %v660 = vshll.u32 %v634, 16
      %v662 = vor.u32 %v659, %v660
      %v663 = vrot.slane %v659, 4
      %v665 = vshrl.u32 %v635, 16
      %v667 = vrot.slane %v665, 7
      %v668 = vshll.u32 %v635, 16
      %v670 = vor.u32 %v667, %v668
      %v671 = vrot.slane %v667, 4
      %v673 = vshrl.u32 %v636, 16
      %v675 = vrot.slane %v673, 7
      %v676 = vshll.u32 %v636, 16
      %v678 = vor.u32 %v675, %v676
      %v679 = vrot.slane %v675, 4
      %v681 = vshrl.u32 %v637, 16
      %v683 = vrot.slane %v681, 7
      %v684 = vshll.u32 %v637, 16
      %v686 = vor.u32 %v683, %v684
      %v687 = vrot.slane %v683, 4
      %v689 = vshrl.u32 %v638, 16
      %v691 = vrot.slane %v689, 7
      %v692 = vshll.u32 %v638, 16
      %v694 = vor.u32 %v691, %v692
      %v695 = vrot.slane %v691, 4
      %v697 = vshrl.u32 %v639, 16
      %v699 = vrot.slane %v697, 7
      %v700 = vshll.u32 %v639, 16
      %v702 = vor.u32 %v699, %v700
      %v703 = vrot.slane %v699, 4
      %s720 = scalar_lea.vmem [#allocation2], 8
      %vm721 = vcmask 257024
      %vm722 = vsmask.f32 7938
      %vm723 = vmand %vm721, %vm722
      %v724 = vld [vmem:[%s720] sm:$0xf]
      %v725 = vsel %vm723, %v646, %v724
      %726 = vst [vmem:[%s720] sm:$0xf] %v725
      %vm727 = vcmask 253952
      %vm728 = vsmask.f32 256
      %vm729 = vmand %vm727, %vm728
      %v730 = vld [vmem:[%s720 + $0x4] sm:$0x1]
      %v731 = vsel %vm729, %v647, %v730
      %732 = vst [vmem:[%s720 + $0x4] sm:$0x1] %v731
      %v733 = vld [vmem:[%s720 + $0x8] sm:$0xf]
      %v734 = vsel %vm723, %v654, %v733
      %735 = vst [vmem:[%s720 + $0x8] sm:$0xf] %v734
      %v736 = vld [vmem:[%s720 + $0xc] sm:$0x1]
      %v737 = vsel %vm729, %v655, %v736
      %738 = vst [vmem:[%s720 + $0xc] sm:$0x1] %v737
      %v739 = vld [vmem:[%s720 + $0x10] sm:$0xf]
      %v740 = vsel %vm723, %v662, %v739
      %741 = vst [vmem:[%s720 + $0x10] sm:$0xf] %v740
      %v742 = vld [vmem:[%s720 + $0x14] sm:$0x1]
      %v743 = vsel %vm729, %v663, %v742
      %744 = vst [vmem:[%s720 + $0x14] sm:$0x1] %v743
      %v745 = vld [vmem:[%s720 + $0x18] sm:$0xf]
      %v746 = vsel %vm723, %v670, %v745
      %747 = vst [vmem:[%s720 + $0x18] sm:$0xf] %v746
      %v748 = vld [vmem:[%s720 + $0x1c] sm:$0x1]
      %v749 = vsel %vm729, %v671, %v748
      %750 = vst [vmem:[%s720 + $0x1c] sm:$0x1] %v749
      %v751 = vld [vmem:[%s720 + $0x20] sm:$0xf]
      %v752 = vsel %vm723, %v678, %v751
      %753 = vst [vmem:[%s720 + $0x20] sm:$0xf] %v752
      %v754 = vld [vmem:[%s720 + $0x24] sm:$0x1]
      %v755 = vsel %vm729, %v679, %v754
      %756 = vst [vmem:[%s720 + $0x24] sm:$0x1] %v755
      %v757 = vld [vmem:[%s720 + $0x28] sm:$0xf]
      %v758 = vsel %vm723, %v686, %v757
      %759 = vst [vmem:[%s720 + $0x28] sm:$0xf] %v758
      %v760 = vld [vmem:[%s720 + $0x2c] sm:$0x1]
      %v761 = vsel %vm729, %v687, %v760
      %762 = vst [vmem:[%s720 + $0x2c] sm:$0x1] %v761
      %v763 = vld [vmem:[%s720 + $0x30] sm:$0xf]
      %v764 = vsel %vm723, %v694, %v763
      %765 = vst [vmem:[%s720 + $0x30] sm:$0xf] %v764
      %v766 = vld [vmem:[%s720 + $0x34] sm:$0x1]
      %v767 = vsel %vm729, %v695, %v766
      %768 = vst [vmem:[%s720 + $0x34] sm:$0x1] %v767
      %v769 = vld [vmem:[%s720 + $0x38] sm:$0xf]
      %v770 = vsel %vm723, %v702, %v769
      %771 = vst [vmem:[%s720 + $0x38] sm:$0xf] %v770
      %v772 = vld [vmem:[%s720 + $0x3c] sm:$0x1]
      %v773 = vsel %vm729, %v703, %v772
      %774 = vst [vmem:[%s720 + $0x3c] sm:$0x1] %v773
      %v775 = vld [vmem:[#allocation2] sm:$0xf]
      %v776 = vld [vmem:[#allocation2 + $0x8] sm:$0xf]
      %v777 = vld [vmem:[#allocation2 + $0x10] sm:$0xf]
      %v778 = vld [vmem:[#allocation2 + $0x18] sm:$0xf]
      %v779 = vld [vmem:[#allocation2 + $0x20] sm:$0xf]
      %v780 = vld [vmem:[#allocation2 + $0x28] sm:$0xf]
      %v781 = vld [vmem:[#allocation2 + $0x30] sm:$0xf]
      %v782 = vld [vmem:[#allocation2 + $0x38] sm:$0xf]
      %v783 = vld [vmem:[%s3] sm:$0xf]
      %v784 = vld [vmem:[%s3 + $0x4] sm:$0xf]
      %v785 = vld [vmem:[%s3 + $0x8] sm:$0xf]
      %v786 = vld [vmem:[%s3 + $0xc] sm:$0xf]
      %v787 = vld [vmem:[#allocation2 + $0x4] sm:$0x1]
      %v788 = vld [vmem:[#allocation2 + $0xc] sm:$0x1]
      %v789 = vld [vmem:[#allocation2 + $0x14] sm:$0x1]
      %v790 = vld [vmem:[#allocation2 + $0x1c] sm:$0x1]
      %v791 = vld [vmem:[#allocation2 + $0x24] sm:$0x1]
      %v792 = vld [vmem:[#allocation2 + $0x2c] sm:$0x1]
      %v793 = vld [vmem:[#allocation2 + $0x34] sm:$0x1]
      %v794 = vld [vmem:[#allocation2 + $0x3c] sm:$0x1]
      %vm795 = vsmask.f32 3328
      %vm796 = vsmask.f32 7440
      %vm797 = vmor %vm795, %vm796
      %v799 = vshrl.u32 %v775, 16
      %v801 = vrot.slane %v799, 4
      %v802 = vshll.u32 %v775, 16
      %v804 = vrot.slane %v802, 5
      %v805 = vor.u32 %v801, %v804
      %v806 = vrot.slane %v805, 4
      %v808 = vshll.u32 %v787, 16
      %v810 = vrot.slane %v808, 5
      %v811 = vsel %vm797, %v806, %v810
      %v813 = vshrl.u32 %v776, 16
      %v815 = vrot.slane %v813, 4
      %v816 = vshll.u32 %v776, 16
      %v818 = vrot.slane %v816, 5
      %v819 = vor.u32 %v815, %v818
      %v820 = vrot.slane %v819, 4
      %v822 = vshll.u32 %v788, 16
      %v824 = vrot.slane %v822, 5
      %v825 = vsel %vm797, %v820, %v824
      %v827 = vshrl.u32 %v777, 16
      %v829 = vrot.slane %v827, 4
      %v830 = vshll.u32 %v777, 16
      %v832 = vrot.slane %v830, 5
      %v833 = vor.u32 %v829, %v832
      %v834 = vrot.slane %v833, 4
      %v836 = vshll.u32 %v789, 16
      %v838 = vrot.slane %v836, 5
      %v839 = vsel %vm797, %v834, %v838
      %v841 = vshrl.u32 %v778, 16
      %v843 = vrot.slane %v841, 4
      %v844 = vshll.u32 %v778, 16
      %v846 = vrot.slane %v844, 5
      %v847 = vor.u32 %v843, %v846
      %v848 = vrot.slane %v847, 4
      %v850 = vshll.u32 %v790, 16
      %v852 = vrot.slane %v850, 5
      %v853 = vsel %vm797, %v848, %v852
      %v855 = vshrl.u32 %v779, 16
      %v857 = vrot.slane %v855, 4
      %v858 = vshll.u32 %v779, 16
      %v860 = vrot.slane %v858, 5
      %v861 = vor.u32 %v857, %v860
      %v862 = vrot.slane %v861, 4
      %v864 = vshll.u32 %v791, 16
      %v866 = vrot.slane %v864, 5
      %v867 = vsel %vm797, %v862, %v866
      %v869 = vshrl.u32 %v780, 16
      %v871 = vrot.slane %v869, 4
      %v872 = vshll.u32 %v780, 16
      %v874 = vrot.slane %v872, 5
      %v875 = vor.u32 %v871, %v874
      %v876 = vrot.slane %v875, 4
      %v878 = vshll.u32 %v792, 16
      %v880 = vrot.slane %v878, 5
      %v881 = vsel %vm797, %v876, %v880
      %v883 = vshrl.u32 %v781, 16
      %v885 = vrot.slane %v883, 4
      %v886 = vshll.u32 %v781, 16
      %v888 = vrot.slane %v886, 5
      %v889 = vor.u32 %v885, %v888
      %v890 = vrot.slane %v889, 4
      %v892 = vshll.u32 %v793, 16
      %v894 = vrot.slane %v892, 5
      %v895 = vsel %vm797, %v890, %v894
      %v897 = vshrl.u32 %v782, 16
      %v899 = vrot.slane %v897, 4
      %v900 = vshll.u32 %v782, 16
      %v902 = vrot.slane %v900, 5
      %v903 = vor.u32 %v899, %v902
      %v904 = vrot.slane %v903, 4
      %v906 = vshll.u32 %v794, 16
      %v908 = vrot.slane %v906, 5
      %v909 = vsel %vm797, %v904, %v908
      %s910 = scalar_lea.vmem %s3, 16
      %v911 = vld [vmem:[%s910] sm:$0xf]
      %v912 = vld [vmem:[%s910 + $0x4] sm:$0xf]
      %v913 = vld [vmem:[%s910 + $0x8] sm:$0xf]
      %v914 = vld [vmem:[%s910 + $0xc] sm:$0xf]
      %v915 = vunpack.c.l.b16 %v811
      %v916 = vunpack.c.l.b16 %v825
      %v917 = vunpack.c.l.b16 %v839
      %v918 = vunpack.c.l.b16 %v853
      %v919 = vunpack.c.l.b16 %v867
      %v920 = vunpack.c.l.b16 %v881
      %v921 = vunpack.c.l.b16 %v895
      %v922 = vunpack.c.l.b16 %v909
      %v923 = vpack.c.b16 %v916, %v915
      %v924 = vpack.c.b16 %v918, %v917
      %v925 = vpack.c.b16 %v920, %v919
      %v926 = vpack.c.b16 %v922, %v921
      %v931 = vunpack.c.l.b16 %v911
      %v932 = vunpack.c.l.b16 %v912
      %v933 = vunpack.c.l.b16 %v913
      %v934 = vunpack.c.l.b16 %v914
      %v935 = vpack.c.b16 %v932, %v931
      %v936 = vpack.c.b16 %v934, %v933
      %v940 = vsel %vm342, %v923, 0
      %v943 = vsel %vm342, %v924, 0
      %v946 = vsel %vm342, %v925, 0
      %v949 = vsel %vm342, %v926, 0
      %951 = vmatprep.subr.bf16.mxu0 0
      %952 = vmatpush1.bf16.msra.mxu0 %v935
      %953 = vmatprep.subr.bf16.mxu0 0
      %954 = vmatpush1.bf16.msra.mxu0 %v936
      %955 = vmatprep.subr.bf16.mxu0 0
      %956 = vmatpush1.bf16.msra.mxu0 0
      %957 = vmatprep.subr.bf16.mxu0 0
      %958 = vmatpush1.bf16.msra.mxu0 0
      %959 = vmatprep.subr.bf16.mxu0 0
      %960 = vmatpush1.bf16.msra.mxu0 0
      %961 = vmatprep.subr.bf16.mxu0 0
      %962 = vmatpush1.bf16.msra.mxu0 0
      %963 = vmatprep.subr.bf16.mxu0 0
      %964 = vmatpush1.bf16.msra.mxu0 0
      %965 = vmatprep.subr.bf16.mxu0 0
      %966 = vmatpush1.bf16.msra.mxu0 0
      %967 = vmatprep.subr.bf16.mxu0 0
      %968 = vmatpush1.bf16.msra.mxu0 0
      %969 = vmatprep.subr.bf16.mxu0 0
      %970 = vmatpush1.bf16.msra.mxu0 0
      %971 = vmatprep.subr.bf16.mxu0 0
      %972 = vmatpush1.bf16.msra.mxu0 0
      %973 = vmatprep.subr.bf16.mxu0 0
      %974 = vmatpush1.bf16.msra.mxu0 0
      %975 = vmatprep.subr.bf16.mxu0 0
      %976 = vmatpush1.bf16.msra.mxu0 0
      %977 = vmatprep.subr.bf16.mxu0 0
      %978 = vmatpush1.bf16.msra.mxu0 0
      %979 = vmatprep.subr.bf16.mxu0 0
      %980 = vmatpush1.bf16.msra.mxu0 0
      %981 = vmatprep.subr.bf16.mxu0 0
      %982 = vmatpush1.bf16.msra.mxu0 0
      %983 = vmatprep.mubr.bf16.mxu0 0
      %984 = vmatmul.mubr.bf16.gmra.mrb[0].mxu0 %v940
      %v985 = vpop.f32.mrb[0].mxu0
      %v986 = vadd.f32 0.0, %v985
      %v987 = vpop.f32.mrb[0].mxu0
      %v988 = vpop.f32.mrb[0].mxu0
      %v989 = vadd.f32 0.0, %v988
      %v990 = vpop.f32.mrb[0].mxu0
      %991 = vmatprep.mubr.bf16.mxu0 0
      %992 = vmatmul.mubr.bf16.gmra.mrb[0].mxu0 %v943
      %v993 = vpop.f32.mrb[0].mxu0
      %v994 = vadd.f32 0.0, %v993
      %v995 = vpop.f32.mrb[0].mxu0
      %v996 = vpop.f32.mrb[0].mxu0
      %v997 = vadd.f32 0.0, %v996
      %v998 = vpop.f32.mrb[0].mxu0
      %999 = vmatprep.mubr.bf16.mxu0 0
      %1000 = vmatmul.mubr.bf16.gmra.mrb[0].mxu0 %v946
      %v1001 = vpop.f32.mrb[0].mxu0
      %v1002 = vadd.f32 0.0, %v1001
      %v1003 = vpop.f32.mrb[0].mxu0
      %v1004 = vpop.f32.mrb[0].mxu0
      %v1005 = vadd.f32 0.0, %v1004
      %v1006 = vpop.f32.mrb[0].mxu0
      %1007 = vmatprep.mubr.bf16.mxu0 0
      %1008 = vmatmul.mubr.bf16.gmra.mrb[0].mxu0 %v949
      %v1009 = vpop.f32.mrb[0].mxu0
      %v1010 = vadd.f32 0.0, %v1009
      %v1011 = vpop.f32.mrb[0].mxu0
      %v1012 = vpop.f32.mrb[0].mxu0
      %v1013 = vadd.f32 0.0, %v1012
      %v1014 = vpop.f32.mrb[0].mxu0
      %1015 = vdwg.mxu0
      %v1024 = vunpack.c.l.b16 %v775
      %v1025 = vunpack.c.l.b16 %v776
      %v1026 = vunpack.c.l.b16 %v777
      %v1027 = vunpack.c.l.b16 %v778
      %v1028 = vunpack.c.l.b16 %v779
      %v1029 = vunpack.c.l.b16 %v780
      %v1030 = vunpack.c.l.b16 %v781
      %v1031 = vunpack.c.l.b16 %v782
      %v1032 = vpack.c.b16 %v1025, %v1024
      %v1033 = vpack.c.b16 %v1027, %v1026
      %v1034 = vpack.c.b16 %v1029, %v1028
      %v1035 = vpack.c.b16 %v1031, %v1030
      %v1040 = vunpack.c.l.b16 %v783
      %v1041 = vunpack.c.l.b16 %v784
      %v1042 = vunpack.c.l.b16 %v785
      %v1043 = vunpack.c.l.b16 %v786
      %v1044 = vpack.c.b16 %v1041, %v1040
      %v1045 = vpack.c.b16 %v1043, %v1042
      %v1049 = vsel %vm342, %v1032, 0
      %v1052 = vsel %vm342, %v1033, 0
      %v1055 = vsel %vm342, %v1034, 0
      %v1058 = vsel %vm342, %v1035, 0
      %1060 = vmatprep.subr.bf16.mxu0 0
      %1061 = vmatpush1.bf16.msra.mxu0 %v1044
      %1062 = vmatprep.subr.bf16.mxu0 0
      %1063 = vmatpush1.bf16.msra.mxu0 %v1045
      %1064 = vmatprep.subr.bf16.mxu0 0
      %1065 = vmatpush1.bf16.msra.mxu0 0
      %1066 = vmatprep.subr.bf16.mxu0 0
      %1067 = vmatpush1.bf16.msra.mxu0 0
      %1068 = vmatprep.subr.bf16.mxu0 0
      %1069 = vmatpush1.bf16.msra.mxu0 0
      %1070 = vmatprep.subr.bf16.mxu0 0
      %1071 = vmatpush1.bf16.msra.mxu0 0
      %1072 = vmatprep.subr.bf16.mxu0 0
      %1073 = vmatpush1.bf16.msra.mxu0 0
      %1074 = vmatprep.subr.bf16.mxu0 0
      %1075 = vmatpush1.bf16.msra.mxu0 0
      %1076 = vmatprep.subr.bf16.mxu0 0
      %1077 = vmatpush1.bf16.msra.mxu0 0
      %1078 = vmatprep.subr.bf16.mxu0 0
      %1079 = vmatpush1.bf16.msra.mxu0 0
      %1080 = vmatprep.subr.bf16.mxu0 0
      %1081 = vmatpush1.bf16.msra.mxu0 0
      %1082 = vmatprep.subr.bf16.mxu0 0
      %1083 = vmatpush1.bf16.msra.mxu0 0
      %1084 = vmatprep.subr.bf16.mxu0 0
      %1085 = vmatpush1.bf16.msra.mxu0 0
      %1086 = vmatprep.subr.bf16.mxu0 0
      %1087 = vmatpush1.bf16.msra.mxu0 0
      %1088 = vmatprep.subr.bf16.mxu0 0
      %1089 = vmatpush1.bf16.msra.mxu0 0
      %1090 = vmatprep.subr.bf16.mxu0 0
      %1091 = vmatpush1.bf16.msra.mxu0 0
      %1092 = vmatprep.mubr.bf16.mxu0 0
      %1093 = vmatmul.mubr.bf16.gmra.mrb[0].mxu0 %v1049
      %v1094 = vpop.f32.mrb[0].mxu0
      %v1095 = vadd.f32 %v986, %v1094
      %v1096 = vpop.f32.mrb[0].mxu0
      %v1097 = vpop.f32.mrb[0].mxu0
      %v1098 = vadd.f32 %v989, %v1097
      %v1099 = vpop.f32.mrb[0].mxu0
      %1100 = vmatprep.mubr.bf16.mxu0 0
      %1101 = vmatmul.mubr.bf16.gmra.mrb[0].mxu0 %v1052
      %v1102 = vpop.f32.mrb[0].mxu0
      %v1103 = vadd.f32 %v994, %v1102
      %v1104 = vpop.f32.mrb[0].mxu0
      %v1105 = vpop.f32.mrb[0].mxu0
      %v1106 = vadd.f32 %v997, %v1105
      %v1107 = vpop.f32.mrb[0].mxu0
      %1108 = vmatprep.mubr.bf16.mxu0 0
      %1109 = vmatmul.mubr.bf16.gmra.mrb[0].mxu0 %v1055
      %v1110 = vpop.f32.mrb[0].mxu0
      %v1111 = vadd.f32 %v1002, %v1110
      %v1112 = vpop.f32.mrb[0].mxu0
      %v1113 = vpop.f32.mrb[0].mxu0
      %v1114 = vadd.f32 %v1005, %v1113
      %v1115 = vpop.f32.mrb[0].mxu0
      %1116 = vmatprep.mubr.bf16.mxu0 0
      %1117 = vmatmul.mubr.bf16.gmra.mrb[0].mxu0 %v1058
      %v1118 = vpop.f32.mrb[0].mxu0
      %v1119 = vadd.f32 %v1010, %v1118
      %v1120 = vpop.f32.mrb[0].mxu0
      %v1121 = vpop.f32.mrb[0].mxu0
      %v1122 = vadd.f32 %v1013, %v1121
      %v1123 = vpop.f32.mrb[0].mxu0
      %1124 = vdwg.mxu0
      %v1125 = vld [vmem:[#allocation2] sm:$0xe]
      %v1126 = vld [vmem:[#allocation2 + $0x8] sm:$0xe]
      %v1127 = vld [vmem:[#allocation2 + $0x10] sm:$0xe]
      %v1128 = vld [vmem:[#allocation2 + $0x18] sm:$0xe]
      %v1129 = vld [vmem:[#allocation2 + $0x20] sm:$0xe]
      %v1130 = vld [vmem:[#allocation2 + $0x28] sm:$0xe]
      %v1131 = vld [vmem:[#allocation2 + $0x30] sm:$0xe]
      %v1132 = vld [vmem:[#allocation2 + $0x38] sm:$0xe]
      %vm1149 = vcmask 1042432
      %vm1150 = vcmask 1046532
      %vm1151 = vmor %vm1149, %vm1150
      %v1152 = vrot.slane %v1125, 5
      %v1153 = vrot.slane %v1152, 4
      %v1154 = vrot.slane %v787, 5
      %v1155 = vsel %vm1151, %v1153, %v1154
      %v1156 = vrot.slane %v1126, 5
      %v1157 = vrot.slane %v1156, 4
      %v1158 = vrot.slane %v788, 5
      %v1159 = vsel %vm1151, %v1157, %v1158
      %v1160 = vrot.slane %v1127, 5
      %v1161 = vrot.slane %v1160, 4
      %v1162 = vrot.slane %v789, 5
      %v1163 = vsel %vm1151, %v1161, %v1162
      %v1164 = vrot.slane %v1128, 5
      %v1165 = vrot.slane %v1164, 4
      %v1166 = vrot.slane %v790, 5
      %v1167 = vsel %vm1151, %v1165, %v1166
      %v1168 = vrot.slane %v1129, 5
      %v1169 = vrot.slane %v1168, 4
      %v1170 = vrot.slane %v791, 5
      %v1171 = vsel %vm1151, %v1169, %v1170
      %v1172 = vrot.slane %v1130, 5
      %v1173 = vrot.slane %v1172, 4
      %v1174 = vrot.slane %v792, 5
      %v1175 = vsel %vm1151, %v1173, %v1174
      %v1176 = vrot.slane %v1131, 5
      %v1177 = vrot.slane %v1176, 4
      %v1178 = vrot.slane %v793, 5
      %v1179 = vsel %vm1151, %v1177, %v1178
      %v1180 = vrot.slane %v1132, 5
      %v1181 = vrot.slane %v1180, 4
      %v1182 = vrot.slane %v794, 5
      %v1183 = vsel %vm1151, %v1181, %v1182
      %s1184 = scalar_lea.vmem %s3, 32
      %v1185 = vld [vmem:[%s1184] sm:$0xf]
      %v1186 = vld [vmem:[%s1184 + $0x4] sm:$0xf]
      %v1187 = vld [vmem:[%s1184 + $0x8] sm:$0xf]
      %v1188 = vld [vmem:[%s1184 + $0xc] sm:$0xf]
      %v1189 = vunpack.c.l.b16 %v1155
      %v1190 = vunpack.c.l.b16 %v1159
      %v1191 = vunpack.c.l.b16 %v1163
      %v1192 = vunpack.c.l.b16 %v1167
      %v1193 = vunpack.c.l.b16 %v1171
      %v1194 = vunpack.c.l.b16 %v1175
      %v1195 = vunpack.c.l.b16 %v1179
      %v1196 = vunpack.c.l.b16 %v1183
      %v1197 = vpack.c.b16 %v1190, %v1189
      %v1198 = vpack.c.b16 %v1192, %v1191
      %v1199 = vpack.c.b16 %v1194, %v1193
      %v1200 = vpack.c.b16 %v1196, %v1195
      %v1205 = vunpack.c.l.b16 %v1185
      %v1206 = vunpack.c.l.b16 %v1186
      %v1207 = vunpack.c.l.b16 %v1187
      %v1208 = vunpack.c.l.b16 %v1188
      %v1209 = vpack.c.b16 %v1206, %v1205
      %v1210 = vpack.c.b16 %v1208, %v1207
      %v1214 = vsel %vm342, %v1197, 0
      %v1217 = vsel %vm342, %v1198, 0
      %v1220 = vsel %vm342, %v1199, 0
      %v1223 = vsel %vm342, %v1200, 0
      %1225 = vmatprep.subr.bf16.mxu0 0
      %1226 = vmatpush1.bf16.msra.mxu0 %v1209
      %1227 = vmatprep.subr.bf16.mxu0 0
      %1228 = vmatpush1.bf16.msra.mxu0 %v1210
      %1229 = vmatprep.subr.bf16.mxu0 0
      %1230 = vmatpush1.bf16.msra.mxu0 0
      %1231 = vmatprep.subr.bf16.mxu0 0
      %1232 = vmatpush1.bf16.msra.mxu0 0
      %1233 = vmatprep.subr.bf16.mxu0 0
      %1234 = vmatpush1.bf16.msra.mxu0 0
      %1235 = vmatprep.subr.bf16.mxu0 0
      %1236 = vmatpush1.bf16.msra.mxu0 0
      %1237 = vmatprep.subr.bf16.mxu0 0
      %1238 = vmatpush1.bf16.msra.mxu0 0
      %1239 = vmatprep.subr.bf16.mxu0 0
      %1240 = vmatpush1.bf16.msra.mxu0 0
      %1241 = vmatprep.subr.bf16.mxu0 0
      %1242 = vmatpush1.bf16.msra.mxu0 0
      %1243 = vmatprep.subr.bf16.mxu0 0
      %1244 = vmatpush1.bf16.msra.mxu0 0
      %1245 = vmatprep.subr.bf16.mxu0 0
      %1246 = vmatpush1.bf16.msra.mxu0 0
      %1247 = vmatprep.subr.bf16.mxu0 0
      %1248 = vmatpush1.bf16.msra.mxu0 0
      %1249 = vmatprep.subr.bf16.mxu0 0
      %1250 = vmatpush1.bf16.msra.mxu0 0
      %1251 = vmatprep.subr.bf16.mxu0 0
      %1252 = vmatpush1.bf16.msra.mxu0 0
      %1253 = vmatprep.subr.bf16.mxu0 0
      %1254 = vmatpush1.bf16.msra.mxu0 0
      %1255 = vmatprep.subr.bf16.mxu0 0
      %1256 = vmatpush1.bf16.msra.mxu0 0
      %1257 = vmatprep.mubr.bf16.mxu0 0
      %1258 = vmatmul.mubr.bf16.gmra.mrb[0].mxu0 %v1214
      %v1259 = vpop.f32.mrb[0].mxu0
      %v1260 = vadd.f32 0.0, %v1259
      %v1261 = vpop.f32.mrb[0].mxu0
      %v1262 = vpop.f32.mrb[0].mxu0
      %v1263 = vadd.f32 0.0, %v1262
      %v1264 = vpop.f32.mrb[0].mxu0
      %1265 = vmatprep.mubr.bf16.mxu0 0
      %1266 = vmatmul.mubr.bf16.gmra.mrb[0].mxu0 %v1217
      %v1267 = vpop.f32.mrb[0].mxu0
      %v1268 = vadd.f32 0.0, %v1267
      %v1269 = vpop.f32.mrb[0].mxu0
      %v1270 = vpop.f32.mrb[0].mxu0
      %v1271 = vadd.f32 0.0, %v1270
      %v1272 = vpop.f32.mrb[0].mxu0
      %1273 = vmatprep.mubr.bf16.mxu0 0
      %1274 = vmatmul.mubr.bf16.gmra.mrb[0].mxu0 %v1220
      %v1275 = vpop.f32.mrb[0].mxu0
      %v1276 = vadd.f32 0.0, %v1275
      %v1277 = vpop.f32.mrb[0].mxu0
      %v1278 = vpop.f32.mrb[0].mxu0
      %v1279 = vadd.f32 0.0, %v1278
      %v1280 = vpop.f32.mrb[0].mxu0
      %1281 = vmatprep.mubr.bf16.mxu0 0
      %1282 = vmatmul.mubr.bf16.gmra.mrb[0].mxu0 %v1223
      %v1283 = vpop.f32.mrb[0].mxu0
      %v1284 = vadd.f32 0.0, %v1283
      %v1285 = vpop.f32.mrb[0].mxu0
      %v1286 = vpop.f32.mrb[0].mxu0
      %v1287 = vadd.f32 0.0, %v1286
      %v1288 = vpop.f32.mrb[0].mxu0
      %1289 = vdwg.mxu0
      %v1290 = vadd.f32 %v1095, %v1260
      %v1291 = vadd.f32 %v1098, %v1263
      %v1292 = vadd.f32 %v1103, %v1268
      %v1293 = vadd.f32 %v1106, %v1271
      %v1294 = vadd.f32 %v1111, %v1276
      %v1295 = vadd.f32 %v1114, %v1279
      %v1296 = vadd.f32 %v1119, %v1284
      %v1297 = vadd.f32 %v1122, %v1287
      %v1298 = vld [vmem:[%s720] sm:$0xf]
      %v1299 = vld [vmem:[%s720 + $0x8] sm:$0xf]
      %v1300 = vld [vmem:[%s720 + $0x10] sm:$0xf]
      %v1301 = vld [vmem:[%s720 + $0x18] sm:$0xf]
      %v1302 = vld [vmem:[%s720 + $0x20] sm:$0xf]
      %v1303 = vld [vmem:[%s720 + $0x28] sm:$0xf]
      %v1304 = vld [vmem:[%s720 + $0x30] sm:$0xf]
      %v1305 = vld [vmem:[%s720 + $0x38] sm:$0xf]
      %s1306 = scalar_lea.vmem %s3, 48
      %v1307 = vld [vmem:[%s1306] sm:$0xf]
      %v1308 = vld [vmem:[%s1306 + $0x4] sm:$0xf]
      %v1309 = vld [vmem:[%s1306 + $0x8] sm:$0xf]
      %v1310 = vld [vmem:[%s1306 + $0xc] sm:$0xf]
      %v1319 = vunpack.c.l.b16 %v1298
      %v1320 = vunpack.c.l.b16 %v1299
      %v1321 = vunpack.c.l.b16 %v1300
      %v1322 = vunpack.c.l.b16 %v1301
      %v1323 = vunpack.c.l.b16 %v1302
      %v1324 = vunpack.c.l.b16 %v1303
      %v1325 = vunpack.c.l.b16 %v1304
      %v1326 = vunpack.c.l.b16 %v1305
      %v1327 = vpack.c.b16 %v1320, %v1319
      %v1328 = vpack.c.b16 %v1322, %v1321
      %v1329 = vpack.c.b16 %v1324, %v1323
      %v1330 = vpack.c.b16 %v1326, %v1325
      %v1335 = vunpack.c.l.b16 %v1307
      %v1336 = vunpack.c.l.b16 %v1308
      %v1337 = vunpack.c.l.b16 %v1309
      %v1338 = vunpack.c.l.b16 %v1310
      %v1339 = vpack.c.b16 %v1336, %v1335
      %v1340 = vpack.c.b16 %v1338, %v1337
      %v1344 = vsel %vm342, %v1327, 0
      %v1347 = vsel %vm342, %v1328, 0
      %v1350 = vsel %vm342, %v1329, 0
      %v1353 = vsel %vm342, %v1330, 0
      %1355 = vmatprep.subr.bf16.mxu0 0
      %1356 = vmatpush1.bf16.msra.mxu0 %v1339
      %1357 = vmatprep.subr.bf16.mxu0 0
      %1358 = vmatpush1.bf16.msra.mxu0 %v1340
      %1359 = vmatprep.subr.bf16.mxu0 0
      %1360 = vmatpush1.bf16.msra.mxu0 0
      %1361 = vmatprep.subr.bf16.mxu0 0
      %1362 = vmatpush1.bf16.msra.mxu0 0
      %1363 = vmatprep.subr.bf16.mxu0 0
      %1364 = vmatpush1.bf16.msra.mxu0 0
      %1365 = vmatprep.subr.bf16.mxu0 0
      %1366 = vmatpush1.bf16.msra.mxu0 0
      %1367 = vmatprep.subr.bf16.mxu0 0
      %1368 = vmatpush1.bf16.msra.mxu0 0
      %1369 = vmatprep.subr.bf16.mxu0 0
      %1370 = vmatpush1.bf16.msra.mxu0 0
      %1371 = vmatprep.subr.bf16.mxu0 0
      %1372 = vmatpush1.bf16.msra.mxu0 0
      %1373 = vmatprep.subr.bf16.mxu0 0
      %1374 = vmatpush1.bf16.msra.mxu0 0
      %1375 = vmatprep.subr.bf16.mxu0 0
      %1376 = vmatpush1.bf16.msra.mxu0 0
      %1377 = vmatprep.subr.bf16.mxu0 0
      %1378 = vmatpush1.bf16.msra.mxu0 0
      %1379 = vmatprep.subr.bf16.mxu0 0
      %1380 = vmatpush1.bf16.msra.mxu0 0
      %1381 = vmatprep.subr.bf16.mxu0 0
      %1382 = vmatpush1.bf16.msra.mxu0 0
      %1383 = vmatprep.subr.bf16.mxu0 0
      %1384 = vmatpush1.bf16.msra.mxu0 0
      %1385 = vmatprep.subr.bf16.mxu0 0
      %1386 = vmatpush1.bf16.msra.mxu0 0
      %1387 = vmatprep.mubr.bf16.mxu0 0
      %1388 = vmatmul.mubr.bf16.gmra.mrb[0].mxu0 %v1344
      %v1389 = vpop.f32.mrb[0].mxu0
      %v1390 = vadd.f32 0.0, %v1389
      %v1391 = vpop.f32.mrb[0].mxu0
      %v1392 = vpop.f32.mrb[0].mxu0
      %v1393 = vadd.f32 0.0, %v1392
      %v1394 = vpop.f32.mrb[0].mxu0
      %1395 = vmatprep.mubr.bf16.mxu0 0
      %1396 = vmatmul.mubr.bf16.gmra.mrb[0].mxu0 %v1347
      %v1397 = vpop.f32.mrb[0].mxu0
      %v1398 = vadd.f32 0.0, %v1397
      %v1399 = vpop.f32.mrb[0].mxu0
      %v1400 = vpop.f32.mrb[0].mxu0
      %v1401 = vadd.f32 0.0, %v1400
      %v1402 = vpop.f32.mrb[0].mxu0
      %1403 = vmatprep.mubr.bf16.mxu0 0
      %1404 = vmatmul.mubr.bf16.gmra.mrb[0].mxu0 %v1350
      %v1405 = vpop.f32.mrb[0].mxu0
      %v1406 = vadd.f32 0.0, %v1405
      %v1407 = vpop.f32.mrb[0].mxu0
      %v1408 = vpop.f32.mrb[0].mxu0
      %v1409 = vadd.f32 0.0, %v1408
      %v1410 = vpop.f32.mrb[0].mxu0
      %1411 = vmatprep.mubr.bf16.mxu0 0
      %1412 = vmatmul.mubr.bf16.gmra.mrb[0].mxu0 %v1353
      %v1413 = vpop.f32.mrb[0].mxu0
      %v1414 = vadd.f32 0.0, %v1413
      %v1415 = vpop.f32.mrb[0].mxu0
      %v1416 = vpop.f32.mrb[0].mxu0
      %v1417 = vadd.f32 0.0, %v1416
      %v1418 = vpop.f32.mrb[0].mxu0
      %1419 = vdwg.mxu0
      %v1420 = vadd.f32 %v1290, %v1390
      %v1421 = vadd.f32 %v1291, %v1393
      %v1422 = vadd.f32 %v1292, %v1398
      %v1423 = vadd.f32 %v1293, %v1401
      %v1424 = vadd.f32 %v1294, %v1406
      %v1425 = vadd.f32 %v1295, %v1409
      %v1426 = vadd.f32 %v1296, %v1414
      %v1427 = vadd.f32 %v1297, %v1417
      %v1428 = vld [vmem:[%s720] sm:$0xf]
      %v1429 = vld [vmem:[%s720 + $0x4] sm:$0x1]
      %v1430 = vld [vmem:[%s720 + $0x8] sm:$0xf]
      %v1431 = vld [vmem:[%s720 + $0xc] sm:$0x1]
      %v1432 = vld [vmem:[%s720 + $0x10] sm:$0xf]
      %v1433 = vld [vmem:[%s720 + $0x14] sm:$0x1]
      %v1434 = vld [vmem:[%s720 + $0x18] sm:$0xf]
      %v1435 = vld [vmem:[%s720 + $0x1c] sm:$0x1]
      %v1436 = vld [vmem:[%s720 + $0x20] sm:$0xf]
      %v1437 = vld [vmem:[%s720 + $0x24] sm:$0x1]
      %v1438 = vld [vmem:[%s720 + $0x28] sm:$0xf]
      %v1439 = vld [vmem:[%s720 + $0x2c] sm:$0x1]
      %v1440 = vld [vmem:[%s720 + $0x30] sm:$0xf]
      %v1441 = vld [vmem:[%s720 + $0x34] sm:$0x1]
      %v1442 = vld [vmem:[%s720 + $0x38] sm:$0xf]
      %v1443 = vld [vmem:[%s720 + $0x3c] sm:$0x1]
      %v1445 = vshrl.u32 %v1428, 16
      %v1447 = vrot.slane %v1445, 4
      %v1448 = vshll.u32 %v1428, 16
      %v1450 = vrot.slane %v1448, 5
      %v1451 = vor.u32 %v1447, %v1450
      %v1452 = vrot.slane %v1451, 4
      %v1454 = vshll.u32 %v1429, 16
      %v1456 = vrot.slane %v1454, 5
      %v1457 = vsel %vm797, %v1452, %v1456
      %v1459 = vshrl.u32 %v1430, 16
      %v1461 = vrot.slane %v1459, 4
      %v1462 = vshll.u32 %v1430, 16
      %v1464 = vrot.slane %v1462, 5
      %v1465 = vor.u32 %v1461, %v1464
      %v1466 = vrot.slane %v1465, 4
      %v1468 = vshll.u32 %v1431, 16
      %v1470 = vrot.slane %v1468, 5
      %v1471 = vsel %vm797, %v1466, %v1470
      %v1473 = vshrl.u32 %v1432, 16
      %v1475 = vrot.slane %v1473, 4
      %v1476 = vshll.u32 %v1432, 16
      %v1478 = vrot.slane %v1476, 5
      %v1479 = vor.u32 %v1475, %v1478
      %v1480 = vrot.slane %v1479, 4
      %v1482 = vshll.u32 %v1433, 16
      %v1484 = vrot.slane %v1482, 5
      %v1485 = vsel %vm797, %v1480, %v1484
      %v1487 = vshrl.u32 %v1434, 16
      %v1489 = vrot.slane %v1487, 4
      %v1490 = vshll.u32 %v1434, 16
      %v1492 = vrot.slane %v1490, 5
      %v1493 = vor.u32 %v1489, %v1492
      %v1494 = vrot.slane %v1493, 4
      %v1496 = vshll.u32 %v1435, 16
      %v1498 = vrot.slane %v1496, 5
      %v1499 = vsel %vm797, %v1494, %v1498
      %v1501 = vshrl.u32 %v1436, 16
      %v1503 = vrot.slane %v1501, 4
      %v1504 = vshll.u32 %v1436, 16
      %v1506 = vrot.slane %v1504, 5
      %v1507 = vor.u32 %v1503, %v1506
      %v1508 = vrot.slane %v1507, 4
      %v1510 = vshll.u32 %v1437, 16
      %v1512 = vrot.slane %v1510, 5
      %v1513 = vsel %vm797, %v1508, %v1512
      %v1515 = vshrl.u32 %v1438, 16
      %v1517 = vrot.slane %v1515, 4
      %v1518 = vshll.u32 %v1438, 16
      %v1520 = vrot.slane %v1518, 5
      %v1521 = vor.u32 %v1517, %v1520
      %v1522 = vrot.slane %v1521, 4
      %v1524 = vshll.u32 %v1439, 16
      %v1526 = vrot.slane %v1524, 5
      %v1527 = vsel %vm797, %v1522, %v1526
      %v1529 = vshrl.u32 %v1440, 16
      %v1531 = vrot.slane %v1529, 4
      %v1532 = vshll.u32 %v1440, 16
      %v1534 = vrot.slane %v1532, 5
      %v1535 = vor.u32 %v1531, %v1534
      %v1536 = vrot.slane %v1535, 4
      %v1538 = vshll.u32 %v1441, 16
      %v1540 = vrot.slane %v1538, 5
      %v1541 = vsel %vm797, %v1536, %v1540
      %v1543 = vshrl.u32 %v1442, 16
      %v1545 = vrot.slane %v1543, 4
      %v1546 = vshll.u32 %v1442, 16
      %v1548 = vrot.slane %v1546, 5
      %v1549 = vor.u32 %v1545, %v1548
      %v1550 = vrot.slane %v1549, 4
      %v1552 = vshll.u32 %v1443, 16
      %v1554 = vrot.slane %v1552, 5
      %v1555 = vsel %vm797, %v1550, %v1554
      %s1556 = scalar_lea.vmem %s3, 64
      %v1557 = vld [vmem:[%s1556] sm:$0xf]
      %v1558 = vld [vmem:[%s1556 + $0x4] sm:$0xf]
      %v1559 = vld [vmem:[%s1556 + $0x8] sm:$0xf]
      %v1560 = vld [vmem:[%s1556 + $0xc] sm:$0xf]
      %v1561 = vunpack.c.l.b16 %v1457
      %v1562 = vunpack.c.l.b16 %v1471
      %v1563 = vunpack.c.l.b16 %v1485
      %v1564 = vunpack.c.l.b16 %v1499
      %v1565 = vunpack.c.l.b16 %v1513
      %v1566 = vunpack.c.l.b16 %v1527
      %v1567 = vunpack.c.l.b16 %v1541
      %v1568 = vunpack.c.l.b16 %v1555
      %v1569 = vpack.c.b16 %v1562, %v1561
      %v1570 = vpack.c.b16 %v1564, %v1563
      %v1571 = vpack.c.b16 %v1566, %v1565
      %v1572 = vpack.c.b16 %v1568, %v1567
      %v1577 = vunpack.c.l.b16 %v1557
      %v1578 = vunpack.c.l.b16 %v1558
      %v1579 = vunpack.c.l.b16 %v1559
      %v1580 = vunpack.c.l.b16 %v1560
      %v1581 = vpack.c.b16 %v1578, %v1577
      %v1582 = vpack.c.b16 %v1580, %v1579
      %v1586 = vsel %vm342, %v1569, 0
      %v1589 = vsel %vm342, %v1570, 0
      %v1592 = vsel %vm342, %v1571, 0
      %v1595 = vsel %vm342, %v1572, 0
      %1597 = vmatprep.subr.bf16.mxu0 0
      %1598 = vmatpush1.bf16.msra.mxu0 %v1581
      %1599 = vmatprep.subr.bf16.mxu0 0
      %1600 = vmatpush1.bf16.msra.mxu0 %v1582
      %1601 = vmatprep.subr.bf16.mxu0 0
      %1602 = vmatpush1.bf16.msra.mxu0 0
      %1603 = vmatprep.subr.bf16.mxu0 0
      %1604 = vmatpush1.bf16.msra.mxu0 0
      %1605 = vmatprep.subr.bf16.mxu0 0
      %1606 = vmatpush1.bf16.msra.mxu0 0
      %1607 = vmatprep.subr.bf16.mxu0 0
      %1608 = vmatpush1.bf16.msra.mxu0 0
      %1609 = vmatprep.subr.bf16.mxu0 0
      %1610 = vmatpush1.bf16.msra.mxu0 0
      %1611 = vmatprep.subr.bf16.mxu0 0
      %1612 = vmatpush1.bf16.msra.mxu0 0
      %1613 = vmatprep.subr.bf16.mxu0 0
      %1614 = vmatpush1.bf16.msra.mxu0 0
      %1615 = vmatprep.subr.bf16.mxu0 0
      %1616 = vmatpush1.bf16.msra.mxu0 0
      %1617 = vmatprep.subr.bf16.mxu0 0
      %1618 = vmatpush1.bf16.msra.mxu0 0
      %1619 = vmatprep.subr.bf16.mxu0 0
      %1620 = vmatpush1.bf16.msra.mxu0 0
      %1621 = vmatprep.subr.bf16.mxu0 0
      %1622 = vmatpush1.bf16.msra.mxu0 0
      %1623 = vmatprep.subr.bf16.mxu0 0
      %1624 = vmatpush1.bf16.msra.mxu0 0
      %1625 = vmatprep.subr.bf16.mxu0 0
      %1626 = vmatpush1.bf16.msra.mxu0 0
      %1627 = vmatprep.subr.bf16.mxu0 0
      %1628 = vmatpush1.bf16.msra.mxu0 0
      %1629 = vmatprep.mubr.bf16.mxu0 0
      %1630 = vmatmul.mubr.bf16.gmra.mrb[0].mxu0 %v1586
      %v1631 = vpop.f32.mrb[0].mxu0
      %v1632 = vadd.f32 0.0, %v1631
      %v1633 = vpop.f32.mrb[0].mxu0
      %v1634 = vpop.f32.mrb[0].mxu0
      %v1635 = vadd.f32 0.0, %v1634
      %v1636 = vpop.f32.mrb[0].mxu0
      %1637 = vmatprep.mubr.bf16.mxu0 0
      %1638 = vmatmul.mubr.bf16.gmra.mrb[0].mxu0 %v1589
      %v1639 = vpop.f32.mrb[0].mxu0
      %v1640 = vadd.f32 0.0, %v1639
      %v1641 = vpop.f32.mrb[0].mxu0
      %v1642 = vpop.f32.mrb[0].mxu0
      %v1643 = vadd.f32 0.0, %v1642
      %v1644 = vpop.f32.mrb[0].mxu0
      %1645 = vmatprep.mubr.bf16.mxu0 0
      %1646 = vmatmul.mubr.bf16.gmra.mrb[0].mxu0 %v1592
      %v1647 = vpop.f32.mrb[0].mxu0
      %v1648 = vadd.f32 0.0, %v1647
      %v1649 = vpop.f32.mrb[0].mxu0
      %v1650 = vpop.f32.mrb[0].mxu0
      %v1651 = vadd.f32 0.0, %v1650
      %v1652 = vpop.f32.mrb[0].mxu0
      %1653 = vmatprep.mubr.bf16.mxu0 0
      %1654 = vmatmul.mubr.bf16.gmra.mrb[0].mxu0 %v1595
      %v1655 = vpop.f32.mrb[0].mxu0
      %v1656 = vadd.f32 0.0, %v1655
      %v1657 = vpop.f32.mrb[0].mxu0
      %v1658 = vpop.f32.mrb[0].mxu0
      %v1659 = vadd.f32 0.0, %v1658
      %v1660 = vpop.f32.mrb[0].mxu0
      %1661 = vdwg.mxu0
      %v1662 = vadd.f32 %v1420, %v1632
      %v1663 = vadd.f32 %v1421, %v1635
      %v1664 = vadd.f32 %v1422, %v1640
      %v1665 = vadd.f32 %v1423, %v1643
      %v1666 = vadd.f32 %v1424, %v1648
      %v1667 = vadd.f32 %v1425, %v1651
      %v1668 = vadd.f32 %v1426, %v1656
      %v1669 = vadd.f32 %v1427, %v1659
      %v1670 = vld [vmem:[%s720] sm:$0xe]
      %v1671 = vld [vmem:[%s720 + $0x8] sm:$0xe]
      %v1672 = vld [vmem:[%s720 + $0x10] sm:$0xe]
      %v1673 = vld [vmem:[%s720 + $0x18] sm:$0xe]
      %v1674 = vld [vmem:[%s720 + $0x20] sm:$0xe]
      %v1675 = vld [vmem:[%s720 + $0x28] sm:$0xe]
      %v1676 = vld [vmem:[%s720 + $0x30] sm:$0xe]
      %v1677 = vld [vmem:[%s720 + $0x38] sm:$0xe]
      %v1694 = vrot.slane %v1670, 5
      %v1695 = vrot.slane %v1694, 4
      %v1696 = vrot.slane %v1429, 5
      %v1697 = vsel %vm1151, %v1695, %v1696
      %v1698 = vrot.slane %v1671, 5
      %v1699 = vrot.slane %v1698, 4
      %v1700 = vrot.slane %v1431, 5
      %v1701 = vsel %vm1151, %v1699, %v1700
      %v1702 = vrot.slane %v1672, 5
      %v1703 = vrot.slane %v1702, 4
      %v1704 = vrot.slane %v1433, 5
      %v1705 = vsel %vm1151, %v1703, %v1704
      %v1706 = vrot.slane %v1673, 5
      %v1707 = vrot.slane %v1706, 4
      %v1708 = vrot.slane %v1435, 5
      %v1709 = vsel %vm1151, %v1707, %v1708
      %v1710 = vrot.slane %v1674, 5
      %v1711 = vrot.slane %v1710, 4
      %v1712 = vrot.slane %v1437, 5
      %v1713 = vsel %vm1151, %v1711, %v1712
      %v1714 = vrot.slane %v1675, 5
      %v1715 = vrot.slane %v1714, 4
      %v1716 = vrot.slane %v1439, 5
      %v1717 = vsel %vm1151, %v1715, %v1716
      %v1718 = vrot.slane %v1676, 5
      %v1719 = vrot.slane %v1718, 4
      %v1720 = vrot.slane %v1441, 5
      %v1721 = vsel %vm1151, %v1719, %v1720
      %v1722 = vrot.slane %v1677, 5
      %v1723 = vrot.slane %v1722, 4
      %v1724 = vrot.slane %v1443, 5
      %v1725 = vsel %vm1151, %v1723, %v1724
      %s1726 = scalar_lea.vmem %s3, 80
      %v1727 = vld [vmem:[%s1726] sm:$0xf]
      %v1728 = vld [vmem:[%s1726 + $0x4] sm:$0xf]
      %v1729 = vld [vmem:[%s1726 + $0x8] sm:$0xf]
      %v1730 = vld [vmem:[%s1726 + $0xc] sm:$0xf]
      %v1731 = vunpack.c.l.b16 %v1697
      %v1732 = vunpack.c.l.b16 %v1701
      %v1733 = vunpack.c.l.b16 %v1705
      %v1734 = vunpack.c.l.b16 %v1709
      %v1735 = vunpack.c.l.b16 %v1713
      %v1736 = vunpack.c.l.b16 %v1717
      %v1737 = vunpack.c.l.b16 %v1721
      %v1738 = vunpack.c.l.b16 %v1725
      %v1739 = vpack.c.b16 %v1732, %v1731
      %v1740 = vpack.c.b16 %v1734, %v1733
      %v1741 = vpack.c.b16 %v1736, %v1735
      %v1742 = vpack.c.b16 %v1738, %v1737
      %v1747 = vunpack.c.l.b16 %v1727
      %v1748 = vunpack.c.l.b16 %v1728
      %v1749 = vunpack.c.l.b16 %v1729
      %v1750 = vunpack.c.l.b16 %v1730
      %v1751 = vpack.c.b16 %v1748, %v1747
      %v1752 = vpack.c.b16 %v1750, %v1749
      %v1756 = vsel %vm342, %v1739, 0
      %v1759 = vsel %vm342, %v1740, 0
      %v1762 = vsel %vm342, %v1741, 0
      %v1765 = vsel %vm342, %v1742, 0
      %1767 = vmatprep.subr.bf16.mxu0 0
      %1768 = vmatpush1.bf16.msra.mxu0 %v1751
      %1769 = vmatprep.subr.bf16.mxu0 0
      %1770 = vmatpush1.bf16.msra.mxu0 %v1752
      %1771 = vmatprep.subr.bf16.mxu0 0
      %1772 = vmatpush1.bf16.msra.mxu0 0
      %1773 = vmatprep.subr.bf16.mxu0 0
      %1774 = vmatpush1.bf16.msra.mxu0 0
      %1775 = vmatprep.subr.bf16.mxu0 0
      %1776 = vmatpush1.bf16.msra.mxu0 0
      %1777 = vmatprep.subr.bf16.mxu0 0
      %1778 = vmatpush1.bf16.msra.mxu0 0
      %1779 = vmatprep.subr.bf16.mxu0 0
      %1780 = vmatpush1.bf16.msra.mxu0 0
      %1781 = vmatprep.subr.bf16.mxu0 0
      %1782 = vmatpush1.bf16.msra.mxu0 0
      %1783 = vmatprep.subr.bf16.mxu0 0
      %1784 = vmatpush1.bf16.msra.mxu0 0
      %1785 = vmatprep.subr.bf16.mxu0 0
      %1786 = vmatpush1.bf16.msra.mxu0 0
      %1787 = vmatprep.subr.bf16.mxu0 0
      %1788 = vmatpush1.bf16.msra.mxu0 0
      %1789 = vmatprep.subr.bf16.mxu0 0
      %1790 = vmatpush1.bf16.msra.mxu0 0
      %1791 = vmatprep.subr.bf16.mxu0 0
      %1792 = vmatpush1.bf16.msra.mxu0 0
      %1793 = vmatprep.subr.bf16.mxu0 0
      %1794 = vmatpush1.bf16.msra.mxu0 0
      %1795 = vmatprep.subr.bf16.mxu0 0
      %1796 = vmatpush1.bf16.msra.mxu0 0
      %1797 = vmatprep.subr.bf16.mxu0 0
      %1798 = vmatpush1.bf16.msra.mxu0 0
      %1799 = vmatprep.mubr.bf16.mxu0 0
      %1800 = vmatmul.mubr.bf16.gmra.mrb[0].mxu0 %v1756
      %v1801 = vpop.f32.mrb[0].mxu0
      %v1802 = vadd.f32 0.0, %v1801
      %v1803 = vpop.f32.mrb[0].mxu0
      %v1804 = vpop.f32.mrb[0].mxu0
      %v1805 = vadd.f32 0.0, %v1804
      %v1806 = vpop.f32.mrb[0].mxu0
      %1807 = vmatprep.mubr.bf16.mxu0 0
      %1808 = vmatmul.mubr.bf16.gmra.mrb[0].mxu0 %v1759
      %v1809 = vpop.f32.mrb[0].mxu0
      %v1810 = vadd.f32 0.0, %v1809
      %v1811 = vpop.f32.mrb[0].mxu0
      %v1812 = vpop.f32.mrb[0].mxu0
      %v1813 = vadd.f32 0.0, %v1812
      %v1814 = vpop.f32.mrb[0].mxu0
      %1815 = vmatprep.mubr.bf16.mxu0 0
      %1816 = vmatmul.mubr.bf16.gmra.mrb[0].mxu0 %v1762
      %v1817 = vpop.f32.mrb[0].mxu0
      %v1818 = vadd.f32 0.0, %v1817
      %v1819 = vpop.f32.mrb[0].mxu0
      %v1820 = vpop.f32.mrb[0].mxu0
      %v1821 = vadd.f32 0.0, %v1820
      %v1822 = vpop.f32.mrb[0].mxu0
      %1823 = vmatprep.mubr.bf16.mxu0 0
      %1824 = vmatmul.mubr.bf16.gmra.mrb[0].mxu0 %v1765
      %v1825 = vpop.f32.mrb[0].mxu0
      %v1826 = vadd.f32 0.0, %v1825
      %v1827 = vpop.f32.mrb[0].mxu0
      %v1828 = vpop.f32.mrb[0].mxu0
      %v1829 = vadd.f32 0.0, %v1828
      %v1830 = vpop.f32.mrb[0].mxu0
      %1831 = vdwg.mxu0
      %v1832 = vadd.f32 %v1662, %v1802
      %v1833 = vadd.f32 %v1663, %v1805
      %v1834 = vadd.f32 %v1664, %v1810
      %v1835 = vadd.f32 %v1665, %v1813
      %v1836 = vadd.f32 %v1666, %v1818
      %v1837 = vadd.f32 %v1667, %v1821
      %v1838 = vadd.f32 %v1668, %v1826
      %v1839 = vadd.f32 %v1669, %v1829
      %s1840 = scalar_lea.vmem [#allocation2], 16
      %v1841 = vld [vmem:[%s1840] sm:$0xf]
      %v1842 = vld [vmem:[%s1840 + $0x8] sm:$0xf]
      %v1843 = vld [vmem:[%s1840 + $0x10] sm:$0xf]
      %v1844 = vld [vmem:[%s1840 + $0x18] sm:$0xf]
      %v1845 = vld [vmem:[%s1840 + $0x20] sm:$0xf]
      %v1846 = vld [vmem:[%s1840 + $0x28] sm:$0xf]
      %v1847 = vld [vmem:[%s1840 + $0x30] sm:$0xf]
      %v1848 = vld [vmem:[%s1840 + $0x38] sm:$0xf]
      %s1849 = scalar_lea.vmem %s3, 96
      %v1850 = vld [vmem:[%s1849] sm:$0xf]
      %v1851 = vld [vmem:[%s1849 + $0x4] sm:$0xf]
      %v1852 = vld [vmem:[%s1849 + $0x8] sm:$0xf]
      %v1853 = vld [vmem:[%s1849 + $0xc] sm:$0xf]
      %v1862 = vunpack.c.l.b16 %v1841
      %v1863 = vunpack.c.l.b16 %v1842
      %v1864 = vunpack.c.l.b16 %v1843
      %v1865 = vunpack.c.l.b16 %v1844
      %v1866 = vunpack.c.l.b16 %v1845
      %v1867 = vunpack.c.l.b16 %v1846
      %v1868 = vunpack.c.l.b16 %v1847
      %v1869 = vunpack.c.l.b16 %v1848
      %v1870 = vpack.c.b16 %v1863, %v1862
      %v1871 = vpack.c.b16 %v1865, %v1864
      %v1872 = vpack.c.b16 %v1867, %v1866
      %v1873 = vpack.c.b16 %v1869, %v1868
      %v1878 = vunpack.c.l.b16 %v1850
      %v1879 = vunpack.c.l.b16 %v1851
      %v1880 = vunpack.c.l.b16 %v1852
      %v1881 = vunpack.c.l.b16 %v1853
      %v1882 = vpack.c.b16 %v1879, %v1878
      %v1883 = vpack.c.b16 %v1881, %v1880
      %v1887 = vsel %vm342, %v1870, 0
      %v1890 = vsel %vm342, %v1871, 0
      %v1893 = vsel %vm342, %v1872, 0
      %v1896 = vsel %vm342, %v1873, 0
      %1898 = vmatprep.subr.bf16.mxu0 0
      %1899 = vmatpush1.bf16.msra.mxu0 %v1882
      %1900 = vmatprep.subr.bf16.mxu0 0
      %1901 = vmatpush1.bf16.msra.mxu0 %v1883
      %1902 = vmatprep.subr.bf16.mxu0 0
      %1903 = vmatpush1.bf16.msra.mxu0 0
      %1904 = vmatprep.subr.bf16.mxu0 0
      %1905 = vmatpush1.bf16.msra.mxu0 0
      %1906 = vmatprep.subr.bf16.mxu0 0
      %1907 = vmatpush1.bf16.msra.mxu0 0
      %1908 = vmatprep.subr.bf16.mxu0 0
      %1909 = vmatpush1.bf16.msra.mxu0 0
      %1910 = vmatprep.subr.bf16.mxu0 0
      %1911 = vmatpush1.bf16.msra.mxu0 0
      %1912 = vmatprep.subr.bf16.mxu0 0
      %1913 = vmatpush1.bf16.msra.mxu0 0
      %1914 = vmatprep.subr.bf16.mxu0 0
      %1915 = vmatpush1.bf16.msra.mxu0 0
      %1916 = vmatprep.subr.bf16.mxu0 0
      %1917 = vmatpush1.bf16.msra.mxu0 0
      %1918 = vmatprep.subr.bf16.mxu0 0
      %1919 = vmatpush1.bf16.msra.mxu0 0
      %1920 = vmatprep.subr.bf16.mxu0 0
      %1921 = vmatpush1.bf16.msra.mxu0 0
      %1922 = vmatprep.subr.bf16.mxu0 0
      %1923 = vmatpush1.bf16.msra.mxu0 0
      %1924 = vmatprep.subr.bf16.mxu0 0
      %1925 = vmatpush1.bf16.msra.mxu0 0
      %1926 = vmatprep.subr.bf16.mxu0 0
      %1927 = vmatpush1.bf16.msra.mxu0 0
      %1928 = vmatprep.subr.bf16.mxu0 0
      %1929 = vmatpush1.bf16.msra.mxu0 0
      %1930 = vmatprep.mubr.bf16.mxu0 0
      %1931 = vmatmul.mubr.bf16.gmra.mrb[0].mxu0 %v1887
      %v1932 = vpop.f32.mrb[0].mxu0
      %v1933 = vadd.f32 0.0, %v1932
      %v1934 = vpop.f32.mrb[0].mxu0
      %v1935 = vpop.f32.mrb[0].mxu0
      %v1936 = vadd.f32 0.0, %v1935
      %v1937 = vpop.f32.mrb[0].mxu0
      %1938 = vmatprep.mubr.bf16.mxu0 0
      %1939 = vmatmul.mubr.bf16.gmra.mrb[0].mxu0 %v1890
      %v1940 = vpop.f32.mrb[0].mxu0
      %v1941 = vadd.f32 0.0, %v1940
      %v1942 = vpop.f32.mrb[0].mxu0
      %v1943 = vpop.f32.mrb[0].mxu0
      %v1944 = vadd.f32 0.0, %v1943
      %v1945 = vpop.f32.mrb[0].mxu0
      %1946 = vmatprep.mubr.bf16.mxu0 0
      %1947 = vmatmul.mubr.bf16.gmra.mrb[0].mxu0 %v1893
      %v1948 = vpop.f32.mrb[0].mxu0
      %v1949 = vadd.f32 0.0, %v1948
      %v1950 = vpop.f32.mrb[0].mxu0
      %v1951 = vpop.f32.mrb[0].mxu0
      %v1952 = vadd.f32 0.0, %v1951
      %v1953 = vpop.f32.mrb[0].mxu0
      %1954 = vmatprep.mubr.bf16.mxu0 0
      %1955 = vmatmul.mubr.bf16.gmra.mrb[0].mxu0 %v1896
      %v1956 = vpop.f32.mrb[0].mxu0
      %v1957 = vadd.f32 0.0, %v1956
      %v1958 = vpop.f32.mrb[0].mxu0
      %v1959 = vpop.f32.mrb[0].mxu0
      %v1960 = vadd.f32 0.0, %v1959
      %v1961 = vpop.f32.mrb[0].mxu0
      %1962 = vdwg.mxu0
      %v1963 = vadd.f32 %v1832, %v1933
      %v1964 = vadd.f32 %v1833, %v1936
      %v1965 = vadd.f32 %v1834, %v1941
      %v1966 = vadd.f32 %v1835, %v1944
      %v1967 = vadd.f32 %v1836, %v1949
      %v1968 = vadd.f32 %v1837, %v1952
      %v1969 = vadd.f32 %v1838, %v1957
      %v1970 = vadd.f32 %v1839, %v1960
      %v1971 = vld [vmem:[%s1840] sm:$0xf]
      %v1972 = vld [vmem:[%s1840 + $0x4] sm:$0x1]
      %v1973 = vld [vmem:[%s1840 + $0x8] sm:$0xf]
      %v1974 = vld [vmem:[%s1840 + $0xc] sm:$0x1]
      %v1975 = vld [vmem:[%s1840 + $0x10] sm:$0xf]
      %v1976 = vld [vmem:[%s1840 + $0x14] sm:$0x1]
      %v1977 = vld [vmem:[%s1840 + $0x18] sm:$0xf]
      %v1978 = vld [vmem:[%s1840 + $0x1c] sm:$0x1]
      %v1979 = vld [vmem:[%s1840 + $0x20] sm:$0xf]
      %v1980 = vld [vmem:[%s1840 + $0x24] sm:$0x1]
      %v1981 = vld [vmem:[%s1840 + $0x28] sm:$0xf]
      %v1982 = vld [vmem:[%s1840 + $0x2c] sm:$0x1]
      %v1983 = vld [vmem:[%s1840 + $0x30] sm:$0xf]
      %v1984 = vld [vmem:[%s1840 + $0x34] sm:$0x1]
      %v1985 = vld [vmem:[%s1840 + $0x38] sm:$0xf]
      %v1986 = vld [vmem:[%s1840 + $0x3c] sm:$0x1]
      %v1988 = vshrl.u32 %v1971, 16
      %v1990 = vrot.slane %v1988, 4
      %v1991 = vshll.u32 %v1971, 16
      %v1993 = vrot.slane %v1991, 5
      %v1994 = vor.u32 %v1990, %v1993
      %v1995 = vrot.slane %v1994, 4
      %v1997 = vshll.u32 %v1972, 16
      %v1999 = vrot.slane %v1997, 5
      %v2000 = vsel %vm797, %v1995, %v1999
      %v2002 = vshrl.u32 %v1973, 16
      %v2004 = vrot.slane %v2002, 4
      %v2005 = vshll.u32 %v1973, 16
      %v2007 = vrot.slane %v2005, 5
      %v2008 = vor.u32 %v2004, %v2007
      %v2009 = vrot.slane %v2008, 4
      %v2011 = vshll.u32 %v1974, 16
      %v2013 = vrot.slane %v2011, 5
      %v2014 = vsel %vm797, %v2009, %v2013
      %v2016 = vshrl.u32 %v1975, 16
      %v2018 = vrot.slane %v2016, 4
      %v2019 = vshll.u32 %v1975, 16
      %v2021 = vrot.slane %v2019, 5
      %v2022 = vor.u32 %v2018, %v2021
      %v2023 = vrot.slane %v2022, 4
      %v2025 = vshll.u32 %v1976, 16
      %v2027 = vrot.slane %v2025, 5
      %v2028 = vsel %vm797, %v2023, %v2027
      %v2030 = vshrl.u32 %v1977, 16
      %v2032 = vrot.slane %v2030, 4
      %v2033 = vshll.u32 %v1977, 16
      %v2035 = vrot.slane %v2033, 5
      %v2036 = vor.u32 %v2032, %v2035
      %v2037 = vrot.slane %v2036, 4
      %v2039 = vshll.u32 %v1978, 16
      %v2041 = vrot.slane %v2039, 5
      %v2042 = vsel %vm797, %v2037, %v2041
      %v2044 = vshrl.u32 %v1979, 16
      %v2046 = vrot.slane %v2044, 4
      %v2047 = vshll.u32 %v1979, 16
      %v2049 = vrot.slane %v2047, 5
      %v2050 = vor.u32 %v2046, %v2049
      %v2051 = vrot.slane %v2050, 4
      %v2053 = vshll.u32 %v1980, 16
      %v2055 = vrot.slane %v2053, 5
      %v2056 = vsel %vm797, %v2051, %v2055
      %v2058 = vshrl.u32 %v1981, 16
      %v2060 = vrot.slane %v2058, 4
      %v2061 = vshll.u32 %v1981, 16
      %v2063 = vrot.slane %v2061, 5
      %v2064 = vor.u32 %v2060, %v2063
      %v2065 = vrot.slane %v2064, 4
      %v2067 = vshll.u32 %v1982, 16
      %v2069 = vrot.slane %v2067, 5
      %v2070 = vsel %vm797, %v2065, %v2069
      %v2072 = vshrl.u32 %v1983, 16
      %v2074 = vrot.slane %v2072, 4
      %v2075 = vshll.u32 %v1983, 16
      %v2077 = vrot.slane %v2075, 5
      %v2078 = vor.u32 %v2074, %v2077
      %v2079 = vrot.slane %v2078, 4
      %v2081 = vshll.u32 %v1984, 16
      %v2083 = vrot.slane %v2081, 5
      %v2084 = vsel %vm797, %v2079, %v2083
      %v2086 = vshrl.u32 %v1985, 16
      %v2088 = vrot.slane %v2086, 4
      %v2089 = vshll.u32 %v1985, 16
      %v2091 = vrot.slane %v2089, 5
      %v2092 = vor.u32 %v2088, %v2091
      %v2093 = vrot.slane %v2092, 4
      %v2095 = vshll.u32 %v1986, 16
      %v2097 = vrot.slane %v2095, 5
      %v2098 = vsel %vm797, %v2093, %v2097
      %s2099 = scalar_lea.vmem %s3, 112
      %v2100 = vld [vmem:[%s2099] sm:$0xf]
      %v2101 = vld [vmem:[%s2099 + $0x4] sm:$0xf]
      %v2102 = vld [vmem:[%s2099 + $0x8] sm:$0xf]
      %v2103 = vld [vmem:[%s2099 + $0xc] sm:$0xf]
      %v2104 = vunpack.c.l.b16 %v2000
      %v2105 = vunpack.c.l.b16 %v2014
      %v2106 = vunpack.c.l.b16 %v2028
      %v2107 = vunpack.c.l.b16 %v2042
      %v2108 = vunpack.c.l.b16 %v2056
      %v2109 = vunpack.c.l.b16 %v2070
      %v2110 = vunpack.c.l.b16 %v2084
      %v2111 = vunpack.c.l.b16 %v2098
      %v2112 = vpack.c.b16 %v2105, %v2104
      %v2113 = vpack.c.b16 %v2107, %v2106
      %v2114 = vpack.c.b16 %v2109, %v2108
      %v2115 = vpack.c.b16 %v2111, %v2110
      %v2120 = vunpack.c.l.b16 %v2100
      %v2121 = vunpack.c.l.b16 %v2101
      %v2122 = vunpack.c.l.b16 %v2102
      %v2123 = vunpack.c.l.b16 %v2103
      %v2124 = vpack.c.b16 %v2121, %v2120
      %v2125 = vpack.c.b16 %v2123, %v2122
      %v2129 = vsel %vm342, %v2112, 0
      %v2132 = vsel %vm342, %v2113, 0
      %v2135 = vsel %vm342, %v2114, 0
      %v2138 = vsel %vm342, %v2115, 0
      %2140 = vmatprep.subr.bf16.mxu0 0
      %2141 = vmatpush1.bf16.msra.mxu0 %v2124
      %2142 = vmatprep.subr.bf16.mxu0 0
      %2143 = vmatpush1.bf16.msra.mxu0 %v2125
      %2144 = vmatprep.subr.bf16.mxu0 0
      %2145 = vmatpush1.bf16.msra.mxu0 0
      %2146 = vmatprep.subr.bf16.mxu0 0
      %2147 = vmatpush1.bf16.msra.mxu0 0
      %2148 = vmatprep.subr.bf16.mxu0 0
      %2149 = vmatpush1.bf16.msra.mxu0 0
      %2150 = vmatprep.subr.bf16.mxu0 0
      %2151 = vmatpush1.bf16.msra.mxu0 0
      %2152 = vmatprep.subr.bf16.mxu0 0
      %2153 = vmatpush1.bf16.msra.mxu0 0
      %2154 = vmatprep.subr.bf16.mxu0 0
      %2155 = vmatpush1.bf16.msra.mxu0 0
      %2156 = vmatprep.subr.bf16.mxu0 0
      %2157 = vmatpush1.bf16.msra.mxu0 0
      %2158 = vmatprep.subr.bf16.mxu0 0
      %2159 = vmatpush1.bf16.msra.mxu0 0
      %2160 = vmatprep.subr.bf16.mxu0 0
      %2161 = vmatpush1.bf16.msra.mxu0 0
      %2162 = vmatprep.subr.bf16.mxu0 0
      %2163 = vmatpush1.bf16.msra.mxu0 0
      %2164 = vmatprep.subr.bf16.mxu0 0
      %2165 = vmatpush1.bf16.msra.mxu0 0
      %2166 = vmatprep.subr.bf16.mxu0 0
      %2167 = vmatpush1.bf16.msra.mxu0 0
      %2168 = vmatprep.subr.bf16.mxu0 0
      %2169 = vmatpush1.bf16.msra.mxu0 0
      %2170 = vmatprep.subr.bf16.mxu0 0
      %2171 = vmatpush1.bf16.msra.mxu0 0
      %2172 = vmatprep.mubr.bf16.mxu0 0
      %2173 = vmatmul.mubr.bf16.gmra.mrb[0].mxu0 %v2129
      %v2174 = vpop.f32.mrb[0].mxu0
      %v2175 = vadd.f32 0.0, %v2174
      %v2176 = vpop.f32.mrb[0].mxu0
      %v2177 = vpop.f32.mrb[0].mxu0
      %v2178 = vadd.f32 0.0, %v2177
      %v2179 = vpop.f32.mrb[0].mxu0
      %2180 = vmatprep.mubr.bf16.mxu0 0
      %2181 = vmatmul.mubr.bf16.gmra.mrb[0].mxu0 %v2132
      %v2182 = vpop.f32.mrb[0].mxu0
      %v2183 = vadd.f32 0.0, %v2182
      %v2184 = vpop.f32.mrb[0].mxu0
      %v2185 = vpop.f32.mrb[0].mxu0
      %v2186 = vadd.f32 0.0, %v2185
      %v2187 = vpop.f32.mrb[0].mxu0
      %2188 = vmatprep.mubr.bf16.mxu0 0
      %2189 = vmatmul.mubr.bf16.gmra.mrb[0].mxu0 %v2135
      %v2190 = vpop.f32.mrb[0].mxu0
      %v2191 = vadd.f32 0.0, %v2190
      %v2192 = vpop.f32.mrb[0].mxu0
      %v2193 = vpop.f32.mrb[0].mxu0
      %v2194 = vadd.f32 0.0, %v2193
      %v2195 = vpop.f32.mrb[0].mxu0
      %2196 = vmatprep.mubr.bf16.mxu0 0
      %2197 = vmatmul.mubr.bf16.gmra.mrb[0].mxu0 %v2138
      %v2198 = vpop.f32.mrb[0].mxu0
      %v2199 = vadd.f32 0.0, %v2198
      %v2200 = vpop.f32.mrb[0].mxu0
      %v2201 = vpop.f32.mrb[0].mxu0
      %v2202 = vadd.f32 0.0, %v2201
      %v2203 = vpop.f32.mrb[0].mxu0
      %2204 = vdwg.mxu0
      %v2205 = vadd.f32 %v1963, %v2175
      %v2206 = vadd.f32 %v1964, %v2178
      %v2207 = vadd.f32 %v1965, %v2183
      %v2208 = vadd.f32 %v1966, %v2186
      %v2209 = vadd.f32 %v1967, %v2191
      %v2210 = vadd.f32 %v1968, %v2194
      %v2211 = vadd.f32 %v1969, %v2199
      %v2212 = vadd.f32 %v1970, %v2202
      %v2213 = vld [vmem:[%s1840] sm:$0xe]
      %v2214 = vld [vmem:[%s1840 + $0x8] sm:$0xe]
      %v2215 = vld [vmem:[%s1840 + $0x10] sm:$0xe]
      %v2216 = vld [vmem:[%s1840 + $0x18] sm:$0xe]
      %v2217 = vld [vmem:[%s1840 + $0x20] sm:$0xe]
      %v2218 = vld [vmem:[%s1840 + $0x28] sm:$0xe]
      %v2219 = vld [vmem:[%s1840 + $0x30] sm:$0xe]
      %v2220 = vld [vmem:[%s1840 + $0x38] sm:$0xe]
      %v2237 = vrot.slane %v2213, 5
      %v2238 = vrot.slane %v2237, 4
      %v2239 = vrot.slane %v1972, 5
      %v2240 = vsel %vm1151, %v2238, %v2239
      %v2241 = vrot.slane %v2214, 5
      %v2242 = vrot.slane %v2241, 4
      %v2243 = vrot.slane %v1974, 5
      %v2244 = vsel %vm1151, %v2242, %v2243
      %v2245 = vrot.slane %v2215, 5
      %v2246 = vrot.slane %v2245, 4
      %v2247 = vrot.slane %v1976, 5
      %v2248 = vsel %vm1151, %v2246, %v2247
      %v2249 = vrot.slane %v2216, 5
      %v2250 = vrot.slane %v2249, 4
      %v2251 = vrot.slane %v1978, 5
      %v2252 = vsel %vm1151, %v2250, %v2251
      %v2253 = vrot.slane %v2217, 5
      %v2254 = vrot.slane %v2253, 4
      %v2255 = vrot.slane %v1980, 5
      %v2256 = vsel %vm1151, %v2254, %v2255
      %v2257 = vrot.slane %v2218, 5
      %v2258 = vrot.slane %v2257, 4
      %v2259 = vrot.slane %v1982, 5
      %v2260 = vsel %vm1151, %v2258, %v2259
      %v2261 = vrot.slane %v2219, 5
      %v2262 = vrot.slane %v2261, 4
      %v2263 = vrot.slane %v1984, 5
      %v2264 = vsel %vm1151, %v2262, %v2263
      %v2265 = vrot.slane %v2220, 5
      %v2266 = vrot.slane %v2265, 4
      %v2267 = vrot.slane %v1986, 5
      %v2268 = vsel %vm1151, %v2266, %v2267
      %s2269 = scalar_lea.vmem %s3, 128
      %v2270 = vld [vmem:[%s2269] sm:$0xf]
      %v2271 = vld [vmem:[%s2269 + $0x4] sm:$0xf]
      %v2272 = vld [vmem:[%s2269 + $0x8] sm:$0xf]
      %v2273 = vld [vmem:[%s2269 + $0xc] sm:$0xf]
      %v2274 = vunpack.c.l.b16 %v2240
      %v2275 = vunpack.c.l.b16 %v2244
      %v2276 = vunpack.c.l.b16 %v2248
      %v2277 = vunpack.c.l.b16 %v2252
      %v2278 = vunpack.c.l.b16 %v2256
      %v2279 = vunpack.c.l.b16 %v2260
      %v2280 = vunpack.c.l.b16 %v2264
      %v2281 = vunpack.c.l.b16 %v2268
      %v2282 = vpack.c.b16 %v2275, %v2274
      %v2283 = vpack.c.b16 %v2277, %v2276
      %v2284 = vpack.c.b16 %v2279, %v2278
      %v2285 = vpack.c.b16 %v2281, %v2280
      %v2290 = vunpack.c.l.b16 %v2270
      %v2291 = vunpack.c.l.b16 %v2271
      %v2292 = vunpack.c.l.b16 %v2272
      %v2293 = vunpack.c.l.b16 %v2273
      %v2294 = vpack.c.b16 %v2291, %v2290
      %v2295 = vpack.c.b16 %v2293, %v2292
      %v2299 = vsel %vm342, %v2282, 0
      %v2302 = vsel %vm342, %v2283, 0
      %v2305 = vsel %vm342, %v2284, 0
      %v2308 = vsel %vm342, %v2285, 0
      %2310 = vmatprep.subr.bf16.mxu0 0
      %2311 = vmatpush1.bf16.msra.mxu0 %v2294
      %2312 = vmatprep.subr.bf16.mxu0 0
      %2313 = vmatpush1.bf16.msra.mxu0 %v2295
      %2314 = vmatprep.subr.bf16.mxu0 0
      %2315 = vmatpush1.bf16.msra.mxu0 0
      %2316 = vmatprep.subr.bf16.mxu0 0
      %2317 = vmatpush1.bf16.msra.mxu0 0
      %2318 = vmatprep.subr.bf16.mxu0 0
      %2319 = vmatpush1.bf16.msra.mxu0 0
      %2320 = vmatprep.subr.bf16.mxu0 0
      %2321 = vmatpush1.bf16.msra.mxu0 0
      %2322 = vmatprep.subr.bf16.mxu0 0
      %2323 = vmatpush1.bf16.msra.mxu0 0
      %2324 = vmatprep.subr.bf16.mxu0 0
      %2325 = vmatpush1.bf16.msra.mxu0 0
      %2326 = vmatprep.subr.bf16.mxu0 0
      %2327 = vmatpush1.bf16.msra.mxu0 0
      %2328 = vmatprep.subr.bf16.mxu0 0
      %2329 = vmatpush1.bf16.msra.mxu0 0
      %2330 = vmatprep.subr.bf16.mxu0 0
      %2331 = vmatpush1.bf16.msra.mxu0 0
      %2332 = vmatprep.subr.bf16.mxu0 0
      %2333 = vmatpush1.bf16.msra.mxu0 0
      %2334 = vmatprep.subr.bf16.mxu0 0
      %2335 = vmatpush1.bf16.msra.mxu0 0
      %2336 = vmatprep.subr.bf16.mxu0 0
      %2337 = vmatpush1.bf16.msra.mxu0 0
      %2338 = vmatprep.subr.bf16.mxu0 0
      %2339 = vmatpush1.bf16.msra.mxu0 0
      %2340 = vmatprep.subr.bf16.mxu0 0
      %2341 = vmatpush1.bf16.msra.mxu0 0
      %2342 = vmatprep.mubr.bf16.mxu0 0
      %2343 = vmatmul.mubr.bf16.gmra.mrb[0].mxu0 %v2299
      %v2344 = vpop.f32.mrb[0].mxu0
      %v2345 = vadd.f32 0.0, %v2344
      %v2346 = vpop.f32.mrb[0].mxu0
      %v2347 = vpop.f32.mrb[0].mxu0
      %v2348 = vadd.f32 0.0, %v2347
      %v2349 = vpop.f32.mrb[0].mxu0
      %2350 = vmatprep.mubr.bf16.mxu0 0
      %2351 = vmatmul.mubr.bf16.gmra.mrb[0].mxu0 %v2302
      %v2352 = vpop.f32.mrb[0].mxu0
      %v2353 = vadd.f32 0.0, %v2352
      %v2354 = vpop.f32.mrb[0].mxu0
      %v2355 = vpop.f32.mrb[0].mxu0
      %v2356 = vadd.f32 0.0, %v2355
      %v2357 = vpop.f32.mrb[0].mxu0
      %2358 = vmatprep.mubr.bf16.mxu0 0
      %2359 = vmatmul.mubr.bf16.gmra.mrb[0].mxu0 %v2305
      %v2360 = vpop.f32.mrb[0].mxu0
      %v2361 = vadd.f32 0.0, %v2360
      %v2362 = vpop.f32.mrb[0].mxu0
      %v2363 = vpop.f32.mrb[0].mxu0
      %v2364 = vadd.f32 0.0, %v2363
      %v2365 = vpop.f32.mrb[0].mxu0
      %2366 = vmatprep.mubr.bf16.mxu0 0
      %2367 = vmatmul.mubr.bf16.gmra.mrb[0].mxu0 %v2308
      %v2368 = vpop.f32.mrb[0].mxu0
      %v2369 = vadd.f32 0.0, %v2368
      %v2370 = vpop.f32.mrb[0].mxu0
      %v2371 = vpop.f32.mrb[0].mxu0
      %v2372 = vadd.f32 0.0, %v2371
      %v2373 = vpop.f32.mrb[0].mxu0
      %2374 = vdwg.mxu0
      %v2375 = vadd.f32 %v2205, %v2345
      %v2376 = vadd.f32 %v2206, %v2348
      %v2377 = vadd.f32 %v2207, %v2353
      %v2378 = vadd.f32 %v2208, %v2356
      %v2379 = vadd.f32 %v2209, %v2361
      %v2380 = vadd.f32 %v2210, %v2364
      %v2381 = vadd.f32 %v2211, %v2369
      %v2382 = vadd.f32 %v2212, %v2372
      %v2383 = vld [vmem:[%s4] sm:$0x1]
      %v2385 = vlaneseq
      %v2386 = vshrl.u32 %v2385, 7
      %v2387 = vsub.s32 0, %v2386
      %v2388 = vrot.slane %v2383, %v2387
      %v2390 = vadd.f32 %v2375, %v2388
      %v2391 = vadd.f32 %v2376, %v2388
      %v2392 = vadd.f32 %v2377, %v2388
      %v2393 = vadd.f32 %v2378, %v2388
      %v2394 = vadd.f32 %v2379, %v2388
      %v2395 = vadd.f32 %v2380, %v2388
      %v2396 = vadd.f32 %v2381, %v2388
      %v2397 = vadd.f32 %v2382, %v2388
      %v2398 = vsel %vm342, %v2390, 0.0
      %v2399 = vsel %vm342, %v2391, 0.0
      %v2400 = vadd.f32 %v2398, %v2399
      %v2401 = vsel %vm342, %v2392, 0.0
      %v2402 = vadd.f32 %v2400, %v2401
      %v2403 = vsel %vm342, %v2393, 0.0
      %v2404 = vadd.f32 %v2402, %v2403
      %v2405 = vsel %vm342, %v2394, 0.0
      %v2406 = vadd.f32 %v2404, %v2405
      %v2407 = vsel %vm342, %v2395, 0.0
      %v2408 = vadd.f32 %v2406, %v2407
      %v2409 = vsel %vm342, %v2396, 0.0
      %v2410 = vadd.f32 %v2408, %v2409
      %v2411 = vsel %vm342, %v2397, 0.0
      %v2412 = vadd.f32 %v2410, %v2411
      %v2413 = vmul.f32 %v2412, %v358
      %v2414 = vsub.f32 %v2390, %v2413
      %v2415 = vsub.f32 %v2391, %v2413
      %v2416 = vsub.f32 %v2392, %v2413
      %v2417 = vsub.f32 %v2393, %v2413
      %v2418 = vsub.f32 %v2394, %v2413
      %v2419 = vsub.f32 %v2395, %v2413
      %v2420 = vsub.f32 %v2396, %v2413
      %v2421 = vsub.f32 %v2397, %v2413
      %v2422 = vmul.f32 %v2414, %v2414
      %v2423 = vmul.f32 %v2415, %v2415
      %v2424 = vmul.f32 %v2416, %v2416
      %v2425 = vmul.f32 %v2417, %v2417
      %v2426 = vmul.f32 %v2418, %v2418
      %v2427 = vmul.f32 %v2419, %v2419
      %v2428 = vmul.f32 %v2420, %v2420
      %v2429 = vmul.f32 %v2421, %v2421
      %v2430 = vsel %vm342, %v2422, 0.0
      %v2431 = vsel %vm342, %v2423, 0.0
      %v2432 = vadd.f32 %v2430, %v2431
      %v2433 = vsel %vm342, %v2424, 0.0
      %v2434 = vadd.f32 %v2432, %v2433
      %v2435 = vsel %vm342, %v2425, 0.0
      %v2436 = vadd.f32 %v2434, %v2435
      %v2437 = vsel %vm342, %v2426, 0.0
      %v2438 = vadd.f32 %v2436, %v2437
      %v2439 = vsel %vm342, %v2427, 0.0
      %v2440 = vadd.f32 %v2438, %v2439
      %v2441 = vsel %vm342, %v2428, 0.0
      %v2442 = vadd.f32 %v2440, %v2441
      %v2443 = vsel %vm342, %v2429, 0.0
      %v2444 = vadd.f32 %v2442, %v2443
      %v2445 = vmul.f32 %v2444, %v358
      %v2446 = vadd.f32 %v2445, 1e-05
      %v2447 = vrsqrt.pop %v2446
      %v2448 = vmul.f32 %v2414, %v2447
      %v2449 = vmul.f32 %v2415, %v2447
      %v2450 = vmul.f32 %v2416, %v2447
      %v2451 = vmul.f32 %v2417, %v2447
      %v2452 = vmul.f32 %v2418, %v2447
      %v2453 = vmul.f32 %v2419, %v2447
      %v2454 = vmul.f32 %v2420, %v2447
      %v2455 = vmul.f32 %v2421, %v2447
      %v2456 = vld [vmem:[%s5] sm:$0x1]
      %v2457 = vld [vmem:[%s5 + $0x1] sm:$0x1]
      %v2458 = vld [vmem:[%s5 + $0x2] sm:$0x1]
      %v2459 = vld [vmem:[%s5 + $0x3] sm:$0x1]
      %v2460 = vld [vmem:[%s5 + $0x4] sm:$0x1]
      %v2461 = vld [vmem:[%s5 + $0x5] sm:$0x1]
      %v2462 = vld [vmem:[%s5 + $0x6] sm:$0x1]
      %v2463 = vld [vmem:[%s5 + $0x7] sm:$0x1]
      %v2472 = vlaneseq
      %v2473 = vshrl.u32 %v2472, 7
      %v2474 = vsub.s32 0, %v2473
      %v2475 = vrot.slane %v2456, %v2474
      %v2476 = vlaneseq
      %v2477 = vshrl.u32 %v2476, 7
      %v2478 = vsub.s32 0, %v2477
      %v2479 = vrot.slane %v2457, %v2478
      %v2480 = vlaneseq
      %v2481 = vshrl.u32 %v2480, 7
      %v2482 = vsub.s32 0, %v2481
      %v2483 = vrot.slane %v2458, %v2482
      %v2484 = vlaneseq
      %v2485 = vshrl.u32 %v2484, 7
      %v2486 = vsub.s32 0, %v2485
      %v2487 = vrot.slane %v2459, %v2486
      %v2488 = vlaneseq
      %v2489 = vshrl.u32 %v2488, 7
      %v2490 = vsub.s32 0, %v2489
      %v2491 = vrot.slane %v2460, %v2490
      %v2492 = vlaneseq
      %v2493 = vshrl.u32 %v2492, 7
      %v2494 = vsub.s32 0, %v2493
      %v2495 = vrot.slane %v2461, %v2494
      %v2496 = vlaneseq
      %v2497 = vshrl.u32 %v2496, 7
      %v2498 = vsub.s32 0, %v2497
      %v2499 = vrot.slane %v2462, %v2498
      %v2500 = vlaneseq
      %v2501 = vshrl.u32 %v2500, 7
      %v2502 = vsub.s32 0, %v2501
      %v2503 = vrot.slane %v2463, %v2502
      %2504 = vset.pattern.permute.xlu0 0
      %2505 = vperm.xlu0 %2504, %v2475
      %v2506 = vpop.permute.xlu0 %2505
      %2508 = vset.pattern.permute.xlu0 0
      %2509 = vperm.xlu0 %2508, %v2479
      %v2510 = vpop.permute.xlu0 %2509
      %2512 = vset.pattern.permute.xlu0 0
      %2513 = vperm.xlu0 %2512, %v2483
      %v2514 = vpop.permute.xlu0 %2513
      %2516 = vset.pattern.permute.xlu0 0
      %2517 = vperm.xlu0 %2516, %v2487
      %v2518 = vpop.permute.xlu0 %2517
      %2520 = vset.pattern.permute.xlu0 0
      %2521 = vperm.xlu0 %2520, %v2491
      %v2522 = vpop.permute.xlu0 %2521
      %2524 = vset.pattern.permute.xlu0 0
      %2525 = vperm.xlu0 %2524, %v2495
      %v2526 = vpop.permute.xlu0 %2525
      %2528 = vset.pattern.permute.xlu0 0
      %2529 = vperm.xlu0 %2528, %v2499
      %v2530 = vpop.permute.xlu0 %2529
      %2532 = vset.pattern.permute.xlu0 0
      %2533 = vperm.xlu0 %2532, %v2503
      %v2534 = vpop.permute.xlu0 %2533
      %v2536 = vmul.f32 %v2448, %v2506
      %v2537 = vmul.f32 %v2449, %v2510
      %v2538 = vmul.f32 %v2450, %v2514
      %v2539 = vmul.f32 %v2451, %v2518
      %v2540 = vmul.f32 %v2452, %v2522
      %v2541 = vmul.f32 %v2453, %v2526
      %v2542 = vmul.f32 %v2454, %v2530
      %v2543 = vmul.f32 %v2455, %v2534
      %v2544 = vld [vmem:[%s6] sm:$0x1]
      %v2545 = vld [vmem:[%s6 + $0x1] sm:$0x1]
      %v2546 = vld [vmem:[%s6 + $0x2] sm:$0x1]
      %v2547 = vld [vmem:[%s6 + $0x3] sm:$0x1]
      %v2548 = vld [vmem:[%s6 + $0x4] sm:$0x1]
      %v2549 = vld [vmem:[%s6 + $0x5] sm:$0x1]
      %v2550 = vld [vmem:[%s6 + $0x6] sm:$0x1]
      %v2551 = vld [vmem:[%s6 + $0x7] sm:$0x1]
      %v2560 = vlaneseq
      %v2561 = vshrl.u32 %v2560, 7
      %v2562 = vsub.s32 0, %v2561
      %v2563 = vrot.slane %v2544, %v2562
      %v2564 = vlaneseq
      %v2565 = vshrl.u32 %v2564, 7
      %v2566 = vsub.s32 0, %v2565
      %v2567 = vrot.slane %v2545, %v2566
      %v2568 = vlaneseq
      %v2569 = vshrl.u32 %v2568, 7
      %v2570 = vsub.s32 0, %v2569
      %v2571 = vrot.slane %v2546, %v2570
      %v2572 = vlaneseq
      %v2573 = vshrl.u32 %v2572, 7
      %v2574 = vsub.s32 0, %v2573
      %v2575 = vrot.slane %v2547, %v2574
      %v2576 = vlaneseq
      %v2577 = vshrl.u32 %v2576, 7
      %v2578 = vsub.s32 0, %v2577
      %v2579 = vrot.slane %v2548, %v2578
      %v2580 = vlaneseq
      %v2581 = vshrl.u32 %v2580, 7
      %v2582 = vsub.s32 0, %v2581
      %v2583 = vrot.slane %v2549, %v2582
      %v2584 = vlaneseq
      %v2585 = vshrl.u32 %v2584, 7
      %v2586 = vsub.s32 0, %v2585
      %v2587 = vrot.slane %v2550, %v2586
      %v2588 = vlaneseq
      %v2589 = vshrl.u32 %v2588, 7
      %v2590 = vsub.s32 0, %v2589
      %v2591 = vrot.slane %v2551, %v2590
      %2592 = vset.pattern.permute.xlu0 0
      %2593 = vperm.xlu0 %2592, %v2563
      %v2594 = vpop.permute.xlu0 %2593
      %2596 = vset.pattern.permute.xlu0 0
      %2597 = vperm.xlu0 %2596, %v2567
      %v2598 = vpop.permute.xlu0 %2597
      %2600 = vset.pattern.permute.xlu0 0
      %2601 = vperm.xlu0 %2600, %v2571
      %v2602 = vpop.permute.xlu0 %2601
      %2604 = vset.pattern.permute.xlu0 0
      %2605 = vperm.xlu0 %2604, %v2575
      %v2606 = vpop.permute.xlu0 %2605
      %2608 = vset.pattern.permute.xlu0 0
      %2609 = vperm.xlu0 %2608, %v2579
      %v2610 = vpop.permute.xlu0 %2609
      %2612 = vset.pattern.permute.xlu0 0
      %2613 = vperm.xlu0 %2612, %v2583
      %v2614 = vpop.permute.xlu0 %2613
      %2616 = vset.pattern.permute.xlu0 0
      %2617 = vperm.xlu0 %2616, %v2587
      %v2618 = vpop.permute.xlu0 %2617
      %2620 = vset.pattern.permute.xlu0 0
      %2621 = vperm.xlu0 %2620, %v2591
      %v2622 = vpop.permute.xlu0 %2621
      %v2624 = vadd.f32 %v2536, %v2594
      %v2625 = vadd.f32 %v2537, %v2598
      %v2626 = vadd.f32 %v2538, %v2602
      %v2627 = vadd.f32 %v2539, %v2606
      %v2628 = vadd.f32 %v2540, %v2610
      %v2629 = vadd.f32 %v2541, %v2614
      %v2630 = vadd.f32 %v2542, %v2618
      %v2631 = vadd.f32 %v2543, %v2622
      %v2632 = vmax.f32 %v2624, 0.0
      %v2633 = vmax.f32 %v2625, 0.0
      %v2634 = vmax.f32 %v2626, 0.0
      %v2635 = vmax.f32 %v2627, 0.0
      %v2636 = vmax.f32 %v2628, 0.0
      %v2637 = vmax.f32 %v2629, 0.0
      %v2638 = vmax.f32 %v2630, 0.0
      %v2639 = vmax.f32 %v2631, 0.0
      %v2640 = vpack.c.bf16 %v2632, %v2632
      %v2641 = vpack.c.bf16 %v2633, %v2633
      %v2642 = vpack.c.bf16 %v2634, %v2634
      %v2643 = vpack.c.bf16 %v2635, %v2635
      %v2644 = vpack.c.bf16 %v2636, %v2636
      %v2645 = vpack.c.bf16 %v2637, %v2637
      %v2646 = vpack.c.bf16 %v2638, %v2638
      %v2647 = vpack.c.bf16 %v2639, %v2639
      %v2656 = vunpack.c.l.b16 %v2640
      %v2657 = vunpack.c.l.b16 %v2641
      %v2658 = vunpack.c.l.b16 %v2642
      %v2659 = vunpack.c.l.b16 %v2643
      %v2660 = vunpack.c.l.b16 %v2644
      %v2661 = vunpack.c.l.b16 %v2645
      %v2662 = vunpack.c.l.b16 %v2646
      %v2663 = vunpack.c.l.b16 %v2647
      %v2664 = vpack.c.b16 %v2656, %v2656
      %v2665 = vpack.c.b16 %v2657, %v2657
      %v2666 = vpack.c.b16 %v2658, %v2658
      %v2667 = vpack.c.b16 %v2659, %v2659
      %v2668 = vpack.c.b16 %v2660, %v2660
      %v2669 = vpack.c.b16 %v2661, %v2661
      %v2670 = vpack.c.b16 %v2662, %v2662
      %v2671 = vpack.c.b16 %v2663, %v2663
      %v2673 = vshrl.u32 %v2664, 16
      %v2675 = vrot.slane %v2673, 7
      %v2676 = vshll.u32 %v2664, 16
      %v2678 = vor.u32 %v2675, %v2676
      %v2679 = vrot.slane %v2675, 4
      %v2681 = vshrl.u32 %v2665, 16
      %v2683 = vrot.slane %v2681, 7
      %v2684 = vshll.u32 %v2665, 16
      %v2686 = vor.u32 %v2683, %v2684
      %v2687 = vrot.slane %v2683, 4
      %v2689 = vshrl.u32 %v2666, 16
      %v2691 = vrot.slane %v2689, 7
      %v2692 = vshll.u32 %v2666, 16
      %v2694 = vor.u32 %v2691, %v2692
      %v2695 = vrot.slane %v2691, 4
      %v2697 = vshrl.u32 %v2667, 16
      %v2699 = vrot.slane %v2697, 7
      %v2700 = vshll.u32 %v2667, 16
      %v2702 = vor.u32 %v2699, %v2700
      %v2703 = vrot.slane %v2699, 4
      %v2705 = vshrl.u32 %v2668, 16
      %v2707 = vrot.slane %v2705, 7
      %v2708 = vshll.u32 %v2668, 16
      %v2710 = vor.u32 %v2707, %v2708
      %v2711 = vrot.slane %v2707, 4
      %v2713 = vshrl.u32 %v2669, 16
      %v2715 = vrot.slane %v2713, 7
      %v2716 = vshll.u32 %v2669, 16
      %v2718 = vor.u32 %v2715, %v2716
      %v2719 = vrot.slane %v2715, 4
      %v2721 = vshrl.u32 %v2670, 16
      %v2723 = vrot.slane %v2721, 7
      %v2724 = vshll.u32 %v2670, 16
      %v2726 = vor.u32 %v2723, %v2724
      %v2727 = vrot.slane %v2723, 4
      %v2729 = vshrl.u32 %v2671, 16
      %v2731 = vrot.slane %v2729, 7
      %v2732 = vshll.u32 %v2671, 16
      %v2734 = vor.u32 %v2731, %v2732
      %v2735 = vrot.slane %v2731, 4
      %v2752 = vsel %vm723, %v2678, %v1428
      %2753 = vst [vmem:[%s720] sm:$0xf] %v2752
      %v2754 = vld [vmem:[%s720 + $0x4] sm:$0x1]
      %v2755 = vsel %vm729, %v2679, %v2754
      %2756 = vst [vmem:[%s720 + $0x4] sm:$0x1] %v2755
      %v2757 = vld [vmem:[%s720 + $0x8] sm:$0xf]
      %v2758 = vsel %vm723, %v2686, %v2757
      %2759 = vst [vmem:[%s720 + $0x8] sm:$0xf] %v2758
      %v2760 = vld [vmem:[%s720 + $0xc] sm:$0x1]
      %v2761 = vsel %vm729, %v2687, %v2760
      %2762 = vst [vmem:[%s720 + $0xc] sm:$0x1] %v2761
      %v2763 = vld [vmem:[%s720 + $0x10] sm:$0xf]
      %v2764 = vsel %vm723, %v2694, %v2763
      %2765 = vst [vmem:[%s720 + $0x10] sm:$0xf] %v2764
      %v2766 = vld [vmem:[%s720 + $0x14] sm:$0x1]
      %v2767 = vsel %vm729, %v2695, %v2766
      %2768 = vst [vmem:[%s720 + $0x14] sm:$0x1] %v2767
      %v2769 = vld [vmem:[%s720 + $0x18] sm:$0xf]
      %v2770 = vsel %vm723, %v2702, %v2769
      %2771 = vst [vmem:[%s720 + $0x18] sm:$0xf] %v2770
      %v2772 = vld [vmem:[%s720 + $0x1c] sm:$0x1]
      %v2773 = vsel %vm729, %v2703, %v2772
      %2774 = vst [vmem:[%s720 + $0x1c] sm:$0x1] %v2773
      %v2775 = vld [vmem:[%s720 + $0x20] sm:$0xf]
      %v2776 = vsel %vm723, %v2710, %v2775
      %2777 = vst [vmem:[%s720 + $0x20] sm:$0xf] %v2776
      %v2778 = vld [vmem:[%s720 + $0x24] sm:$0x1]
      %v2779 = vsel %vm729, %v2711, %v2778
      %2780 = vst [vmem:[%s720 + $0x24] sm:$0x1] %v2779
      %v2781 = vld [vmem:[%s720 + $0x28] sm:$0xf]
      %v2782 = vsel %vm723, %v2718, %v2781
      %2783 = vst [vmem:[%s720 + $0x28] sm:$0xf] %v2782
      %v2784 = vld [vmem:[%s720 + $0x2c] sm:$0x1]
      %v2785 = vsel %vm729, %v2719, %v2784
      %2786 = vst [vmem:[%s720 + $0x2c] sm:$0x1] %v2785
      %v2787 = vld [vmem:[%s720 + $0x30] sm:$0xf]
      %v2788 = vsel %vm723, %v2726, %v2787
      %2789 = vst [vmem:[%s720 + $0x30] sm:$0xf] %v2788
      %v2790 = vld [vmem:[%s720 + $0x34] sm:$0x1]
      %v2791 = vsel %vm729, %v2727, %v2790
      %2792 = vst [vmem:[%s720 + $0x34] sm:$0x1] %v2791
      %v2793 = vld [vmem:[%s720 + $0x38] sm:$0xf]
      %v2794 = vsel %vm723, %v2734, %v2793
      %2795 = vst [vmem:[%s720 + $0x38] sm:$0xf] %v2794
      %v2796 = vld [vmem:[%s720 + $0x3c] sm:$0x1]
      %v2797 = vsel %vm729, %v2735, %v2796
      %2798 = vst [vmem:[%s720 + $0x3c] sm:$0x1] %v2797
      %v2799 = vld [vmem:[#allocation2] sm:$0xf]
      %v2800 = vld [vmem:[#allocation2 + $0x8] sm:$0xf]
      %v2801 = vld [vmem:[#allocation2 + $0x10] sm:$0xf]
      %v2802 = vld [vmem:[#allocation2 + $0x18] sm:$0xf]
      %v2803 = vld [vmem:[#allocation2 + $0x20] sm:$0xf]
      %v2804 = vld [vmem:[#allocation2 + $0x28] sm:$0xf]
      %v2805 = vld [vmem:[#allocation2 + $0x30] sm:$0xf]
      %v2806 = vld [vmem:[#allocation2 + $0x38] sm:$0xf]
      %v2807 = vld [vmem:[%s7] sm:$0xf]
      %v2808 = vld [vmem:[%s7 + $0x4] sm:$0xf]
      %v2809 = vld [vmem:[%s7 + $0x8] sm:$0xf]
      %v2810 = vld [vmem:[%s7 + $0xc] sm:$0xf]
      %v2811 = vld [vmem:[#allocation2 + $0x4] sm:$0x1]
      %v2812 = vld [vmem:[#allocation2 + $0xc] sm:$0x1]
      %v2813 = vld [vmem:[#allocation2 + $0x14] sm:$0x1]
      %v2814 = vld [vmem:[#allocation2 + $0x1c] sm:$0x1]
      %v2815 = vld [vmem:[#allocation2 + $0x24] sm:$0x1]
      %v2816 = vld [vmem:[#allocation2 + $0x2c] sm:$0x1]
      %v2817 = vld [vmem:[#allocation2 + $0x34] sm:$0x1]
      %v2818 = vld [vmem:[#allocation2 + $0x3c] sm:$0x1]
      %v2820 = vshrl.u32 %v2799, 16
      %v2822 = vrot.slane %v2820, 4
      %v2823 = vshll.u32 %v2799, 16
      %v2825 = vrot.slane %v2823, 5
      %v2826 = vor.u32 %v2822, %v2825
      %v2827 = vrot.slane %v2826, 4
      %v2829 = vshll.u32 %v2811, 16
      %v2831 = vrot.slane %v2829, 5
      %v2832 = vsel %vm797, %v2827, %v2831
      %v2834 = vshrl.u32 %v2800, 16
      %v2836 = vrot.slane %v2834, 4
      %v2837 = vshll.u32 %v2800, 16
      %v2839 = vrot.slane %v2837, 5
      %v2840 = vor.u32 %v2836, %v2839
      %v2841 = vrot.slane %v2840, 4
      %v2843 = vshll.u32 %v2812, 16
      %v2845 = vrot.slane %v2843, 5
      %v2846 = vsel %vm797, %v2841, %v2845
      %v2848 = vshrl.u32 %v2801, 16
      %v2850 = vrot.slane %v2848, 4
      %v2851 = vshll.u32 %v2801, 16
      %v2853 = vrot.slane %v2851, 5
      %v2854 = vor.u32 %v2850, %v2853
      %v2855 = vrot.slane %v2854, 4
      %v2857 = vshll.u32 %v2813, 16
      %v2859 = vrot.slane %v2857, 5
      %v2860 = vsel %vm797, %v2855, %v2859
      %v2862 = vshrl.u32 %v2802, 16
      %v2864 = vrot.slane %v2862, 4
      %v2865 = vshll.u32 %v2802, 16
      %v2867 = vrot.slane %v2865, 5
      %v2868 = vor.u32 %v2864, %v2867
      %v2869 = vrot.slane %v2868, 4
      %v2871 = vshll.u32 %v2814, 16
      %v2873 = vrot.slane %v2871, 5
      %v2874 = vsel %vm797, %v2869, %v2873
      %v2876 = vshrl.u32 %v2803, 16
      %v2878 = vrot.slane %v2876, 4
      %v2879 = vshll.u32 %v2803, 16
      %v2881 = vrot.slane %v2879, 5
      %v2882 = vor.u32 %v2878, %v2881
      %v2883 = vrot.slane %v2882, 4
      %v2885 = vshll.u32 %v2815, 16
      %v2887 = vrot.slane %v2885, 5
      %v2888 = vsel %vm797, %v2883, %v2887
      %v2890 = vshrl.u32 %v2804, 16
      %v2892 = vrot.slane %v2890, 4
      %v2893 = vshll.u32 %v2804, 16
      %v2895 = vrot.slane %v2893, 5
      %v2896 = vor.u32 %v2892, %v2895
      %v2897 = vrot.slane %v2896, 4
      %v2899 = vshll.u32 %v2816, 16
      %v2901 = vrot.slane %v2899, 5
      %v2902 = vsel %vm797, %v2897, %v2901
      %v2904 = vshrl.u32 %v2805, 16
      %v2906 = vrot.slane %v2904, 4
      %v2907 = vshll.u32 %v2805, 16
      %v2909 = vrot.slane %v2907, 5
      %v2910 = vor.u32 %v2906, %v2909
      %v2911 = vrot.slane %v2910, 4
      %v2913 = vshll.u32 %v2817, 16
      %v2915 = vrot.slane %v2913, 5
      %v2916 = vsel %vm797, %v2911, %v2915
      %v2918 = vshrl.u32 %v2806, 16
      %v2920 = vrot.slane %v2918, 4
      %v2921 = vshll.u32 %v2806, 16
      %v2923 = vrot.slane %v2921, 5
      %v2924 = vor.u32 %v2920, %v2923
      %v2925 = vrot.slane %v2924, 4
      %v2927 = vshll.u32 %v2818, 16
      %v2929 = vrot.slane %v2927, 5
      %v2930 = vsel %vm797, %v2925, %v2929
      %s2931 = scalar_lea.vmem %s7, 16
      %v2932 = vld [vmem:[%s2931] sm:$0xf]
      %v2933 = vld [vmem:[%s2931 + $0x4] sm:$0xf]
      %v2934 = vld [vmem:[%s2931 + $0x8] sm:$0xf]
      %v2935 = vld [vmem:[%s2931 + $0xc] sm:$0xf]
      %v2936 = vunpack.c.l.b16 %v2832
      %v2937 = vunpack.c.l.b16 %v2846
      %v2938 = vunpack.c.l.b16 %v2860
      %v2939 = vunpack.c.l.b16 %v2874
      %v2940 = vunpack.c.l.b16 %v2888
      %v2941 = vunpack.c.l.b16 %v2902
      %v2942 = vunpack.c.l.b16 %v2916
      %v2943 = vunpack.c.l.b16 %v2930
      %v2944 = vpack.c.b16 %v2937, %v2936
      %v2945 = vpack.c.b16 %v2939, %v2938
      %v2946 = vpack.c.b16 %v2941, %v2940
      %v2947 = vpack.c.b16 %v2943, %v2942
      %v2952 = vunpack.c.l.b16 %v2932
      %v2953 = vunpack.c.l.b16 %v2933
      %v2954 = vunpack.c.l.b16 %v2934
      %v2955 = vunpack.c.l.b16 %v2935
      %v2956 = vpack.c.b16 %v2953, %v2952
      %v2957 = vpack.c.b16 %v2955, %v2954
      %v2961 = vsel %vm342, %v2944, 0
      %v2964 = vsel %vm342, %v2945, 0
      %v2967 = vsel %vm342, %v2946, 0
      %v2970 = vsel %vm342, %v2947, 0
      %2972 = vmatprep.subr.bf16.mxu0 0
      %2973 = vmatpush1.bf16.msra.mxu0 %v2956
      %2974 = vmatprep.subr.bf16.mxu0 0
      %2975 = vmatpush1.bf16.msra.mxu0 %v2957
      %2976 = vmatprep.subr.bf16.mxu0 0
      %2977 = vmatpush1.bf16.msra.mxu0 0
      %2978 = vmatprep.subr.bf16.mxu0 0
      %2979 = vmatpush1.bf16.msra.mxu0 0
      %2980 = vmatprep.subr.bf16.mxu0 0
      %2981 = vmatpush1.bf16.msra.mxu0 0
      %2982 = vmatprep.subr.bf16.mxu0 0
      %2983 = vmatpush1.bf16.msra.mxu0 0
      %2984 = vmatprep.subr.bf16.mxu0 0
      %2985 = vmatpush1.bf16.msra.mxu0 0
      %2986 = vmatprep.subr.bf16.mxu0 0
      %2987 = vmatpush1.bf16.msra.mxu0 0
      %2988 = vmatprep.subr.bf16.mxu0 0
      %2989 = vmatpush1.bf16.msra.mxu0 0
      %2990 = vmatprep.subr.bf16.mxu0 0
      %2991 = vmatpush1.bf16.msra.mxu0 0
      %2992 = vmatprep.subr.bf16.mxu0 0
      %2993 = vmatpush1.bf16.msra.mxu0 0
      %2994 = vmatprep.subr.bf16.mxu0 0
      %2995 = vmatpush1.bf16.msra.mxu0 0
      %2996 = vmatprep.subr.bf16.mxu0 0
      %2997 = vmatpush1.bf16.msra.mxu0 0
      %2998 = vmatprep.subr.bf16.mxu0 0
      %2999 = vmatpush1.bf16.msra.mxu0 0
      %3000 = vmatprep.subr.bf16.mxu0 0
      %3001 = vmatpush1.bf16.msra.mxu0 0
      %3002 = vmatprep.subr.bf16.mxu0 0
      %3003 = vmatpush1.bf16.msra.mxu0 0
      %3004 = vmatprep.mubr.bf16.mxu0 0
      %3005 = vmatmul.mubr.bf16.gmra.mrb[0].mxu0 %v2961
      %v3006 = vpop.f32.mrb[0].mxu0
      %v3007 = vadd.f32 0.0, %v3006
      %v3008 = vpop.f32.mrb[0].mxu0
      %v3009 = vpop.f32.mrb[0].mxu0
      %v3010 = vadd.f32 0.0, %v3009
      %v3011 = vpop.f32.mrb[0].mxu0
      %3012 = vmatprep.mubr.bf16.mxu0 0
      %3013 = vmatmul.mubr.bf16.gmra.mrb[0].mxu0 %v2964
      %v3014 = vpop.f32.mrb[0].mxu0
      %v3015 = vadd.f32 0.0, %v3014
      %v3016 = vpop.f32.mrb[0].mxu0
      %v3017 = vpop.f32.mrb[0].mxu0
      %v3018 = vadd.f32 0.0, %v3017
      %v3019 = vpop.f32.mrb[0].mxu0
      %3020 = vmatprep.mubr.bf16.mxu0 0
      %3021 = vmatmul.mubr.bf16.gmra.mrb[0].mxu0 %v2967
      %v3022 = vpop.f32.mrb[0].mxu0
      %v3023 = vadd.f32 0.0, %v3022
      %v3024 = vpop.f32.mrb[0].mxu0
      %v3025 = vpop.f32.mrb[0].mxu0
      %v3026 = vadd.f32 0.0, %v3025
      %v3027 = vpop.f32.mrb[0].mxu0
      %3028 = vmatprep.mubr.bf16.mxu0 0
      %3029 = vmatmul.mubr.bf16.gmra.mrb[0].mxu0 %v2970
      %v3030 = vpop.f32.mrb[0].mxu0
      %v3031 = vadd.f32 0.0, %v3030
      %v3032 = vpop.f32.mrb[0].mxu0
      %v3033 = vpop.f32.mrb[0].mxu0
      %v3034 = vadd.f32 0.0, %v3033
      %v3035 = vpop.f32.mrb[0].mxu0
      %3036 = vdwg.mxu0
      %v3045 = vunpack.c.l.b16 %v2799
      %v3046 = vunpack.c.l.b16 %v2800
      %v3047 = vunpack.c.l.b16 %v2801
      %v3048 = vunpack.c.l.b16 %v2802
      %v3049 = vunpack.c.l.b16 %v2803
      %v3050 = vunpack.c.l.b16 %v2804
      %v3051 = vunpack.c.l.b16 %v2805
      %v3052 = vunpack.c.l.b16 %v2806
      %v3053 = vpack.c.b16 %v3046, %v3045
      %v3054 = vpack.c.b16 %v3048, %v3047
      %v3055 = vpack.c.b16 %v3050, %v3049
      %v3056 = vpack.c.b16 %v3052, %v3051
      %v3061 = vunpack.c.l.b16 %v2807
      %v3062 = vunpack.c.l.b16 %v2808
      %v3063 = vunpack.c.l.b16 %v2809
      %v3064 = vunpack.c.l.b16 %v2810
      %v3065 = vpack.c.b16 %v3062, %v3061
      %v3066 = vpack.c.b16 %v3064, %v3063
      %v3070 = vsel %vm342, %v3053, 0
      %v3073 = vsel %vm342, %v3054, 0
      %v3076 = vsel %vm342, %v3055, 0
      %v3079 = vsel %vm342, %v3056, 0
      %3081 = vmatprep.subr.bf16.mxu0 0
      %3082 = vmatpush1.bf16.msra.mxu0 %v3065
      %3083 = vmatprep.subr.bf16.mxu0 0
      %3084 = vmatpush1.bf16.msra.mxu0 %v3066
      %3085 = vmatprep.subr.bf16.mxu0 0
      %3086 = vmatpush1.bf16.msra.mxu0 0
      %3087 = vmatprep.subr.bf16.mxu0 0
      %3088 = vmatpush1.bf16.msra.mxu0 0
      %3089 = vmatprep.subr.bf16.mxu0 0
      %3090 = vmatpush1.bf16.msra.mxu0 0
      %3091 = vmatprep.subr.bf16.mxu0 0
      %3092 = vmatpush1.bf16.msra.mxu0 0
      %3093 = vmatprep.subr.bf16.mxu0 0
      %3094 = vmatpush1.bf16.msra.mxu0 0
      %3095 = vmatprep.subr.bf16.mxu0 0
      %3096 = vmatpush1.bf16.msra.mxu0 0
      %3097 = vmatprep.subr.bf16.mxu0 0
      %3098 = vmatpush1.bf16.msra.mxu0 0
      %3099 = vmatprep.subr.bf16.mxu0 0
      %3100 = vmatpush1.bf16.msra.mxu0 0
      %3101 = vmatprep.subr.bf16.mxu0 0
      %3102 = vmatpush1.bf16.msra.mxu0 0
      %3103 = vmatprep.subr.bf16.mxu0 0
      %3104 = vmatpush1.bf16.msra.mxu0 0
      %3105 = vmatprep.subr.bf16.mxu0 0
      %3106 = vmatpush1.bf16.msra.mxu0 0
      %3107 = vmatprep.subr.bf16.mxu0 0
      %3108 = vmatpush1.bf16.msra.mxu0 0
      %3109 = vmatprep.subr.bf16.mxu0 0
      %3110 = vmatpush1.bf16.msra.mxu0 0
      %3111 = vmatprep.subr.bf16.mxu0 0
      %3112 = vmatpush1.bf16.msra.mxu0 0
      %3113 = vmatprep.mubr.bf16.mxu0 0
      %3114 = vmatmul.mubr.bf16.gmra.mrb[0].mxu0 %v3070
      %v3115 = vpop.f32.mrb[0].mxu0
      %v3116 = vadd.f32 %v3007, %v3115
      %v3117 = vpop.f32.mrb[0].mxu0
      %v3118 = vpop.f32.mrb[0].mxu0
      %v3119 = vadd.f32 %v3010, %v3118
      %v3120 = vpop.f32.mrb[0].mxu0
      %3121 = vmatprep.mubr.bf16.mxu0 0
      %3122 = vmatmul.mubr.bf16.gmra.mrb[0].mxu0 %v3073
      %v3123 = vpop.f32.mrb[0].mxu0
      %v3124 = vadd.f32 %v3015, %v3123
      %v3125 = vpop.f32.mrb[0].mxu0
      %v3126 = vpop.f32.mrb[0].mxu0
      %v3127 = vadd.f32 %v3018, %v3126
      %v3128 = vpop.f32.mrb[0].mxu0
      %3129 = vmatprep.mubr.bf16.mxu0 0
      %3130 = vmatmul.mubr.bf16.gmra.mrb[0].mxu0 %v3076
      %v3131 = vpop.f32.mrb[0].mxu0
      %v3132 = vadd.f32 %v3023, %v3131
      %v3133 = vpop.f32.mrb[0].mxu0
      %v3134 = vpop.f32.mrb[0].mxu0
      %v3135 = vadd.f32 %v3026, %v3134
      %v3136 = vpop.f32.mrb[0].mxu0
      %3137 = vmatprep.mubr.bf16.mxu0 0
      %3138 = vmatmul.mubr.bf16.gmra.mrb[0].mxu0 %v3079
      %v3139 = vpop.f32.mrb[0].mxu0
      %v3140 = vadd.f32 %v3031, %v3139
      %v3141 = vpop.f32.mrb[0].mxu0
      %v3142 = vpop.f32.mrb[0].mxu0
      %v3143 = vadd.f32 %v3034, %v3142
      %v3144 = vpop.f32.mrb[0].mxu0
      %3145 = vdwg.mxu0
      %v3146 = vld [vmem:[#allocation2] sm:$0xe]
      %v3147 = vld [vmem:[#allocation2 + $0x8] sm:$0xe]
      %v3148 = vld [vmem:[#allocation2 + $0x10] sm:$0xe]
      %v3149 = vld [vmem:[#allocation2 + $0x18] sm:$0xe]
      %v3150 = vld [vmem:[#allocation2 + $0x20] sm:$0xe]
      %v3151 = vld [vmem:[#allocation2 + $0x28] sm:$0xe]
      %v3152 = vld [vmem:[#allocation2 + $0x30] sm:$0xe]
      %v3153 = vld [vmem:[#allocation2 + $0x38] sm:$0xe]
      %v3170 = vrot.slane %v3146, 5
      %v3171 = vrot.slane %v3170, 4
      %v3172 = vrot.slane %v2811, 5
      %v3173 = vsel %vm1151, %v3171, %v3172
      %v3174 = vrot.slane %v3147, 5
      %v3175 = vrot.slane %v3174, 4
      %v3176 = vrot.slane %v2812, 5
      %v3177 = vsel %vm1151, %v3175, %v3176
      %v3178 = vrot.slane %v3148, 5
      %v3179 = vrot.slane %v3178, 4
      %v3180 = vrot.slane %v2813, 5
      %v3181 = vsel %vm1151, %v3179, %v3180
      %v3182 = vrot.slane %v3149, 5
      %v3183 = vrot.slane %v3182, 4
      %v3184 = vrot.slane %v2814, 5
      %v3185 = vsel %vm1151, %v3183, %v3184
      %v3186 = vrot.slane %v3150, 5
      %v3187 = vrot.slane %v3186, 4
      %v3188 = vrot.slane %v2815, 5
      %v3189 = vsel %vm1151, %v3187, %v3188
      %v3190 = vrot.slane %v3151, 5
      %v3191 = vrot.slane %v3190, 4
      %v3192 = vrot.slane %v2816, 5
      %v3193 = vsel %vm1151, %v3191, %v3192
      %v3194 = vrot.slane %v3152, 5
      %v3195 = vrot.slane %v3194, 4
      %v3196 = vrot.slane %v2817, 5
      %v3197 = vsel %vm1151, %v3195, %v3196
      %v3198 = vrot.slane %v3153, 5
      %v3199 = vrot.slane %v3198, 4
      %v3200 = vrot.slane %v2818, 5
      %v3201 = vsel %vm1151, %v3199, %v3200
      %s3202 = scalar_lea.vmem %s7, 32
      %v3203 = vld [vmem:[%s3202] sm:$0xf]
      %v3204 = vld [vmem:[%s3202 + $0x4] sm:$0xf]
      %v3205 = vld [vmem:[%s3202 + $0x8] sm:$0xf]
      %v3206 = vld [vmem:[%s3202 + $0xc] sm:$0xf]
      %v3207 = vunpack.c.l.b16 %v3173
      %v3208 = vunpack.c.l.b16 %v3177
      %v3209 = vunpack.c.l.b16 %v3181
      %v3210 = vunpack.c.l.b16 %v3185
      %v3211 = vunpack.c.l.b16 %v3189
      %v3212 = vunpack.c.l.b16 %v3193
      %v3213 = vunpack.c.l.b16 %v3197
      %v3214 = vunpack.c.l.b16 %v3201
      %v3215 = vpack.c.b16 %v3208, %v3207
      %v3216 = vpack.c.b16 %v3210, %v3209
      %v3217 = vpack.c.b16 %v3212, %v3211
      %v3218 = vpack.c.b16 %v3214, %v3213
      %v3223 = vunpack.c.l.b16 %v3203
      %v3224 = vunpack.c.l.b16 %v3204
      %v3225 = vunpack.c.l.b16 %v3205
      %v3226 = vunpack.c.l.b16 %v3206
      %v3227 = vpack.c.b16 %v3224, %v3223
      %v3228 = vpack.c.b16 %v3226, %v3225
      %v3232 = vsel %vm342, %v3215, 0
      %v3235 = vsel %vm342, %v3216, 0
      %v3238 = vsel %vm342, %v3217, 0
      %v3241 = vsel %vm342, %v3218, 0
      %3243 = vmatprep.subr.bf16.mxu0 0
      %3244 = vmatpush1.bf16.msra.mxu0 %v3227
      %3245 = vmatprep.subr.bf16.mxu0 0
      %3246 = vmatpush1.bf16.msra.mxu0 %v3228
      %3247 = vmatprep.subr.bf16.mxu0 0
      %3248 = vmatpush1.bf16.msra.mxu0 0
      %3249 = vmatprep.subr.bf16.mxu0 0
      %3250 = vmatpush1.bf16.msra.mxu0 0
      %3251 = vmatprep.subr.bf16.mxu0 0
      %3252 = vmatpush1.bf16.msra.mxu0 0
      %3253 = vmatprep.subr.bf16.mxu0 0
      %3254 = vmatpush1.bf16.msra.mxu0 0
      %3255 = vmatprep.subr.bf16.mxu0 0
      %3256 = vmatpush1.bf16.msra.mxu0 0
      %3257 = vmatprep.subr.bf16.mxu0 0
      %3258 = vmatpush1.bf16.msra.mxu0 0
      %3259 = vmatprep.subr.bf16.mxu0 0
      %3260 = vmatpush1.bf16.msra.mxu0 0
      %3261 = vmatprep.subr.bf16.mxu0 0
      %3262 = vmatpush1.bf16.msra.mxu0 0
      %3263 = vmatprep.subr.bf16.mxu0 0
      %3264 = vmatpush1.bf16.msra.mxu0 0
      %3265 = vmatprep.subr.bf16.mxu0 0
      %3266 = vmatpush1.bf16.msra.mxu0 0
      %3267 = vmatprep.subr.bf16.mxu0 0
      %3268 = vmatpush1.bf16.msra.mxu0 0
      %3269 = vmatprep.subr.bf16.mxu0 0
      %3270 = vmatpush1.bf16.msra.mxu0 0
      %3271 = vmatprep.subr.bf16.mxu0 0
      %3272 = vmatpush1.bf16.msra.mxu0 0
      %3273 = vmatprep.subr.bf16.mxu0 0
      %3274 = vmatpush1.bf16.msra.mxu0 0
      %3275 = vmatprep.mubr.bf16.mxu0 0
      %3276 = vmatmul.mubr.bf16.gmra.mrb[0].mxu0 %v3232
      %v3277 = vpop.f32.mrb[0].mxu0
      %v3278 = vadd.f32 0.0, %v3277
      %v3279 = vpop.f32.mrb[0].mxu0
      %v3280 = vpop.f32.mrb[0].mxu0
      %v3281 = vadd.f32 0.0, %v3280
      %v3282 = vpop.f32.mrb[0].mxu0
      %3283 = vmatprep.mubr.bf16.mxu0 0
      %3284 = vmatmul.mubr.bf16.gmra.mrb[0].mxu0 %v3235
      %v3285 = vpop.f32.mrb[0].mxu0
      %v3286 = vadd.f32 0.0, %v3285
      %v3287 = vpop.f32.mrb[0].mxu0
      %v3288 = vpop.f32.mrb[0].mxu0
      %v3289 = vadd.f32 0.0, %v3288
      %v3290 = vpop.f32.mrb[0].mxu0
      %3291 = vmatprep.mubr.bf16.mxu0 0
      %3292 = vmatmul.mubr.bf16.gmra.mrb[0].mxu0 %v3238
      %v3293 = vpop.f32.mrb[0].mxu0
      %v3294 = vadd.f32 0.0, %v3293
      %v3295 = vpop.f32.mrb[0].mxu0
      %v3296 = vpop.f32.mrb[0].mxu0
      %v3297 = vadd.f32 0.0, %v3296
      %v3298 = vpop.f32.mrb[0].mxu0
      %3299 = vmatprep.mubr.bf16.mxu0 0
      %3300 = vmatmul.mubr.bf16.gmra.mrb[0].mxu0 %v3241
      %v3301 = vpop.f32.mrb[0].mxu0
      %v3302 = vadd.f32 0.0, %v3301
      %v3303 = vpop.f32.mrb[0].mxu0
      %v3304 = vpop.f32.mrb[0].mxu0
      %v3305 = vadd.f32 0.0, %v3304
      %v3306 = vpop.f32.mrb[0].mxu0
      %3307 = vdwg.mxu0
      %v3308 = vadd.f32 %v3116, %v3278
      %v3309 = vadd.f32 %v3119, %v3281
      %v3310 = vadd.f32 %v3124, %v3286
      %v3311 = vadd.f32 %v3127, %v3289
      %v3312 = vadd.f32 %v3132, %v3294
      %v3313 = vadd.f32 %v3135, %v3297
      %v3314 = vadd.f32 %v3140, %v3302
      %v3315 = vadd.f32 %v3143, %v3305
      %v3316 = vld [vmem:[%s720] sm:$0xf]
      %v3317 = vld [vmem:[%s720 + $0x8] sm:$0xf]
      %v3318 = vld [vmem:[%s720 + $0x10] sm:$0xf]
      %v3319 = vld [vmem:[%s720 + $0x18] sm:$0xf]
      %v3320 = vld [vmem:[%s720 + $0x20] sm:$0xf]
      %v3321 = vld [vmem:[%s720 + $0x28] sm:$0xf]
      %v3322 = vld [vmem:[%s720 + $0x30] sm:$0xf]
      %v3323 = vld [vmem:[%s720 + $0x38] sm:$0xf]
      %s3324 = scalar_lea.vmem %s7, 48
      %v3325 = vld [vmem:[%s3324] sm:$0xf]
      %v3326 = vld [vmem:[%s3324 + $0x4] sm:$0xf]
      %v3327 = vld [vmem:[%s3324 + $0x8] sm:$0xf]
      %v3328 = vld [vmem:[%s3324 + $0xc] sm:$0xf]
      %v3337 = vunpack.c.l.b16 %v3316
      %v3338 = vunpack.c.l.b16 %v3317
      %v3339 = vunpack.c.l.b16 %v3318
      %v3340 = vunpack.c.l.b16 %v3319
      %v3341 = vunpack.c.l.b16 %v3320
      %v3342 = vunpack.c.l.b16 %v3321
      %v3343 = vunpack.c.l.b16 %v3322
      %v3344 = vunpack.c.l.b16 %v3323
      %v3345 = vpack.c.b16 %v3338, %v3337
      %v3346 = vpack.c.b16 %v3340, %v3339
      %v3347 = vpack.c.b16 %v3342, %v3341
      %v3348 = vpack.c.b16 %v3344, %v3343
      %v3353 = vunpack.c.l.b16 %v3325
      %v3354 = vunpack.c.l.b16 %v3326
      %v3355 = vunpack.c.l.b16 %v3327
      %v3356 = vunpack.c.l.b16 %v3328
      %v3357 = vpack.c.b16 %v3354, %v3353
      %v3358 = vpack.c.b16 %v3356, %v3355
      %v3362 = vsel %vm342, %v3345, 0
      %v3365 = vsel %vm342, %v3346, 0
      %v3368 = vsel %vm342, %v3347, 0
      %v3371 = vsel %vm342, %v3348, 0
      %3373 = vmatprep.subr.bf16.mxu0 0
      %3374 = vmatpush1.bf16.msra.mxu0 %v3357
      %3375 = vmatprep.subr.bf16.mxu0 0
      %3376 = vmatpush1.bf16.msra.mxu0 %v3358
      %3377 = vmatprep.subr.bf16.mxu0 0
      %3378 = vmatpush1.bf16.msra.mxu0 0
      %3379 = vmatprep.subr.bf16.mxu0 0
      %3380 = vmatpush1.bf16.msra.mxu0 0
      %3381 = vmatprep.subr.bf16.mxu0 0
      %3382 = vmatpush1.bf16.msra.mxu0 0
      %3383 = vmatprep.subr.bf16.mxu0 0
      %3384 = vmatpush1.bf16.msra.mxu0 0
      %3385 = vmatprep.subr.bf16.mxu0 0
      %3386 = vmatpush1.bf16.msra.mxu0 0
      %3387 = vmatprep.subr.bf16.mxu0 0
      %3388 = vmatpush1.bf16.msra.mxu0 0
      %3389 = vmatprep.subr.bf16.mxu0 0
      %3390 = vmatpush1.bf16.msra.mxu0 0
      %3391 = vmatprep.subr.bf16.mxu0 0
      %3392 = vmatpush1.bf16.msra.mxu0 0
      %3393 = vmatprep.subr.bf16.mxu0 0
      %3394 = vmatpush1.bf16.msra.mxu0 0
      %3395 = vmatprep.subr.bf16.mxu0 0
      %3396 = vmatpush1.bf16.msra.mxu0 0
      %3397 = vmatprep.subr.bf16.mxu0 0
      %3398 = vmatpush1.bf16.msra.mxu0 0
      %3399 = vmatprep.subr.bf16.mxu0 0
      %3400 = vmatpush1.bf16.msra.mxu0 0
      %3401 = vmatprep.subr.bf16.mxu0 0
      %3402 = vmatpush1.bf16.msra.mxu0 0
      %3403 = vmatprep.subr.bf16.mxu0 0
      %3404 = vmatpush1.bf16.msra.mxu0 0
      %3405 = vmatprep.mubr.bf16.mxu0 0
      %3406 = vmatmul.mubr.bf16.gmra.mrb[0].mxu0 %v3362
      %v3407 = vpop.f32.mrb[0].mxu0
      %v3408 = vadd.f32 0.0, %v3407
      %v3409 = vpop.f32.mrb[0].mxu0
      %v3410 = vpop.f32.mrb[0].mxu0
      %v3411 = vadd.f32 0.0, %v3410
      %v3412 = vpop.f32.mrb[0].mxu0
      %3413 = vmatprep.mubr.bf16.mxu0 0
      %3414 = vmatmul.mubr.bf16.gmra.mrb[0].mxu0 %v3365
      %v3415 = vpop.f32.mrb[0].mxu0
      %v3416 = vadd.f32 0.0, %v3415
      %v3417 = vpop.f32.mrb[0].mxu0
      %v3418 = vpop.f32.mrb[0].mxu0
      %v3419 = vadd.f32 0.0, %v3418
      %v3420 = vpop.f32.mrb[0].mxu0
      %3421 = vmatprep.mubr.bf16.mxu0 0
      %3422 = vmatmul.mubr.bf16.gmra.mrb[0].mxu0 %v3368
      %v3423 = vpop.f32.mrb[0].mxu0
      %v3424 = vadd.f32 0.0, %v3423
      %v3425 = vpop.f32.mrb[0].mxu0
      %v3426 = vpop.f32.mrb[0].mxu0
      %v3427 = vadd.f32 0.0, %v3426
      %v3428 = vpop.f32.mrb[0].mxu0
      %3429 = vmatprep.mubr.bf16.mxu0 0
      %3430 = vmatmul.mubr.bf16.gmra.mrb[0].mxu0 %v3371
      %v3431 = vpop.f32.mrb[0].mxu0
      %v3432 = vadd.f32 0.0, %v3431
      %v3433 = vpop.f32.mrb[0].mxu0
      %v3434 = vpop.f32.mrb[0].mxu0
      %v3435 = vadd.f32 0.0, %v3434
      %v3436 = vpop.f32.mrb[0].mxu0
      %3437 = vdwg.mxu0
      %v3438 = vadd.f32 %v3308, %v3408
      %v3439 = vadd.f32 %v3309, %v3411
      %v3440 = vadd.f32 %v3310, %v3416
      %v3441 = vadd.f32 %v3311, %v3419
      %v3442 = vadd.f32 %v3312, %v3424
      %v3443 = vadd.f32 %v3313, %v3427
      %v3444 = vadd.f32 %v3314, %v3432
      %v3445 = vadd.f32 %v3315, %v3435
      %v3446 = vld [vmem:[%s720] sm:$0xf]
      %v3447 = vld [vmem:[%s720 + $0x4] sm:$0x1]
      %v3448 = vld [vmem:[%s720 + $0x8] sm:$0xf]
      %v3449 = vld [vmem:[%s720 + $0xc] sm:$0x1]
      %v3450 = vld [vmem:[%s720 + $0x10] sm:$0xf]
      %v3451 = vld [vmem:[%s720 + $0x14] sm:$0x1]
      %v3452 = vld [vmem:[%s720 + $0x18] sm:$0xf]
      %v3453 = vld [vmem:[%s720 + $0x1c] sm:$0x1]
      %v3454 = vld [vmem:[%s720 + $0x20] sm:$0xf]
      %v3455 = vld [vmem:[%s720 + $0x24] sm:$0x1]
      %v3456 = vld [vmem:[%s720 + $0x28] sm:$0xf]
      %v3457 = vld [vmem:[%s720 + $0x2c] sm:$0x1]
      %v3458 = vld [vmem:[%s720 + $0x30] sm:$0xf]
      %v3459 = vld [vmem:[%s720 + $0x34] sm:$0x1]
      %v3460 = vld [vmem:[%s720 + $0x38] sm:$0xf]
      %v3461 = vld [vmem:[%s720 + $0x3c] sm:$0x1]
      %v3463 = vshrl.u32 %v3446, 16
      %v3465 = vrot.slane %v3463, 4
      %v3466 = vshll.u32 %v3446, 16
      %v3468 = vrot.slane %v3466, 5
      %v3469 = vor.u32 %v3465, %v3468
      %v3470 = vrot.slane %v3469, 4
      %v3472 = vshll.u32 %v3447, 16
      %v3474 = vrot.slane %v3472, 5
      %v3475 = vsel %vm797, %v3470, %v3474
      %v3477 = vshrl.u32 %v3448, 16
      %v3479 = vrot.slane %v3477, 4
      %v3480 = vshll.u32 %v3448, 16
      %v3482 = vrot.slane %v3480, 5
      %v3483 = vor.u32 %v3479, %v3482
      %v3484 = vrot.slane %v3483, 4
      %v3486 = vshll.u32 %v3449, 16
      %v3488 = vrot.slane %v3486, 5
      %v3489 = vsel %vm797, %v3484, %v3488
      %v3491 = vshrl.u32 %v3450, 16
      %v3493 = vrot.slane %v3491, 4
      %v3494 = vshll.u32 %v3450, 16
      %v3496 = vrot.slane %v3494, 5
      %v3497 = vor.u32 %v3493, %v3496
      %v3498 = vrot.slane %v3497, 4
      %v3500 = vshll.u32 %v3451, 16
      %v3502 = vrot.slane %v3500, 5
      %v3503 = vsel %vm797, %v3498, %v3502
      %v3505 = vshrl.u32 %v3452, 16
      %v3507 = vrot.slane %v3505, 4
      %v3508 = vshll.u32 %v3452, 16
      %v3510 = vrot.slane %v3508, 5
      %v3511 = vor.u32 %v3507, %v3510
      %v3512 = vrot.slane %v3511, 4
      %v3514 = vshll.u32 %v3453, 16
      %v3516 = vrot.slane %v3514, 5
      %v3517 = vsel %vm797, %v3512, %v3516
      %v3519 = vshrl.u32 %v3454, 16
      %v3521 = vrot.slane %v3519, 4
      %v3522 = vshll.u32 %v3454, 16
      %v3524 = vrot.slane %v3522, 5
      %v3525 = vor.u32 %v3521, %v3524
      %v3526 = vrot.slane %v3525, 4
      %v3528 = vshll.u32 %v3455, 16
      %v3530 = vrot.slane %v3528, 5
      %v3531 = vsel %vm797, %v3526, %v3530
      %v3533 = vshrl.u32 %v3456, 16
      %v3535 = vrot.slane %v3533, 4
      %v3536 = vshll.u32 %v3456, 16
      %v3538 = vrot.slane %v3536, 5
      %v3539 = vor.u32 %v3535, %v3538
      %v3540 = vrot.slane %v3539, 4
      %v3542 = vshll.u32 %v3457, 16
      %v3544 = vrot.slane %v3542, 5
      %v3545 = vsel %vm797, %v3540, %v3544
      %v3547 = vshrl.u32 %v3458, 16
      %v3549 = vrot.slane %v3547, 4
      %v3550 = vshll.u32 %v3458, 16
      %v3552 = vrot.slane %v3550, 5
      %v3553 = vor.u32 %v3549, %v3552
      %v3554 = vrot.slane %v3553, 4
      %v3556 = vshll.u32 %v3459, 16
      %v3558 = vrot.slane %v3556, 5
      %v3559 = vsel %vm797, %v3554, %v3558
      %v3561 = vshrl.u32 %v3460, 16
      %v3563 = vrot.slane %v3561, 4
      %v3564 = vshll.u32 %v3460, 16
      %v3566 = vrot.slane %v3564, 5
      %v3567 = vor.u32 %v3563, %v3566
      %v3568 = vrot.slane %v3567, 4
      %v3570 = vshll.u32 %v3461, 16
      %v3572 = vrot.slane %v3570, 5
      %v3573 = vsel %vm797, %v3568, %v3572
      %s3574 = scalar_lea.vmem %s7, 64
      %v3575 = vld [vmem:[%s3574] sm:$0xf]
      %v3576 = vld [vmem:[%s3574 + $0x4] sm:$0xf]
      %v3577 = vld [vmem:[%s3574 + $0x8] sm:$0xf]
      %v3578 = vld [vmem:[%s3574 + $0xc] sm:$0xf]
      %v3579 = vunpack.c.l.b16 %v3475
      %v3580 = vunpack.c.l.b16 %v3489
      %v3581 = vunpack.c.l.b16 %v3503
      %v3582 = vunpack.c.l.b16 %v3517
      %v3583 = vunpack.c.l.b16 %v3531
      %v3584 = vunpack.c.l.b16 %v3545
      %v3585 = vunpack.c.l.b16 %v3559
      %v3586 = vunpack.c.l.b16 %v3573
      %v3587 = vpack.c.b16 %v3580, %v3579
      %v3588 = vpack.c.b16 %v3582, %v3581
      %v3589 = vpack.c.b16 %v3584, %v3583
      %v3590 = vpack.c.b16 %v3586, %v3585
      %v3595 = vunpack.c.l.b16 %v3575
      %v3596 = vunpack.c.l.b16 %v3576
      %v3597 = vunpack.c.l.b16 %v3577
      %v3598 = vunpack.c.l.b16 %v3578
      %v3599 = vpack.c.b16 %v3596, %v3595
      %v3600 = vpack.c.b16 %v3598, %v3597
      %v3604 = vsel %vm342, %v3587, 0
      %v3607 = vsel %vm342, %v3588, 0
      %v3610 = vsel %vm342, %v3589, 0
      %v3613 = vsel %vm342, %v3590, 0
      %3615 = vmatprep.subr.bf16.mxu0 0
      %3616 = vmatpush1.bf16.msra.mxu0 %v3599
      %3617 = vmatprep.subr.bf16.mxu0 0
      %3618 = vmatpush1.bf16.msra.mxu0 %v3600
      %3619 = vmatprep.subr.bf16.mxu0 0
      %3620 = vmatpush1.bf16.msra.mxu0 0
      %3621 = vmatprep.subr.bf16.mxu0 0
      %3622 = vmatpush1.bf16.msra.mxu0 0
      %3623 = vmatprep.subr.bf16.mxu0 0
      %3624 = vmatpush1.bf16.msra.mxu0 0
      %3625 = vmatprep.subr.bf16.mxu0 0
      %3626 = vmatpush1.bf16.msra.mxu0 0
      %3627 = vmatprep.subr.bf16.mxu0 0
      %3628 = vmatpush1.bf16.msra.mxu0 0
      %3629 = vmatprep.subr.bf16.mxu0 0
      %3630 = vmatpush1.bf16.msra.mxu0 0
      %3631 = vmatprep.subr.bf16.mxu0 0
      %3632 = vmatpush1.bf16.msra.mxu0 0
      %3633 = vmatprep.subr.bf16.mxu0 0
      %3634 = vmatpush1.bf16.msra.mxu0 0
      %3635 = vmatprep.subr.bf16.mxu0 0
      %3636 = vmatpush1.bf16.msra.mxu0 0
      %3637 = vmatprep.subr.bf16.mxu0 0
      %3638 = vmatpush1.bf16.msra.mxu0 0
      %3639 = vmatprep.subr.bf16.mxu0 0
      %3640 = vmatpush1.bf16.msra.mxu0 0
      %3641 = vmatprep.subr.bf16.mxu0 0
      %3642 = vmatpush1.bf16.msra.mxu0 0
      %3643 = vmatprep.subr.bf16.mxu0 0
      %3644 = vmatpush1.bf16.msra.mxu0 0
      %3645 = vmatprep.subr.bf16.mxu0 0
      %3646 = vmatpush1.bf16.msra.mxu0 0
      %3647 = vmatprep.mubr.bf16.mxu0 0
      %3648 = vmatmul.mubr.bf16.gmra.mrb[0].mxu0 %v3604
      %v3649 = vpop.f32.mrb[0].mxu0
      %v3650 = vadd.f32 0.0, %v3649
      %v3651 = vpop.f32.mrb[0].mxu0
      %v3652 = vpop.f32.mrb[0].mxu0
      %v3653 = vadd.f32 0.0, %v3652
      %v3654 = vpop.f32.mrb[0].mxu0
      %3655 = vmatprep.mubr.bf16.mxu0 0
      %3656 = vmatmul.mubr.bf16.gmra.mrb[0].mxu0 %v3607
      %v3657 = vpop.f32.mrb[0].mxu0
      %v3658 = vadd.f32 0.0, %v3657
      %v3659 = vpop.f32.mrb[0].mxu0
      %v3660 = vpop.f32.mrb[0].mxu0
      %v3661 = vadd.f32 0.0, %v3660
      %v3662 = vpop.f32.mrb[0].mxu0
      %3663 = vmatprep.mubr.bf16.mxu0 0
      %3664 = vmatmul.mubr.bf16.gmra.mrb[0].mxu0 %v3610
      %v3665 = vpop.f32.mrb[0].mxu0
      %v3666 = vadd.f32 0.0, %v3665
      %v3667 = vpop.f32.mrb[0].mxu0
      %v3668 = vpop.f32.mrb[0].mxu0
      %v3669 = vadd.f32 0.0, %v3668
      %v3670 = vpop.f32.mrb[0].mxu0
      %3671 = vmatprep.mubr.bf16.mxu0 0
      %3672 = vmatmul.mubr.bf16.gmra.mrb[0].mxu0 %v3613
      %v3673 = vpop.f32.mrb[0].mxu0
      %v3674 = vadd.f32 0.0, %v3673
      %v3675 = vpop.f32.mrb[0].mxu0
      %v3676 = vpop.f32.mrb[0].mxu0
      %v3677 = vadd.f32 0.0, %v3676
      %v3678 = vpop.f32.mrb[0].mxu0
      %3679 = vdwg.mxu0
      %v3680 = vadd.f32 %v3438, %v3650
      %v3681 = vadd.f32 %v3439, %v3653
      %v3682 = vadd.f32 %v3440, %v3658
      %v3683 = vadd.f32 %v3441, %v3661
      %v3684 = vadd.f32 %v3442, %v3666
      %v3685 = vadd.f32 %v3443, %v3669
      %v3686 = vadd.f32 %v3444, %v3674
      %v3687 = vadd.f32 %v3445, %v3677
      %v3688 = vld [vmem:[%s720] sm:$0xe]
      %v3689 = vld [vmem:[%s720 + $0x8] sm:$0xe]
      %v3690 = vld [vmem:[%s720 + $0x10] sm:$0xe]
      %v3691 = vld [vmem:[%s720 + $0x18] sm:$0xe]
      %v3692 = vld [vmem:[%s720 + $0x20] sm:$0xe]
      %v3693 = vld [vmem:[%s720 + $0x28] sm:$0xe]
      %v3694 = vld [vmem:[%s720 + $0x30] sm:$0xe]
      %v3695 = vld [vmem:[%s720 + $0x38] sm:$0xe]
      %v3712 = vrot.slane %v3688, 5
      %v3713 = vrot.slane %v3712, 4
      %v3714 = vrot.slane %v3447, 5
      %v3715 = vsel %vm1151, %v3713, %v3714
      %v3716 = vrot.slane %v3689, 5
      %v3717 = vrot.slane %v3716, 4
      %v3718 = vrot.slane %v3449, 5
      %v3719 = vsel %vm1151, %v3717, %v3718
      %v3720 = vrot.slane %v3690, 5
      %v3721 = vrot.slane %v3720, 4
      %v3722 = vrot.slane %v3451, 5
      %v3723 = vsel %vm1151, %v3721, %v3722
      %v3724 = vrot.slane %v3691, 5
      %v3725 = vrot.slane %v3724, 4
      %v3726 = vrot.slane %v3453, 5
      %v3727 = vsel %vm1151, %v3725, %v3726
      %v3728 = vrot.slane %v3692, 5
      %v3729 = vrot.slane %v3728, 4
      %v3730 = vrot.slane %v3455, 5
      %v3731 = vsel %vm1151, %v3729, %v3730
      %v3732 = vrot.slane %v3693, 5
      %v3733 = vrot.slane %v3732, 4
      %v3734 = vrot.slane %v3457, 5
      %v3735 = vsel %vm1151, %v3733, %v3734
      %v3736 = vrot.slane %v3694, 5
      %v3737 = vrot.slane %v3736, 4
      %v3738 = vrot.slane %v3459, 5
      %v3739 = vsel %vm1151, %v3737, %v3738
      %v3740 = vrot.slane %v3695, 5
      %v3741 = vrot.slane %v3740, 4
      %v3742 = vrot.slane %v3461, 5
      %v3743 = vsel %vm1151, %v3741, %v3742
      %s3744 = scalar_lea.vmem %s7, 80
      %v3745 = vld [vmem:[%s3744] sm:$0xf]
      %v3746 = vld [vmem:[%s3744 + $0x4] sm:$0xf]
      %v3747 = vld [vmem:[%s3744 + $0x8] sm:$0xf]
      %v3748 = vld [vmem:[%s3744 + $0xc] sm:$0xf]
      %v3749 = vunpack.c.l.b16 %v3715
      %v3750 = vunpack.c.l.b16 %v3719
      %v3751 = vunpack.c.l.b16 %v3723
      %v3752 = vunpack.c.l.b16 %v3727
      %v3753 = vunpack.c.l.b16 %v3731
      %v3754 = vunpack.c.l.b16 %v3735
      %v3755 = vunpack.c.l.b16 %v3739
      %v3756 = vunpack.c.l.b16 %v3743
      %v3757 = vpack.c.b16 %v3750, %v3749
      %v3758 = vpack.c.b16 %v3752, %v3751
      %v3759 = vpack.c.b16 %v3754, %v3753
      %v3760 = vpack.c.b16 %v3756, %v3755
      %v3765 = vunpack.c.l.b16 %v3745
      %v3766 = vunpack.c.l.b16 %v3746
      %v3767 = vunpack.c.l.b16 %v3747
      %v3768 = vunpack.c.l.b16 %v3748
      %v3769 = vpack.c.b16 %v3766, %v3765
      %v3770 = vpack.c.b16 %v3768, %v3767
      %v3774 = vsel %vm342, %v3757, 0
      %v3777 = vsel %vm342, %v3758, 0
      %v3780 = vsel %vm342, %v3759, 0
      %v3783 = vsel %vm342, %v3760, 0
      %3785 = vmatprep.subr.bf16.mxu0 0
      %3786 = vmatpush1.bf16.msra.mxu0 %v3769
      %3787 = vmatprep.subr.bf16.mxu0 0
      %3788 = vmatpush1.bf16.msra.mxu0 %v3770
      %3789 = vmatprep.subr.bf16.mxu0 0
      %3790 = vmatpush1.bf16.msra.mxu0 0
      %3791 = vmatprep.subr.bf16.mxu0 0
      %3792 = vmatpush1.bf16.msra.mxu0 0
      %3793 = vmatprep.subr.bf16.mxu0 0
      %3794 = vmatpush1.bf16.msra.mxu0 0
      %3795 = vmatprep.subr.bf16.mxu0 0
      %3796 = vmatpush1.bf16.msra.mxu0 0
      %3797 = vmatprep.subr.bf16.mxu0 0
      %3798 = vmatpush1.bf16.msra.mxu0 0
      %3799 = vmatprep.subr.bf16.mxu0 0
      %3800 = vmatpush1.bf16.msra.mxu0 0
      %3801 = vmatprep.subr.bf16.mxu0 0
      %3802 = vmatpush1.bf16.msra.mxu0 0
      %3803 = vmatprep.subr.bf16.mxu0 0
      %3804 = vmatpush1.bf16.msra.mxu0 0
      %3805 = vmatprep.subr.bf16.mxu0 0
      %3806 = vmatpush1.bf16.msra.mxu0 0
      %3807 = vmatprep.subr.bf16.mxu0 0
      %3808 = vmatpush1.bf16.msra.mxu0 0
      %3809 = vmatprep.subr.bf16.mxu0 0
      %3810 = vmatpush1.bf16.msra.mxu0 0
      %3811 = vmatprep.subr.bf16.mxu0 0
      %3812 = vmatpush1.bf16.msra.mxu0 0
      %3813 = vmatprep.subr.bf16.mxu0 0
      %3814 = vmatpush1.bf16.msra.mxu0 0
      %3815 = vmatprep.subr.bf16.mxu0 0
      %3816 = vmatpush1.bf16.msra.mxu0 0
      %3817 = vmatprep.mubr.bf16.mxu0 0
      %3818 = vmatmul.mubr.bf16.gmra.mrb[0].mxu0 %v3774
      %v3819 = vpop.f32.mrb[0].mxu0
      %v3820 = vadd.f32 0.0, %v3819
      %v3821 = vpop.f32.mrb[0].mxu0
      %v3822 = vpop.f32.mrb[0].mxu0
      %v3823 = vadd.f32 0.0, %v3822
      %v3824 = vpop.f32.mrb[0].mxu0
      %3825 = vmatprep.mubr.bf16.mxu0 0
      %3826 = vmatmul.mubr.bf16.gmra.mrb[0].mxu0 %v3777
      %v3827 = vpop.f32.mrb[0].mxu0
      %v3828 = vadd.f32 0.0, %v3827
      %v3829 = vpop.f32.mrb[0].mxu0
      %v3830 = vpop.f32.mrb[0].mxu0
      %v3831 = vadd.f32 0.0, %v3830
      %v3832 = vpop.f32.mrb[0].mxu0
      %3833 = vmatprep.mubr.bf16.mxu0 0
      %3834 = vmatmul.mubr.bf16.gmra.mrb[0].mxu0 %v3780
      %v3835 = vpop.f32.mrb[0].mxu0
      %v3836 = vadd.f32 0.0, %v3835
      %v3837 = vpop.f32.mrb[0].mxu0
      %v3838 = vpop.f32.mrb[0].mxu0
      %v3839 = vadd.f32 0.0, %v3838
      %v3840 = vpop.f32.mrb[0].mxu0
      %3841 = vmatprep.mubr.bf16.mxu0 0
      %3842 = vmatmul.mubr.bf16.gmra.mrb[0].mxu0 %v3783
      %v3843 = vpop.f32.mrb[0].mxu0
      %v3844 = vadd.f32 0.0, %v3843
      %v3845 = vpop.f32.mrb[0].mxu0
      %v3846 = vpop.f32.mrb[0].mxu0
      %v3847 = vadd.f32 0.0, %v3846
      %v3848 = vpop.f32.mrb[0].mxu0
      %3849 = vdwg.mxu0
      %v3850 = vadd.f32 %v3680, %v3820
      %v3851 = vadd.f32 %v3681, %v3823
      %v3852 = vadd.f32 %v3682, %v3828
      %v3853 = vadd.f32 %v3683, %v3831
      %v3854 = vadd.f32 %v3684, %v3836
      %v3855 = vadd.f32 %v3685, %v3839
      %v3856 = vadd.f32 %v3686, %v3844
      %v3857 = vadd.f32 %v3687, %v3847
      %v3858 = vld [vmem:[%s1840] sm:$0xf]
      %v3859 = vld [vmem:[%s1840 + $0x8] sm:$0xf]
      %v3860 = vld [vmem:[%s1840 + $0x10] sm:$0xf]
      %v3861 = vld [vmem:[%s1840 + $0x18] sm:$0xf]
      %v3862 = vld [vmem:[%s1840 + $0x20] sm:$0xf]
      %v3863 = vld [vmem:[%s1840 + $0x28] sm:$0xf]
      %v3864 = vld [vmem:[%s1840 + $0x30] sm:$0xf]
      %v3865 = vld [vmem:[%s1840 + $0x38] sm:$0xf]
      %s3866 = scalar_lea.vmem %s7, 96
      %v3867 = vld [vmem:[%s3866] sm:$0xf]
      %v3868 = vld [vmem:[%s3866 + $0x4] sm:$0xf]
      %v3869 = vld [vmem:[%s3866 + $0x8] sm:$0xf]
      %v3870 = vld [vmem:[%s3866 + $0xc] sm:$0xf]
      %v3879 = vunpack.c.l.b16 %v3858
      %v3880 = vunpack.c.l.b16 %v3859
      %v3881 = vunpack.c.l.b16 %v3860
      %v3882 = vunpack.c.l.b16 %v3861
      %v3883 = vunpack.c.l.b16 %v3862
      %v3884 = vunpack.c.l.b16 %v3863
      %v3885 = vunpack.c.l.b16 %v3864
      %v3886 = vunpack.c.l.b16 %v3865
      %v3887 = vpack.c.b16 %v3880, %v3879
      %v3888 = vpack.c.b16 %v3882, %v3881
      %v3889 = vpack.c.b16 %v3884, %v3883
      %v3890 = vpack.c.b16 %v3886, %v3885
      %v3895 = vunpack.c.l.b16 %v3867
      %v3896 = vunpack.c.l.b16 %v3868
      %v3897 = vunpack.c.l.b16 %v3869
      %v3898 = vunpack.c.l.b16 %v3870
      %v3899 = vpack.c.b16 %v3896, %v3895
      %v3900 = vpack.c.b16 %v3898, %v3897
      %v3904 = vsel %vm342, %v3887, 0
      %v3907 = vsel %vm342, %v3888, 0
      %v3910 = vsel %vm342, %v3889, 0
      %v3913 = vsel %vm342, %v3890, 0
      %3915 = vmatprep.subr.bf16.mxu0 0
      %3916 = vmatpush1.bf16.msra.mxu0 %v3899
      %3917 = vmatprep.subr.bf16.mxu0 0
      %3918 = vmatpush1.bf16.msra.mxu0 %v3900
      %3919 = vmatprep.subr.bf16.mxu0 0
      %3920 = vmatpush1.bf16.msra.mxu0 0
      %3921 = vmatprep.subr.bf16.mxu0 0
      %3922 = vmatpush1.bf16.msra.mxu0 0
      %3923 = vmatprep.subr.bf16.mxu0 0
      %3924 = vmatpush1.bf16.msra.mxu0 0
      %3925 = vmatprep.subr.bf16.mxu0 0
      %3926 = vmatpush1.bf16.msra.mxu0 0
      %3927 = vmatprep.subr.bf16.mxu0 0
      %3928 = vmatpush1.bf16.msra.mxu0 0
      %3929 = vmatprep.subr.bf16.mxu0 0
      %3930 = vmatpush1.bf16.msra.mxu0 0
      %3931 = vmatprep.subr.bf16.mxu0 0
      %3932 = vmatpush1.bf16.msra.mxu0 0
      %3933 = vmatprep.subr.bf16.mxu0 0
      %3934 = vmatpush1.bf16.msra.mxu0 0
      %3935 = vmatprep.subr.bf16.mxu0 0
      %3936 = vmatpush1.bf16.msra.mxu0 0
      %3937 = vmatprep.subr.bf16.mxu0 0
      %3938 = vmatpush1.bf16.msra.mxu0 0
      %3939 = vmatprep.subr.bf16.mxu0 0
      %3940 = vmatpush1.bf16.msra.mxu0 0
      %3941 = vmatprep.subr.bf16.mxu0 0
      %3942 = vmatpush1.bf16.msra.mxu0 0
      %3943 = vmatprep.subr.bf16.mxu0 0
      %3944 = vmatpush1.bf16.msra.mxu0 0
      %3945 = vmatprep.subr.bf16.mxu0 0
      %3946 = vmatpush1.bf16.msra.mxu0 0
      %3947 = vmatprep.mubr.bf16.mxu0 0
      %3948 = vmatmul.mubr.bf16.gmra.mrb[0].mxu0 %v3904
      %v3949 = vpop.f32.mrb[0].mxu0
      %v3950 = vadd.f32 0.0, %v3949
      %v3951 = vpop.f32.mrb[0].mxu0
      %v3952 = vpop.f32.mrb[0].mxu0
      %v3953 = vadd.f32 0.0, %v3952
      %v3954 = vpop.f32.mrb[0].mxu0
      %3955 = vmatprep.mubr.bf16.mxu0 0
      %3956 = vmatmul.mubr.bf16.gmra.mrb[0].mxu0 %v3907
      %v3957 = vpop.f32.mrb[0].mxu0
      %v3958 = vadd.f32 0.0, %v3957
      %v3959 = vpop.f32.mrb[0].mxu0
      %v3960 = vpop.f32.mrb[0].mxu0
      %v3961 = vadd.f32 0.0, %v3960
      %v3962 = vpop.f32.mrb[0].mxu0
      %3963 = vmatprep.mubr.bf16.mxu0 0
      %3964 = vmatmul.mubr.bf16.gmra.mrb[0].mxu0 %v3910
      %v3965 = vpop.f32.mrb[0].mxu0
      %v3966 = vadd.f32 0.0, %v3965
      %v3967 = vpop.f32.mrb[0].mxu0
      %v3968 = vpop.f32.mrb[0].mxu0
      %v3969 = vadd.f32 0.0, %v3968
      %v3970 = vpop.f32.mrb[0].mxu0
      %3971 = vmatprep.mubr.bf16.mxu0 0
      %3972 = vmatmul.mubr.bf16.gmra.mrb[0].mxu0 %v3913
      %v3973 = vpop.f32.mrb[0].mxu0
      %v3974 = vadd.f32 0.0, %v3973
      %v3975 = vpop.f32.mrb[0].mxu0
      %v3976 = vpop.f32.mrb[0].mxu0
      %v3977 = vadd.f32 0.0, %v3976
      %v3978 = vpop.f32.mrb[0].mxu0
      %3979 = vdwg.mxu0
      %v3980 = vadd.f32 %v3850, %v3950
      %v3981 = vadd.f32 %v3851, %v3953
      %v3982 = vadd.f32 %v3852, %v3958
      %v3983 = vadd.f32 %v3853, %v3961
      %v3984 = vadd.f32 %v3854, %v3966
      %v3985 = vadd.f32 %v3855, %v3969
      %v3986 = vadd.f32 %v3856, %v3974
      %v3987 = vadd.f32 %v3857, %v3977
      %v3988 = vld [vmem:[%s1840] sm:$0xf]
      %v3989 = vld [vmem:[%s1840 + $0x4] sm:$0x1]
      %v3990 = vld [vmem:[%s1840 + $0x8] sm:$0xf]
      %v3991 = vld [vmem:[%s1840 + $0xc] sm:$0x1]
      %v3992 = vld [vmem:[%s1840 + $0x10] sm:$0xf]
      %v3993 = vld [vmem:[%s1840 + $0x14] sm:$0x1]
      %v3994 = vld [vmem:[%s1840 + $0x18] sm:$0xf]
      %v3995 = vld [vmem:[%s1840 + $0x1c] sm:$0x1]
      %v3996 = vld [vmem:[%s1840 + $0x20] sm:$0xf]
      %v3997 = vld [vmem:[%s1840 + $0x24] sm:$0x1]
      %v3998 = vld [vmem:[%s1840 + $0x28] sm:$0xf]
      %v3999 = vld [vmem:[%s1840 + $0x2c] sm:$0x1]
      %v4000 = vld [vmem:[%s1840 + $0x30] sm:$0xf]
      %v4001 = vld [vmem:[%s1840 + $0x34] sm:$0x1]
      %v4002 = vld [vmem:[%s1840 + $0x38] sm:$0xf]
      %v4003 = vld [vmem:[%s1840 + $0x3c] sm:$0x1]
      %v4005 = vshrl.u32 %v3988, 16
      %v4007 = vrot.slane %v4005, 4
      %v4008 = vshll.u32 %v3988, 16
      %v4010 = vrot.slane %v4008, 5
      %v4011 = vor.u32 %v4007, %v4010
      %v4012 = vrot.slane %v4011, 4
      %v4014 = vshll.u32 %v3989, 16
      %v4016 = vrot.slane %v4014, 5
      %v4017 = vsel %vm797, %v4012, %v4016
      %v4019 = vshrl.u32 %v3990, 16
      %v4021 = vrot.slane %v4019, 4
      %v4022 = vshll.u32 %v3990, 16
      %v4024 = vrot.slane %v4022, 5
      %v4025 = vor.u32 %v4021, %v4024
      %v4026 = vrot.slane %v4025, 4
      %v4028 = vshll.u32 %v3991, 16
      %v4030 = vrot.slane %v4028, 5
      %v4031 = vsel %vm797, %v4026, %v4030
      %v4033 = vshrl.u32 %v3992, 16
      %v4035 = vrot.slane %v4033, 4
      %v4036 = vshll.u32 %v3992, 16
      %v4038 = vrot.slane %v4036, 5
      %v4039 = vor.u32 %v4035, %v4038
      %v4040 = vrot.slane %v4039, 4
      %v4042 = vshll.u32 %v3993, 16
      %v4044 = vrot.slane %v4042, 5
      %v4045 = vsel %vm797, %v4040, %v4044
      %v4047 = vshrl.u32 %v3994, 16
      %v4049 = vrot.slane %v4047, 4
      %v4050 = vshll.u32 %v3994, 16
      %v4052 = vrot.slane %v4050, 5
      %v4053 = vor.u32 %v4049, %v4052
      %v4054 = vrot.slane %v4053, 4
      %v4056 = vshll.u32 %v3995, 16
      %v4058 = vrot.slane %v4056, 5
      %v4059 = vsel %vm797, %v4054, %v4058
      %v4061 = vshrl.u32 %v3996, 16
      %v4063 = vrot.slane %v4061, 4
      %v4064 = vshll.u32 %v3996, 16
      %v4066 = vrot.slane %v4064, 5
      %v4067 = vor.u32 %v4063, %v4066
      %v4068 = vrot.slane %v4067, 4
      %v4070 = vshll.u32 %v3997, 16
      %v4072 = vrot.slane %v4070, 5
      %v4073 = vsel %vm797, %v4068, %v4072
      %v4075 = vshrl.u32 %v3998, 16
      %v4077 = vrot.slane %v4075, 4
      %v4078 = vshll.u32 %v3998, 16
      %v4080 = vrot.slane %v4078, 5
      %v4081 = vor.u32 %v4077, %v4080
      %v4082 = vrot.slane %v4081, 4
      %v4084 = vshll.u32 %v3999, 16
      %v4086 = vrot.slane %v4084, 5
      %v4087 = vsel %vm797, %v4082, %v4086
      %v4089 = vshrl.u32 %v4000, 16
      %v4091 = vrot.slane %v4089, 4
      %v4092 = vshll.u32 %v4000, 16
      %v4094 = vrot.slane %v4092, 5
      %v4095 = vor.u32 %v4091, %v4094
      %v4096 = vrot.slane %v4095, 4
      %v4098 = vshll.u32 %v4001, 16
      %v4100 = vrot.slane %v4098, 5
      %v4101 = vsel %vm797, %v4096, %v4100
      %v4103 = vshrl.u32 %v4002, 16
      %v4105 = vrot.slane %v4103, 4
      %v4106 = vshll.u32 %v4002, 16
      %v4108 = vrot.slane %v4106, 5
      %v4109 = vor.u32 %v4105, %v4108
      %v4110 = vrot.slane %v4109, 4
      %v4112 = vshll.u32 %v4003, 16
      %v4114 = vrot.slane %v4112, 5
      %v4115 = vsel %vm797, %v4110, %v4114
      %s4116 = scalar_lea.vmem %s7, 112
      %v4117 = vld [vmem:[%s4116] sm:$0xf]
      %v4118 = vld [vmem:[%s4116 + $0x4] sm:$0xf]
      %v4119 = vld [vmem:[%s4116 + $0x8] sm:$0xf]
      %v4120 = vld [vmem:[%s4116 + $0xc] sm:$0xf]
      %v4121 = vunpack.c.l.b16 %v4017
      %v4122 = vunpack.c.l.b16 %v4031
      %v4123 = vunpack.c.l.b16 %v4045
      %v4124 = vunpack.c.l.b16 %v4059
      %v4125 = vunpack.c.l.b16 %v4073
      %v4126 = vunpack.c.l.b16 %v4087
      %v4127 = vunpack.c.l.b16 %v4101
      %v4128 = vunpack.c.l.b16 %v4115
      %v4129 = vpack.c.b16 %v4122, %v4121
      %v4130 = vpack.c.b16 %v4124, %v4123
      %v4131 = vpack.c.b16 %v4126, %v4125
      %v4132 = vpack.c.b16 %v4128, %v4127
      %v4137 = vunpack.c.l.b16 %v4117
      %v4138 = vunpack.c.l.b16 %v4118
      %v4139 = vunpack.c.l.b16 %v4119
      %v4140 = vunpack.c.l.b16 %v4120
      %v4141 = vpack.c.b16 %v4138, %v4137
      %v4142 = vpack.c.b16 %v4140, %v4139
      %v4146 = vsel %vm342, %v4129, 0
      %v4149 = vsel %vm342, %v4130, 0
      %v4152 = vsel %vm342, %v4131, 0
      %v4155 = vsel %vm342, %v4132, 0
      %4157 = vmatprep.subr.bf16.mxu0 0
      %4158 = vmatpush1.bf16.msra.mxu0 %v4141
      %4159 = vmatprep.subr.bf16.mxu0 0
      %4160 = vmatpush1.bf16.msra.mxu0 %v4142
      %4161 = vmatprep.subr.bf16.mxu0 0
      %4162 = vmatpush1.bf16.msra.mxu0 0
      %4163 = vmatprep.subr.bf16.mxu0 0
      %4164 = vmatpush1.bf16.msra.mxu0 0
      %4165 = vmatprep.subr.bf16.mxu0 0
      %4166 = vmatpush1.bf16.msra.mxu0 0
      %4167 = vmatprep.subr.bf16.mxu0 0
      %4168 = vmatpush1.bf16.msra.mxu0 0
      %4169 = vmatprep.subr.bf16.mxu0 0
      %4170 = vmatpush1.bf16.msra.mxu0 0
      %4171 = vmatprep.subr.bf16.mxu0 0
      %4172 = vmatpush1.bf16.msra.mxu0 0
      %4173 = vmatprep.subr.bf16.mxu0 0
      %4174 = vmatpush1.bf16.msra.mxu0 0
      %4175 = vmatprep.subr.bf16.mxu0 0
      %4176 = vmatpush1.bf16.msra.mxu0 0
      %4177 = vmatprep.subr.bf16.mxu0 0
      %4178 = vmatpush1.bf16.msra.mxu0 0
      %4179 = vmatprep.subr.bf16.mxu0 0
      %4180 = vmatpush1.bf16.msra.mxu0 0
      %4181 = vmatprep.subr.bf16.mxu0 0
      %4182 = vmatpush1.bf16.msra.mxu0 0
      %4183 = vmatprep.subr.bf16.mxu0 0
      %4184 = vmatpush1.bf16.msra.mxu0 0
      %4185 = vmatprep.subr.bf16.mxu0 0
      %4186 = vmatpush1.bf16.msra.mxu0 0
      %4187 = vmatprep.subr.bf16.mxu0 0
      %4188 = vmatpush1.bf16.msra.mxu0 0
      %4189 = vmatprep.mubr.bf16.mxu0 0
      %4190 = vmatmul.mubr.bf16.gmra.mrb[0].mxu0 %v4146
      %v4191 = vpop.f32.mrb[0].mxu0
      %v4192 = vadd.f32 0.0, %v4191
      %v4193 = vpop.f32.mrb[0].mxu0
      %v4194 = vpop.f32.mrb[0].mxu0
      %v4195 = vadd.f32 0.0, %v4194
      %v4196 = vpop.f32.mrb[0].mxu0
      %4197 = vmatprep.mubr.bf16.mxu0 0
      %4198 = vmatmul.mubr.bf16.gmra.mrb[0].mxu0 %v4149
      %v4199 = vpop.f32.mrb[0].mxu0
      %v4200 = vadd.f32 0.0, %v4199
      %v4201 = vpop.f32.mrb[0].mxu0
      %v4202 = vpop.f32.mrb[0].mxu0
      %v4203 = vadd.f32 0.0, %v4202
      %v4204 = vpop.f32.mrb[0].mxu0
      %4205 = vmatprep.mubr.bf16.mxu0 0
      %4206 = vmatmul.mubr.bf16.gmra.mrb[0].mxu0 %v4152
      %v4207 = vpop.f32.mrb[0].mxu0
      %v4208 = vadd.f32 0.0, %v4207
      %v4209 = vpop.f32.mrb[0].mxu0
      %v4210 = vpop.f32.mrb[0].mxu0
      %v4211 = vadd.f32 0.0, %v4210
      %v4212 = vpop.f32.mrb[0].mxu0
      %4213 = vmatprep.mubr.bf16.mxu0 0
      %4214 = vmatmul.mubr.bf16.gmra.mrb[0].mxu0 %v4155
      %v4215 = vpop.f32.mrb[0].mxu0
      %v4216 = vadd.f32 0.0, %v4215
      %v4217 = vpop.f32.mrb[0].mxu0
      %v4218 = vpop.f32.mrb[0].mxu0
      %v4219 = vadd.f32 0.0, %v4218
      %v4220 = vpop.f32.mrb[0].mxu0
      %4221 = vdwg.mxu0
      %v4222 = vadd.f32 %v3980, %v4192
      %v4223 = vadd.f32 %v3981, %v4195
      %v4224 = vadd.f32 %v3982, %v4200
      %v4225 = vadd.f32 %v3983, %v4203
      %v4226 = vadd.f32 %v3984, %v4208
      %v4227 = vadd.f32 %v3985, %v4211
      %v4228 = vadd.f32 %v3986, %v4216
      %v4229 = vadd.f32 %v3987, %v4219
      %v4230 = vld [vmem:[%s1840] sm:$0xe]
      %v4231 = vld [vmem:[%s1840 + $0x8] sm:$0xe]
      %v4232 = vld [vmem:[%s1840 + $0x10] sm:$0xe]
      %v4233 = vld [vmem:[%s1840 + $0x18] sm:$0xe]
      %v4234 = vld [vmem:[%s1840 + $0x20] sm:$0xe]
      %v4235 = vld [vmem:[%s1840 + $0x28] sm:$0xe]
      %v4236 = vld [vmem:[%s1840 + $0x30] sm:$0xe]
      %v4237 = vld [vmem:[%s1840 + $0x38] sm:$0xe]
      %v4254 = vrot.slane %v4230, 5
      %v4255 = vrot.slane %v4254, 4
      %v4256 = vrot.slane %v3989, 5
      %v4257 = vsel %vm1151, %v4255, %v4256
      %v4258 = vrot.slane %v4231, 5
      %v4259 = vrot.slane %v4258, 4
      %v4260 = vrot.slane %v3991, 5
      %v4261 = vsel %vm1151, %v4259, %v4260
      %v4262 = vrot.slane %v4232, 5
      %v4263 = vrot.slane %v4262, 4
      %v4264 = vrot.slane %v3993, 5
      %v4265 = vsel %vm1151, %v4263, %v4264
      %v4266 = vrot.slane %v4233, 5
      %v4267 = vrot.slane %v4266, 4
      %v4268 = vrot.slane %v3995, 5
      %v4269 = vsel %vm1151, %v4267, %v4268
      %v4270 = vrot.slane %v4234, 5
      %v4271 = vrot.slane %v4270, 4
      %v4272 = vrot.slane %v3997, 5
      %v4273 = vsel %vm1151, %v4271, %v4272
      %v4274 = vrot.slane %v4235, 5
      %v4275 = vrot.slane %v4274, 4
      %v4276 = vrot.slane %v3999, 5
      %v4277 = vsel %vm1151, %v4275, %v4276
      %v4278 = vrot.slane %v4236, 5
      %v4279 = vrot.slane %v4278, 4
      %v4280 = vrot.slane %v4001, 5
      %v4281 = vsel %vm1151, %v4279, %v4280
      %v4282 = vrot.slane %v4237, 5
      %v4283 = vrot.slane %v4282, 4
      %v4284 = vrot.slane %v4003, 5
      %v4285 = vsel %vm1151, %v4283, %v4284
      %s4286 = scalar_lea.vmem %s7, 128
      %v4287 = vld [vmem:[%s4286] sm:$0xf]
      %v4288 = vld [vmem:[%s4286 + $0x4] sm:$0xf]
      %v4289 = vld [vmem:[%s4286 + $0x8] sm:$0xf]
      %v4290 = vld [vmem:[%s4286 + $0xc] sm:$0xf]
      %v4291 = vunpack.c.l.b16 %v4257
      %v4292 = vunpack.c.l.b16 %v4261
      %v4293 = vunpack.c.l.b16 %v4265
      %v4294 = vunpack.c.l.b16 %v4269
      %v4295 = vunpack.c.l.b16 %v4273
      %v4296 = vunpack.c.l.b16 %v4277
      %v4297 = vunpack.c.l.b16 %v4281
      %v4298 = vunpack.c.l.b16 %v4285
      %v4299 = vpack.c.b16 %v4292, %v4291
      %v4300 = vpack.c.b16 %v4294, %v4293
      %v4301 = vpack.c.b16 %v4296, %v4295
      %v4302 = vpack.c.b16 %v4298, %v4297
      %v4307 = vunpack.c.l.b16 %v4287
      %v4308 = vunpack.c.l.b16 %v4288
      %v4309 = vunpack.c.l.b16 %v4289
      %v4310 = vunpack.c.l.b16 %v4290
      %v4311 = vpack.c.b16 %v4308, %v4307
      %v4312 = vpack.c.b16 %v4310, %v4309
      %v4316 = vsel %vm342, %v4299, 0
      %v4319 = vsel %vm342, %v4300, 0
      %v4322 = vsel %vm342, %v4301, 0
      %v4325 = vsel %vm342, %v4302, 0
      %4327 = vmatprep.subr.bf16.mxu0 0
      %4328 = vmatpush1.bf16.msra.mxu0 %v4311
      %4329 = vmatprep.subr.bf16.mxu0 0
      %4330 = vmatpush1.bf16.msra.mxu0 %v4312
      %4331 = vmatprep.subr.bf16.mxu0 0
      %4332 = vmatpush1.bf16.msra.mxu0 0
      %4333 = vmatprep.subr.bf16.mxu0 0
      %4334 = vmatpush1.bf16.msra.mxu0 0
      %4335 = vmatprep.subr.bf16.mxu0 0
      %4336 = vmatpush1.bf16.msra.mxu0 0
      %4337 = vmatprep.subr.bf16.mxu0 0
      %4338 = vmatpush1.bf16.msra.mxu0 0
      %4339 = vmatprep.subr.bf16.mxu0 0
      %4340 = vmatpush1.bf16.msra.mxu0 0
      %4341 = vmatprep.subr.bf16.mxu0 0
      %4342 = vmatpush1.bf16.msra.mxu0 0
      %4343 = vmatprep.subr.bf16.mxu0 0
      %4344 = vmatpush1.bf16.msra.mxu0 0
      %4345 = vmatprep.subr.bf16.mxu0 0
      %4346 = vmatpush1.bf16.msra.mxu0 0
      %4347 = vmatprep.subr.bf16.mxu0 0
      %4348 = vmatpush1.bf16.msra.mxu0 0
      %4349 = vmatprep.subr.bf16.mxu0 0
      %4350 = vmatpush1.bf16.msra.mxu0 0
      %4351 = vmatprep.subr.bf16.mxu0 0
      %4352 = vmatpush1.bf16.msra.mxu0 0
      %4353 = vmatprep.subr.bf16.mxu0 0
      %4354 = vmatpush1.bf16.msra.mxu0 0
      %4355 = vmatprep.subr.bf16.mxu0 0
      %4356 = vmatpush1.bf16.msra.mxu0 0
      %4357 = vmatprep.subr.bf16.mxu0 0
      %4358 = vmatpush1.bf16.msra.mxu0 0
      %4359 = vmatprep.mubr.bf16.mxu0 0
      %4360 = vmatmul.mubr.bf16.gmra.mrb[0].mxu0 %v4316
      %v4361 = vpop.f32.mrb[0].mxu0
      %v4362 = vadd.f32 0.0, %v4361
      %v4363 = vpop.f32.mrb[0].mxu0
      %v4364 = vpop.f32.mrb[0].mxu0
      %v4365 = vadd.f32 0.0, %v4364
      %v4366 = vpop.f32.mrb[0].mxu0
      %4367 = vmatprep.mubr.bf16.mxu0 0
      %4368 = vmatmul.mubr.bf16.gmra.mrb[0].mxu0 %v4319
      %v4369 = vpop.f32.mrb[0].mxu0
      %v4370 = vadd.f32 0.0, %v4369
      %v4371 = vpop.f32.mrb[0].mxu0
      %v4372 = vpop.f32.mrb[0].mxu0
      %v4373 = vadd.f32 0.0, %v4372
      %v4374 = vpop.f32.mrb[0].mxu0
      %4375 = vmatprep.mubr.bf16.mxu0 0
      %4376 = vmatmul.mubr.bf16.gmra.mrb[0].mxu0 %v4322
      %v4377 = vpop.f32.mrb[0].mxu0
      %v4378 = vadd.f32 0.0, %v4377
      %v4379 = vpop.f32.mrb[0].mxu0
      %v4380 = vpop.f32.mrb[0].mxu0
      %v4381 = vadd.f32 0.0, %v4380
      %v4382 = vpop.f32.mrb[0].mxu0
      %4383 = vmatprep.mubr.bf16.mxu0 0
      %4384 = vmatmul.mubr.bf16.gmra.mrb[0].mxu0 %v4325
      %v4385 = vpop.f32.mrb[0].mxu0
      %v4386 = vadd.f32 0.0, %v4385
      %v4387 = vpop.f32.mrb[0].mxu0
      %v4388 = vpop.f32.mrb[0].mxu0
      %v4389 = vadd.f32 0.0, %v4388
      %v4390 = vpop.f32.mrb[0].mxu0
      %4391 = vdwg.mxu0
      %v4392 = vadd.f32 %v4222, %v4362
      %v4393 = vadd.f32 %v4223, %v4365
      %v4394 = vadd.f32 %v4224, %v4370
      %v4395 = vadd.f32 %v4225, %v4373
      %v4396 = vadd.f32 %v4226, %v4378
      %v4397 = vadd.f32 %v4227, %v4381
      %v4398 = vadd.f32 %v4228, %v4386
      %v4399 = vadd.f32 %v4229, %v4389
      %v4400 = vld [vmem:[%s8] sm:$0x1]
      %v4402 = vlaneseq
      %v4403 = vshrl.u32 %v4402, 7
      %v4404 = vsub.s32 0, %v4403
      %v4405 = vrot.slane %v4400, %v4404
      %v4407 = vadd.f32 %v4392, %v4405
      %v4408 = vadd.f32 %v4393, %v4405
      %v4409 = vadd.f32 %v4394, %v4405
      %v4410 = vadd.f32 %v4395, %v4405
      %v4411 = vadd.f32 %v4396, %v4405
      %v4412 = vadd.f32 %v4397, %v4405
      %v4413 = vadd.f32 %v4398, %v4405
      %v4414 = vadd.f32 %v4399, %v4405
      %v4415 = vadd.f32 %v4407, %v334
      %v4416 = vadd.f32 %v4408, %v335
      %v4417 = vadd.f32 %v4409, %v336
      %v4418 = vadd.f32 %v4410, %v337
      %v4419 = vadd.f32 %v4411, %v338
      %v4420 = vadd.f32 %v4412, %v339
      %v4421 = vadd.f32 %v4413, %v340
      %v4422 = vadd.f32 %v4414, %v341
      %4423 = vst.msk [vmem:[%s332] sm:$0xff] %vm342, %v4415
      %4424 = vst.msk [vmem:[%s332 + $0x8] sm:$0xff] %vm342, %v4416
      %4425 = vst.msk [vmem:[%s332 + $0x10] sm:$0xff] %vm342, %v4417
      %4426 = vst.msk [vmem:[%s332 + $0x18] sm:$0xff] %vm342, %v4418
      %4427 = vst.msk [vmem:[%s332 + $0x20] sm:$0xff] %vm342, %v4419
      %4428 = vst.msk [vmem:[%s332 + $0x28] sm:$0xff] %vm342, %v4420
      %4429 = vst.msk [vmem:[%s332 + $0x30] sm:$0xff] %vm342, %v4421
      %4430 = vst.msk [vmem:[%s332 + $0x38] sm:$0xff] %vm342, %v4422
      %p4431 = scmp.lt.s32.totalorder %s20, 1
      %s4432 = scalar_select %p4431, %s20, 1
      %s4433 = smul.addr %s4432, 8
      %s4434 = smul.addr %s4433, 8
      %s4435 = scalar_lea.vmem %s9, %s4434
      // Predicated region
      $region57: #{speech_model_forward.8} parent=55 // pred_check
        %p4436 = pneg %p232
      $region58: #{speech_model_forward.8} parent=55 // pred_check_branch
        %4438 = sbr.rel (%p4436) target = $region60
      $region59: #{speech_model_forward.8} parent=55 // pred_region
        _
      $region60: #{speech_model_forward.8} parent=55 // pred_fallthru
        _
    $region56: #{speech_model_forward.8} parent=5 // pred_fallthru
      _
    %p4439 = scmp.le.s32.totalorder 2, %s15
    // Predicated region
    $region61: #{speech_model_forward.8} parent=5 // pred_check
      %p4440 = pneg %p4439
    $region62: #{speech_model_forward.8} parent=5 // pred_check_branch
      %4442 = sbr.rel (%p4440) target = $region64
    $region63: #{speech_model_forward.8} parent=5 // pred_region
      %s4443 = ssub.s32 %s15, 2
      // Predicated region
      $region65: #{speech_model_forward.8} parent=63 // pred_check
        %p4444 = pneg %p238
      $region66: #{speech_model_forward.8} parent=63 // pred_check_branch
        %4446 = sbr.rel (%p4444) target = $region68
      $region67: #{speech_model_forward.8} parent=63 // pred_region
        %p4447 = scmp.lt.s32.totalorder %s21, 1
        %s4448 = scalar_select %p4447, %s21, 1
        %s4449 = smul.addr %s4448, 8
        %s4450 = smul.addr %s4449, 8
        %s4451 = scalar_lea.vmem %s9, %s4450
      $region68: #{speech_model_forward.8} parent=63 // pred_fallthru
        _
    $region64: #{speech_model_forward.8} parent=5 // pred_fallthru
      _
  $region6: #{speech_model_forward.8} parent=0 // loop_footer
    %s19 = sadd.s32 1, %s15
  $region7: #{speech_model_forward.8} parent=0 // loop_footer_branch
    %14 = sbr.rel target = $region3
  $region8: #{speech_model_forward.8} parent=0 // loop_exit
    _

// kernel: speech_model_forward.13
$region0: #{speech_model_forward.13}
  #allocation0 [shape = 'u32[]', space=smem, size = 0x4, offset = 0x4, fixed_abs, tag = 'smem constant byte address 0x4 - core index']
  #allocation1 [shape = 'u32[144,128]{1,0:T(1,128)}', space=vmem, size = 0x12000, scoped, tag = 'internal scratch']
  %s0 = inlined_call_operand.vmem [shape: f32[16,64], index: 0, kind: input, shape index: {}]
  %s1 = inlined_call_operand.vmem [shape: bf16[64,32], index: 1, kind: input, shape index: {}]
  %s2 = inlined_call_operand.vmem [shape: f32[1,32], index: 2, kind: input, shape index: {}]
  %s3 = inlined_call_operand.vmem [shape: bf16[32,128], index: 3, kind: input, shape index: {}]
  %s4 = inlined_call_operand.vmem [shape: f32[1,128], index: 4, kind: input, shape index: {}]
  %s5 = inlined_call_operand.vmem [shape: f32[16,128], index: 5, kind: output, shape index: {}]
  %s6 = sld [smem:[#allocation0]]
  $region30: #{speech_model_forward.13} parent=0
    _
  %s8 = ssub.s32 1, %s6
  %s9 = scalar_select 0, %s8, %s6
  // Predicated region
  $region2: #{speech_model_forward.13} parent=0 // pred_check
    _
  $region3: #{speech_model_forward.13} parent=0 // pred_check_branch
    %11 = sbr.rel (0) target = $region5
  $region4: #{speech_model_forward.13} parent=0 // pred_region
    _
  $region5: #{speech_model_forward.13} parent=0 // pred_fallthru
    _
  // Predicated region
  $region6: #{speech_model_forward.13} parent=0 // pred_check
    _
  $region7: #{speech_model_forward.13} parent=0 // pred_check_branch
    %13 = sbr.rel (0) target = $region9
  $region8: #{speech_model_forward.13} parent=0 // pred_region
    _
  $region9: #{speech_model_forward.13} parent=0 // pred_fallthru
    _
  // Predicated region
  $region10: #{speech_model_forward.13} parent=0 // pred_check
    _
  $region11: #{speech_model_forward.13} parent=0 // pred_check_branch
    %15 = sbr.rel (0) target = $region13
  $region12: #{speech_model_forward.13} parent=0 // pred_region
    _
  $region13: #{speech_model_forward.13} parent=0 // pred_fallthru
    _
  // Predicated region
  $region14: #{speech_model_forward.13} parent=0 // pred_check
    _
  $region15: #{speech_model_forward.13} parent=0 // pred_check_branch
    %17 = sbr.rel (0) target = $region17
  $region16: #{speech_model_forward.13} parent=0 // pred_region
    _
  $region17: #{speech_model_forward.13} parent=0 // pred_fallthru
    _
  // Predicated region
  $region18: #{speech_model_forward.13} parent=0 // pred_check
    _
  $region19: #{speech_model_forward.13} parent=0 // pred_check_branch
    %19 = sbr.rel (0) target = $region21
  $region20: #{speech_model_forward.13} parent=0 // pred_region
    _
  $region21: #{speech_model_forward.13} parent=0 // pred_fallthru
    _
  %v21 = vld [vmem:[%s0] sm:$0xff]
  %v22 = vld [vmem:[%s0 + $0x8] sm:$0xff]
  %v23 = vpack.c.bf16 %v22, %v21
  %v24 = vld [vmem:[%s1] sm:$0xf]
  %v25 = vld [vmem:[%s1 + $0x4] sm:$0xf]
  %v26 = vld [vmem:[%s1 + $0x8] sm:$0xf]
  %v27 = vld [vmem:[%s1 + $0xc] sm:$0xf]
  %v28 = vld [vmem:[%s1 + $0x10] sm:$0xf]
  %v29 = vld [vmem:[%s1 + $0x14] sm:$0xf]
  %v30 = vld [vmem:[%s1 + $0x18] sm:$0xf]
  %v31 = vld [vmem:[%s1 + $0x1c] sm:$0xf]
  %v32 = vld [vmem:[%s2] sm:$0x1]
  %v34 = vlaneseq
  %v35 = vshrl.u32 %v34, 7
  %v36 = vsub.s32 0, %v35
  %v37 = vrot.slane %v32, %v36
  %v47 = vunpack.c.l.b16 %v24
  %v48 = vunpack.c.l.b16 %v25
  %v49 = vunpack.c.l.b16 %v26
  %v50 = vunpack.c.l.b16 %v27
  %v51 = vunpack.c.l.b16 %v28
  %v52 = vunpack.c.l.b16 %v29
  %v53 = vunpack.c.l.b16 %v30
  %v54 = vunpack.c.l.b16 %v31
  %v55 = vpack.c.b16 %v48, %v47
  %v56 = vpack.c.b16 %v50, %v49
  %v57 = vpack.c.b16 %v52, %v51
  %v58 = vpack.c.b16 %v54, %v53
  %vm63 = vcmask 523264
  %v65 = vsel %vm63, %v23, 0
  %67 = vmatprep.subr.bf16.mxu0 0
  %68 = vmatpush1.bf16.msra.mxu0 %v55
  %69 = vmatprep.subr.bf16.mxu0 0
  %70 = vmatpush1.bf16.msra.mxu0 %v56
  %71 = vmatprep.subr.bf16.mxu0 0
  %72 = vmatpush1.bf16.msra.mxu0 %v57
  %73 = vmatprep.subr.bf16.mxu0 0
  %74 = vmatpush1.bf16.msra.mxu0 %v58
  %75 = vmatprep.subr.bf16.mxu0 0
  %76 = vmatpush1.bf16.msra.mxu0 0
  %77 = vmatprep.subr.bf16.mxu0 0
  %78 = vmatpush1.bf16.msra.mxu0 0
  %79 = vmatprep.subr.bf16.mxu0 0
  %80 = vmatpush1.bf16.msra.mxu0 0
  %81 = vmatprep.subr.bf16.mxu0 0
  %82 = vmatpush1.bf16.msra.mxu0 0
  %83 = vmatprep.subr.bf16.mxu0 0
  %84 = vmatpush1.bf16.msra.mxu0 0
  %85 = vmatprep.subr.bf16.mxu0 0
  %86 = vmatpush1.bf16.msra.mxu0 0
  %87 = vmatprep.subr.bf16.mxu0 0
  %88 = vmatpush1.bf16.msra.mxu0 0
  %89 = vmatprep.subr.bf16.mxu0 0
  %90 = vmatpush1.bf16.msra.mxu0 0
  %91 = vmatprep.subr.bf16.mxu0 0
  %92 = vmatpush1.bf16.msra.mxu0 0
  %93 = vmatprep.subr.bf16.mxu0 0
  %94 = vmatpush1.bf16.msra.mxu0 0
  %95 = vmatprep.subr.bf16.mxu0 0
  %96 = vmatpush1.bf16.msra.mxu0 0
  %97 = vmatprep.subr.bf16.mxu0 0
  %98 = vmatpush1.bf16.msra.mxu0 0
  %99 = vmatprep.mubr.bf16.mxu0 0
  %100 = vmatmul.mubr.bf16.gmra.mrb[0].mxu0 %v65
  %v101 = vpop.f32.mrb[0].mxu0
  %v102 = vadd.f32 %v37, %v101
  %v103 = vpop.f32.mrb[0].mxu0
  %v104 = vpop.f32.mrb[0].mxu0
  %v105 = vadd.f32 %v37, %v104
  %v106 = vpop.f32.mrb[0].mxu0
  %107 = vdwg.mxu0
  %v108 = vmax.f32 %v102, 0.0
  %v109 = vmax.f32 %v105, 0.0
  %v110 = vpack.c.bf16 %v109, %v108
  %v111 = vld [vmem:[%s3] sm:$0xf]
  %v112 = vld [vmem:[%s3 + $0x4] sm:$0xf]
  %v113 = vld [vmem:[%s3 + $0x8] sm:$0xf]
  %v114 = vld [vmem:[%s3 + $0xc] sm:$0xf]
  %v115 = vld [vmem:[%s4] sm:$0x1]
  %v117 = vlaneseq
  %v118 = vshrl.u32 %v117, 7
  %v119 = vsub.s32 0, %v118
  %v120 = vrot.slane %v115, %v119
  %v126 = vunpack.c.l.b16 %v111
  %v127 = vunpack.c.l.b16 %v112
  %v128 = vunpack.c.l.b16 %v113
  %v129 = vunpack.c.l.b16 %v114
  %v130 = vpack.c.b16 %v127, %v126
  %v131 = vpack.c.b16 %v129, %v128
  %vm134 = vcmask 261120
  %v136 = vsel %vm134, %v110, 0
  %138 = vmatprep.subr.bf16.mxu0 0
  %139 = vmatpush1.bf16.msra.mxu0 %v130
  %140 = vmatprep.subr.bf16.mxu0 0
  %141 = vmatpush1.bf16.msra.mxu0 %v131
  %142 = vmatprep.subr.bf16.mxu0 0
  %143 = vmatpush1.bf16.msra.mxu0 0
  %144 = vmatprep.subr.bf16.mxu0 0
  %145 = vmatpush1.bf16.msra.mxu0 0
  %146 = vmatprep.subr.bf16.mxu0 0
  %147 = vmatpush1.bf16.msra.mxu0 0
  %148 = vmatprep.subr.bf16.mxu0 0
  %149 = vmatpush1.bf16.msra.mxu0 0
  %150 = vmatprep.subr.bf16.mxu0 0
  %151 = vmatpush1.bf16.msra.mxu0 0
  %152 = vmatprep.subr.bf16.mxu0 0
  %153 = vmatpush1.bf16.msra.mxu0 0
  %154 = vmatprep.subr.bf16.mxu0 0
  %155 = vmatpush1.bf16.msra.mxu0 0
  %156 = vmatprep.subr.bf16.mxu0 0
  %157 = vmatpush1.bf16.msra.mxu0 0
  %158 = vmatprep.subr.bf16.mxu0 0
  %159 = vmatpush1.bf16.msra.mxu0 0
  %160 = vmatprep.subr.bf16.mxu0 0
  %161 = vmatpush1.bf16.msra.mxu0 0
  %162 = vmatprep.subr.bf16.mxu0 0
  %163 = vmatpush1.bf16.msra.mxu0 0
  %164 = vmatprep.subr.bf16.mxu0 0
  %165 = vmatpush1.bf16.msra.mxu0 0
  %166 = vmatprep.subr.bf16.mxu0 0
  %167 = vmatpush1.bf16.msra.mxu0 0
  %168 = vmatprep.subr.bf16.mxu0 0
  %169 = vmatpush1.bf16.msra.mxu0 0
  %170 = vmatprep.mubr.bf16.mxu0 0
  %171 = vmatmul.mubr.bf16.gmra.mrb[0].mxu0 %v136
  %v172 = vpop.f32.mrb[0].mxu0
  %v173 = vadd.f32 %v120, %v172
  %v174 = vpop.f32.mrb[0].mxu0
  %v175 = vpop.f32.mrb[0].mxu0
  %v176 = vadd.f32 %v120, %v175
  %v177 = vpop.f32.mrb[0].mxu0
  %178 = vdwg.mxu0
  %179 = vst [vmem:[%s5] sm:$0xff] %v173
  %180 = vst [vmem:[%s5 + $0x8] sm:$0xff] %v176
  // Predicated region
  $region22: #{speech_model_forward.13} parent=0 // pred_check
    _
  $region23: #{speech_model_forward.13} parent=0 // pred_check_branch
    %182 = sbr.rel (0) target = $region25
  $region24: #{speech_model_forward.13} parent=0 // pred_region
    _
  $region25: #{speech_model_forward.13} parent=0 // pred_fallthru
    _
  // Predicated region
  $region26: #{speech_model_forward.13} parent=0 // pred_check
    _
  $region27: #{speech_model_forward.13} parent=0 // pred_check_branch
    %184 = sbr.rel (0) target = $region29
  $region28: #{speech_model_forward.13} parent=0 // pred_region
    _
  $region29: #{speech_model_forward.13} parent=0 // pred_fallthru
    _

</llo_original>
